<compile_context>
chip_gen: v6e
topology: v6e:2x2x1
jax: 0.10.0
libtpu: 0.0.40
codegen_flags: <defaults>
</compile_context>

<pallas_src>
import jax
import jax.numpy as jnp
from jax import lax
from jax.experimental import pallas as pl
from jax.experimental.pallas import tpu as pltpu

BN_EPS = 1e-5
LANE = 128


def _round_up(x, m):
    return (x + m - 1) // m * m


# --------------------------------------------------------------------------
# Kernel
# --------------------------------------------------------------------------
def classifier_mini_kernel(text_ref, emb_ref,
                           w1_ref, b1_ref, w2_ref, b2_ref, w3_ref, b3_ref,
                           out_ref):
    TB, S = text_ref.shape
    V = emb_ref.shape[0]

    # Embedding bag as a count matmul: counts @ emb == sum of gathered rows.
    # Counts are built by a static unroll over S, accumulating into ONE
    # (TB, V) bf16 plane (no 3-D intermediate, no cross-sublane reduce).
    # Counts are small exact integers (<= S <= 256), so bf16 is lossless.
    ids = text_ref[...]                                            # (TB, S) i32
    iota_v = lax.broadcasted_iota(jnp.int32, (TB, V), 1)           # hoisted
    counts = jnp.zeros((TB, V), jnp.bfloat16)
    for s in range(S):                                             # static unroll
        counts = counts + (ids[:, s:s + 1] == iota_v).astype(jnp.bfloat16)

    h1 = jnp.dot(counts, emb_ref[...],
                 preferred_element_type=jnp.float32)               # (TB, 384) f32

    # Linear(300->1024) + ReLU.  Dropout(0.1) is identity in eval mode.
    z = jnp.dot(h1.astype(jnp.bfloat16), w1_ref[...],
                preferred_element_type=jnp.float32) + b1_ref[...]
    z = jnp.maximum(z, 0.0)

    # BatchNorm1d(1024) (eval) folded into w2/b2 on the host.
    z = jnp.dot(z.astype(jnp.bfloat16), w2_ref[...],
                preferred_element_type=jnp.float32) + b2_ref[...]
    z = jnp.maximum(z, 0.0)

    # BatchNorm1d(512) (eval) folded into w3/b3 on the host; the tanh
    # pre-scale 8.0 is folded into w3/b3 as well (exact power-of-2 scale).
    z = jnp.dot(z.astype(jnp.bfloat16), w3_ref[...],
                preferred_element_type=jnp.float32) + b3_ref[...]

    # Activations / tanh stay f32 (v5e VPU/EUP have no bf16 path).
    out_ref[...] = jnp.tanh(z)


# --------------------------------------------------------------------------
# Host-side param preparation: BN fold, 8x fold, lane padding, bf16 cast.
# --------------------------------------------------------------------------
def prepare_params(params):
    emb, w1 = params["emb"], params["w1"]
    V, D = emb.shape
    D1 = w1.shape[1]                 # 1024
    D2 = params["w2"].shape[1]       # 512
    n_out = params["w3"].shape[1]    # 150

    # Eval-mode BN: y = x*s + t with s = g*rsqrt(v+eps), t = be - m*s.
    s1 = params["g1"] * lax.rsqrt(params["v1"] + BN_EPS)
    t1 = params["be1"] - params["m1"] * s1
    s2 = params["g2"] * lax.rsqrt(params["v2"] + BN_EPS)
    t2 = params["be2"] - params["m2"] * s2

    # Fold BN1 into Linear2 and BN2 into Linear3:
    #   (x*s + t) @ W + b == x @ (s[:,None]*W) + (t @ W + b)
    w2f = params["w2"] * s1.reshape(D1, 1)
    b2f = params["b2"] + t1 @ params["w2"]
    # Also fold the tanh pre-scale 8.0 into the last Linear (bit-exact).
    w3f = 8.0 * (params["w3"] * s2.reshape(D2, 1))
    b3f = 8.0 * (params["b3"] + t2 @ params["w3"])

    # Zero-pad to lane-aligned shapes (zeros on both sides of each contraction
    # keep results bit-compatible; output is sliced back to n_out).
    V_pad = _round_up(V, LANE)      # 128 -> 128
    D_pad = _round_up(D, LANE)      # 300 -> 384
    N_pad = _round_up(n_out, LANE)  # 150 -> 256

    emb_p = jnp.zeros((V_pad, D_pad), jnp.float32).at[:V, :D].set(emb)
    w1_p = jnp.zeros((D_pad, D1), jnp.float32).at[:D, :].set(w1)
    w3_p = jnp.zeros((D2, N_pad), jnp.float32).at[:, :n_out].set(w3f)
    b3_p = jnp.zeros((1, N_pad), jnp.float32).at[:, :n_out].set(b3f)

    return dict(
        emb=emb_p.astype(jnp.bfloat16),
        w1=w1_p.astype(jnp.bfloat16),
        b1=params["b1"].astype(jnp.float32),
        w2=w2f.astype(jnp.bfloat16),
        b2=b2f.astype(jnp.float32),
        w3=w3_p.astype(jnp.bfloat16),
        b3=b3_p.astype(jnp.float32),
        n_out=n_out,
        vocab=V_pad,
    )


# --------------------------------------------------------------------------
# Wrapper
# --------------------------------------------------------------------------
def classifier_mini_forward(text_ix, prep, *, batch_tile=256):
    B, S = text_ix.shape
    # bf16 count accumulation is exact only for per-(row, token) counts <= 256.
    assert S <= 256, "bf16 count accumulation requires S <= 256"

    # Batch tile: multiple of 16 (bf16 sublane packing), up to 256 to fill the
    # 256-wide MXU on v6e/v7x.  When the whole batch would fit in one >=256
    # tile, split into two so v7x's second TensorCore (dimension_semantics=
    # "parallel") gets work.
    TB = max(16, min(batch_tile, _round_up(B, 16)))
    if _round_up(B, TB) // TB < 2 and TB >= 256:
        TB = TB // 2
    B_pad = _round_up(B, TB)
    if B_pad != B:
        text_ix = jnp.pad(text_ix, ((0, B_pad - B), (0, 0)))
    N_pad = prep["w3"].shape[1]

    weights = (prep["emb"], prep["w1"], prep["b1"], prep["w2"], prep["b2"],
               prep["w3"], prep["b3"])

    def build_call(weight_pipeline_mode):
        kw = ({} if weight_pipeline_mode is None
              else {"pipeline_mode": weight_pipeline_mode})
        # Constant index_map -> weights are DMA'd once and stay VMEM-resident
        # across all batch tiles.
        weight_specs = [pl.BlockSpec(w.shape, lambda i: (0, 0), **kw)
                        for w in weights]
        return pl.pallas_call(
            classifier_mini_kernel,
            out_shape=jax.ShapeDtypeStruct((B_pad, N_pad), jnp.float32),
            grid=(B_pad // TB,),
            in_specs=[pl.BlockSpec((TB, S), lambda i: (i, 0))] + weight_specs,
            out_specs=pl.BlockSpec((TB, N_pad), lambda i: (i, 0)),
            compiler_params=pltpu.CompilerParams(
                # Batch tiles are independent -> shard across v7x's 2 TCs.
                dimension_semantics=("parallel",),
                # ~2.2 MB bf16 weights + activation tiles fit everywhere;
                # explicit limit keeps it honest on v5e (16 MiB scoped default).
                vmem_limit_bytes=32 * 1024 * 1024,
            ),
        )

    try:
        # Weights never change across the grid -> single-buffer them to skip
        # the redundant double-buffer allocation / per-step DMA descriptors.
        out = build_call(pl.Buffered(1))(text_ix, *weights)
    except Exception:
        # Fallback for jax/libtpu builds that reject single-buffered
        # BlockSpecs in the grid pipeline (correctness identical).
        out = build_call(None)(text_ix, *weights)

    return out[:B, :prep["n_out"]]


# --------------------------------------------------------------------------
# References
# --------------------------------------------------------------------------
def matched_reference(text_ix, prep):
    """Pure-JAX reference with the SAME numerics as the kernel
    (bf16 weights, folded BN + 8x, f32 accumulation)."""
    emb = prep["emb"].astype(jnp.float32)
    h1 = jnp.take(emb, text_ix, axis=0).sum(axis=1)
    z = jnp.dot(h1.astype(jnp.bfloat16), prep["w1"],
                preferred_element_type=jnp.float32) + prep["b1"]
    z = jnp.maximum(z, 0.0)
    z = jnp.dot(z.astype(jnp.bfloat16), prep["w2"],
                preferred_element_type=jnp.float32) + prep["b2"]
    z = jnp.maximum(z, 0.0)
    z = jnp.dot(z.astype(jnp.bfloat16), prep["w3"],
                preferred_element_type=jnp.float32) + prep["b3"]
    return jnp.tanh(z)[:, :prep["n_out"]]


def reference_forward(text_ix, params):
    """Full-precision (f32) eval-mode reference of the PyTorch module."""
    h1 = jnp.take(params["emb"], text_ix, axis=0).sum(axis=1)
    z = jnp.maximum(h1 @ params["w1"] + params["b1"], 0.0)
    z = (z - params["m1"]) / jnp.sqrt(params["v1"] + BN_EPS) * params["g1"] + params["be1"]
    z = jnp.maximum(z @ params["w2"] + params["b2"], 0.0)
    z = (z - params["m2"]) / jnp.sqrt(params["v2"] + BN_EPS) * params["g2"] + params["be2"]
    z = z @ params["w3"] + params["b3"]
    return jnp.tanh(z * 8.0)


def init_params(key, vocab=128, emb_dim=300):
    ks = jax.random.split(key, 12)

    def lin(kw, kb, fan_in, fan_out):
        bound = 1.0 / jnp.sqrt(fan_in)
        w = jax.random.uniform(kw, (fan_in, fan_out), jnp.float32, -bound, bound)
        b = jax.random.uniform(kb, (1, fan_out), jnp.float32, -bound, bound)
        return w, b

    emb = jax.random.normal(ks[0], (vocab, emb_dim), jnp.float32)
    w1, b1 = lin(ks[1], ks[2], emb_dim, 1024)
    w2, b2 = lin(ks[3], ks[4], 1024, 512)
    w3, b3 = lin(ks[5], ks[6], 512, 150)
    g1 = 1.0 + 0.1 * jax.random.normal(ks[7], (1, 1024), jnp.float32)
    be1 = 0.1 * jax.random.normal(ks[8], (1, 1024), jnp.float32)
    m1 = 0.1 * jax.random.normal(ks[9], (1, 1024), jnp.float32)
    v1 = jax.random.uniform(ks[10], (1, 1024), jnp.float32, 0.5, 1.5)
    k2 = jax.random.split(ks[11], 4)
    g2 = 1.0 + 0.1 * jax.random.normal(k2[0], (1, 512), jnp.float32)
    be2 = 0.1 * jax.random.normal(k2[1], (1, 512), jnp.float32)
    m2 = 0.1 * jax.random.normal(k2[2], (1, 512), jnp.float32)
    v2 = jax.random.uniform(k2[3], (1, 512), jnp.float32, 0.5, 1.5)
    return dict(emb=emb, w1=w1, b1=b1, g1=g1, be1=be1, m1=m1, v1=v1,
                w2=w2, b2=b2, g2=g2, be2=be2, m2=m2, v2=v2, w3=w3, b3=b3)


if __name__ == "__main__":
    key = jax.random.PRNGKey(0)
    k_par, k_ix = jax.random.split(key)

    VOCAB, EMB_DIM = 128, 300
    B, S = 8, 8  # small batch / sequence length

    params = init_params(k_par, vocab=VOCAB, emb_dim=EMB_DIM)
    text_ix = jax.random.randint(k_ix, (B, S), 0, VOCAB, dtype=jnp.int32)

    prep = prepare_params(params)
    out = jax.block_until_ready(classifier_mini_forward(text_ix, prep))
    assert out.shape == (B, 150) and out.dtype == jnp.float32

    # Tight check vs. a pure-JAX reference with identical numerics (bf16
    # weights, folded BN/8x, f32 accumulation).
    ref_matched = jax.block_until_ready(matched_reference(text_ix, prep))
    assert jnp.allclose(out, ref_matched, rtol=2e-2, atol=2e-2), \
        "mismatch vs matched-precision reference"

    # Loose sanity check vs. the full-f32 module reference; slack accounts for
    # bf16 weight quantization amplified by the tanh(8*x) slope.
    ref_f32 = jax.block_until_ready(reference_forward(text_ix, params))
    assert jnp.allclose(out, ref_f32, rtol=0.0, atol=0.25), \
        "mismatch vs f32 module reference"

    print("KERNEL_OK")
</pallas_src>

<mosaic_0001>
module attributes {stable_mosaic.version = 11 : i64} {
  func.func @classifier_mini_kernel(%arg0: i32, %arg1: memref<16x8xi32, #tpu.memory_space<vmem>>, %arg2: memref<128x384xbf16, #tpu.memory_space<vmem>>, %arg3: memref<384x1024xbf16, #tpu.memory_space<vmem>>, %arg4: memref<1x1024xf32, #tpu.memory_space<vmem>>, %arg5: memref<1024x512xbf16, #tpu.memory_space<vmem>>, %arg6: memref<1x512xf32, #tpu.memory_space<vmem>>, %arg7: memref<512x256xbf16, #tpu.memory_space<vmem>>, %arg8: memref<1x256xf32, #tpu.memory_space<vmem>>, %arg9: memref<16x256xf32, #tpu.memory_space<vmem>>) attributes {dimension_semantics = [#tpu.dimension_semantics<parallel>], iteration_bounds = array<i64: 1>, scalar_prefetch = 0 : i64, scratch_operands = 0 : i64, tpu.core_type = #tpu.core_type<tc>, window_params = [{transform_indices = @transform_0, window_bounds = array<i64: 16, 8>}, {pipeline_mode = #tpu.pipeline_mode<synchronous>, transform_indices = @transform_1, window_bounds = array<i64: 128, 384>}, {pipeline_mode = #tpu.pipeline_mode<synchronous>, transform_indices = @transform_2, window_bounds = array<i64: 384, 1024>}, {pipeline_mode = #tpu.pipeline_mode<synchronous>, transform_indices = @transform_3, window_bounds = array<i64: 1, 1024>}, {pipeline_mode = #tpu.pipeline_mode<synchronous>, transform_indices = @transform_4, window_bounds = array<i64: 1024, 512>}, {pipeline_mode = #tpu.pipeline_mode<synchronous>, transform_indices = @transform_5, window_bounds = array<i64: 1, 512>}, {pipeline_mode = #tpu.pipeline_mode<synchronous>, transform_indices = @transform_6, window_bounds = array<i64: 512, 256>}, {pipeline_mode = #tpu.pipeline_mode<synchronous>, transform_indices = @transform_7, window_bounds = array<i64: 1, 256>}, {transform_indices = @transform_8, window_bounds = array<i64: 16, 256>}]} {
    %c0 = arith.constant 0 : index
    %c0_0 = arith.constant 0 : index
    %0 = vector.load %arg1[%c0, %c0_0] : memref<16x8xi32, #tpu.memory_space<vmem>>, vector<16x8xi32>
    %1 = tpu.iota {dimensions = array<i32: 1>} : vector<16x128xi32>
    %cst = arith.constant 0.000000e+00 : bf16
    %2 = vector.broadcast %cst : bf16 to vector<16x128xbf16>
    %3 = vector.extract_strided_slice %0 {offsets = [0, 0], sizes = [16, 1], strides = [1, 1]} : vector<16x8xi32> to vector<16x1xi32>
    %4 = vector.broadcast %3 : vector<16x1xi32> to vector<16x128xi32>
    %5 = arith.cmpi eq, %4, %1 : vector<16x128xi32>
    %6 = arith.extui %5 : vector<16x128xi1> to vector<16x128xi32>
    %7 = arith.sitofp %6 : vector<16x128xi32> to vector<16x128xf32>
    %8 = arith.truncf %7 : vector<16x128xf32> to vector<16x128xbf16>
    %9 = arith.addf %2, %8 : vector<16x128xbf16>
    %10 = vector.extract_strided_slice %0 {offsets = [0, 1], sizes = [16, 1], strides = [1, 1]} : vector<16x8xi32> to vector<16x1xi32>
    %11 = vector.broadcast %10 : vector<16x1xi32> to vector<16x128xi32>
    %12 = arith.cmpi eq, %11, %1 : vector<16x128xi32>
    %13 = arith.extui %12 : vector<16x128xi1> to vector<16x128xi32>
    %14 = arith.sitofp %13 : vector<16x128xi32> to vector<16x128xf32>
    %15 = arith.truncf %14 : vector<16x128xf32> to vector<16x128xbf16>
    %16 = arith.addf %9, %15 : vector<16x128xbf16>
    %17 = vector.extract_strided_slice %0 {offsets = [0, 2], sizes = [16, 1], strides = [1, 1]} : vector<16x8xi32> to vector<16x1xi32>
    %18 = vector.broadcast %17 : vector<16x1xi32> to vector<16x128xi32>
    %19 = arith.cmpi eq, %18, %1 : vector<16x128xi32>
    %20 = arith.extui %19 : vector<16x128xi1> to vector<16x128xi32>
    %21 = arith.sitofp %20 : vector<16x128xi32> to vector<16x128xf32>
    %22 = arith.truncf %21 : vector<16x128xf32> to vector<16x128xbf16>
    %23 = arith.addf %16, %22 : vector<16x128xbf16>
    %24 = vector.extract_strided_slice %0 {offsets = [0, 3], sizes = [16, 1], strides = [1, 1]} : vector<16x8xi32> to vector<16x1xi32>
    %25 = vector.broadcast %24 : vector<16x1xi32> to vector<16x128xi32>
    %26 = arith.cmpi eq, %25, %1 : vector<16x128xi32>
    %27 = arith.extui %26 : vector<16x128xi1> to vector<16x128xi32>
    %28 = arith.sitofp %27 : vector<16x128xi32> to vector<16x128xf32>
    %29 = arith.truncf %28 : vector<16x128xf32> to vector<16x128xbf16>
    %30 = arith.addf %23, %29 : vector<16x128xbf16>
    %31 = vector.extract_strided_slice %0 {offsets = [0, 4], sizes = [16, 1], strides = [1, 1]} : vector<16x8xi32> to vector<16x1xi32>
    %32 = vector.broadcast %31 : vector<16x1xi32> to vector<16x128xi32>
    %33 = arith.cmpi eq, %32, %1 : vector<16x128xi32>
    %34 = arith.extui %33 : vector<16x128xi1> to vector<16x128xi32>
    %35 = arith.sitofp %34 : vector<16x128xi32> to vector<16x128xf32>
    %36 = arith.truncf %35 : vector<16x128xf32> to vector<16x128xbf16>
    %37 = arith.addf %30, %36 : vector<16x128xbf16>
    %38 = vector.extract_strided_slice %0 {offsets = [0, 5], sizes = [16, 1], strides = [1, 1]} : vector<16x8xi32> to vector<16x1xi32>
    %39 = vector.broadcast %38 : vector<16x1xi32> to vector<16x128xi32>
    %40 = arith.cmpi eq, %39, %1 : vector<16x128xi32>
    %41 = arith.extui %40 : vector<16x128xi1> to vector<16x128xi32>
    %42 = arith.sitofp %41 : vector<16x128xi32> to vector<16x128xf32>
    %43 = arith.truncf %42 : vector<16x128xf32> to vector<16x128xbf16>
    %44 = arith.addf %37, %43 : vector<16x128xbf16>
    %45 = vector.extract_strided_slice %0 {offsets = [0, 6], sizes = [16, 1], strides = [1, 1]} : vector<16x8xi32> to vector<16x1xi32>
    %46 = vector.broadcast %45 : vector<16x1xi32> to vector<16x128xi32>
    %47 = arith.cmpi eq, %46, %1 : vector<16x128xi32>
    %48 = arith.extui %47 : vector<16x128xi1> to vector<16x128xi32>
    %49 = arith.sitofp %48 : vector<16x128xi32> to vector<16x128xf32>
    %50 = arith.truncf %49 : vector<16x128xf32> to vector<16x128xbf16>
    %51 = arith.addf %44, %50 : vector<16x128xbf16>
    %52 = vector.extract_strided_slice %0 {offsets = [0, 7], sizes = [16, 1], strides = [1, 1]} : vector<16x8xi32> to vector<16x1xi32>
    %53 = vector.broadcast %52 : vector<16x1xi32> to vector<16x128xi32>
    %54 = arith.cmpi eq, %53, %1 : vector<16x128xi32>
    %55 = arith.extui %54 : vector<16x128xi1> to vector<16x128xi32>
    %56 = arith.sitofp %55 : vector<16x128xi32> to vector<16x128xf32>
    %57 = arith.truncf %56 : vector<16x128xf32> to vector<16x128xbf16>
    %58 = arith.addf %51, %57 : vector<16x128xbf16>
    %c0_1 = arith.constant 0 : index
    %c0_2 = arith.constant 0 : index
    %59 = vector.load %arg2[%c0_1, %c0_2] : memref<128x384xbf16, #tpu.memory_space<vmem>>, vector<128x384xbf16>
    %cst_3 = arith.constant dense<0.000000e+00> : vector<16x384xf32>
    %60 = tpu.matmul %58, %59, %cst_3 {dimension_numbers = #tpu.dot_dimension_numbers<[1], [0], [0], [1], [0, 0, 1, 1], [], []>} : vector<16x128xbf16>, vector<128x384xbf16>, vector<16x384xf32> -> vector<16x384xf32>
    %61 = arith.truncf %60 : vector<16x384xf32> to vector<16x384xbf16>
    %c0_4 = arith.constant 0 : index
    %c0_5 = arith.constant 0 : index
    %62 = vector.load %arg3[%c0_4, %c0_5] : memref<384x1024xbf16, #tpu.memory_space<vmem>>, vector<384x1024xbf16>
    %cst_6 = arith.constant dense<0.000000e+00> : vector<16x1024xf32>
    %63 = tpu.matmul %61, %62, %cst_6 {dimension_numbers = #tpu.dot_dimension_numbers<[1], [0], [0], [1], [0, 0, 1, 1], [], []>} : vector<16x384xbf16>, vector<384x1024xbf16>, vector<16x1024xf32> -> vector<16x1024xf32>
    %c0_7 = arith.constant 0 : index
    %c0_8 = arith.constant 0 : index
    %64 = vector.load %arg4[%c0_7, %c0_8] : memref<1x1024xf32, #tpu.memory_space<vmem>>, vector<1x1024xf32>
    %65 = vector.broadcast %64 : vector<1x1024xf32> to vector<16x1024xf32>
    %66 = arith.addf %63, %65 : vector<16x1024xf32>
    %cst_9 = arith.constant 0.000000e+00 : f32
    %67 = vector.broadcast %cst_9 : f32 to vector<16x1024xf32>
    %68 = arith.maximumf %66, %67 : vector<16x1024xf32>
    %69 = arith.truncf %68 : vector<16x1024xf32> to vector<16x1024xbf16>
    %c0_10 = arith.constant 0 : index
    %c0_11 = arith.constant 0 : index
    %70 = vector.load %arg5[%c0_10, %c0_11] : memref<1024x512xbf16, #tpu.memory_space<vmem>>, vector<1024x512xbf16>
    %cst_12 = arith.constant dense<0.000000e+00> : vector<16x512xf32>
    %71 = tpu.matmul %69, %70, %cst_12 {dimension_numbers = #tpu.dot_dimension_numbers<[1], [0], [0], [1], [0, 0, 1, 1], [], []>} : vector<16x1024xbf16>, vector<1024x512xbf16>, vector<16x512xf32> -> vector<16x512xf32>
    %c0_13 = arith.constant 0 : index
    %c0_14 = arith.constant 0 : index
    %72 = vector.load %arg6[%c0_13, %c0_14] : memref<1x512xf32, #tpu.memory_space<vmem>>, vector<1x512xf32>
    %73 = vector.broadcast %72 : vector<1x512xf32> to vector<16x512xf32>
    %74 = arith.addf %71, %73 : vector<16x512xf32>
    %cst_15 = arith.constant 0.000000e+00 : f32
    %75 = vector.broadcast %cst_15 : f32 to vector<16x512xf32>
    %76 = arith.maximumf %74, %75 : vector<16x512xf32>
    %77 = arith.truncf %76 : vector<16x512xf32> to vector<16x512xbf16>
    %c0_16 = arith.constant 0 : index
    %c0_17 = arith.constant 0 : index
    %78 = vector.load %arg7[%c0_16, %c0_17] : memref<512x256xbf16, #tpu.memory_space<vmem>>, vector<512x256xbf16>
    %cst_18 = arith.constant dense<0.000000e+00> : vector<16x256xf32>
    %79 = tpu.matmul %77, %78, %cst_18 {dimension_numbers = #tpu.dot_dimension_numbers<[1], [0], [0], [1], [0, 0, 1, 1], [], []>} : vector<16x512xbf16>, vector<512x256xbf16>, vector<16x256xf32> -> vector<16x256xf32>
    %c0_19 = arith.constant 0 : index
    %c0_20 = arith.constant 0 : index
    %80 = vector.load %arg8[%c0_19, %c0_20] : memref<1x256xf32, #tpu.memory_space<vmem>>, vector<1x256xf32>
    %81 = vector.broadcast %80 : vector<1x256xf32> to vector<16x256xf32>
    %82 = arith.addf %79, %81 : vector<16x256xf32>
    %83 = math.tanh %82 : vector<16x256xf32>
    %c0_21 = arith.constant 0 : index
    %c0_22 = arith.constant 0 : index
    %84 = vector.load %arg9[%c0_21, %c0_22] : memref<16x256xf32, #tpu.memory_space<vmem>>, vector<16x256xf32>
    tpu.vector_store %arg9[%c0_21, %c0_22], %83 {strides = array<i32>} : memref<16x256xf32, #tpu.memory_space<vmem>>, vector<16x256xf32>,
    return
  }
  func.func @transform_0(%arg0: i32) -> (i32, i32) {
    %c0_i32 = arith.constant 0 : i32
    %c0_i32_0 = arith.constant 0 : i32
    return %arg0, %c0_i32 : i32, i32
  }
  func.func @transform_1(%arg0: i32) -> (i32, i32) {
    %c0_i32 = arith.constant 0 : i32
    %c0_i32_0 = arith.constant 0 : i32
    %c0_i32_1 = arith.constant 0 : i32
    return %c0_i32, %c0_i32_0 : i32, i32
  }
  func.func @transform_2(%arg0: i32) -> (i32, i32) {
    %c0_i32 = arith.constant 0 : i32
    %c0_i32_0 = arith.constant 0 : i32
    %c0_i32_1 = arith.constant 0 : i32
    return %c0_i32, %c0_i32_0 : i32, i32
  }
  func.func @transform_3(%arg0: i32) -> (i32, i32) {
    %c0_i32 = arith.constant 0 : i32
    %c0_i32_0 = arith.constant 0 : i32
    %c0_i32_1 = arith.constant 0 : i32
    return %c0_i32, %c0_i32_0 : i32, i32
  }
  func.func @transform_4(%arg0: i32) -> (i32, i32) {
    %c0_i32 = arith.constant 0 : i32
    %c0_i32_0 = arith.constant 0 : i32
    %c0_i32_1 = arith.constant 0 : i32
    return %c0_i32, %c0_i32_0 : i32, i32
  }
  func.func @transform_5(%arg0: i32) -> (i32, i32) {
    %c0_i32 = arith.constant 0 : i32
    %c0_i32_0 = arith.constant 0 : i32
    %c0_i32_1 = arith.constant 0 : i32
    return %c0_i32, %c0_i32_0 : i32, i32
  }
  func.func @transform_6(%arg0: i32) -> (i32, i32) {
    %c0_i32 = arith.constant 0 : i32
    %c0_i32_0 = arith.constant 0 : i32
    %c0_i32_1 = arith.constant 0 : i32
    return %c0_i32, %c0_i32_0 : i32, i32
  }
  func.func @transform_7(%arg0: i32) -> (i32, i32) {
    %c0_i32 = arith.constant 0 : i32
    %c0_i32_0 = arith.constant 0 : i32
    %c0_i32_1 = arith.constant 0 : i32
    return %c0_i32, %c0_i32_0 : i32, i32
  }
  func.func @transform_8(%arg0: i32) -> (i32, i32) {
    %c0_i32 = arith.constant 0 : i32
    %c0_i32_0 = arith.constant 0 : i32
    return %arg0, %c0_i32 : i32, i32
  }
}

module attributes {stable_mosaic.version = 11 : i64} {
  func.func @classifier_mini_kernel(%arg0: i32, %arg1: memref<16x8xi32, #tpu.memory_space<vmem>>, %arg2: memref<128x384xbf16, #tpu.memory_space<vmem>>, %arg3: memref<384x1024xbf16, #tpu.memory_space<vmem>>, %arg4: memref<1x1024xf32, #tpu.memory_space<vmem>>, %arg5: memref<1024x512xbf16, #tpu.memory_space<vmem>>, %arg6: memref<1x512xf32, #tpu.memory_space<vmem>>, %arg7: memref<512x256xbf16, #tpu.memory_space<vmem>>, %arg8: memref<1x256xf32, #tpu.memory_space<vmem>>, %arg9: memref<16x256xf32, #tpu.memory_space<vmem>>) attributes {dimension_semantics = [#tpu.dimension_semantics<parallel>], iteration_bounds = array<i64: 1>, scalar_prefetch = 0 : i64, scratch_operands = 0 : i64, tpu.core_type = #tpu.core_type<tc>, window_params = [{transform_indices = @transform_0, window_bounds = array<i64: 16, 8>}, {pipeline_mode = #tpu.pipeline_mode<synchronous>, transform_indices = @transform_1, window_bounds = array<i64: 128, 384>}, {pipeline_mode = #tpu.pipeline_mode<synchronous>, transform_indices = @transform_2, window_bounds = array<i64: 384, 1024>}, {pipeline_mode = #tpu.pipeline_mode<synchronous>, transform_indices = @transform_3, window_bounds = array<i64: 1, 1024>}, {pipeline_mode = #tpu.pipeline_mode<synchronous>, transform_indices = @transform_4, window_bounds = array<i64: 1024, 512>}, {pipeline_mode = #tpu.pipeline_mode<synchronous>, transform_indices = @transform_5, window_bounds = array<i64: 1, 512>}, {pipeline_mode = #tpu.pipeline_mode<synchronous>, transform_indices = @transform_6, window_bounds = array<i64: 512, 256>}, {pipeline_mode = #tpu.pipeline_mode<synchronous>, transform_indices = @transform_7, window_bounds = array<i64: 1, 256>}, {transform_indices = @transform_8, window_bounds = array<i64: 16, 256>}]} {
    %c0 = arith.constant 0 : index
    %c0_0 = arith.constant 0 : index
    %0 = vector.load %arg1[%c0, %c0_0] : memref<16x8xi32, #tpu.memory_space<vmem>>, vector<16x8xi32>
    %1 = tpu.iota {dimensions = array<i32: 1>} : vector<16x128xi32>
    %cst = arith.constant 0.000000e+00 : bf16
    %2 = vector.broadcast %cst : bf16 to vector<16x128xbf16>
    %3 = vector.extract_strided_slice %0 {offsets = [0, 0], sizes = [16, 1], strides = [1, 1]} : vector<16x8xi32> to vector<16x1xi32>
    %4 = vector.broadcast %3 : vector<16x1xi32> to vector<16x128xi32>
    %5 = arith.cmpi eq, %4, %1 : vector<16x128xi32>
    %6 = arith.extui %5 : vector<16x128xi1> to vector<16x128xi32>
    %7 = arith.sitofp %6 : vector<16x128xi32> to vector<16x128xf32>
    %8 = arith.truncf %7 : vector<16x128xf32> to vector<16x128xbf16>
    %9 = arith.addf %2, %8 : vector<16x128xbf16>
    %10 = vector.extract_strided_slice %0 {offsets = [0, 1], sizes = [16, 1], strides = [1, 1]} : vector<16x8xi32> to vector<16x1xi32>
    %11 = vector.broadcast %10 : vector<16x1xi32> to vector<16x128xi32>
    %12 = arith.cmpi eq, %11, %1 : vector<16x128xi32>
    %13 = arith.extui %12 : vector<16x128xi1> to vector<16x128xi32>
    %14 = arith.sitofp %13 : vector<16x128xi32> to vector<16x128xf32>
    %15 = arith.truncf %14 : vector<16x128xf32> to vector<16x128xbf16>
    %16 = arith.addf %9, %15 : vector<16x128xbf16>
    %17 = vector.extract_strided_slice %0 {offsets = [0, 2], sizes = [16, 1], strides = [1, 1]} : vector<16x8xi32> to vector<16x1xi32>
    %18 = vector.broadcast %17 : vector<16x1xi32> to vector<16x128xi32>
    %19 = arith.cmpi eq, %18, %1 : vector<16x128xi32>
    %20 = arith.extui %19 : vector<16x128xi1> to vector<16x128xi32>
    %21 = arith.sitofp %20 : vector<16x128xi32> to vector<16x128xf32>
    %22 = arith.truncf %21 : vector<16x128xf32> to vector<16x128xbf16>
    %23 = arith.addf %16, %22 : vector<16x128xbf16>
    %24 = vector.extract_strided_slice %0 {offsets = [0, 3], sizes = [16, 1], strides = [1, 1]} : vector<16x8xi32> to vector<16x1xi32>
    %25 = vector.broadcast %24 : vector<16x1xi32> to vector<16x128xi32>
    %26 = arith.cmpi eq, %25, %1 : vector<16x128xi32>
    %27 = arith.extui %26 : vector<16x128xi1> to vector<16x128xi32>
    %28 = arith.sitofp %27 : vector<16x128xi32> to vector<16x128xf32>
    %29 = arith.truncf %28 : vector<16x128xf32> to vector<16x128xbf16>
    %30 = arith.addf %23, %29 : vector<16x128xbf16>
    %31 = vector.extract_strided_slice %0 {offsets = [0, 4], sizes = [16, 1], strides = [1, 1]} : vector<16x8xi32> to vector<16x1xi32>
    %32 = vector.broadcast %31 : vector<16x1xi32> to vector<16x128xi32>
    %33 = arith.cmpi eq, %32, %1 : vector<16x128xi32>
    %34 = arith.extui %33 : vector<16x128xi1> to vector<16x128xi32>
    %35 = arith.sitofp %34 : vector<16x128xi32> to vector<16x128xf32>
    %36 = arith.truncf %35 : vector<16x128xf32> to vector<16x128xbf16>
    %37 = arith.addf %30, %36 : vector<16x128xbf16>
    %38 = vector.extract_strided_slice %0 {offsets = [0, 5], sizes = [16, 1], strides = [1, 1]} : vector<16x8xi32> to vector<16x1xi32>
    %39 = vector.broadcast %38 : vector<16x1xi32> to vector<16x128xi32>
    %40 = arith.cmpi eq, %39, %1 : vector<16x128xi32>
    %41 = arith.extui %40 : vector<16x128xi1> to vector<16x128xi32>
    %42 = arith.sitofp %41 : vector<16x128xi32> to vector<16x128xf32>
    %43 = arith.truncf %42 : vector<16x128xf32> to vector<16x128xbf16>
    %44 = arith.addf %37, %43 : vector<16x128xbf16>
    %45 = vector.extract_strided_slice %0 {offsets = [0, 6], sizes = [16, 1], strides = [1, 1]} : vector<16x8xi32> to vector<16x1xi32>
    %46 = vector.broadcast %45 : vector<16x1xi32> to vector<16x128xi32>
    %47 = arith.cmpi eq, %46, %1 : vector<16x128xi32>
    %48 = arith.extui %47 : vector<16x128xi1> to vector<16x128xi32>
    %49 = arith.sitofp %48 : vector<16x128xi32> to vector<16x128xf32>
    %50 = arith.truncf %49 : vector<16x128xf32> to vector<16x128xbf16>
    %51 = arith.addf %44, %50 : vector<16x128xbf16>
    %52 = vector.extract_strided_slice %0 {offsets = [0, 7], sizes = [16, 1], strides = [1, 1]} : vector<16x8xi32> to vector<16x1xi32>
    %53 = vector.broadcast %52 : vector<16x1xi32> to vector<16x128xi32>
    %54 = arith.cmpi eq, %53, %1 : vector<16x128xi32>
    %55 = arith.extui %54 : vector<16x128xi1> to vector<16x128xi32>
    %56 = arith.sitofp %55 : vector<16x128xi32> to vector<16x128xf32>
    %57 = arith.truncf %56 : vector<16x128xf32> to vector<16x128xbf16>
    %58 = arith.addf %51, %57 : vector<16x128xbf16>
    %c0_1 = arith.constant 0 : index
    %c0_2 = arith.constant 0 : index
    %59 = vector.load %arg2[%c0_1, %c0_2] : memref<128x384xbf16, #tpu.memory_space<vmem>>, vector<128x384xbf16>
    %cst_3 = arith.constant dense<0.000000e+00> : vector<16x384xf32>
    %60 = tpu.matmul %58, %59, %cst_3 {dimension_numbers = #tpu.dot_dimension_numbers<[1], [0], [0], [1], [0, 0, 1, 1], [], []>} : vector<16x128xbf16>, vector<128x384xbf16>, vector<16x384xf32> -> vector<16x384xf32>
    %61 = arith.truncf %60 : vector<16x384xf32> to vector<16x384xbf16>
    %c0_4 = arith.constant 0 : index
    %c0_5 = arith.constant 0 : index
    %62 = vector.load %arg3[%c0_4, %c0_5] : memref<384x1024xbf16, #tpu.memory_space<vmem>>, vector<384x1024xbf16>
    %cst_6 = arith.constant dense<0.000000e+00> : vector<16x1024xf32>
    %63 = tpu.matmul %61, %62, %cst_6 {dimension_numbers = #tpu.dot_dimension_numbers<[1], [0], [0], [1], [0, 0, 1, 1], [], []>} : vector<16x384xbf16>, vector<384x1024xbf16>, vector<16x1024xf32> -> vector<16x1024xf32>
    %c0_7 = arith.constant 0 : index
    %c0_8 = arith.constant 0 : index
    %64 = vector.load %arg4[%c0_7, %c0_8] : memref<1x1024xf32, #tpu.memory_space<vmem>>, vector<1x1024xf32>
    %65 = vector.broadcast %64 : vector<1x1024xf32> to vector<16x1024xf32>
    %66 = arith.addf %63, %65 : vector<16x1024xf32>
    %cst_9 = arith.constant 0.000000e+00 : f32
    %67 = vector.broadcast %cst_9 : f32 to vector<16x1024xf32>
    %68 = arith.maximumf %66, %67 : vector<16x1024xf32>
    %69 = arith.truncf %68 : vector<16x1024xf32> to vector<16x1024xbf16>
    %c0_10 = arith.constant 0 : index
    %c0_11 = arith.constant 0 : index
    %70 = vector.load %arg5[%c0_10, %c0_11] : memref<1024x512xbf16, #tpu.memory_space<vmem>>, vector<1024x512xbf16>
    %cst_12 = arith.constant dense<0.000000e+00> : vector<16x512xf32>
    %71 = tpu.matmul %69, %70, %cst_12 {dimension_numbers = #tpu.dot_dimension_numbers<[1], [0], [0], [1], [0, 0, 1, 1], [], []>} : vector<16x1024xbf16>, vector<1024x512xbf16>, vector<16x512xf32> -> vector<16x512xf32>
    %c0_13 = arith.constant 0 : index
    %c0_14 = arith.constant 0 : index
    %72 = vector.load %arg6[%c0_13, %c0_14] : memref<1x512xf32, #tpu.memory_space<vmem>>, vector<1x512xf32>
    %73 = vector.broadcast %72 : vector<1x512xf32> to vector<16x512xf32>
    %74 = arith.addf %71, %73 : vector<16x512xf32>
    %cst_15 = arith.constant 0.000000e+00 : f32
    %75 = vector.broadcast %cst_15 : f32 to vector<16x512xf32>
    %76 = arith.maximumf %74, %75 : vector<16x512xf32>
    %77 = arith.truncf %76 : vector<16x512xf32> to vector<16x512xbf16>
    %c0_16 = arith.constant 0 : index
    %c0_17 = arith.constant 0 : index
    %78 = vector.load %arg7[%c0_16, %c0_17] : memref<512x256xbf16, #tpu.memory_space<vmem>>, vector<512x256xbf16>
    %cst_18 = arith.constant dense<0.000000e+00> : vector<16x256xf32>
    %79 = tpu.matmul %77, %78, %cst_18 {dimension_numbers = #tpu.dot_dimension_numbers<[1], [0], [0], [1], [0, 0, 1, 1], [], []>} : vector<16x512xbf16>, vector<512x256xbf16>, vector<16x256xf32> -> vector<16x256xf32>
    %c0_19 = arith.constant 0 : index
    %c0_20 = arith.constant 0 : index
    %80 = vector.load %arg8[%c0_19, %c0_20] : memref<1x256xf32, #tpu.memory_space<vmem>>, vector<1x256xf32>
    %81 = vector.broadcast %80 : vector<1x256xf32> to vector<16x256xf32>
    %82 = arith.addf %79, %81 : vector<16x256xf32>
    %83 = math.tanh %82 : vector<16x256xf32>
    %c0_21 = arith.constant 0 : index
    %c0_22 = arith.constant 0 : index
    %84 = vector.load %arg9[%c0_21, %c0_22] : memref<16x256xf32, #tpu.memory_space<vmem>>, vector<16x256xf32>
    tpu.vector_store %arg9[%c0_21, %c0_22], %83 {strides = array<i32>} : memref<16x256xf32, #tpu.memory_space<vmem>>, vector<16x256xf32>,
    return
  }
  func.func @transform_0(%arg0: i32) -> (i32, i32) {
    %c0_i32 = arith.constant 0 : i32
    %c0_i32_0 = arith.constant 0 : i32
    return %arg0, %c0_i32 : i32, i32
  }
  func.func @transform_1(%arg0: i32) -> (i32, i32) {
    %c0_i32 = arith.constant 0 : i32
    %c0_i32_0 = arith.constant 0 : i32
    %c0_i32_1 = arith.constant 0 : i32
    return %c0_i32, %c0_i32_0 : i32, i32
  }
  func.func @transform_2(%arg0: i32) -> (i32, i32) {
    %c0_i32 = arith.constant 0 : i32
    %c0_i32_0 = arith.constant 0 : i32
    %c0_i32_1 = arith.constant 0 : i32
    return %c0_i32, %c0_i32_0 : i32, i32
  }
  func.func @transform_3(%arg0: i32) -> (i32, i32) {
    %c0_i32 = arith.constant 0 : i32
    %c0_i32_0 = arith.constant 0 : i32
    %c0_i32_1 = arith.constant 0 : i32
    return %c0_i32, %c0_i32_0 : i32, i32
  }
  func.func @transform_4(%arg0: i32) -> (i32, i32) {
    %c0_i32 = arith.constant 0 : i32
    %c0_i32_0 = arith.constant 0 : i32
    %c0_i32_1 = arith.constant 0 : i32
    return %c0_i32, %c0_i32_0 : i32, i32
  }
  func.func @transform_5(%arg0: i32) -> (i32, i32) {
    %c0_i32 = arith.constant 0 : i32
    %c0_i32_0 = arith.constant 0 : i32
    %c0_i32_1 = arith.constant 0 : i32
    return %c0_i32, %c0_i32_0 : i32, i32
  }
  func.func @transform_6(%arg0: i32) -> (i32, i32) {
    %c0_i32 = arith.constant 0 : i32
    %c0_i32_0 = arith.constant 0 : i32
    %c0_i32_1 = arith.constant 0 : i32
    return %c0_i32, %c0_i32_0 : i32, i32
  }
  func.func @transform_7(%arg0: i32) -> (i32, i32) {
    %c0_i32 = arith.constant 0 : i32
    %c0_i32_0 = arith.constant 0 : i32
    %c0_i32_1 = arith.constant 0 : i32
    return %c0_i32, %c0_i32_0 : i32, i32
  }
  func.func @transform_8(%arg0: i32) -> (i32, i32) {
    %c0_i32 = arith.constant 0 : i32
    %c0_i32_0 = arith.constant 0 : i32
    return %arg0, %c0_i32 : i32, i32
  }
}

</mosaic_0001>

<llo_original>
// kernel: tpu_custom_call.1
$region0: #{tpu_custom_call.1}
  #allocation0 [shape = 'u32[]', space=smem, size = 0x4, offset = 0x4, fixed_abs, tag = 'smem constant byte address 0x4 - core index']
  #allocation1 [shape = 'u32[144,128]{1,0:T(1,128)}', space=vmem, size = 0x12000, scoped, tag = 'internal scratch']
  %s0 = inlined_call_operand.vmem [shape: s32[16,8], index: 0, kind: input, shape index: {}]
  %s1 = inlined_call_operand.hbm [shape: bf16[128,384], index: 1, kind: input, shape index: {}]
  %s2 = inlined_call_operand.hbm [shape: bf16[384,1024], index: 2, kind: input, shape index: {}]
  %s3 = inlined_call_operand.vmem [shape: f32[1,1024], index: 3, kind: input, shape index: {}]
  %s4 = inlined_call_operand.hbm [shape: bf16[1024,512], index: 4, kind: input, shape index: {}]
  %s5 = inlined_call_operand.vmem [shape: f32[1,512], index: 5, kind: input, shape index: {}]
  %s6 = inlined_call_operand.hbm [shape: bf16[512,256], index: 6, kind: input, shape index: {}]
  %s7 = inlined_call_operand.vmem [shape: f32[1,256], index: 7, kind: input, shape index: {}]
  %s8 = inlined_call_operand.hbm [shape: f32[16,256], index: 8, kind: output, shape index: {}]
  %s9 = sld [smem:[#allocation0]]
  $region58: #{tpu_custom_call.1} parent=0
    _
  %s11 = ssub.s32 1, %s9
  %s12 = scalar_select 0, %s11, %s9
  $region1: #{tpu_custom_call.1} parent=0
    #allocation2 [shape = 'u8[98304]{0}', space=vmem, size = 0x18000, scoped, tag = 'input window, operand 1, single buffered']
    #allocation3 [shape = 's32[1]{0}', space=sflag, size = 0x4, scoped, tag = 'scoped memory for tpu_custom_call.1']
    #allocation4 [shape = 's32[1]{0}', space=sflag, size = 0x4, scoped, tag = 'scoped memory for tpu_custom_call.1']
    #allocation5 [shape = 'u8[786432]{0}', space=vmem, size = 0xc0000, scoped, tag = 'input window, operand 2, single buffered']
    #allocation6 [shape = 's32[1]{0}', space=sflag, size = 0x4, scoped, tag = 'scoped memory for tpu_custom_call.1']
    #allocation7 [shape = 'u8[1048576]{0}', space=vmem, size = 0x100000, scoped, tag = 'input window, operand 4, single buffered']
    #allocation8 [shape = 'u8[262144]{0}', space=vmem, size = 0x40000, scoped, tag = 'input window, operand 6, single buffered']
    #allocation9 [shape = 's32[1]{0}', space=sflag, size = 0x4, scoped, tag = 'scoped memory for tpu_custom_call.1']
    #allocation10 [shape = 'u8[16384]{0}', space=vmem, size = 0x4000, scoped, tag = 'output window, operand 0, single buffered']
    %13 = vsyncpa [#allocation3], 0
    %14 = vsyncpa [#allocation6], 0
    %15 = vsyncpa [#allocation9], 0
    %16 = vsyncpa [#allocation4], 0
    // Predicated region
    $region2: #{tpu_custom_call.1} parent=1 // pred_check
      _
    $region3: #{tpu_custom_call.1} parent=1 // pred_check_branch
      %18 = sbr.rel (0) target = $region5
    $region4: #{tpu_custom_call.1} parent=1 // pred_region
      _
    $region5: #{tpu_custom_call.1} parent=1 // pred_fallthru
      _
    // Predicated region
    $region6: #{tpu_custom_call.1} parent=1 // pred_check
      _
    $region7: #{tpu_custom_call.1} parent=1 // pred_check_branch
      %20 = sbr.rel (0) target = $region9
    $region8: #{tpu_custom_call.1} parent=1 // pred_region
      %s22 = ssub.s32 3072, 3072
      %23 = vsyncadd [#allocation3], %s22
      %s24 = sshll.u32 [#allocation2], 4
      %s25 = int_to_ptr.vmem [resolvable:$true] %s24
      %30 = dma.hbm_to_vmem [thread:$0]  %s1, 3072, %s25, [#allocation3], 192, 192, 12
    $region9: #{tpu_custom_call.1} parent=1 // pred_fallthru
      _
    // Predicated region
    $region10: #{tpu_custom_call.1} parent=1 // pred_check
      _
    $region11: #{tpu_custom_call.1} parent=1 // pred_check_branch
      %32 = sbr.rel (0) target = $region13
    $region12: #{tpu_custom_call.1} parent=1 // pred_region
      %s34 = ssub.s32 24576, 24576
      %35 = vsyncadd [#allocation6], %s34
      %s36 = sshll.u32 [#allocation5], 4
      %s37 = int_to_ptr.vmem [resolvable:$true] %s36
      %42 = dma.hbm_to_vmem [thread:$0]  %s2, 24576, %s37, [#allocation6], 512, 512, 32
    $region13: #{tpu_custom_call.1} parent=1 // pred_fallthru
      _
    // Predicated region
    $region14: #{tpu_custom_call.1} parent=1 // pred_check
      _
    $region15: #{tpu_custom_call.1} parent=1 // pred_check_branch
      %44 = sbr.rel (0) target = $region17
    $region16: #{tpu_custom_call.1} parent=1 // pred_region
      _
    $region17: #{tpu_custom_call.1} parent=1 // pred_fallthru
      _
    // Predicated region
    $region18: #{tpu_custom_call.1} parent=1 // pred_check
      _
    $region19: #{tpu_custom_call.1} parent=1 // pred_check_branch
      %46 = sbr.rel (0) target = $region21
    $region20: #{tpu_custom_call.1} parent=1 // pred_region
      %s48 = ssub.s32 32768, 32768
      %49 = vsyncadd [#allocation6], %s48
      %s50 = sshll.u32 [#allocation7], 4
      %s51 = int_to_ptr.vmem [resolvable:$true] %s50
      %56 = dma.hbm_to_vmem [thread:$0]  %s4, 32768, %s51, [#allocation6], 256, 256, 16
    $region21: #{tpu_custom_call.1} parent=1 // pred_fallthru
      _
    // Predicated region
    $region22: #{tpu_custom_call.1} parent=1 // pred_check
      _
    $region23: #{tpu_custom_call.1} parent=1 // pred_check_branch
      %58 = sbr.rel (0) target = $region25
    $region24: #{tpu_custom_call.1} parent=1 // pred_region
      _
    $region25: #{tpu_custom_call.1} parent=1 // pred_fallthru
      _
    // Predicated region
    $region26: #{tpu_custom_call.1} parent=1 // pred_check
      _
    $region27: #{tpu_custom_call.1} parent=1 // pred_check_branch
      %60 = sbr.rel (0) target = $region29
    $region28: #{tpu_custom_call.1} parent=1 // pred_region
      %s62 = ssub.s32 8192, 8192
      %63 = vsyncadd [#allocation9], %s62
      %s64 = sshll.u32 [#allocation8], 4
      %s65 = int_to_ptr.vmem [resolvable:$true] %s64
      %70 = dma.hbm_to_vmem [thread:$0]  %s6, 8192, %s65, [#allocation9], 128, 128, 8
    $region29: #{tpu_custom_call.1} parent=1 // pred_fallthru
      _
    // Predicated region
    $region30: #{tpu_custom_call.1} parent=1 // pred_check
      _
    $region31: #{tpu_custom_call.1} parent=1 // pred_check_branch
      %72 = sbr.rel (0) target = $region33
    $region32: #{tpu_custom_call.1} parent=1 // pred_region
      _
    $region33: #{tpu_custom_call.1} parent=1 // pred_fallthru
      _
    // Predicated region
    $region34: #{tpu_custom_call.1} parent=1 // pred_check
      _
    $region35: #{tpu_custom_call.1} parent=1 // pred_check_branch
      %74 = sbr.rel (0) target = $region37
    $region36: #{tpu_custom_call.1} parent=1 // pred_region
      %75 = dma.done [#allocation3], 3072
    $region37: #{tpu_custom_call.1} parent=1 // pred_fallthru
      _
    // Predicated region
    $region38: #{tpu_custom_call.1} parent=1 // pred_check
      _
    $region39: #{tpu_custom_call.1} parent=1 // pred_check_branch
      %77 = sbr.rel (0) target = $region41
    $region40: #{tpu_custom_call.1} parent=1 // pred_region
      %78 = dma.done [#allocation6], 24576
    $region41: #{tpu_custom_call.1} parent=1 // pred_fallthru
      _
    // Predicated region
    $region42: #{tpu_custom_call.1} parent=1 // pred_check
      _
    $region43: #{tpu_custom_call.1} parent=1 // pred_check_branch
      %80 = sbr.rel (0) target = $region45
    $region44: #{tpu_custom_call.1} parent=1 // pred_region
      %81 = dma.done [#allocation6], 32768
    $region45: #{tpu_custom_call.1} parent=1 // pred_fallthru
      _
    // Predicated region
    $region46: #{tpu_custom_call.1} parent=1 // pred_check
      _
    $region47: #{tpu_custom_call.1} parent=1 // pred_check_branch
      %83 = sbr.rel (0) target = $region49
    $region48: #{tpu_custom_call.1} parent=1 // pred_region
      %84 = dma.done [#allocation9], 8192
    $region49: #{tpu_custom_call.1} parent=1 // pred_fallthru
      _
    %v86 = vld [vmem:[%s0] sm:$0xff]
    %v87 = vld [vmem:[%s0 + $0x8] sm:$0xff]
    %v88 = vlaneseq
    %v89 = vand.u32 %v88, 127
    %90 = vset.pattern.permute.xlu0 0
    %91 = vperm.xlu0 %90, %v86
    %v92 = vpop.permute.xlu0 %91
    %93 = vset.pattern.permute.xlu0 0
    %94 = vperm.xlu0 %93, %v87
    %v95 = vpop.permute.xlu0 %94
    %vm96 = vcmp.eq.s32.totalorder %v92, %v89
    %vm97 = vcmp.eq.s32.totalorder %v95, %v89
    %v98 = vsel %vm96, 1, 0
    %v99 = vsel %vm97, 1, 0
    %v100 = vcvt.s32.f32 %v98
    %v101 = vcvt.s32.f32 %v99
    %v102 = vpack.c.bf16 %v101, %v100
    %v103 = vadd.bf16 %v102, 0
    %104 = vset.pattern.permute.xlu0 1
    %105 = vperm.xlu0 %104, %v86
    %v106 = vpop.permute.xlu0 %105
    %107 = vset.pattern.permute.xlu0 1
    %108 = vperm.xlu0 %107, %v87
    %v109 = vpop.permute.xlu0 %108
    %vm110 = vcmp.eq.s32.totalorder %v106, %v89
    %vm111 = vcmp.eq.s32.totalorder %v109, %v89
    %v112 = vsel %vm110, 1, 0
    %v113 = vsel %vm111, 1, 0
    %v114 = vcvt.s32.f32 %v112
    %v115 = vcvt.s32.f32 %v113
    %v116 = vpack.c.bf16 %v115, %v114
    %v117 = vadd.bf16 %v103, %v116
    %118 = vset.pattern.permute.xlu0 2
    %119 = vperm.xlu0 %118, %v86
    %v120 = vpop.permute.xlu0 %119
    %121 = vset.pattern.permute.xlu0 2
    %122 = vperm.xlu0 %121, %v87
    %v123 = vpop.permute.xlu0 %122
    %vm124 = vcmp.eq.s32.totalorder %v120, %v89
    %vm125 = vcmp.eq.s32.totalorder %v123, %v89
    %v126 = vsel %vm124, 1, 0
    %v127 = vsel %vm125, 1, 0
    %v128 = vcvt.s32.f32 %v126
    %v129 = vcvt.s32.f32 %v127
    %v130 = vpack.c.bf16 %v129, %v128
    %v131 = vadd.bf16 %v117, %v130
    %132 = vset.pattern.permute.xlu0 3
    %133 = vperm.xlu0 %132, %v86
    %v134 = vpop.permute.xlu0 %133
    %135 = vset.pattern.permute.xlu0 3
    %136 = vperm.xlu0 %135, %v87
    %v137 = vpop.permute.xlu0 %136
    %vm138 = vcmp.eq.s32.totalorder %v134, %v89
    %vm139 = vcmp.eq.s32.totalorder %v137, %v89
    %v140 = vsel %vm138, 1, 0
    %v141 = vsel %vm139, 1, 0
    %v142 = vcvt.s32.f32 %v140
    %v143 = vcvt.s32.f32 %v141
    %v144 = vpack.c.bf16 %v143, %v142
    %v145 = vadd.bf16 %v131, %v144
    %146 = vset.pattern.permute.xlu0 4
    %147 = vperm.xlu0 %146, %v86
    %v148 = vpop.permute.xlu0 %147
    %149 = vset.pattern.permute.xlu0 4
    %150 = vperm.xlu0 %149, %v87
    %v151 = vpop.permute.xlu0 %150
    %vm152 = vcmp.eq.s32.totalorder %v148, %v89
    %vm153 = vcmp.eq.s32.totalorder %v151, %v89
    %v154 = vsel %vm152, 1, 0
    %v155 = vsel %vm153, 1, 0
    %v156 = vcvt.s32.f32 %v154
    %v157 = vcvt.s32.f32 %v155
    %v158 = vpack.c.bf16 %v157, %v156
    %v159 = vadd.bf16 %v145, %v158
    %160 = vset.pattern.permute.xlu0 5
    %161 = vperm.xlu0 %160, %v86
    %v162 = vpop.permute.xlu0 %161
    %163 = vset.pattern.permute.xlu0 5
    %164 = vperm.xlu0 %163, %v87
    %v165 = vpop.permute.xlu0 %164
    %vm166 = vcmp.eq.s32.totalorder %v162, %v89
    %vm167 = vcmp.eq.s32.totalorder %v165, %v89
    %v168 = vsel %vm166, 1, 0
    %v169 = vsel %vm167, 1, 0
    %v170 = vcvt.s32.f32 %v168
    %v171 = vcvt.s32.f32 %v169
    %v172 = vpack.c.bf16 %v171, %v170
    %v173 = vadd.bf16 %v159, %v172
    %174 = vset.pattern.permute.xlu0 6
    %175 = vperm.xlu0 %174, %v86
    %v176 = vpop.permute.xlu0 %175
    %177 = vset.pattern.permute.xlu0 6
    %178 = vperm.xlu0 %177, %v87
    %v179 = vpop.permute.xlu0 %178
    %vm180 = vcmp.eq.s32.totalorder %v176, %v89
    %vm181 = vcmp.eq.s32.totalorder %v179, %v89
    %v182 = vsel %vm180, 1, 0
    %v183 = vsel %vm181, 1, 0
    %v184 = vcvt.s32.f32 %v182
    %v185 = vcvt.s32.f32 %v183
    %v186 = vpack.c.bf16 %v185, %v184
    %v187 = vadd.bf16 %v173, %v186
    %188 = vset.pattern.permute.xlu0 7
    %189 = vperm.xlu0 %188, %v86
    %v190 = vpop.permute.xlu0 %189
    %191 = vset.pattern.permute.xlu0 7
    %192 = vperm.xlu0 %191, %v87
    %v193 = vpop.permute.xlu0 %192
    %vm194 = vcmp.eq.s32.totalorder %v190, %v89
    %vm195 = vcmp.eq.s32.totalorder %v193, %v89
    %v196 = vsel %vm194, 1, 0
    %v197 = vsel %vm195, 1, 0
    %v198 = vcvt.s32.f32 %v196
    %v199 = vcvt.s32.f32 %v197
    %v200 = vpack.c.bf16 %v199, %v198
    %v201 = vadd.bf16 %v187, %v200
    %v202 = vld [vmem:[#allocation2] sm:$0xff]
    %v203 = vld [vmem:[#allocation2 + $0x8] sm:$0xf]
    %v204 = vld [vmem:[#allocation2 + $0xc] sm:$0xff]
    %v205 = vld [vmem:[#allocation2 + $0x14] sm:$0xf]
    %v206 = vld [vmem:[#allocation2 + $0x18] sm:$0xff]
    %v207 = vld [vmem:[#allocation2 + $0x20] sm:$0xf]
    %v208 = vld [vmem:[#allocation2 + $0x24] sm:$0xff]
    %v209 = vld [vmem:[#allocation2 + $0x2c] sm:$0xf]
    %v210 = vld [vmem:[#allocation2 + $0x30] sm:$0xff]
    %v211 = vld [vmem:[#allocation2 + $0x38] sm:$0xf]
    %v212 = vld [vmem:[#allocation2 + $0x3c] sm:$0xff]
    %v213 = vld [vmem:[#allocation2 + $0x44] sm:$0xf]
    %v214 = vld [vmem:[#allocation2 + $0x48] sm:$0xff]
    %v215 = vld [vmem:[#allocation2 + $0x50] sm:$0xf]
    %v216 = vld [vmem:[#allocation2 + $0x54] sm:$0xff]
    %v217 = vld [vmem:[#allocation2 + $0x5c] sm:$0xf]
    %v218 = vld [vmem:[#allocation2 + $0x60] sm:$0xff]
    %v219 = vld [vmem:[#allocation2 + $0x68] sm:$0xf]
    %v220 = vld [vmem:[#allocation2 + $0x6c] sm:$0xff]
    %v221 = vld [vmem:[#allocation2 + $0x74] sm:$0xf]
    %v222 = vld [vmem:[#allocation2 + $0x78] sm:$0xff]
    %v223 = vld [vmem:[#allocation2 + $0x80] sm:$0xf]
    %v224 = vld [vmem:[#allocation2 + $0x84] sm:$0xff]
    %v225 = vld [vmem:[#allocation2 + $0x8c] sm:$0xf]
    %v226 = vld [vmem:[#allocation2 + $0x90] sm:$0xff]
    %v227 = vld [vmem:[#allocation2 + $0x98] sm:$0xf]
    %v228 = vld [vmem:[#allocation2 + $0x9c] sm:$0xff]
    %v229 = vld [vmem:[#allocation2 + $0xa4] sm:$0xf]
    %v230 = vld [vmem:[#allocation2 + $0xa8] sm:$0xff]
    %v231 = vld [vmem:[#allocation2 + $0xb0] sm:$0xf]
    %v232 = vld [vmem:[#allocation2 + $0xb4] sm:$0xff]
    %v233 = vld [vmem:[#allocation2 + $0xbc] sm:$0xf]
    %v266 = vunpack.c.l.b16 %v202
    %v267 = vunpack.c.h.b16 %v202
    %v268 = vunpack.c.l.b16 %v203
    %v269 = vunpack.c.l.b16 %v204
    %v270 = vunpack.c.h.b16 %v204
    %v271 = vunpack.c.l.b16 %v205
    %v272 = vunpack.c.l.b16 %v206
    %v273 = vunpack.c.h.b16 %v206
    %v274 = vunpack.c.l.b16 %v207
    %v275 = vunpack.c.l.b16 %v208
    %v276 = vunpack.c.h.b16 %v208
    %v277 = vunpack.c.l.b16 %v209
    %v278 = vunpack.c.l.b16 %v210
    %v279 = vunpack.c.h.b16 %v210
    %v280 = vunpack.c.l.b16 %v211
    %v281 = vunpack.c.l.b16 %v212
    %v282 = vunpack.c.h.b16 %v212
    %v283 = vunpack.c.l.b16 %v213
    %v284 = vunpack.c.l.b16 %v214
    %v285 = vunpack.c.h.b16 %v214
    %v286 = vunpack.c.l.b16 %v215
    %v287 = vunpack.c.l.b16 %v216
    %v288 = vunpack.c.h.b16 %v216
    %v289 = vunpack.c.l.b16 %v217
    %v290 = vunpack.c.l.b16 %v218
    %v291 = vunpack.c.h.b16 %v218
    %v292 = vunpack.c.l.b16 %v219
    %v293 = vunpack.c.l.b16 %v220
    %v294 = vunpack.c.h.b16 %v220
    %v295 = vunpack.c.l.b16 %v221
    %v296 = vunpack.c.l.b16 %v222
    %v297 = vunpack.c.h.b16 %v222
    %v298 = vunpack.c.l.b16 %v223
    %v299 = vunpack.c.l.b16 %v224
    %v300 = vunpack.c.h.b16 %v224
    %v301 = vunpack.c.l.b16 %v225
    %v302 = vunpack.c.l.b16 %v226
    %v303 = vunpack.c.h.b16 %v226
    %v304 = vunpack.c.l.b16 %v227
    %v305 = vunpack.c.l.b16 %v228
    %v306 = vunpack.c.h.b16 %v228
    %v307 = vunpack.c.l.b16 %v229
    %v308 = vunpack.c.l.b16 %v230
    %v309 = vunpack.c.h.b16 %v230
    %v310 = vunpack.c.l.b16 %v231
    %v311 = vunpack.c.l.b16 %v232
    %v312 = vunpack.c.h.b16 %v232
    %v313 = vunpack.c.l.b16 %v233
    %v314 = vpack.c.b16 %v269, %v266
    %v315 = vpack.c.b16 %v270, %v267
    %v316 = vpack.c.b16 %v271, %v268
    %v317 = vpack.c.b16 %v275, %v272
    %v318 = vpack.c.b16 %v276, %v273
    %v319 = vpack.c.b16 %v277, %v274
    %v320 = vpack.c.b16 %v281, %v278
    %v321 = vpack.c.b16 %v282, %v279
    %v322 = vpack.c.b16 %v283, %v280
    %v323 = vpack.c.b16 %v287, %v284
    %v324 = vpack.c.b16 %v288, %v285
    %v325 = vpack.c.b16 %v289, %v286
    %v326 = vpack.c.b16 %v293, %v290
    %v327 = vpack.c.b16 %v294, %v291
    %v328 = vpack.c.b16 %v295, %v292
    %v329 = vpack.c.b16 %v299, %v296
    %v330 = vpack.c.b16 %v300, %v297
    %v331 = vpack.c.b16 %v301, %v298
    %v332 = vpack.c.b16 %v305, %v302
    %v333 = vpack.c.b16 %v306, %v303
    %v334 = vpack.c.b16 %v307, %v304
    %v335 = vpack.c.b16 %v311, %v308
    %v336 = vpack.c.b16 %v312, %v309
    %v337 = vpack.c.b16 %v313, %v310
    %362 = vmatprep.subr.bf16.mxu0 %v336
    %363 = vmatpush1.bf16.msra.mxu0 %v335
    %364 = vmatprep.subr.bf16.mxu0 %v333
    %365 = vmatpush1.bf16.msra.mxu0 %v332
    %366 = vmatprep.subr.bf16.mxu0 %v330
    %367 = vmatpush1.bf16.msra.mxu0 %v329
    %368 = vmatprep.subr.bf16.mxu0 %v327
    %369 = vmatpush1.bf16.msra.mxu0 %v326
    %370 = vmatprep.subr.bf16.mxu0 %v324
    %371 = vmatpush1.bf16.msra.mxu0 %v323
    %372 = vmatprep.subr.bf16.mxu0 %v321
    %373 = vmatpush1.bf16.msra.mxu0 %v320
    %374 = vmatprep.subr.bf16.mxu0 %v318
    %375 = vmatpush1.bf16.msra.mxu0 %v317
    %376 = vmatprep.subr.bf16.mxu0 %v315
    %377 = vmatpush1.bf16.msra.mxu0 %v314
    %378 = vmatprep.subr.bf16.mxu0 0
    %379 = vmatpush2.bf16.msra.mxu0 0
    %380 = vmatprep.subr.bf16.mxu0 0
    %381 = vmatpush2.bf16.msra.mxu0 0
    %382 = vmatprep.subr.bf16.mxu0 0
    %383 = vmatpush2.bf16.msra.mxu0 0
    %384 = vmatprep.subr.bf16.mxu0 0
    %385 = vmatpush2.bf16.msra.mxu0 0
    %386 = vmatprep.subr.bf16.mxu0 0
    %387 = vmatpush2.bf16.msra.mxu0 0
    %388 = vmatprep.subr.bf16.mxu0 0
    %389 = vmatpush2.bf16.msra.mxu0 0
    %390 = vmatprep.subr.bf16.mxu0 0
    %391 = vmatpush2.bf16.msra.mxu0 0
    %392 = vmatprep.subr.bf16.mxu0 0
    %393 = vmatpush2.bf16.msra.mxu0 0
    %394 = vmatprep.mubr.bf16.mxu0 0
    %395 = vmatmul.mubr.bf16.gmra.mxu0 %v201
    %v396 = vpop.f32.mrf.mxu0
    %v397 = vadd.f32 0.0, %v396
    %v398 = vpop.f32.mrf.mxu0
    %v399 = vadd.f32 0.0, %v398
    %v400 = vpop.f32.mrf.mxu0
    %v401 = vadd.f32 0.0, %v400
    %v402 = vpop.f32.mrf.mxu0
    %v403 = vadd.f32 0.0, %v402
    %404 = vdwg.mxu0
    %405 = vmatprep.subr.bf16.mxu0 0
    %406 = vmatpush1.bf16.msra.mxu0 %v337
    %407 = vmatprep.subr.bf16.mxu0 0
    %408 = vmatpush1.bf16.msra.mxu0 %v334
    %409 = vmatprep.subr.bf16.mxu0 0
    %410 = vmatpush1.bf16.msra.mxu0 %v331
    %411 = vmatprep.subr.bf16.mxu0 0
    %412 = vmatpush1.bf16.msra.mxu0 %v328
    %413 = vmatprep.subr.bf16.mxu0 0
    %414 = vmatpush1.bf16.msra.mxu0 %v325
    %415 = vmatprep.subr.bf16.mxu0 0
    %416 = vmatpush1.bf16.msra.mxu0 %v322
    %417 = vmatprep.subr.bf16.mxu0 0
    %418 = vmatpush1.bf16.msra.mxu0 %v319
    %419 = vmatprep.subr.bf16.mxu0 0
    %420 = vmatpush1.bf16.msra.mxu0 %v316
    %421 = vmatprep.subr.bf16.mxu0 0
    %422 = vmatpush2.bf16.msra.mxu0 0
    %423 = vmatprep.subr.bf16.mxu0 0
    %424 = vmatpush2.bf16.msra.mxu0 0
    %425 = vmatprep.subr.bf16.mxu0 0
    %426 = vmatpush2.bf16.msra.mxu0 0
    %427 = vmatprep.subr.bf16.mxu0 0
    %428 = vmatpush2.bf16.msra.mxu0 0
    %429 = vmatprep.subr.bf16.mxu0 0
    %430 = vmatpush2.bf16.msra.mxu0 0
    %431 = vmatprep.subr.bf16.mxu0 0
    %432 = vmatpush2.bf16.msra.mxu0 0
    %433 = vmatprep.subr.bf16.mxu0 0
    %434 = vmatpush2.bf16.msra.mxu0 0
    %435 = vmatprep.subr.bf16.mxu0 0
    %436 = vmatpush2.bf16.msra.mxu0 0
    %437 = vmatprep.mubr.bf16.mxu0 0
    %438 = vmatmul.mubr.bf16.gmra.mxu0 %v201
    %v439 = vpop.f32.mrf.mxu0
    %v440 = vadd.f32 0.0, %v439
    %v441 = vpop.f32.mrf.mxu0
    %v442 = vpop.f32.mrf.mxu0
    %v443 = vadd.f32 0.0, %v442
    %v444 = vpop.f32.mrf.mxu0
    %445 = vdwg.mxu0
    %v446 = vpack.c.bf16 %v401, %v397
    %v447 = vpack.c.bf16 %v403, %v399
    %v448 = vpack.c.bf16 %v443, %v440
    %v449 = vld [vmem:[#allocation5] sm:$0xff]
    %v450 = vld [vmem:[#allocation5 + $0x8] sm:$0xff]
    %v451 = vld [vmem:[#allocation5 + $0x10] sm:$0xff]
    %v452 = vld [vmem:[#allocation5 + $0x18] sm:$0xff]
    %v453 = vld [vmem:[#allocation5 + $0x20] sm:$0xff]
    %v454 = vld [vmem:[#allocation5 + $0x28] sm:$0xff]
    %v455 = vld [vmem:[#allocation5 + $0x30] sm:$0xff]
    %v456 = vld [vmem:[#allocation5 + $0x38] sm:$0xff]
    %v457 = vld [vmem:[#allocation5 + $0x40] sm:$0xff]
    %v458 = vld [vmem:[#allocation5 + $0x48] sm:$0xff]
    %v459 = vld [vmem:[#allocation5 + $0x50] sm:$0xff]
    %v460 = vld [vmem:[#allocation5 + $0x58] sm:$0xff]
    %v461 = vld [vmem:[#allocation5 + $0x60] sm:$0xff]
    %v462 = vld [vmem:[#allocation5 + $0x68] sm:$0xff]
    %v463 = vld [vmem:[#allocation5 + $0x70] sm:$0xff]
    %v464 = vld [vmem:[#allocation5 + $0x78] sm:$0xff]
    %v465 = vld [vmem:[#allocation5 + $0x80] sm:$0xff]
    %v466 = vld [vmem:[#allocation5 + $0x88] sm:$0xff]
    %v467 = vld [vmem:[#allocation5 + $0x90] sm:$0xff]
    %v468 = vld [vmem:[#allocation5 + $0x98] sm:$0xff]
    %v469 = vld [vmem:[#allocation5 + $0xa0] sm:$0xff]
    %v470 = vld [vmem:[#allocation5 + $0xa8] sm:$0xff]
    %v471 = vld [vmem:[#allocation5 + $0xb0] sm:$0xff]
    %v472 = vld [vmem:[#allocation5 + $0xb8] sm:$0xff]
    %v473 = vld [vmem:[#allocation5 + $0xc0] sm:$0xff]
    %v474 = vld [vmem:[#allocation5 + $0xc8] sm:$0xff]
    %v475 = vld [vmem:[#allocation5 + $0xd0] sm:$0xff]
    %v476 = vld [vmem:[#allocation5 + $0xd8] sm:$0xff]
    %v477 = vld [vmem:[#allocation5 + $0xe0] sm:$0xff]
    %v478 = vld [vmem:[#allocation5 + $0xe8] sm:$0xff]
    %v479 = vld [vmem:[#allocation5 + $0xf0] sm:$0xff]
    %v480 = vld [vmem:[#allocation5 + $0xf8] sm:$0xff]
    %v481 = vld [vmem:[#allocation5 + $0x100] sm:$0xff]
    %v482 = vld [vmem:[#allocation5 + $0x108] sm:$0xff]
    %v483 = vld [vmem:[#allocation5 + $0x110] sm:$0xff]
    %v484 = vld [vmem:[#allocation5 + $0x118] sm:$0xff]
    %v485 = vld [vmem:[#allocation5 + $0x120] sm:$0xff]
    %v486 = vld [vmem:[#allocation5 + $0x128] sm:$0xff]
    %v487 = vld [vmem:[#allocation5 + $0x130] sm:$0xff]
    %v488 = vld [vmem:[#allocation5 + $0x138] sm:$0xff]
    %v489 = vld [vmem:[#allocation5 + $0x140] sm:$0xff]
    %v490 = vld [vmem:[#allocation5 + $0x148] sm:$0xff]
    %v491 = vld [vmem:[#allocation5 + $0x150] sm:$0xff]
    %v492 = vld [vmem:[#allocation5 + $0x158] sm:$0xff]
    %v493 = vld [vmem:[#allocation5 + $0x160] sm:$0xff]
    %v494 = vld [vmem:[#allocation5 + $0x168] sm:$0xff]
    %v495 = vld [vmem:[#allocation5 + $0x170] sm:$0xff]
    %v496 = vld [vmem:[#allocation5 + $0x178] sm:$0xff]
    %v497 = vld [vmem:[#allocation5 + $0x180] sm:$0xff]
    %v498 = vld [vmem:[#allocation5 + $0x188] sm:$0xff]
    %v499 = vld [vmem:[#allocation5 + $0x190] sm:$0xff]
    %v500 = vld [vmem:[#allocation5 + $0x198] sm:$0xff]
    %v501 = vld [vmem:[#allocation5 + $0x1a0] sm:$0xff]
    %v502 = vld [vmem:[#allocation5 + $0x1a8] sm:$0xff]
    %v503 = vld [vmem:[#allocation5 + $0x1b0] sm:$0xff]
    %v504 = vld [vmem:[#allocation5 + $0x1b8] sm:$0xff]
    %v505 = vld [vmem:[#allocation5 + $0x1c0] sm:$0xff]
    %v506 = vld [vmem:[#allocation5 + $0x1c8] sm:$0xff]
    %v507 = vld [vmem:[#allocation5 + $0x1d0] sm:$0xff]
    %v508 = vld [vmem:[#allocation5 + $0x1d8] sm:$0xff]
    %v509 = vld [vmem:[#allocation5 + $0x1e0] sm:$0xff]
    %v510 = vld [vmem:[#allocation5 + $0x1e8] sm:$0xff]
    %v511 = vld [vmem:[#allocation5 + $0x1f0] sm:$0xff]
    %v512 = vld [vmem:[#allocation5 + $0x1f8] sm:$0xff]
    %v513 = vld [vmem:[#allocation5 + $0x200] sm:$0xff]
    %v514 = vld [vmem:[#allocation5 + $0x208] sm:$0xff]
    %v515 = vld [vmem:[#allocation5 + $0x210] sm:$0xff]
    %v516 = vld [vmem:[#allocation5 + $0x218] sm:$0xff]
    %v517 = vld [vmem:[#allocation5 + $0x220] sm:$0xff]
    %v518 = vld [vmem:[#allocation5 + $0x228] sm:$0xff]
    %v519 = vld [vmem:[#allocation5 + $0x230] sm:$0xff]
    %v520 = vld [vmem:[#allocation5 + $0x238] sm:$0xff]
    %v521 = vld [vmem:[#allocation5 + $0x240] sm:$0xff]
    %v522 = vld [vmem:[#allocation5 + $0x248] sm:$0xff]
    %v523 = vld [vmem:[#allocation5 + $0x250] sm:$0xff]
    %v524 = vld [vmem:[#allocation5 + $0x258] sm:$0xff]
    %v525 = vld [vmem:[#allocation5 + $0x260] sm:$0xff]
    %v526 = vld [vmem:[#allocation5 + $0x268] sm:$0xff]
    %v527 = vld [vmem:[#allocation5 + $0x270] sm:$0xff]
    %v528 = vld [vmem:[#allocation5 + $0x278] sm:$0xff]
    %v529 = vld [vmem:[#allocation5 + $0x280] sm:$0xff]
    %v530 = vld [vmem:[#allocation5 + $0x288] sm:$0xff]
    %v531 = vld [vmem:[#allocation5 + $0x290] sm:$0xff]
    %v532 = vld [vmem:[#allocation5 + $0x298] sm:$0xff]
    %v533 = vld [vmem:[#allocation5 + $0x2a0] sm:$0xff]
    %v534 = vld [vmem:[#allocation5 + $0x2a8] sm:$0xff]
    %v535 = vld [vmem:[#allocation5 + $0x2b0] sm:$0xff]
    %v536 = vld [vmem:[#allocation5 + $0x2b8] sm:$0xff]
    %v537 = vld [vmem:[#allocation5 + $0x2c0] sm:$0xff]
    %v538 = vld [vmem:[#allocation5 + $0x2c8] sm:$0xff]
    %v539 = vld [vmem:[#allocation5 + $0x2d0] sm:$0xff]
    %v540 = vld [vmem:[#allocation5 + $0x2d8] sm:$0xff]
    %v541 = vld [vmem:[#allocation5 + $0x2e0] sm:$0xff]
    %v542 = vld [vmem:[#allocation5 + $0x2e8] sm:$0xff]
    %v543 = vld [vmem:[#allocation5 + $0x2f0] sm:$0xff]
    %v544 = vld [vmem:[#allocation5 + $0x2f8] sm:$0xff]
    %v545 = vld [vmem:[#allocation5 + $0x300] sm:$0xff]
    %v546 = vld [vmem:[#allocation5 + $0x308] sm:$0xff]
    %v547 = vld [vmem:[#allocation5 + $0x310] sm:$0xff]
    %v548 = vld [vmem:[#allocation5 + $0x318] sm:$0xff]
    %v549 = vld [vmem:[#allocation5 + $0x320] sm:$0xff]
    %v550 = vld [vmem:[#allocation5 + $0x328] sm:$0xff]
    %v551 = vld [vmem:[#allocation5 + $0x330] sm:$0xff]
    %v552 = vld [vmem:[#allocation5 + $0x338] sm:$0xff]
    %v553 = vld [vmem:[#allocation5 + $0x340] sm:$0xff]
    %v554 = vld [vmem:[#allocation5 + $0x348] sm:$0xff]
    %v555 = vld [vmem:[#allocation5 + $0x350] sm:$0xff]
    %v556 = vld [vmem:[#allocation5 + $0x358] sm:$0xff]
    %v557 = vld [vmem:[#allocation5 + $0x360] sm:$0xff]
    %v558 = vld [vmem:[#allocation5 + $0x368] sm:$0xff]
    %v559 = vld [vmem:[#allocation5 + $0x370] sm:$0xff]
    %v560 = vld [vmem:[#allocation5 + $0x378] sm:$0xff]
    %v561 = vld [vmem:[#allocation5 + $0x380] sm:$0xff]
    %v562 = vld [vmem:[#allocation5 + $0x388] sm:$0xff]
    %v563 = vld [vmem:[#allocation5 + $0x390] sm:$0xff]
    %v564 = vld [vmem:[#allocation5 + $0x398] sm:$0xff]
    %v565 = vld [vmem:[#allocation5 + $0x3a0] sm:$0xff]
    %v566 = vld [vmem:[#allocation5 + $0x3a8] sm:$0xff]
    %v567 = vld [vmem:[#allocation5 + $0x3b0] sm:$0xff]
    %v568 = vld [vmem:[#allocation5 + $0x3b8] sm:$0xff]
    %v569 = vld [vmem:[#allocation5 + $0x3c0] sm:$0xff]
    %v570 = vld [vmem:[#allocation5 + $0x3c8] sm:$0xff]
    %v571 = vld [vmem:[#allocation5 + $0x3d0] sm:$0xff]
    %v572 = vld [vmem:[#allocation5 + $0x3d8] sm:$0xff]
    %v573 = vld [vmem:[#allocation5 + $0x3e0] sm:$0xff]
    %v574 = vld [vmem:[#allocation5 + $0x3e8] sm:$0xff]
    %v575 = vld [vmem:[#allocation5 + $0x3f0] sm:$0xff]
    %v576 = vld [vmem:[#allocation5 + $0x3f8] sm:$0xff]
    %v577 = vld [vmem:[#allocation5 + $0x400] sm:$0xff]
    %v578 = vld [vmem:[#allocation5 + $0x408] sm:$0xff]
    %v579 = vld [vmem:[#allocation5 + $0x410] sm:$0xff]
    %v580 = vld [vmem:[#allocation5 + $0x418] sm:$0xff]
    %v581 = vld [vmem:[#allocation5 + $0x420] sm:$0xff]
    %v582 = vld [vmem:[#allocation5 + $0x428] sm:$0xff]
    %v583 = vld [vmem:[#allocation5 + $0x430] sm:$0xff]
    %v584 = vld [vmem:[#allocation5 + $0x438] sm:$0xff]
    %v585 = vld [vmem:[#allocation5 + $0x440] sm:$0xff]
    %v586 = vld [vmem:[#allocation5 + $0x448] sm:$0xff]
    %v587 = vld [vmem:[#allocation5 + $0x450] sm:$0xff]
    %v588 = vld [vmem:[#allocation5 + $0x458] sm:$0xff]
    %v589 = vld [vmem:[#allocation5 + $0x460] sm:$0xff]
    %v590 = vld [vmem:[#allocation5 + $0x468] sm:$0xff]
    %v591 = vld [vmem:[#allocation5 + $0x470] sm:$0xff]
    %v592 = vld [vmem:[#allocation5 + $0x478] sm:$0xff]
    %v593 = vld [vmem:[#allocation5 + $0x480] sm:$0xff]
    %v594 = vld [vmem:[#allocation5 + $0x488] sm:$0xff]
    %v595 = vld [vmem:[#allocation5 + $0x490] sm:$0xff]
    %v596 = vld [vmem:[#allocation5 + $0x498] sm:$0xff]
    %v597 = vld [vmem:[#allocation5 + $0x4a0] sm:$0xff]
    %v598 = vld [vmem:[#allocation5 + $0x4a8] sm:$0xff]
    %v599 = vld [vmem:[#allocation5 + $0x4b0] sm:$0xff]
    %v600 = vld [vmem:[#allocation5 + $0x4b8] sm:$0xff]
    %v601 = vld [vmem:[#allocation5 + $0x4c0] sm:$0xff]
    %v602 = vld [vmem:[#allocation5 + $0x4c8] sm:$0xff]
    %v603 = vld [vmem:[#allocation5 + $0x4d0] sm:$0xff]
    %v604 = vld [vmem:[#allocation5 + $0x4d8] sm:$0xff]
    %v605 = vld [vmem:[#allocation5 + $0x4e0] sm:$0xff]
    %v606 = vld [vmem:[#allocation5 + $0x4e8] sm:$0xff]
    %v607 = vld [vmem:[#allocation5 + $0x4f0] sm:$0xff]
    %v608 = vld [vmem:[#allocation5 + $0x4f8] sm:$0xff]
    %v609 = vld [vmem:[#allocation5 + $0x500] sm:$0xff]
    %v610 = vld [vmem:[#allocation5 + $0x508] sm:$0xff]
    %v611 = vld [vmem:[#allocation5 + $0x510] sm:$0xff]
    %v612 = vld [vmem:[#allocation5 + $0x518] sm:$0xff]
    %v613 = vld [vmem:[#allocation5 + $0x520] sm:$0xff]
    %v614 = vld [vmem:[#allocation5 + $0x528] sm:$0xff]
    %v615 = vld [vmem:[#allocation5 + $0x530] sm:$0xff]
    %v616 = vld [vmem:[#allocation5 + $0x538] sm:$0xff]
    %v617 = vld [vmem:[#allocation5 + $0x540] sm:$0xff]
    %v618 = vld [vmem:[#allocation5 + $0x548] sm:$0xff]
    %v619 = vld [vmem:[#allocation5 + $0x550] sm:$0xff]
    %v620 = vld [vmem:[#allocation5 + $0x558] sm:$0xff]
    %v621 = vld [vmem:[#allocation5 + $0x560] sm:$0xff]
    %v622 = vld [vmem:[#allocation5 + $0x568] sm:$0xff]
    %v623 = vld [vmem:[#allocation5 + $0x570] sm:$0xff]
    %v624 = vld [vmem:[#allocation5 + $0x578] sm:$0xff]
    %v625 = vld [vmem:[#allocation5 + $0x580] sm:$0xff]
    %v626 = vld [vmem:[#allocation5 + $0x588] sm:$0xff]
    %v627 = vld [vmem:[#allocation5 + $0x590] sm:$0xff]
    %v628 = vld [vmem:[#allocation5 + $0x598] sm:$0xff]
    %v629 = vld [vmem:[#allocation5 + $0x5a0] sm:$0xff]
    %v630 = vld [vmem:[#allocation5 + $0x5a8] sm:$0xff]
    %v631 = vld [vmem:[#allocation5 + $0x5b0] sm:$0xff]
    %v632 = vld [vmem:[#allocation5 + $0x5b8] sm:$0xff]
    %v633 = vld [vmem:[#allocation5 + $0x5c0] sm:$0xff]
    %v634 = vld [vmem:[#allocation5 + $0x5c8] sm:$0xff]
    %v635 = vld [vmem:[#allocation5 + $0x5d0] sm:$0xff]
    %v636 = vld [vmem:[#allocation5 + $0x5d8] sm:$0xff]
    %v637 = vld [vmem:[#allocation5 + $0x5e0] sm:$0xff]
    %v638 = vld [vmem:[#allocation5 + $0x5e8] sm:$0xff]
    %v639 = vld [vmem:[#allocation5 + $0x5f0] sm:$0xff]
    %v640 = vld [vmem:[#allocation5 + $0x5f8] sm:$0xff]
    %v641 = vld [vmem:[%s3] sm:$0xff]
    %v643 = vlaneseq
    %v644 = vshrl.u32 %v643, 7
    %v645 = vsub.s32 0, %v644
    %v646 = vrot.slane %v641, %v645
    %v647 = vlaneseq
    %v648 = vshrl.u32 %v647, 7
    %v649 = vsub.s32 1, %v648
    %v650 = vrot.slane %v641, %v649
    %v651 = vlaneseq
    %v652 = vshrl.u32 %v651, 7
    %v653 = vsub.s32 2, %v652
    %v654 = vrot.slane %v641, %v653
    %v655 = vlaneseq
    %v656 = vshrl.u32 %v655, 7
    %v657 = vsub.s32 3, %v656
    %v658 = vrot.slane %v641, %v657
    %v659 = vlaneseq
    %v660 = vshrl.u32 %v659, 7
    %v661 = vsub.s32 4, %v660
    %v662 = vrot.slane %v641, %v661
    %v663 = vlaneseq
    %v664 = vshrl.u32 %v663, 7
    %v665 = vsub.s32 5, %v664
    %v666 = vrot.slane %v641, %v665
    %v667 = vlaneseq
    %v668 = vshrl.u32 %v667, 7
    %v669 = vsub.s32 6, %v668
    %v670 = vrot.slane %v641, %v669
    %v671 = vlaneseq
    %v672 = vshrl.u32 %v671, 7
    %v673 = vsub.s32 7, %v672
    %v674 = vrot.slane %v641, %v673
    %v875 = vunpack.c.l.b16 %v449
    %v876 = vunpack.c.h.b16 %v449
    %v877 = vunpack.c.l.b16 %v450
    %v878 = vunpack.c.h.b16 %v450
    %v879 = vunpack.c.l.b16 %v451
    %v880 = vunpack.c.h.b16 %v451
    %v881 = vunpack.c.l.b16 %v452
    %v882 = vunpack.c.h.b16 %v452
    %v883 = vunpack.c.l.b16 %v453
    %v884 = vunpack.c.h.b16 %v453
    %v885 = vunpack.c.l.b16 %v454
    %v886 = vunpack.c.h.b16 %v454
    %v887 = vunpack.c.l.b16 %v455
    %v888 = vunpack.c.h.b16 %v455
    %v889 = vunpack.c.l.b16 %v456
    %v890 = vunpack.c.h.b16 %v456
    %v891 = vunpack.c.l.b16 %v457
    %v892 = vunpack.c.h.b16 %v457
    %v893 = vunpack.c.l.b16 %v458
    %v894 = vunpack.c.h.b16 %v458
    %v895 = vunpack.c.l.b16 %v459
    %v896 = vunpack.c.h.b16 %v459
    %v897 = vunpack.c.l.b16 %v460
    %v898 = vunpack.c.h.b16 %v460
    %v899 = vunpack.c.l.b16 %v461
    %v900 = vunpack.c.h.b16 %v461
    %v901 = vunpack.c.l.b16 %v462
    %v902 = vunpack.c.h.b16 %v462
    %v903 = vunpack.c.l.b16 %v463
    %v904 = vunpack.c.h.b16 %v463
    %v905 = vunpack.c.l.b16 %v464
    %v906 = vunpack.c.h.b16 %v464
    %v907 = vunpack.c.l.b16 %v465
    %v908 = vunpack.c.h.b16 %v465
    %v909 = vunpack.c.l.b16 %v466
    %v910 = vunpack.c.h.b16 %v466
    %v911 = vunpack.c.l.b16 %v467
    %v912 = vunpack.c.h.b16 %v467
    %v913 = vunpack.c.l.b16 %v468
    %v914 = vunpack.c.h.b16 %v468
    %v915 = vunpack.c.l.b16 %v469
    %v916 = vunpack.c.h.b16 %v469
    %v917 = vunpack.c.l.b16 %v470
    %v918 = vunpack.c.h.b16 %v470
    %v919 = vunpack.c.l.b16 %v471
    %v920 = vunpack.c.h.b16 %v471
    %v921 = vunpack.c.l.b16 %v472
    %v922 = vunpack.c.h.b16 %v472
    %v923 = vunpack.c.l.b16 %v473
    %v924 = vunpack.c.h.b16 %v473
    %v925 = vunpack.c.l.b16 %v474
    %v926 = vunpack.c.h.b16 %v474
    %v927 = vunpack.c.l.b16 %v475
    %v928 = vunpack.c.h.b16 %v475
    %v929 = vunpack.c.l.b16 %v476
    %v930 = vunpack.c.h.b16 %v476
    %v931 = vunpack.c.l.b16 %v477
    %v932 = vunpack.c.h.b16 %v477
    %v933 = vunpack.c.l.b16 %v478
    %v934 = vunpack.c.h.b16 %v478
    %v935 = vunpack.c.l.b16 %v479
    %v936 = vunpack.c.h.b16 %v479
    %v937 = vunpack.c.l.b16 %v480
    %v938 = vunpack.c.h.b16 %v480
    %v939 = vunpack.c.l.b16 %v481
    %v940 = vunpack.c.h.b16 %v481
    %v941 = vunpack.c.l.b16 %v482
    %v942 = vunpack.c.h.b16 %v482
    %v943 = vunpack.c.l.b16 %v483
    %v944 = vunpack.c.h.b16 %v483
    %v945 = vunpack.c.l.b16 %v484
    %v946 = vunpack.c.h.b16 %v484
    %v947 = vunpack.c.l.b16 %v485
    %v948 = vunpack.c.h.b16 %v485
    %v949 = vunpack.c.l.b16 %v486
    %v950 = vunpack.c.h.b16 %v486
    %v951 = vunpack.c.l.b16 %v487
    %v952 = vunpack.c.h.b16 %v487
    %v953 = vunpack.c.l.b16 %v488
    %v954 = vunpack.c.h.b16 %v488
    %v955 = vunpack.c.l.b16 %v489
    %v956 = vunpack.c.h.b16 %v489
    %v957 = vunpack.c.l.b16 %v490
    %v958 = vunpack.c.h.b16 %v490
    %v959 = vunpack.c.l.b16 %v491
    %v960 = vunpack.c.h.b16 %v491
    %v961 = vunpack.c.l.b16 %v492
    %v962 = vunpack.c.h.b16 %v492
    %v963 = vunpack.c.l.b16 %v493
    %v964 = vunpack.c.h.b16 %v493
    %v965 = vunpack.c.l.b16 %v494
    %v966 = vunpack.c.h.b16 %v494
    %v967 = vunpack.c.l.b16 %v495
    %v968 = vunpack.c.h.b16 %v495
    %v969 = vunpack.c.l.b16 %v496
    %v970 = vunpack.c.h.b16 %v496
    %v971 = vunpack.c.l.b16 %v497
    %v972 = vunpack.c.h.b16 %v497
    %v973 = vunpack.c.l.b16 %v498
    %v974 = vunpack.c.h.b16 %v498
    %v975 = vunpack.c.l.b16 %v499
    %v976 = vunpack.c.h.b16 %v499
    %v977 = vunpack.c.l.b16 %v500
    %v978 = vunpack.c.h.b16 %v500
    %v979 = vunpack.c.l.b16 %v501
    %v980 = vunpack.c.h.b16 %v501
    %v981 = vunpack.c.l.b16 %v502
    %v982 = vunpack.c.h.b16 %v502
    %v983 = vunpack.c.l.b16 %v503
    %v984 = vunpack.c.h.b16 %v503
    %v985 = vunpack.c.l.b16 %v504
    %v986 = vunpack.c.h.b16 %v504
    %v987 = vunpack.c.l.b16 %v505
    %v988 = vunpack.c.h.b16 %v505
    %v989 = vunpack.c.l.b16 %v506
    %v990 = vunpack.c.h.b16 %v506
    %v991 = vunpack.c.l.b16 %v507
    %v992 = vunpack.c.h.b16 %v507
    %v993 = vunpack.c.l.b16 %v508
    %v994 = vunpack.c.h.b16 %v508
    %v995 = vunpack.c.l.b16 %v509
    %v996 = vunpack.c.h.b16 %v509
    %v997 = vunpack.c.l.b16 %v510
    %v998 = vunpack.c.h.b16 %v510
    %v999 = vunpack.c.l.b16 %v511
    %v1000 = vunpack.c.h.b16 %v511
    %v1001 = vunpack.c.l.b16 %v512
    %v1002 = vunpack.c.h.b16 %v512
    %v1003 = vunpack.c.l.b16 %v513
    %v1004 = vunpack.c.h.b16 %v513
    %v1005 = vunpack.c.l.b16 %v514
    %v1006 = vunpack.c.h.b16 %v514
    %v1007 = vunpack.c.l.b16 %v515
    %v1008 = vunpack.c.h.b16 %v515
    %v1009 = vunpack.c.l.b16 %v516
    %v1010 = vunpack.c.h.b16 %v516
    %v1011 = vunpack.c.l.b16 %v517
    %v1012 = vunpack.c.h.b16 %v517
    %v1013 = vunpack.c.l.b16 %v518
    %v1014 = vunpack.c.h.b16 %v518
    %v1015 = vunpack.c.l.b16 %v519
    %v1016 = vunpack.c.h.b16 %v519
    %v1017 = vunpack.c.l.b16 %v520
    %v1018 = vunpack.c.h.b16 %v520
    %v1019 = vunpack.c.l.b16 %v521
    %v1020 = vunpack.c.h.b16 %v521
    %v1021 = vunpack.c.l.b16 %v522
    %v1022 = vunpack.c.h.b16 %v522
    %v1023 = vunpack.c.l.b16 %v523
    %v1024 = vunpack.c.h.b16 %v523
    %v1025 = vunpack.c.l.b16 %v524
    %v1026 = vunpack.c.h.b16 %v524
    %v1027 = vunpack.c.l.b16 %v525
    %v1028 = vunpack.c.h.b16 %v525
    %v1029 = vunpack.c.l.b16 %v526
    %v1030 = vunpack.c.h.b16 %v526
    %v1031 = vunpack.c.l.b16 %v527
    %v1032 = vunpack.c.h.b16 %v527
    %v1033 = vunpack.c.l.b16 %v528
    %v1034 = vunpack.c.h.b16 %v528
    %v1035 = vunpack.c.l.b16 %v529
    %v1036 = vunpack.c.h.b16 %v529
    %v1037 = vunpack.c.l.b16 %v530
    %v1038 = vunpack.c.h.b16 %v530
    %v1039 = vunpack.c.l.b16 %v531
    %v1040 = vunpack.c.h.b16 %v531
    %v1041 = vunpack.c.l.b16 %v532
    %v1042 = vunpack.c.h.b16 %v532
    %v1043 = vunpack.c.l.b16 %v533
    %v1044 = vunpack.c.h.b16 %v533
    %v1045 = vunpack.c.l.b16 %v534
    %v1046 = vunpack.c.h.b16 %v534
    %v1047 = vunpack.c.l.b16 %v535
    %v1048 = vunpack.c.h.b16 %v535
    %v1049 = vunpack.c.l.b16 %v536
    %v1050 = vunpack.c.h.b16 %v536
    %v1051 = vunpack.c.l.b16 %v537
    %v1052 = vunpack.c.h.b16 %v537
    %v1053 = vunpack.c.l.b16 %v538
    %v1054 = vunpack.c.h.b16 %v538
    %v1055 = vunpack.c.l.b16 %v539
    %v1056 = vunpack.c.h.b16 %v539
    %v1057 = vunpack.c.l.b16 %v540
    %v1058 = vunpack.c.h.b16 %v540
    %v1059 = vunpack.c.l.b16 %v541
    %v1060 = vunpack.c.h.b16 %v541
    %v1061 = vunpack.c.l.b16 %v542
    %v1062 = vunpack.c.h.b16 %v542
    %v1063 = vunpack.c.l.b16 %v543
    %v1064 = vunpack.c.h.b16 %v543
    %v1065 = vunpack.c.l.b16 %v544
    %v1066 = vunpack.c.h.b16 %v544
    %v1067 = vunpack.c.l.b16 %v545
    %v1068 = vunpack.c.h.b16 %v545
    %v1069 = vunpack.c.l.b16 %v546
    %v1070 = vunpack.c.h.b16 %v546
    %v1071 = vunpack.c.l.b16 %v547
    %v1072 = vunpack.c.h.b16 %v547
    %v1073 = vunpack.c.l.b16 %v548
    %v1074 = vunpack.c.h.b16 %v548
    %v1075 = vunpack.c.l.b16 %v549
    %v1076 = vunpack.c.h.b16 %v549
    %v1077 = vunpack.c.l.b16 %v550
    %v1078 = vunpack.c.h.b16 %v550
    %v1079 = vunpack.c.l.b16 %v551
    %v1080 = vunpack.c.h.b16 %v551
    %v1081 = vunpack.c.l.b16 %v552
    %v1082 = vunpack.c.h.b16 %v552
    %v1083 = vunpack.c.l.b16 %v553
    %v1084 = vunpack.c.h.b16 %v553
    %v1085 = vunpack.c.l.b16 %v554
    %v1086 = vunpack.c.h.b16 %v554
    %v1087 = vunpack.c.l.b16 %v555
    %v1088 = vunpack.c.h.b16 %v555
    %v1089 = vunpack.c.l.b16 %v556
    %v1090 = vunpack.c.h.b16 %v556
    %v1091 = vunpack.c.l.b16 %v557
    %v1092 = vunpack.c.h.b16 %v557
    %v1093 = vunpack.c.l.b16 %v558
    %v1094 = vunpack.c.h.b16 %v558
    %v1095 = vunpack.c.l.b16 %v559
    %v1096 = vunpack.c.h.b16 %v559
    %v1097 = vunpack.c.l.b16 %v560
    %v1098 = vunpack.c.h.b16 %v560
    %v1099 = vunpack.c.l.b16 %v561
    %v1100 = vunpack.c.h.b16 %v561
    %v1101 = vunpack.c.l.b16 %v562
    %v1102 = vunpack.c.h.b16 %v562
    %v1103 = vunpack.c.l.b16 %v563
    %v1104 = vunpack.c.h.b16 %v563
    %v1105 = vunpack.c.l.b16 %v564
    %v1106 = vunpack.c.h.b16 %v564
    %v1107 = vunpack.c.l.b16 %v565
    %v1108 = vunpack.c.h.b16 %v565
    %v1109 = vunpack.c.l.b16 %v566
    %v1110 = vunpack.c.h.b16 %v566
    %v1111 = vunpack.c.l.b16 %v567
    %v1112 = vunpack.c.h.b16 %v567
    %v1113 = vunpack.c.l.b16 %v568
    %v1114 = vunpack.c.h.b16 %v568
    %v1115 = vunpack.c.l.b16 %v569
    %v1116 = vunpack.c.h.b16 %v569
    %v1117 = vunpack.c.l.b16 %v570
    %v1118 = vunpack.c.h.b16 %v570
    %v1119 = vunpack.c.l.b16 %v571
    %v1120 = vunpack.c.h.b16 %v571
    %v1121 = vunpack.c.l.b16 %v572
    %v1122 = vunpack.c.h.b16 %v572
    %v1123 = vunpack.c.l.b16 %v573
    %v1124 = vunpack.c.h.b16 %v573
    %v1125 = vunpack.c.l.b16 %v574
    %v1126 = vunpack.c.h.b16 %v574
    %v1127 = vunpack.c.l.b16 %v575
    %v1128 = vunpack.c.h.b16 %v575
    %v1129 = vunpack.c.l.b16 %v576
    %v1130 = vunpack.c.h.b16 %v576
    %v1131 = vunpack.c.l.b16 %v577
    %v1132 = vunpack.c.h.b16 %v577
    %v1133 = vunpack.c.l.b16 %v578
    %v1134 = vunpack.c.h.b16 %v578
    %v1135 = vunpack.c.l.b16 %v579
    %v1136 = vunpack.c.h.b16 %v579
    %v1137 = vunpack.c.l.b16 %v580
    %v1138 = vunpack.c.h.b16 %v580
    %v1139 = vunpack.c.l.b16 %v581
    %v1140 = vunpack.c.h.b16 %v581
    %v1141 = vunpack.c.l.b16 %v582
    %v1142 = vunpack.c.h.b16 %v582
    %v1143 = vunpack.c.l.b16 %v583
    %v1144 = vunpack.c.h.b16 %v583
    %v1145 = vunpack.c.l.b16 %v584
    %v1146 = vunpack.c.h.b16 %v584
    %v1147 = vunpack.c.l.b16 %v585
    %v1148 = vunpack.c.h.b16 %v585
    %v1149 = vunpack.c.l.b16 %v586
    %v1150 = vunpack.c.h.b16 %v586
    %v1151 = vunpack.c.l.b16 %v587
    %v1152 = vunpack.c.h.b16 %v587
    %v1153 = vunpack.c.l.b16 %v588
    %v1154 = vunpack.c.h.b16 %v588
    %v1155 = vunpack.c.l.b16 %v589
    %v1156 = vunpack.c.h.b16 %v589
    %v1157 = vunpack.c.l.b16 %v590
    %v1158 = vunpack.c.h.b16 %v590
    %v1159 = vunpack.c.l.b16 %v591
    %v1160 = vunpack.c.h.b16 %v591
    %v1161 = vunpack.c.l.b16 %v592
    %v1162 = vunpack.c.h.b16 %v592
    %v1163 = vunpack.c.l.b16 %v593
    %v1164 = vunpack.c.h.b16 %v593
    %v1165 = vunpack.c.l.b16 %v594
    %v1166 = vunpack.c.h.b16 %v594
    %v1167 = vunpack.c.l.b16 %v595
    %v1168 = vunpack.c.h.b16 %v595
    %v1169 = vunpack.c.l.b16 %v596
    %v1170 = vunpack.c.h.b16 %v596
    %v1171 = vunpack.c.l.b16 %v597
    %v1172 = vunpack.c.h.b16 %v597
    %v1173 = vunpack.c.l.b16 %v598
    %v1174 = vunpack.c.h.b16 %v598
    %v1175 = vunpack.c.l.b16 %v599
    %v1176 = vunpack.c.h.b16 %v599
    %v1177 = vunpack.c.l.b16 %v600
    %v1178 = vunpack.c.h.b16 %v600
    %v1179 = vunpack.c.l.b16 %v601
    %v1180 = vunpack.c.h.b16 %v601
    %v1181 = vunpack.c.l.b16 %v602
    %v1182 = vunpack.c.h.b16 %v602
    %v1183 = vunpack.c.l.b16 %v603
    %v1184 = vunpack.c.h.b16 %v603
    %v1185 = vunpack.c.l.b16 %v604
    %v1186 = vunpack.c.h.b16 %v604
    %v1187 = vunpack.c.l.b16 %v605
    %v1188 = vunpack.c.h.b16 %v605
    %v1189 = vunpack.c.l.b16 %v606
    %v1190 = vunpack.c.h.b16 %v606
    %v1191 = vunpack.c.l.b16 %v607
    %v1192 = vunpack.c.h.b16 %v607
    %v1193 = vunpack.c.l.b16 %v608
    %v1194 = vunpack.c.h.b16 %v608
    %v1195 = vunpack.c.l.b16 %v609
    %v1196 = vunpack.c.h.b16 %v609
    %v1197 = vunpack.c.l.b16 %v610
    %v1198 = vunpack.c.h.b16 %v610
    %v1199 = vunpack.c.l.b16 %v611
    %v1200 = vunpack.c.h.b16 %v611
    %v1201 = vunpack.c.l.b16 %v612
    %v1202 = vunpack.c.h.b16 %v612
    %v1203 = vunpack.c.l.b16 %v613
    %v1204 = vunpack.c.h.b16 %v613
    %v1205 = vunpack.c.l.b16 %v614
    %v1206 = vunpack.c.h.b16 %v614
    %v1207 = vunpack.c.l.b16 %v615
    %v1208 = vunpack.c.h.b16 %v615
    %v1209 = vunpack.c.l.b16 %v616
    %v1210 = vunpack.c.h.b16 %v616
    %v1211 = vunpack.c.l.b16 %v617
    %v1212 = vunpack.c.h.b16 %v617
    %v1213 = vunpack.c.l.b16 %v618
    %v1214 = vunpack.c.h.b16 %v618
    %v1215 = vunpack.c.l.b16 %v619
    %v1216 = vunpack.c.h.b16 %v619
    %v1217 = vunpack.c.l.b16 %v620
    %v1218 = vunpack.c.h.b16 %v620
    %v1219 = vunpack.c.l.b16 %v621
    %v1220 = vunpack.c.h.b16 %v621
    %v1221 = vunpack.c.l.b16 %v622
    %v1222 = vunpack.c.h.b16 %v622
    %v1223 = vunpack.c.l.b16 %v623
    %v1224 = vunpack.c.h.b16 %v623
    %v1225 = vunpack.c.l.b16 %v624
    %v1226 = vunpack.c.h.b16 %v624
    %v1227 = vunpack.c.l.b16 %v625
    %v1228 = vunpack.c.h.b16 %v625
    %v1229 = vunpack.c.l.b16 %v626
    %v1230 = vunpack.c.h.b16 %v626
    %v1231 = vunpack.c.l.b16 %v627
    %v1232 = vunpack.c.h.b16 %v627
    %v1233 = vunpack.c.l.b16 %v628
    %v1234 = vunpack.c.h.b16 %v628
    %v1235 = vunpack.c.l.b16 %v629
    %v1236 = vunpack.c.h.b16 %v629
    %v1237 = vunpack.c.l.b16 %v630
    %v1238 = vunpack.c.h.b16 %v630
    %v1239 = vunpack.c.l.b16 %v631
    %v1240 = vunpack.c.h.b16 %v631
    %v1241 = vunpack.c.l.b16 %v632
    %v1242 = vunpack.c.h.b16 %v632
    %v1243 = vunpack.c.l.b16 %v633
    %v1244 = vunpack.c.h.b16 %v633
    %v1245 = vunpack.c.l.b16 %v634
    %v1246 = vunpack.c.h.b16 %v634
    %v1247 = vunpack.c.l.b16 %v635
    %v1248 = vunpack.c.h.b16 %v635
    %v1249 = vunpack.c.l.b16 %v636
    %v1250 = vunpack.c.h.b16 %v636
    %v1251 = vunpack.c.l.b16 %v637
    %v1252 = vunpack.c.h.b16 %v637
    %v1253 = vunpack.c.l.b16 %v638
    %v1254 = vunpack.c.h.b16 %v638
    %v1255 = vunpack.c.l.b16 %v639
    %v1256 = vunpack.c.h.b16 %v639
    %v1257 = vunpack.c.l.b16 %v640
    %v1258 = vunpack.c.h.b16 %v640
    %v1259 = vpack.c.b16 %v883, %v875
    %v1260 = vpack.c.b16 %v884, %v876
    %v1261 = vpack.c.b16 %v885, %v877
    %v1262 = vpack.c.b16 %v886, %v878
    %v1263 = vpack.c.b16 %v887, %v879
    %v1264 = vpack.c.b16 %v888, %v880
    %v1265 = vpack.c.b16 %v889, %v881
    %v1266 = vpack.c.b16 %v890, %v882
    %v1267 = vpack.c.b16 %v899, %v891
    %v1268 = vpack.c.b16 %v900, %v892
    %v1269 = vpack.c.b16 %v901, %v893
    %v1270 = vpack.c.b16 %v902, %v894
    %v1271 = vpack.c.b16 %v903, %v895
    %v1272 = vpack.c.b16 %v904, %v896
    %v1273 = vpack.c.b16 %v905, %v897
    %v1274 = vpack.c.b16 %v906, %v898
    %v1275 = vpack.c.b16 %v915, %v907
    %v1276 = vpack.c.b16 %v916, %v908
    %v1277 = vpack.c.b16 %v917, %v909
    %v1278 = vpack.c.b16 %v918, %v910
    %v1279 = vpack.c.b16 %v919, %v911
    %v1280 = vpack.c.b16 %v920, %v912
    %v1281 = vpack.c.b16 %v921, %v913
    %v1282 = vpack.c.b16 %v922, %v914
    %v1283 = vpack.c.b16 %v931, %v923
    %v1284 = vpack.c.b16 %v932, %v924
    %v1285 = vpack.c.b16 %v933, %v925
    %v1286 = vpack.c.b16 %v934, %v926
    %v1287 = vpack.c.b16 %v935, %v927
    %v1288 = vpack.c.b16 %v936, %v928
    %v1289 = vpack.c.b16 %v937, %v929
    %v1290 = vpack.c.b16 %v938, %v930
    %v1291 = vpack.c.b16 %v947, %v939
    %v1292 = vpack.c.b16 %v948, %v940
    %v1293 = vpack.c.b16 %v949, %v941
    %v1294 = vpack.c.b16 %v950, %v942
    %v1295 = vpack.c.b16 %v951, %v943
    %v1296 = vpack.c.b16 %v952, %v944
    %v1297 = vpack.c.b16 %v953, %v945
    %v1298 = vpack.c.b16 %v954, %v946
    %v1299 = vpack.c.b16 %v963, %v955
    %v1300 = vpack.c.b16 %v964, %v956
    %v1301 = vpack.c.b16 %v965, %v957
    %v1302 = vpack.c.b16 %v966, %v958
    %v1303 = vpack.c.b16 %v967, %v959
    %v1304 = vpack.c.b16 %v968, %v960
    %v1305 = vpack.c.b16 %v969, %v961
    %v1306 = vpack.c.b16 %v970, %v962
    %v1307 = vpack.c.b16 %v979, %v971
    %v1308 = vpack.c.b16 %v980, %v972
    %v1309 = vpack.c.b16 %v981, %v973
    %v1310 = vpack.c.b16 %v982, %v974
    %v1311 = vpack.c.b16 %v983, %v975
    %v1312 = vpack.c.b16 %v984, %v976
    %v1313 = vpack.c.b16 %v985, %v977
    %v1314 = vpack.c.b16 %v986, %v978
    %v1315 = vpack.c.b16 %v995, %v987
    %v1316 = vpack.c.b16 %v996, %v988
    %v1317 = vpack.c.b16 %v997, %v989
    %v1318 = vpack.c.b16 %v998, %v990
    %v1319 = vpack.c.b16 %v999, %v991
    %v1320 = vpack.c.b16 %v1000, %v992
    %v1321 = vpack.c.b16 %v1001, %v993
    %v1322 = vpack.c.b16 %v1002, %v994
    %v1323 = vpack.c.b16 %v1011, %v1003
    %v1324 = vpack.c.b16 %v1012, %v1004
    %v1325 = vpack.c.b16 %v1013, %v1005
    %v1326 = vpack.c.b16 %v1014, %v1006
    %v1327 = vpack.c.b16 %v1015, %v1007
    %v1328 = vpack.c.b16 %v1016, %v1008
    %v1329 = vpack.c.b16 %v1017, %v1009
    %v1330 = vpack.c.b16 %v1018, %v1010
    %v1331 = vpack.c.b16 %v1027, %v1019
    %v1332 = vpack.c.b16 %v1028, %v1020
    %v1333 = vpack.c.b16 %v1029, %v1021
    %v1334 = vpack.c.b16 %v1030, %v1022
    %v1335 = vpack.c.b16 %v1031, %v1023
    %v1336 = vpack.c.b16 %v1032, %v1024
    %v1337 = vpack.c.b16 %v1033, %v1025
    %v1338 = vpack.c.b16 %v1034, %v1026
    %v1339 = vpack.c.b16 %v1043, %v1035
    %v1340 = vpack.c.b16 %v1044, %v1036
    %v1341 = vpack.c.b16 %v1045, %v1037
    %v1342 = vpack.c.b16 %v1046, %v1038
    %v1343 = vpack.c.b16 %v1047, %v1039
    %v1344 = vpack.c.b16 %v1048, %v1040
    %v1345 = vpack.c.b16 %v1049, %v1041
    %v1346 = vpack.c.b16 %v1050, %v1042
    %v1347 = vpack.c.b16 %v1059, %v1051
    %v1348 = vpack.c.b16 %v1060, %v1052
    %v1349 = vpack.c.b16 %v1061, %v1053
    %v1350 = vpack.c.b16 %v1062, %v1054
    %v1351 = vpack.c.b16 %v1063, %v1055
    %v1352 = vpack.c.b16 %v1064, %v1056
    %v1353 = vpack.c.b16 %v1065, %v1057
    %v1354 = vpack.c.b16 %v1066, %v1058
    %v1355 = vpack.c.b16 %v1075, %v1067
    %v1356 = vpack.c.b16 %v1076, %v1068
    %v1357 = vpack.c.b16 %v1077, %v1069
    %v1358 = vpack.c.b16 %v1078, %v1070
    %v1359 = vpack.c.b16 %v1079, %v1071
    %v1360 = vpack.c.b16 %v1080, %v1072
    %v1361 = vpack.c.b16 %v1081, %v1073
    %v1362 = vpack.c.b16 %v1082, %v1074
    %v1363 = vpack.c.b16 %v1091, %v1083
    %v1364 = vpack.c.b16 %v1092, %v1084
    %v1365 = vpack.c.b16 %v1093, %v1085
    %v1366 = vpack.c.b16 %v1094, %v1086
    %v1367 = vpack.c.b16 %v1095, %v1087
    %v1368 = vpack.c.b16 %v1096, %v1088
    %v1369 = vpack.c.b16 %v1097, %v1089
    %v1370 = vpack.c.b16 %v1098, %v1090
    %v1371 = vpack.c.b16 %v1107, %v1099
    %v1372 = vpack.c.b16 %v1108, %v1100
    %v1373 = vpack.c.b16 %v1109, %v1101
    %v1374 = vpack.c.b16 %v1110, %v1102
    %v1375 = vpack.c.b16 %v1111, %v1103
    %v1376 = vpack.c.b16 %v1112, %v1104
    %v1377 = vpack.c.b16 %v1113, %v1105
    %v1378 = vpack.c.b16 %v1114, %v1106
    %v1379 = vpack.c.b16 %v1123, %v1115
    %v1380 = vpack.c.b16 %v1124, %v1116
    %v1381 = vpack.c.b16 %v1125, %v1117
    %v1382 = vpack.c.b16 %v1126, %v1118
    %v1383 = vpack.c.b16 %v1127, %v1119
    %v1384 = vpack.c.b16 %v1128, %v1120
    %v1385 = vpack.c.b16 %v1129, %v1121
    %v1386 = vpack.c.b16 %v1130, %v1122
    %v1387 = vpack.c.b16 %v1139, %v1131
    %v1388 = vpack.c.b16 %v1140, %v1132
    %v1389 = vpack.c.b16 %v1141, %v1133
    %v1390 = vpack.c.b16 %v1142, %v1134
    %v1391 = vpack.c.b16 %v1143, %v1135
    %v1392 = vpack.c.b16 %v1144, %v1136
    %v1393 = vpack.c.b16 %v1145, %v1137
    %v1394 = vpack.c.b16 %v1146, %v1138
    %v1395 = vpack.c.b16 %v1155, %v1147
    %v1396 = vpack.c.b16 %v1156, %v1148
    %v1397 = vpack.c.b16 %v1157, %v1149
    %v1398 = vpack.c.b16 %v1158, %v1150
    %v1399 = vpack.c.b16 %v1159, %v1151
    %v1400 = vpack.c.b16 %v1160, %v1152
    %v1401 = vpack.c.b16 %v1161, %v1153
    %v1402 = vpack.c.b16 %v1162, %v1154
    %v1403 = vpack.c.b16 %v1171, %v1163
    %v1404 = vpack.c.b16 %v1172, %v1164
    %v1405 = vpack.c.b16 %v1173, %v1165
    %v1406 = vpack.c.b16 %v1174, %v1166
    %v1407 = vpack.c.b16 %v1175, %v1167
    %v1408 = vpack.c.b16 %v1176, %v1168
    %v1409 = vpack.c.b16 %v1177, %v1169
    %v1410 = vpack.c.b16 %v1178, %v1170
    %v1411 = vpack.c.b16 %v1187, %v1179
    %v1412 = vpack.c.b16 %v1188, %v1180
    %v1413 = vpack.c.b16 %v1189, %v1181
    %v1414 = vpack.c.b16 %v1190, %v1182
    %v1415 = vpack.c.b16 %v1191, %v1183
    %v1416 = vpack.c.b16 %v1192, %v1184
    %v1417 = vpack.c.b16 %v1193, %v1185
    %v1418 = vpack.c.b16 %v1194, %v1186
    %v1419 = vpack.c.b16 %v1203, %v1195
    %v1420 = vpack.c.b16 %v1204, %v1196
    %v1421 = vpack.c.b16 %v1205, %v1197
    %v1422 = vpack.c.b16 %v1206, %v1198
    %v1423 = vpack.c.b16 %v1207, %v1199
    %v1424 = vpack.c.b16 %v1208, %v1200
    %v1425 = vpack.c.b16 %v1209, %v1201
    %v1426 = vpack.c.b16 %v1210, %v1202
    %v1427 = vpack.c.b16 %v1219, %v1211
    %v1428 = vpack.c.b16 %v1220, %v1212
    %v1429 = vpack.c.b16 %v1221, %v1213
    %v1430 = vpack.c.b16 %v1222, %v1214
    %v1431 = vpack.c.b16 %v1223, %v1215
    %v1432 = vpack.c.b16 %v1224, %v1216
    %v1433 = vpack.c.b16 %v1225, %v1217
    %v1434 = vpack.c.b16 %v1226, %v1218
    %v1435 = vpack.c.b16 %v1235, %v1227
    %v1436 = vpack.c.b16 %v1236, %v1228
    %v1437 = vpack.c.b16 %v1237, %v1229
    %v1438 = vpack.c.b16 %v1238, %v1230
    %v1439 = vpack.c.b16 %v1239, %v1231
    %v1440 = vpack.c.b16 %v1240, %v1232
    %v1441 = vpack.c.b16 %v1241, %v1233
    %v1442 = vpack.c.b16 %v1242, %v1234
    %v1443 = vpack.c.b16 %v1251, %v1243
    %v1444 = vpack.c.b16 %v1252, %v1244
    %v1445 = vpack.c.b16 %v1253, %v1245
    %v1446 = vpack.c.b16 %v1254, %v1246
    %v1447 = vpack.c.b16 %v1255, %v1247
    %v1448 = vpack.c.b16 %v1256, %v1248
    %v1449 = vpack.c.b16 %v1257, %v1249
    %v1450 = vpack.c.b16 %v1258, %v1250
    %1643 = vmatprep.subr.bf16.mxu0 %v1316
    %1644 = vmatpush1.bf16.msra.mxu0 %v1315
    %1645 = vmatprep.subr.bf16.mxu0 %v1308
    %1646 = vmatpush1.bf16.msra.mxu0 %v1307
    %1647 = vmatprep.subr.bf16.mxu0 %v1300
    %1648 = vmatpush1.bf16.msra.mxu0 %v1299
    %1649 = vmatprep.subr.bf16.mxu0 %v1292
    %1650 = vmatpush1.bf16.msra.mxu0 %v1291
    %1651 = vmatprep.subr.bf16.mxu0 %v1284
    %1652 = vmatpush1.bf16.msra.mxu0 %v1283
    %1653 = vmatprep.subr.bf16.mxu0 %v1276
    %1654 = vmatpush1.bf16.msra.mxu0 %v1275
    %1655 = vmatprep.subr.bf16.mxu0 %v1268
    %1656 = vmatpush1.bf16.msra.mxu0 %v1267
    %1657 = vmatprep.subr.bf16.mxu0 %v1260
    %1658 = vmatpush1.bf16.msra.mxu0 %v1259
    %1659 = vmatprep.subr.bf16.mxu0 %v1380
    %1660 = vmatpush2.bf16.msra.mxu0 %v1379
    %1661 = vmatprep.subr.bf16.mxu0 %v1372
    %1662 = vmatpush2.bf16.msra.mxu0 %v1371
    %1663 = vmatprep.subr.bf16.mxu0 %v1364
    %1664 = vmatpush2.bf16.msra.mxu0 %v1363
    %1665 = vmatprep.subr.bf16.mxu0 %v1356
    %1666 = vmatpush2.bf16.msra.mxu0 %v1355
    %1667 = vmatprep.subr.bf16.mxu0 %v1348
    %1668 = vmatpush2.bf16.msra.mxu0 %v1347
    %1669 = vmatprep.subr.bf16.mxu0 %v1340
    %1670 = vmatpush2.bf16.msra.mxu0 %v1339
    %1671 = vmatprep.subr.bf16.mxu0 %v1332
    %1672 = vmatpush2.bf16.msra.mxu0 %v1331
    %1673 = vmatprep.subr.bf16.mxu0 %v1324
    %1674 = vmatpush2.bf16.msra.mxu0 %v1323
    %1675 = vmatprep.mubr.bf16.mxu0 %v447
    %1676 = vmatmul.mubr.bf16.gmra.mxu0 %v446
    %v1677 = vpop.f32.mrf.mxu0
    %v1678 = vadd.f32 %v646, %v1677
    %v1679 = vpop.f32.mrf.mxu0
    %v1680 = vadd.f32 %v650, %v1679
    %v1681 = vpop.f32.mrf.mxu0
    %v1682 = vadd.f32 %v646, %v1681
    %v1683 = vpop.f32.mrf.mxu0
    %v1684 = vadd.f32 %v650, %v1683
    %1685 = vdwg.mxu0
    %1686 = vmatprep.subr.bf16.mxu0 %v1444
    %1687 = vmatpush1.bf16.msra.mxu0 %v1443
    %1688 = vmatprep.subr.bf16.mxu0 %v1436
    %1689 = vmatpush1.bf16.msra.mxu0 %v1435
    %1690 = vmatprep.subr.bf16.mxu0 %v1428
    %1691 = vmatpush1.bf16.msra.mxu0 %v1427
    %1692 = vmatprep.subr.bf16.mxu0 %v1420
    %1693 = vmatpush1.bf16.msra.mxu0 %v1419
    %1694 = vmatprep.subr.bf16.mxu0 %v1412
    %1695 = vmatpush1.bf16.msra.mxu0 %v1411
    %1696 = vmatprep.subr.bf16.mxu0 %v1404
    %1697 = vmatpush1.bf16.msra.mxu0 %v1403
    %1698 = vmatprep.subr.bf16.mxu0 %v1396
    %1699 = vmatpush1.bf16.msra.mxu0 %v1395
    %1700 = vmatprep.subr.bf16.mxu0 %v1388
    %1701 = vmatpush1.bf16.msra.mxu0 %v1387
    %1702 = vmatprep.subr.bf16.mxu0 0
    %1703 = vmatpush2.bf16.msra.mxu0 0
    %1704 = vmatprep.subr.bf16.mxu0 0
    %1705 = vmatpush2.bf16.msra.mxu0 0
    %1706 = vmatprep.subr.bf16.mxu0 0
    %1707 = vmatpush2.bf16.msra.mxu0 0
    %1708 = vmatprep.subr.bf16.mxu0 0
    %1709 = vmatpush2.bf16.msra.mxu0 0
    %1710 = vmatprep.subr.bf16.mxu0 0
    %1711 = vmatpush2.bf16.msra.mxu0 0
    %1712 = vmatprep.subr.bf16.mxu0 0
    %1713 = vmatpush2.bf16.msra.mxu0 0
    %1714 = vmatprep.subr.bf16.mxu0 0
    %1715 = vmatpush2.bf16.msra.mxu0 0
    %1716 = vmatprep.subr.bf16.mxu0 0
    %1717 = vmatpush2.bf16.msra.mxu0 0
    %1718 = vmatprep.mubr.bf16.mxu0 0
    %1719 = vmatmul.mubr.bf16.gmra.mxu0 %v448
    %v1720 = vpop.f32.mrf.mxu0
    %v1721 = vadd.f32 %v1678, %v1720
    %v1722 = vpop.f32.mrf.mxu0
    %v1723 = vadd.f32 %v1680, %v1722
    %v1724 = vpop.f32.mrf.mxu0
    %v1725 = vadd.f32 %v1682, %v1724
    %v1726 = vpop.f32.mrf.mxu0
    %v1727 = vadd.f32 %v1684, %v1726
    %1728 = vdwg.mxu0
    %1729 = vmatprep.subr.bf16.mxu0 %v1318
    %1730 = vmatpush1.bf16.msra.mxu0 %v1317
    %1731 = vmatprep.subr.bf16.mxu0 %v1310
    %1732 = vmatpush1.bf16.msra.mxu0 %v1309
    %1733 = vmatprep.subr.bf16.mxu0 %v1302
    %1734 = vmatpush1.bf16.msra.mxu0 %v1301
    %1735 = vmatprep.subr.bf16.mxu0 %v1294
    %1736 = vmatpush1.bf16.msra.mxu0 %v1293
    %1737 = vmatprep.subr.bf16.mxu0 %v1286
    %1738 = vmatpush1.bf16.msra.mxu0 %v1285
    %1739 = vmatprep.subr.bf16.mxu0 %v1278
    %1740 = vmatpush1.bf16.msra.mxu0 %v1277
    %1741 = vmatprep.subr.bf16.mxu0 %v1270
    %1742 = vmatpush1.bf16.msra.mxu0 %v1269
    %1743 = vmatprep.subr.bf16.mxu0 %v1262
    %1744 = vmatpush1.bf16.msra.mxu0 %v1261
    %1745 = vmatprep.subr.bf16.mxu0 %v1382
    %1746 = vmatpush2.bf16.msra.mxu0 %v1381
    %1747 = vmatprep.subr.bf16.mxu0 %v1374
    %1748 = vmatpush2.bf16.msra.mxu0 %v1373
    %1749 = vmatprep.subr.bf16.mxu0 %v1366
    %1750 = vmatpush2.bf16.msra.mxu0 %v1365
    %1751 = vmatprep.subr.bf16.mxu0 %v1358
    %1752 = vmatpush2.bf16.msra.mxu0 %v1357
    %1753 = vmatprep.subr.bf16.mxu0 %v1350
    %1754 = vmatpush2.bf16.msra.mxu0 %v1349
    %1755 = vmatprep.subr.bf16.mxu0 %v1342
    %1756 = vmatpush2.bf16.msra.mxu0 %v1341
    %1757 = vmatprep.subr.bf16.mxu0 %v1334
    %1758 = vmatpush2.bf16.msra.mxu0 %v1333
    %1759 = vmatprep.subr.bf16.mxu0 %v1326
    %1760 = vmatpush2.bf16.msra.mxu0 %v1325
    %1761 = vmatprep.mubr.bf16.mxu0 %v447
    %1762 = vmatmul.mubr.bf16.gmra.mxu0 %v446
    %v1763 = vpop.f32.mrf.mxu0
    %v1764 = vadd.f32 %v654, %v1763
    %v1765 = vpop.f32.mrf.mxu0
    %v1766 = vadd.f32 %v658, %v1765
    %v1767 = vpop.f32.mrf.mxu0
    %v1768 = vadd.f32 %v654, %v1767
    %v1769 = vpop.f32.mrf.mxu0
    %v1770 = vadd.f32 %v658, %v1769
    %1771 = vdwg.mxu0
    %1772 = vmatprep.subr.bf16.mxu0 %v1446
    %1773 = vmatpush1.bf16.msra.mxu0 %v1445
    %1774 = vmatprep.subr.bf16.mxu0 %v1438
    %1775 = vmatpush1.bf16.msra.mxu0 %v1437
    %1776 = vmatprep.subr.bf16.mxu0 %v1430
    %1777 = vmatpush1.bf16.msra.mxu0 %v1429
    %1778 = vmatprep.subr.bf16.mxu0 %v1422
    %1779 = vmatpush1.bf16.msra.mxu0 %v1421
    %1780 = vmatprep.subr.bf16.mxu0 %v1414
    %1781 = vmatpush1.bf16.msra.mxu0 %v1413
    %1782 = vmatprep.subr.bf16.mxu0 %v1406
    %1783 = vmatpush1.bf16.msra.mxu0 %v1405
    %1784 = vmatprep.subr.bf16.mxu0 %v1398
    %1785 = vmatpush1.bf16.msra.mxu0 %v1397
    %1786 = vmatprep.subr.bf16.mxu0 %v1390
    %1787 = vmatpush1.bf16.msra.mxu0 %v1389
    %1788 = vmatprep.subr.bf16.mxu0 0
    %1789 = vmatpush2.bf16.msra.mxu0 0
    %1790 = vmatprep.subr.bf16.mxu0 0
    %1791 = vmatpush2.bf16.msra.mxu0 0
    %1792 = vmatprep.subr.bf16.mxu0 0
    %1793 = vmatpush2.bf16.msra.mxu0 0
    %1794 = vmatprep.subr.bf16.mxu0 0
    %1795 = vmatpush2.bf16.msra.mxu0 0
    %1796 = vmatprep.subr.bf16.mxu0 0
    %1797 = vmatpush2.bf16.msra.mxu0 0
    %1798 = vmatprep.subr.bf16.mxu0 0
    %1799 = vmatpush2.bf16.msra.mxu0 0
    %1800 = vmatprep.subr.bf16.mxu0 0
    %1801 = vmatpush2.bf16.msra.mxu0 0
    %1802 = vmatprep.subr.bf16.mxu0 0
    %1803 = vmatpush2.bf16.msra.mxu0 0
    %1804 = vmatprep.mubr.bf16.mxu0 0
    %1805 = vmatmul.mubr.bf16.gmra.mxu0 %v448
    %v1806 = vpop.f32.mrf.mxu0
    %v1807 = vadd.f32 %v1764, %v1806
    %v1808 = vpop.f32.mrf.mxu0
    %v1809 = vadd.f32 %v1766, %v1808
    %v1810 = vpop.f32.mrf.mxu0
    %v1811 = vadd.f32 %v1768, %v1810
    %v1812 = vpop.f32.mrf.mxu0
    %v1813 = vadd.f32 %v1770, %v1812
    %1814 = vdwg.mxu0
    %1815 = vmatprep.subr.bf16.mxu0 %v1320
    %1816 = vmatpush1.bf16.msra.mxu0 %v1319
    %1817 = vmatprep.subr.bf16.mxu0 %v1312
    %1818 = vmatpush1.bf16.msra.mxu0 %v1311
    %1819 = vmatprep.subr.bf16.mxu0 %v1304
    %1820 = vmatpush1.bf16.msra.mxu0 %v1303
    %1821 = vmatprep.subr.bf16.mxu0 %v1296
    %1822 = vmatpush1.bf16.msra.mxu0 %v1295
    %1823 = vmatprep.subr.bf16.mxu0 %v1288
    %1824 = vmatpush1.bf16.msra.mxu0 %v1287
    %1825 = vmatprep.subr.bf16.mxu0 %v1280
    %1826 = vmatpush1.bf16.msra.mxu0 %v1279
    %1827 = vmatprep.subr.bf16.mxu0 %v1272
    %1828 = vmatpush1.bf16.msra.mxu0 %v1271
    %1829 = vmatprep.subr.bf16.mxu0 %v1264
    %1830 = vmatpush1.bf16.msra.mxu0 %v1263
    %1831 = vmatprep.subr.bf16.mxu0 %v1384
    %1832 = vmatpush2.bf16.msra.mxu0 %v1383
    %1833 = vmatprep.subr.bf16.mxu0 %v1376
    %1834 = vmatpush2.bf16.msra.mxu0 %v1375
    %1835 = vmatprep.subr.bf16.mxu0 %v1368
    %1836 = vmatpush2.bf16.msra.mxu0 %v1367
    %1837 = vmatprep.subr.bf16.mxu0 %v1360
    %1838 = vmatpush2.bf16.msra.mxu0 %v1359
    %1839 = vmatprep.subr.bf16.mxu0 %v1352
    %1840 = vmatpush2.bf16.msra.mxu0 %v1351
    %1841 = vmatprep.subr.bf16.mxu0 %v1344
    %1842 = vmatpush2.bf16.msra.mxu0 %v1343
    %1843 = vmatprep.subr.bf16.mxu0 %v1336
    %1844 = vmatpush2.bf16.msra.mxu0 %v1335
    %1845 = vmatprep.subr.bf16.mxu0 %v1328
    %1846 = vmatpush2.bf16.msra.mxu0 %v1327
    %1847 = vmatprep.mubr.bf16.mxu0 %v447
    %1848 = vmatmul.mubr.bf16.gmra.mxu0 %v446
    %v1849 = vpop.f32.mrf.mxu0
    %v1850 = vadd.f32 %v662, %v1849
    %v1851 = vpop.f32.mrf.mxu0
    %v1852 = vadd.f32 %v666, %v1851
    %v1853 = vpop.f32.mrf.mxu0
    %v1854 = vadd.f32 %v662, %v1853
    %v1855 = vpop.f32.mrf.mxu0
    %v1856 = vadd.f32 %v666, %v1855
    %1857 = vdwg.mxu0
    %1858 = vmatprep.subr.bf16.mxu0 %v1448
    %1859 = vmatpush1.bf16.msra.mxu0 %v1447
    %1860 = vmatprep.subr.bf16.mxu0 %v1440
    %1861 = vmatpush1.bf16.msra.mxu0 %v1439
    %1862 = vmatprep.subr.bf16.mxu0 %v1432
    %1863 = vmatpush1.bf16.msra.mxu0 %v1431
    %1864 = vmatprep.subr.bf16.mxu0 %v1424
    %1865 = vmatpush1.bf16.msra.mxu0 %v1423
    %1866 = vmatprep.subr.bf16.mxu0 %v1416
    %1867 = vmatpush1.bf16.msra.mxu0 %v1415
    %1868 = vmatprep.subr.bf16.mxu0 %v1408
    %1869 = vmatpush1.bf16.msra.mxu0 %v1407
    %1870 = vmatprep.subr.bf16.mxu0 %v1400
    %1871 = vmatpush1.bf16.msra.mxu0 %v1399
    %1872 = vmatprep.subr.bf16.mxu0 %v1392
    %1873 = vmatpush1.bf16.msra.mxu0 %v1391
    %1874 = vmatprep.subr.bf16.mxu0 0
    %1875 = vmatpush2.bf16.msra.mxu0 0
    %1876 = vmatprep.subr.bf16.mxu0 0
    %1877 = vmatpush2.bf16.msra.mxu0 0
    %1878 = vmatprep.subr.bf16.mxu0 0
    %1879 = vmatpush2.bf16.msra.mxu0 0
    %1880 = vmatprep.subr.bf16.mxu0 0
    %1881 = vmatpush2.bf16.msra.mxu0 0
    %1882 = vmatprep.subr.bf16.mxu0 0
    %1883 = vmatpush2.bf16.msra.mxu0 0
    %1884 = vmatprep.subr.bf16.mxu0 0
    %1885 = vmatpush2.bf16.msra.mxu0 0
    %1886 = vmatprep.subr.bf16.mxu0 0
    %1887 = vmatpush2.bf16.msra.mxu0 0
    %1888 = vmatprep.subr.bf16.mxu0 0
    %1889 = vmatpush2.bf16.msra.mxu0 0
    %1890 = vmatprep.mubr.bf16.mxu0 0
    %1891 = vmatmul.mubr.bf16.gmra.mxu0 %v448
    %v1892 = vpop.f32.mrf.mxu0
    %v1893 = vadd.f32 %v1850, %v1892
    %v1894 = vpop.f32.mrf.mxu0
    %v1895 = vadd.f32 %v1852, %v1894
    %v1896 = vpop.f32.mrf.mxu0
    %v1897 = vadd.f32 %v1854, %v1896
    %v1898 = vpop.f32.mrf.mxu0
    %v1899 = vadd.f32 %v1856, %v1898
    %1900 = vdwg.mxu0
    %1901 = vmatprep.subr.bf16.mxu0 %v1322
    %1902 = vmatpush1.bf16.msra.mxu0 %v1321
    %1903 = vmatprep.subr.bf16.mxu0 %v1314
    %1904 = vmatpush1.bf16.msra.mxu0 %v1313
    %1905 = vmatprep.subr.bf16.mxu0 %v1306
    %1906 = vmatpush1.bf16.msra.mxu0 %v1305
    %1907 = vmatprep.subr.bf16.mxu0 %v1298
    %1908 = vmatpush1.bf16.msra.mxu0 %v1297
    %1909 = vmatprep.subr.bf16.mxu0 %v1290
    %1910 = vmatpush1.bf16.msra.mxu0 %v1289
    %1911 = vmatprep.subr.bf16.mxu0 %v1282
    %1912 = vmatpush1.bf16.msra.mxu0 %v1281
    %1913 = vmatprep.subr.bf16.mxu0 %v1274
    %1914 = vmatpush1.bf16.msra.mxu0 %v1273
    %1915 = vmatprep.subr.bf16.mxu0 %v1266
    %1916 = vmatpush1.bf16.msra.mxu0 %v1265
    %1917 = vmatprep.subr.bf16.mxu0 %v1386
    %1918 = vmatpush2.bf16.msra.mxu0 %v1385
    %1919 = vmatprep.subr.bf16.mxu0 %v1378
    %1920 = vmatpush2.bf16.msra.mxu0 %v1377
    %1921 = vmatprep.subr.bf16.mxu0 %v1370
    %1922 = vmatpush2.bf16.msra.mxu0 %v1369
    %1923 = vmatprep.subr.bf16.mxu0 %v1362
    %1924 = vmatpush2.bf16.msra.mxu0 %v1361
    %1925 = vmatprep.subr.bf16.mxu0 %v1354
    %1926 = vmatpush2.bf16.msra.mxu0 %v1353
    %1927 = vmatprep.subr.bf16.mxu0 %v1346
    %1928 = vmatpush2.bf16.msra.mxu0 %v1345
    %1929 = vmatprep.subr.bf16.mxu0 %v1338
    %1930 = vmatpush2.bf16.msra.mxu0 %v1337
    %1931 = vmatprep.subr.bf16.mxu0 %v1330
    %1932 = vmatpush2.bf16.msra.mxu0 %v1329
    %1933 = vmatprep.mubr.bf16.mxu0 %v447
    %1934 = vmatmul.mubr.bf16.gmra.mxu0 %v446
    %v1935 = vpop.f32.mrf.mxu0
    %v1936 = vadd.f32 %v670, %v1935
    %v1937 = vpop.f32.mrf.mxu0
    %v1938 = vadd.f32 %v674, %v1937
    %v1939 = vpop.f32.mrf.mxu0
    %v1940 = vadd.f32 %v670, %v1939
    %v1941 = vpop.f32.mrf.mxu0
    %v1942 = vadd.f32 %v674, %v1941
    %1943 = vdwg.mxu0
    %1944 = vmatprep.subr.bf16.mxu0 %v1450
    %1945 = vmatpush1.bf16.msra.mxu0 %v1449
    %1946 = vmatprep.subr.bf16.mxu0 %v1442
    %1947 = vmatpush1.bf16.msra.mxu0 %v1441
    %1948 = vmatprep.subr.bf16.mxu0 %v1434
    %1949 = vmatpush1.bf16.msra.mxu0 %v1433
    %1950 = vmatprep.subr.bf16.mxu0 %v1426
    %1951 = vmatpush1.bf16.msra.mxu0 %v1425
    %1952 = vmatprep.subr.bf16.mxu0 %v1418
    %1953 = vmatpush1.bf16.msra.mxu0 %v1417
    %1954 = vmatprep.subr.bf16.mxu0 %v1410
    %1955 = vmatpush1.bf16.msra.mxu0 %v1409
    %1956 = vmatprep.subr.bf16.mxu0 %v1402
    %1957 = vmatpush1.bf16.msra.mxu0 %v1401
    %1958 = vmatprep.subr.bf16.mxu0 %v1394
    %1959 = vmatpush1.bf16.msra.mxu0 %v1393
    %1960 = vmatprep.subr.bf16.mxu0 0
    %1961 = vmatpush2.bf16.msra.mxu0 0
    %1962 = vmatprep.subr.bf16.mxu0 0
    %1963 = vmatpush2.bf16.msra.mxu0 0
    %1964 = vmatprep.subr.bf16.mxu0 0
    %1965 = vmatpush2.bf16.msra.mxu0 0
    %1966 = vmatprep.subr.bf16.mxu0 0
    %1967 = vmatpush2.bf16.msra.mxu0 0
    %1968 = vmatprep.subr.bf16.mxu0 0
    %1969 = vmatpush2.bf16.msra.mxu0 0
    %1970 = vmatprep.subr.bf16.mxu0 0
    %1971 = vmatpush2.bf16.msra.mxu0 0
    %1972 = vmatprep.subr.bf16.mxu0 0
    %1973 = vmatpush2.bf16.msra.mxu0 0
    %1974 = vmatprep.subr.bf16.mxu0 0
    %1975 = vmatpush2.bf16.msra.mxu0 0
    %1976 = vmatprep.mubr.bf16.mxu0 0
    %1977 = vmatmul.mubr.bf16.gmra.mxu0 %v448
    %v1978 = vpop.f32.mrf.mxu0
    %v1979 = vadd.f32 %v1936, %v1978
    %v1980 = vpop.f32.mrf.mxu0
    %v1981 = vadd.f32 %v1938, %v1980
    %v1982 = vpop.f32.mrf.mxu0
    %v1983 = vadd.f32 %v1940, %v1982
    %v1984 = vpop.f32.mrf.mxu0
    %v1985 = vadd.f32 %v1942, %v1984
    %1986 = vdwg.mxu0
    %v1987 = vmax.f32 %v1721, 0.0
    %v1988 = vmax.f32 %v1723, 0.0
    %v1989 = vmax.f32 %v1807, 0.0
    %v1990 = vmax.f32 %v1809, 0.0
    %v1991 = vmax.f32 %v1893, 0.0
    %v1992 = vmax.f32 %v1895, 0.0
    %v1993 = vmax.f32 %v1979, 0.0
    %v1994 = vmax.f32 %v1981, 0.0
    %v1995 = vmax.f32 %v1725, 0.0
    %v1996 = vmax.f32 %v1727, 0.0
    %v1997 = vmax.f32 %v1811, 0.0
    %v1998 = vmax.f32 %v1813, 0.0
    %v1999 = vmax.f32 %v1897, 0.0
    %v2000 = vmax.f32 %v1899, 0.0
    %v2001 = vmax.f32 %v1983, 0.0
    %v2002 = vmax.f32 %v1985, 0.0
    %v2003 = vpack.c.bf16 %v1995, %v1987
    %v2004 = vpack.c.bf16 %v1996, %v1988
    %v2005 = vpack.c.bf16 %v1997, %v1989
    %v2006 = vpack.c.bf16 %v1998, %v1990
    %v2007 = vpack.c.bf16 %v1999, %v1991
    %v2008 = vpack.c.bf16 %v2000, %v1992
    %v2009 = vpack.c.bf16 %v2001, %v1993
    %v2010 = vpack.c.bf16 %v2002, %v1994
    %v2011 = vld [vmem:[#allocation7] sm:$0xff]
    %v2012 = vld [vmem:[#allocation7 + $0x8] sm:$0xff]
    %v2013 = vld [vmem:[#allocation7 + $0x10] sm:$0xff]
    %v2014 = vld [vmem:[#allocation7 + $0x18] sm:$0xff]
    %v2015 = vld [vmem:[#allocation7 + $0x20] sm:$0xff]
    %v2016 = vld [vmem:[#allocation7 + $0x28] sm:$0xff]
    %v2017 = vld [vmem:[#allocation7 + $0x30] sm:$0xff]
    %v2018 = vld [vmem:[#allocation7 + $0x38] sm:$0xff]
    %v2019 = vld [vmem:[#allocation7 + $0x40] sm:$0xff]
    %v2020 = vld [vmem:[#allocation7 + $0x48] sm:$0xff]
    %v2021 = vld [vmem:[#allocation7 + $0x50] sm:$0xff]
    %v2022 = vld [vmem:[#allocation7 + $0x58] sm:$0xff]
    %v2023 = vld [vmem:[#allocation7 + $0x60] sm:$0xff]
    %v2024 = vld [vmem:[#allocation7 + $0x68] sm:$0xff]
    %v2025 = vld [vmem:[#allocation7 + $0x70] sm:$0xff]
    %v2026 = vld [vmem:[#allocation7 + $0x78] sm:$0xff]
    %v2027 = vld [vmem:[#allocation7 + $0x80] sm:$0xff]
    %v2028 = vld [vmem:[#allocation7 + $0x88] sm:$0xff]
    %v2029 = vld [vmem:[#allocation7 + $0x90] sm:$0xff]
    %v2030 = vld [vmem:[#allocation7 + $0x98] sm:$0xff]
    %v2031 = vld [vmem:[#allocation7 + $0xa0] sm:$0xff]
    %v2032 = vld [vmem:[#allocation7 + $0xa8] sm:$0xff]
    %v2033 = vld [vmem:[#allocation7 + $0xb0] sm:$0xff]
    %v2034 = vld [vmem:[#allocation7 + $0xb8] sm:$0xff]
    %v2035 = vld [vmem:[#allocation7 + $0xc0] sm:$0xff]
    %v2036 = vld [vmem:[#allocation7 + $0xc8] sm:$0xff]
    %v2037 = vld [vmem:[#allocation7 + $0xd0] sm:$0xff]
    %v2038 = vld [vmem:[#allocation7 + $0xd8] sm:$0xff]
    %v2039 = vld [vmem:[#allocation7 + $0xe0] sm:$0xff]
    %v2040 = vld [vmem:[#allocation7 + $0xe8] sm:$0xff]
    %v2041 = vld [vmem:[#allocation7 + $0xf0] sm:$0xff]
    %v2042 = vld [vmem:[#allocation7 + $0xf8] sm:$0xff]
    %v2043 = vld [vmem:[#allocation7 + $0x100] sm:$0xff]
    %v2044 = vld [vmem:[#allocation7 + $0x108] sm:$0xff]
    %v2045 = vld [vmem:[#allocation7 + $0x110] sm:$0xff]
    %v2046 = vld [vmem:[#allocation7 + $0x118] sm:$0xff]
    %v2047 = vld [vmem:[#allocation7 + $0x120] sm:$0xff]
    %v2048 = vld [vmem:[#allocation7 + $0x128] sm:$0xff]
    %v2049 = vld [vmem:[#allocation7 + $0x130] sm:$0xff]
    %v2050 = vld [vmem:[#allocation7 + $0x138] sm:$0xff]
    %v2051 = vld [vmem:[#allocation7 + $0x140] sm:$0xff]
    %v2052 = vld [vmem:[#allocation7 + $0x148] sm:$0xff]
    %v2053 = vld [vmem:[#allocation7 + $0x150] sm:$0xff]
    %v2054 = vld [vmem:[#allocation7 + $0x158] sm:$0xff]
    %v2055 = vld [vmem:[#allocation7 + $0x160] sm:$0xff]
    %v2056 = vld [vmem:[#allocation7 + $0x168] sm:$0xff]
    %v2057 = vld [vmem:[#allocation7 + $0x170] sm:$0xff]
    %v2058 = vld [vmem:[#allocation7 + $0x178] sm:$0xff]
    %v2059 = vld [vmem:[#allocation7 + $0x180] sm:$0xff]
    %v2060 = vld [vmem:[#allocation7 + $0x188] sm:$0xff]
    %v2061 = vld [vmem:[#allocation7 + $0x190] sm:$0xff]
    %v2062 = vld [vmem:[#allocation7 + $0x198] sm:$0xff]
    %v2063 = vld [vmem:[#allocation7 + $0x1a0] sm:$0xff]
    %v2064 = vld [vmem:[#allocation7 + $0x1a8] sm:$0xff]
    %v2065 = vld [vmem:[#allocation7 + $0x1b0] sm:$0xff]
    %v2066 = vld [vmem:[#allocation7 + $0x1b8] sm:$0xff]
    %v2067 = vld [vmem:[#allocation7 + $0x1c0] sm:$0xff]
    %v2068 = vld [vmem:[#allocation7 + $0x1c8] sm:$0xff]
    %v2069 = vld [vmem:[#allocation7 + $0x1d0] sm:$0xff]
    %v2070 = vld [vmem:[#allocation7 + $0x1d8] sm:$0xff]
    %v2071 = vld [vmem:[#allocation7 + $0x1e0] sm:$0xff]
    %v2072 = vld [vmem:[#allocation7 + $0x1e8] sm:$0xff]
    %v2073 = vld [vmem:[#allocation7 + $0x1f0] sm:$0xff]
    %v2074 = vld [vmem:[#allocation7 + $0x1f8] sm:$0xff]
    %v2075 = vld [vmem:[#allocation7 + $0x200] sm:$0xff]
    %v2076 = vld [vmem:[#allocation7 + $0x208] sm:$0xff]
    %v2077 = vld [vmem:[#allocation7 + $0x210] sm:$0xff]
    %v2078 = vld [vmem:[#allocation7 + $0x218] sm:$0xff]
    %v2079 = vld [vmem:[#allocation7 + $0x220] sm:$0xff]
    %v2080 = vld [vmem:[#allocation7 + $0x228] sm:$0xff]
    %v2081 = vld [vmem:[#allocation7 + $0x230] sm:$0xff]
    %v2082 = vld [vmem:[#allocation7 + $0x238] sm:$0xff]
    %v2083 = vld [vmem:[#allocation7 + $0x240] sm:$0xff]
    %v2084 = vld [vmem:[#allocation7 + $0x248] sm:$0xff]
    %v2085 = vld [vmem:[#allocation7 + $0x250] sm:$0xff]
    %v2086 = vld [vmem:[#allocation7 + $0x258] sm:$0xff]
    %v2087 = vld [vmem:[#allocation7 + $0x260] sm:$0xff]
    %v2088 = vld [vmem:[#allocation7 + $0x268] sm:$0xff]
    %v2089 = vld [vmem:[#allocation7 + $0x270] sm:$0xff]
    %v2090 = vld [vmem:[#allocation7 + $0x278] sm:$0xff]
    %v2091 = vld [vmem:[#allocation7 + $0x280] sm:$0xff]
    %v2092 = vld [vmem:[#allocation7 + $0x288] sm:$0xff]
    %v2093 = vld [vmem:[#allocation7 + $0x290] sm:$0xff]
    %v2094 = vld [vmem:[#allocation7 + $0x298] sm:$0xff]
    %v2095 = vld [vmem:[#allocation7 + $0x2a0] sm:$0xff]
    %v2096 = vld [vmem:[#allocation7 + $0x2a8] sm:$0xff]
    %v2097 = vld [vmem:[#allocation7 + $0x2b0] sm:$0xff]
    %v2098 = vld [vmem:[#allocation7 + $0x2b8] sm:$0xff]
    %v2099 = vld [vmem:[#allocation7 + $0x2c0] sm:$0xff]
    %v2100 = vld [vmem:[#allocation7 + $0x2c8] sm:$0xff]
    %v2101 = vld [vmem:[#allocation7 + $0x2d0] sm:$0xff]
    %v2102 = vld [vmem:[#allocation7 + $0x2d8] sm:$0xff]
    %v2103 = vld [vmem:[#allocation7 + $0x2e0] sm:$0xff]
    %v2104 = vld [vmem:[#allocation7 + $0x2e8] sm:$0xff]
    %v2105 = vld [vmem:[#allocation7 + $0x2f0] sm:$0xff]
    %v2106 = vld [vmem:[#allocation7 + $0x2f8] sm:$0xff]
    %v2107 = vld [vmem:[#allocation7 + $0x300] sm:$0xff]
    %v2108 = vld [vmem:[#allocation7 + $0x308] sm:$0xff]
    %v2109 = vld [vmem:[#allocation7 + $0x310] sm:$0xff]
    %v2110 = vld [vmem:[#allocation7 + $0x318] sm:$0xff]
    %v2111 = vld [vmem:[#allocation7 + $0x320] sm:$0xff]
    %v2112 = vld [vmem:[#allocation7 + $0x328] sm:$0xff]
    %v2113 = vld [vmem:[#allocation7 + $0x330] sm:$0xff]
    %v2114 = vld [vmem:[#allocation7 + $0x338] sm:$0xff]
    %v2115 = vld [vmem:[#allocation7 + $0x340] sm:$0xff]
    %v2116 = vld [vmem:[#allocation7 + $0x348] sm:$0xff]
    %v2117 = vld [vmem:[#allocation7 + $0x350] sm:$0xff]
    %v2118 = vld [vmem:[#allocation7 + $0x358] sm:$0xff]
    %v2119 = vld [vmem:[#allocation7 + $0x360] sm:$0xff]
    %v2120 = vld [vmem:[#allocation7 + $0x368] sm:$0xff]
    %v2121 = vld [vmem:[#allocation7 + $0x370] sm:$0xff]
    %v2122 = vld [vmem:[#allocation7 + $0x378] sm:$0xff]
    %v2123 = vld [vmem:[#allocation7 + $0x380] sm:$0xff]
    %v2124 = vld [vmem:[#allocation7 + $0x388] sm:$0xff]
    %v2125 = vld [vmem:[#allocation7 + $0x390] sm:$0xff]
    %v2126 = vld [vmem:[#allocation7 + $0x398] sm:$0xff]
    %v2127 = vld [vmem:[#allocation7 + $0x3a0] sm:$0xff]
    %v2128 = vld [vmem:[#allocation7 + $0x3a8] sm:$0xff]
    %v2129 = vld [vmem:[#allocation7 + $0x3b0] sm:$0xff]
    %v2130 = vld [vmem:[#allocation7 + $0x3b8] sm:$0xff]
    %v2131 = vld [vmem:[#allocation7 + $0x3c0] sm:$0xff]
    %v2132 = vld [vmem:[#allocation7 + $0x3c8] sm:$0xff]
    %v2133 = vld [vmem:[#allocation7 + $0x3d0] sm:$0xff]
    %v2134 = vld [vmem:[#allocation7 + $0x3d8] sm:$0xff]
    %v2135 = vld [vmem:[#allocation7 + $0x3e0] sm:$0xff]
    %v2136 = vld [vmem:[#allocation7 + $0x3e8] sm:$0xff]
    %v2137 = vld [vmem:[#allocation7 + $0x3f0] sm:$0xff]
    %v2138 = vld [vmem:[#allocation7 + $0x3f8] sm:$0xff]
    %v2139 = vld [vmem:[#allocation7 + $0x400] sm:$0xff]
    %v2140 = vld [vmem:[#allocation7 + $0x408] sm:$0xff]
    %v2141 = vld [vmem:[#allocation7 + $0x410] sm:$0xff]
    %v2142 = vld [vmem:[#allocation7 + $0x418] sm:$0xff]
    %v2143 = vld [vmem:[#allocation7 + $0x420] sm:$0xff]
    %v2144 = vld [vmem:[#allocation7 + $0x428] sm:$0xff]
    %v2145 = vld [vmem:[#allocation7 + $0x430] sm:$0xff]
    %v2146 = vld [vmem:[#allocation7 + $0x438] sm:$0xff]
    %v2147 = vld [vmem:[#allocation7 + $0x440] sm:$0xff]
    %v2148 = vld [vmem:[#allocation7 + $0x448] sm:$0xff]
    %v2149 = vld [vmem:[#allocation7 + $0x450] sm:$0xff]
    %v2150 = vld [vmem:[#allocation7 + $0x458] sm:$0xff]
    %v2151 = vld [vmem:[#allocation7 + $0x460] sm:$0xff]
    %v2152 = vld [vmem:[#allocation7 + $0x468] sm:$0xff]
    %v2153 = vld [vmem:[#allocation7 + $0x470] sm:$0xff]
    %v2154 = vld [vmem:[#allocation7 + $0x478] sm:$0xff]
    %v2155 = vld [vmem:[#allocation7 + $0x480] sm:$0xff]
    %v2156 = vld [vmem:[#allocation7 + $0x488] sm:$0xff]
    %v2157 = vld [vmem:[#allocation7 + $0x490] sm:$0xff]
    %v2158 = vld [vmem:[#allocation7 + $0x498] sm:$0xff]
    %v2159 = vld [vmem:[#allocation7 + $0x4a0] sm:$0xff]
    %v2160 = vld [vmem:[#allocation7 + $0x4a8] sm:$0xff]
    %v2161 = vld [vmem:[#allocation7 + $0x4b0] sm:$0xff]
    %v2162 = vld [vmem:[#allocation7 + $0x4b8] sm:$0xff]
    %v2163 = vld [vmem:[#allocation7 + $0x4c0] sm:$0xff]
    %v2164 = vld [vmem:[#allocation7 + $0x4c8] sm:$0xff]
    %v2165 = vld [vmem:[#allocation7 + $0x4d0] sm:$0xff]
    %v2166 = vld [vmem:[#allocation7 + $0x4d8] sm:$0xff]
    %v2167 = vld [vmem:[#allocation7 + $0x4e0] sm:$0xff]
    %v2168 = vld [vmem:[#allocation7 + $0x4e8] sm:$0xff]
    %v2169 = vld [vmem:[#allocation7 + $0x4f0] sm:$0xff]
    %v2170 = vld [vmem:[#allocation7 + $0x4f8] sm:$0xff]
    %v2171 = vld [vmem:[#allocation7 + $0x500] sm:$0xff]
    %v2172 = vld [vmem:[#allocation7 + $0x508] sm:$0xff]
    %v2173 = vld [vmem:[#allocation7 + $0x510] sm:$0xff]
    %v2174 = vld [vmem:[#allocation7 + $0x518] sm:$0xff]
    %v2175 = vld [vmem:[#allocation7 + $0x520] sm:$0xff]
    %v2176 = vld [vmem:[#allocation7 + $0x528] sm:$0xff]
    %v2177 = vld [vmem:[#allocation7 + $0x530] sm:$0xff]
    %v2178 = vld [vmem:[#allocation7 + $0x538] sm:$0xff]
    %v2179 = vld [vmem:[#allocation7 + $0x540] sm:$0xff]
    %v2180 = vld [vmem:[#allocation7 + $0x548] sm:$0xff]
    %v2181 = vld [vmem:[#allocation7 + $0x550] sm:$0xff]
    %v2182 = vld [vmem:[#allocation7 + $0x558] sm:$0xff]
    %v2183 = vld [vmem:[#allocation7 + $0x560] sm:$0xff]
    %v2184 = vld [vmem:[#allocation7 + $0x568] sm:$0xff]
    %v2185 = vld [vmem:[#allocation7 + $0x570] sm:$0xff]
    %v2186 = vld [vmem:[#allocation7 + $0x578] sm:$0xff]
    %v2187 = vld [vmem:[#allocation7 + $0x580] sm:$0xff]
    %v2188 = vld [vmem:[#allocation7 + $0x588] sm:$0xff]
    %v2189 = vld [vmem:[#allocation7 + $0x590] sm:$0xff]
    %v2190 = vld [vmem:[#allocation7 + $0x598] sm:$0xff]
    %v2191 = vld [vmem:[#allocation7 + $0x5a0] sm:$0xff]
    %v2192 = vld [vmem:[#allocation7 + $0x5a8] sm:$0xff]
    %v2193 = vld [vmem:[#allocation7 + $0x5b0] sm:$0xff]
    %v2194 = vld [vmem:[#allocation7 + $0x5b8] sm:$0xff]
    %v2195 = vld [vmem:[#allocation7 + $0x5c0] sm:$0xff]
    %v2196 = vld [vmem:[#allocation7 + $0x5c8] sm:$0xff]
    %v2197 = vld [vmem:[#allocation7 + $0x5d0] sm:$0xff]
    %v2198 = vld [vmem:[#allocation7 + $0x5d8] sm:$0xff]
    %v2199 = vld [vmem:[#allocation7 + $0x5e0] sm:$0xff]
    %v2200 = vld [vmem:[#allocation7 + $0x5e8] sm:$0xff]
    %v2201 = vld [vmem:[#allocation7 + $0x5f0] sm:$0xff]
    %v2202 = vld [vmem:[#allocation7 + $0x5f8] sm:$0xff]
    %v2203 = vld [vmem:[#allocation7 + $0x600] sm:$0xff]
    %v2204 = vld [vmem:[#allocation7 + $0x608] sm:$0xff]
    %v2205 = vld [vmem:[#allocation7 + $0x610] sm:$0xff]
    %v2206 = vld [vmem:[#allocation7 + $0x618] sm:$0xff]
    %v2207 = vld [vmem:[#allocation7 + $0x620] sm:$0xff]
    %v2208 = vld [vmem:[#allocation7 + $0x628] sm:$0xff]
    %v2209 = vld [vmem:[#allocation7 + $0x630] sm:$0xff]
    %v2210 = vld [vmem:[#allocation7 + $0x638] sm:$0xff]
    %v2211 = vld [vmem:[#allocation7 + $0x640] sm:$0xff]
    %v2212 = vld [vmem:[#allocation7 + $0x648] sm:$0xff]
    %v2213 = vld [vmem:[#allocation7 + $0x650] sm:$0xff]
    %v2214 = vld [vmem:[#allocation7 + $0x658] sm:$0xff]
    %v2215 = vld [vmem:[#allocation7 + $0x660] sm:$0xff]
    %v2216 = vld [vmem:[#allocation7 + $0x668] sm:$0xff]
    %v2217 = vld [vmem:[#allocation7 + $0x670] sm:$0xff]
    %v2218 = vld [vmem:[#allocation7 + $0x678] sm:$0xff]
    %v2219 = vld [vmem:[#allocation7 + $0x680] sm:$0xff]
    %v2220 = vld [vmem:[#allocation7 + $0x688] sm:$0xff]
    %v2221 = vld [vmem:[#allocation7 + $0x690] sm:$0xff]
    %v2222 = vld [vmem:[#allocation7 + $0x698] sm:$0xff]
    %v2223 = vld [vmem:[#allocation7 + $0x6a0] sm:$0xff]
    %v2224 = vld [vmem:[#allocation7 + $0x6a8] sm:$0xff]
    %v2225 = vld [vmem:[#allocation7 + $0x6b0] sm:$0xff]
    %v2226 = vld [vmem:[#allocation7 + $0x6b8] sm:$0xff]
    %v2227 = vld [vmem:[#allocation7 + $0x6c0] sm:$0xff]
    %v2228 = vld [vmem:[#allocation7 + $0x6c8] sm:$0xff]
    %v2229 = vld [vmem:[#allocation7 + $0x6d0] sm:$0xff]
    %v2230 = vld [vmem:[#allocation7 + $0x6d8] sm:$0xff]
    %v2231 = vld [vmem:[#allocation7 + $0x6e0] sm:$0xff]
    %v2232 = vld [vmem:[#allocation7 + $0x6e8] sm:$0xff]
    %v2233 = vld [vmem:[#allocation7 + $0x6f0] sm:$0xff]
    %v2234 = vld [vmem:[#allocation7 + $0x6f8] sm:$0xff]
    %v2235 = vld [vmem:[#allocation7 + $0x700] sm:$0xff]
    %v2236 = vld [vmem:[#allocation7 + $0x708] sm:$0xff]
    %v2237 = vld [vmem:[#allocation7 + $0x710] sm:$0xff]
    %v2238 = vld [vmem:[#allocation7 + $0x718] sm:$0xff]
    %v2239 = vld [vmem:[#allocation7 + $0x720] sm:$0xff]
    %v2240 = vld [vmem:[#allocation7 + $0x728] sm:$0xff]
    %v2241 = vld [vmem:[#allocation7 + $0x730] sm:$0xff]
    %v2242 = vld [vmem:[#allocation7 + $0x738] sm:$0xff]
    %v2243 = vld [vmem:[#allocation7 + $0x740] sm:$0xff]
    %v2244 = vld [vmem:[#allocation7 + $0x748] sm:$0xff]
    %v2245 = vld [vmem:[#allocation7 + $0x750] sm:$0xff]
    %v2246 = vld [vmem:[#allocation7 + $0x758] sm:$0xff]
    %v2247 = vld [vmem:[#allocation7 + $0x760] sm:$0xff]
    %v2248 = vld [vmem:[#allocation7 + $0x768] sm:$0xff]
    %v2249 = vld [vmem:[#allocation7 + $0x770] sm:$0xff]
    %v2250 = vld [vmem:[#allocation7 + $0x778] sm:$0xff]
    %v2251 = vld [vmem:[#allocation7 + $0x780] sm:$0xff]
    %v2252 = vld [vmem:[#allocation7 + $0x788] sm:$0xff]
    %v2253 = vld [vmem:[#allocation7 + $0x790] sm:$0xff]
    %v2254 = vld [vmem:[#allocation7 + $0x798] sm:$0xff]
    %v2255 = vld [vmem:[#allocation7 + $0x7a0] sm:$0xff]
    %v2256 = vld [vmem:[#allocation7 + $0x7a8] sm:$0xff]
    %v2257 = vld [vmem:[#allocation7 + $0x7b0] sm:$0xff]
    %v2258 = vld [vmem:[#allocation7 + $0x7b8] sm:$0xff]
    %v2259 = vld [vmem:[#allocation7 + $0x7c0] sm:$0xff]
    %v2260 = vld [vmem:[#allocation7 + $0x7c8] sm:$0xff]
    %v2261 = vld [vmem:[#allocation7 + $0x7d0] sm:$0xff]
    %v2262 = vld [vmem:[#allocation7 + $0x7d8] sm:$0xff]
    %v2263 = vld [vmem:[#allocation7 + $0x7e0] sm:$0xff]
    %v2264 = vld [vmem:[#allocation7 + $0x7e8] sm:$0xff]
    %v2265 = vld [vmem:[#allocation7 + $0x7f0] sm:$0xff]
    %v2266 = vld [vmem:[#allocation7 + $0x7f8] sm:$0xff]
    %v2267 = vld [vmem:[%s5] sm:$0xf]
    %v2269 = vlaneseq
    %v2270 = vshrl.u32 %v2269, 7
    %v2271 = vsub.s32 0, %v2270
    %v2272 = vrot.slane %v2267, %v2271
    %v2273 = vlaneseq
    %v2274 = vshrl.u32 %v2273, 7
    %v2275 = vsub.s32 1, %v2274
    %v2276 = vrot.slane %v2267, %v2275
    %v2277 = vlaneseq
    %v2278 = vshrl.u32 %v2277, 7
    %v2279 = vsub.s32 2, %v2278
    %v2280 = vrot.slane %v2267, %v2279
    %v2281 = vlaneseq
    %v2282 = vshrl.u32 %v2281, 7
    %v2283 = vsub.s32 3, %v2282
    %v2284 = vrot.slane %v2267, %v2283
    %v2545 = vunpack.c.l.b16 %v2011
    %v2546 = vunpack.c.h.b16 %v2011
    %v2547 = vunpack.c.l.b16 %v2012
    %v2548 = vunpack.c.h.b16 %v2012
    %v2549 = vunpack.c.l.b16 %v2013
    %v2550 = vunpack.c.h.b16 %v2013
    %v2551 = vunpack.c.l.b16 %v2014
    %v2552 = vunpack.c.h.b16 %v2014
    %v2553 = vunpack.c.l.b16 %v2015
    %v2554 = vunpack.c.h.b16 %v2015
    %v2555 = vunpack.c.l.b16 %v2016
    %v2556 = vunpack.c.h.b16 %v2016
    %v2557 = vunpack.c.l.b16 %v2017
    %v2558 = vunpack.c.h.b16 %v2017
    %v2559 = vunpack.c.l.b16 %v2018
    %v2560 = vunpack.c.h.b16 %v2018
    %v2561 = vunpack.c.l.b16 %v2019
    %v2562 = vunpack.c.h.b16 %v2019
    %v2563 = vunpack.c.l.b16 %v2020
    %v2564 = vunpack.c.h.b16 %v2020
    %v2565 = vunpack.c.l.b16 %v2021
    %v2566 = vunpack.c.h.b16 %v2021
    %v2567 = vunpack.c.l.b16 %v2022
    %v2568 = vunpack.c.h.b16 %v2022
    %v2569 = vunpack.c.l.b16 %v2023
    %v2570 = vunpack.c.h.b16 %v2023
    %v2571 = vunpack.c.l.b16 %v2024
    %v2572 = vunpack.c.h.b16 %v2024
    %v2573 = vunpack.c.l.b16 %v2025
    %v2574 = vunpack.c.h.b16 %v2025
    %v2575 = vunpack.c.l.b16 %v2026
    %v2576 = vunpack.c.h.b16 %v2026
    %v2577 = vunpack.c.l.b16 %v2027
    %v2578 = vunpack.c.h.b16 %v2027
    %v2579 = vunpack.c.l.b16 %v2028
    %v2580 = vunpack.c.h.b16 %v2028
    %v2581 = vunpack.c.l.b16 %v2029
    %v2582 = vunpack.c.h.b16 %v2029
    %v2583 = vunpack.c.l.b16 %v2030
    %v2584 = vunpack.c.h.b16 %v2030
    %v2585 = vunpack.c.l.b16 %v2031
    %v2586 = vunpack.c.h.b16 %v2031
    %v2587 = vunpack.c.l.b16 %v2032
    %v2588 = vunpack.c.h.b16 %v2032
    %v2589 = vunpack.c.l.b16 %v2033
    %v2590 = vunpack.c.h.b16 %v2033
    %v2591 = vunpack.c.l.b16 %v2034
    %v2592 = vunpack.c.h.b16 %v2034
    %v2593 = vunpack.c.l.b16 %v2035
    %v2594 = vunpack.c.h.b16 %v2035
    %v2595 = vunpack.c.l.b16 %v2036
    %v2596 = vunpack.c.h.b16 %v2036
    %v2597 = vunpack.c.l.b16 %v2037
    %v2598 = vunpack.c.h.b16 %v2037
    %v2599 = vunpack.c.l.b16 %v2038
    %v2600 = vunpack.c.h.b16 %v2038
    %v2601 = vunpack.c.l.b16 %v2039
    %v2602 = vunpack.c.h.b16 %v2039
    %v2603 = vunpack.c.l.b16 %v2040
    %v2604 = vunpack.c.h.b16 %v2040
    %v2605 = vunpack.c.l.b16 %v2041
    %v2606 = vunpack.c.h.b16 %v2041
    %v2607 = vunpack.c.l.b16 %v2042
    %v2608 = vunpack.c.h.b16 %v2042
    %v2609 = vunpack.c.l.b16 %v2043
    %v2610 = vunpack.c.h.b16 %v2043
    %v2611 = vunpack.c.l.b16 %v2044
    %v2612 = vunpack.c.h.b16 %v2044
    %v2613 = vunpack.c.l.b16 %v2045
    %v2614 = vunpack.c.h.b16 %v2045
    %v2615 = vunpack.c.l.b16 %v2046
    %v2616 = vunpack.c.h.b16 %v2046
    %v2617 = vunpack.c.l.b16 %v2047
    %v2618 = vunpack.c.h.b16 %v2047
    %v2619 = vunpack.c.l.b16 %v2048
    %v2620 = vunpack.c.h.b16 %v2048
    %v2621 = vunpack.c.l.b16 %v2049
    %v2622 = vunpack.c.h.b16 %v2049
    %v2623 = vunpack.c.l.b16 %v2050
    %v2624 = vunpack.c.h.b16 %v2050
    %v2625 = vunpack.c.l.b16 %v2051
    %v2626 = vunpack.c.h.b16 %v2051
    %v2627 = vunpack.c.l.b16 %v2052
    %v2628 = vunpack.c.h.b16 %v2052
    %v2629 = vunpack.c.l.b16 %v2053
    %v2630 = vunpack.c.h.b16 %v2053
    %v2631 = vunpack.c.l.b16 %v2054
    %v2632 = vunpack.c.h.b16 %v2054
    %v2633 = vunpack.c.l.b16 %v2055
    %v2634 = vunpack.c.h.b16 %v2055
    %v2635 = vunpack.c.l.b16 %v2056
    %v2636 = vunpack.c.h.b16 %v2056
    %v2637 = vunpack.c.l.b16 %v2057
    %v2638 = vunpack.c.h.b16 %v2057
    %v2639 = vunpack.c.l.b16 %v2058
    %v2640 = vunpack.c.h.b16 %v2058
    %v2641 = vunpack.c.l.b16 %v2059
    %v2642 = vunpack.c.h.b16 %v2059
    %v2643 = vunpack.c.l.b16 %v2060
    %v2644 = vunpack.c.h.b16 %v2060
    %v2645 = vunpack.c.l.b16 %v2061
    %v2646 = vunpack.c.h.b16 %v2061
    %v2647 = vunpack.c.l.b16 %v2062
    %v2648 = vunpack.c.h.b16 %v2062
    %v2649 = vunpack.c.l.b16 %v2063
    %v2650 = vunpack.c.h.b16 %v2063
    %v2651 = vunpack.c.l.b16 %v2064
    %v2652 = vunpack.c.h.b16 %v2064
    %v2653 = vunpack.c.l.b16 %v2065
    %v2654 = vunpack.c.h.b16 %v2065
    %v2655 = vunpack.c.l.b16 %v2066
    %v2656 = vunpack.c.h.b16 %v2066
    %v2657 = vunpack.c.l.b16 %v2067
    %v2658 = vunpack.c.h.b16 %v2067
    %v2659 = vunpack.c.l.b16 %v2068
    %v2660 = vunpack.c.h.b16 %v2068
    %v2661 = vunpack.c.l.b16 %v2069
    %v2662 = vunpack.c.h.b16 %v2069
    %v2663 = vunpack.c.l.b16 %v2070
    %v2664 = vunpack.c.h.b16 %v2070
    %v2665 = vunpack.c.l.b16 %v2071
    %v2666 = vunpack.c.h.b16 %v2071
    %v2667 = vunpack.c.l.b16 %v2072
    %v2668 = vunpack.c.h.b16 %v2072
    %v2669 = vunpack.c.l.b16 %v2073
    %v2670 = vunpack.c.h.b16 %v2073
    %v2671 = vunpack.c.l.b16 %v2074
    %v2672 = vunpack.c.h.b16 %v2074
    %v2673 = vunpack.c.l.b16 %v2075
    %v2674 = vunpack.c.h.b16 %v2075
    %v2675 = vunpack.c.l.b16 %v2076
    %v2676 = vunpack.c.h.b16 %v2076
    %v2677 = vunpack.c.l.b16 %v2077
    %v2678 = vunpack.c.h.b16 %v2077
    %v2679 = vunpack.c.l.b16 %v2078
    %v2680 = vunpack.c.h.b16 %v2078
    %v2681 = vunpack.c.l.b16 %v2079
    %v2682 = vunpack.c.h.b16 %v2079
    %v2683 = vunpack.c.l.b16 %v2080
    %v2684 = vunpack.c.h.b16 %v2080
    %v2685 = vunpack.c.l.b16 %v2081
    %v2686 = vunpack.c.h.b16 %v2081
    %v2687 = vunpack.c.l.b16 %v2082
    %v2688 = vunpack.c.h.b16 %v2082
    %v2689 = vunpack.c.l.b16 %v2083
    %v2690 = vunpack.c.h.b16 %v2083
    %v2691 = vunpack.c.l.b16 %v2084
    %v2692 = vunpack.c.h.b16 %v2084
    %v2693 = vunpack.c.l.b16 %v2085
    %v2694 = vunpack.c.h.b16 %v2085
    %v2695 = vunpack.c.l.b16 %v2086
    %v2696 = vunpack.c.h.b16 %v2086
    %v2697 = vunpack.c.l.b16 %v2087
    %v2698 = vunpack.c.h.b16 %v2087
    %v2699 = vunpack.c.l.b16 %v2088
    %v2700 = vunpack.c.h.b16 %v2088
    %v2701 = vunpack.c.l.b16 %v2089
    %v2702 = vunpack.c.h.b16 %v2089
    %v2703 = vunpack.c.l.b16 %v2090
    %v2704 = vunpack.c.h.b16 %v2090
    %v2705 = vunpack.c.l.b16 %v2091
    %v2706 = vunpack.c.h.b16 %v2091
    %v2707 = vunpack.c.l.b16 %v2092
    %v2708 = vunpack.c.h.b16 %v2092
    %v2709 = vunpack.c.l.b16 %v2093
    %v2710 = vunpack.c.h.b16 %v2093
    %v2711 = vunpack.c.l.b16 %v2094
    %v2712 = vunpack.c.h.b16 %v2094
    %v2713 = vunpack.c.l.b16 %v2095
    %v2714 = vunpack.c.h.b16 %v2095
    %v2715 = vunpack.c.l.b16 %v2096
    %v2716 = vunpack.c.h.b16 %v2096
    %v2717 = vunpack.c.l.b16 %v2097
    %v2718 = vunpack.c.h.b16 %v2097
    %v2719 = vunpack.c.l.b16 %v2098
    %v2720 = vunpack.c.h.b16 %v2098
    %v2721 = vunpack.c.l.b16 %v2099
    %v2722 = vunpack.c.h.b16 %v2099
    %v2723 = vunpack.c.l.b16 %v2100
    %v2724 = vunpack.c.h.b16 %v2100
    %v2725 = vunpack.c.l.b16 %v2101
    %v2726 = vunpack.c.h.b16 %v2101
    %v2727 = vunpack.c.l.b16 %v2102
    %v2728 = vunpack.c.h.b16 %v2102
    %v2729 = vunpack.c.l.b16 %v2103
    %v2730 = vunpack.c.h.b16 %v2103
    %v2731 = vunpack.c.l.b16 %v2104
    %v2732 = vunpack.c.h.b16 %v2104
    %v2733 = vunpack.c.l.b16 %v2105
    %v2734 = vunpack.c.h.b16 %v2105
    %v2735 = vunpack.c.l.b16 %v2106
    %v2736 = vunpack.c.h.b16 %v2106
    %v2737 = vunpack.c.l.b16 %v2107
    %v2738 = vunpack.c.h.b16 %v2107
    %v2739 = vunpack.c.l.b16 %v2108
    %v2740 = vunpack.c.h.b16 %v2108
    %v2741 = vunpack.c.l.b16 %v2109
    %v2742 = vunpack.c.h.b16 %v2109
    %v2743 = vunpack.c.l.b16 %v2110
    %v2744 = vunpack.c.h.b16 %v2110
    %v2745 = vunpack.c.l.b16 %v2111
    %v2746 = vunpack.c.h.b16 %v2111
    %v2747 = vunpack.c.l.b16 %v2112
    %v2748 = vunpack.c.h.b16 %v2112
    %v2749 = vunpack.c.l.b16 %v2113
    %v2750 = vunpack.c.h.b16 %v2113
    %v2751 = vunpack.c.l.b16 %v2114
    %v2752 = vunpack.c.h.b16 %v2114
    %v2753 = vunpack.c.l.b16 %v2115
    %v2754 = vunpack.c.h.b16 %v2115
    %v2755 = vunpack.c.l.b16 %v2116
    %v2756 = vunpack.c.h.b16 %v2116
    %v2757 = vunpack.c.l.b16 %v2117
    %v2758 = vunpack.c.h.b16 %v2117
    %v2759 = vunpack.c.l.b16 %v2118
    %v2760 = vunpack.c.h.b16 %v2118
    %v2761 = vunpack.c.l.b16 %v2119
    %v2762 = vunpack.c.h.b16 %v2119
    %v2763 = vunpack.c.l.b16 %v2120
    %v2764 = vunpack.c.h.b16 %v2120
    %v2765 = vunpack.c.l.b16 %v2121
    %v2766 = vunpack.c.h.b16 %v2121
    %v2767 = vunpack.c.l.b16 %v2122
    %v2768 = vunpack.c.h.b16 %v2122
    %v2769 = vunpack.c.l.b16 %v2123
    %v2770 = vunpack.c.h.b16 %v2123
    %v2771 = vunpack.c.l.b16 %v2124
    %v2772 = vunpack.c.h.b16 %v2124
    %v2773 = vunpack.c.l.b16 %v2125
    %v2774 = vunpack.c.h.b16 %v2125
    %v2775 = vunpack.c.l.b16 %v2126
    %v2776 = vunpack.c.h.b16 %v2126
    %v2777 = vunpack.c.l.b16 %v2127
    %v2778 = vunpack.c.h.b16 %v2127
    %v2779 = vunpack.c.l.b16 %v2128
    %v2780 = vunpack.c.h.b16 %v2128
    %v2781 = vunpack.c.l.b16 %v2129
    %v2782 = vunpack.c.h.b16 %v2129
    %v2783 = vunpack.c.l.b16 %v2130
    %v2784 = vunpack.c.h.b16 %v2130
    %v2785 = vunpack.c.l.b16 %v2131
    %v2786 = vunpack.c.h.b16 %v2131
    %v2787 = vunpack.c.l.b16 %v2132
    %v2788 = vunpack.c.h.b16 %v2132
    %v2789 = vunpack.c.l.b16 %v2133
    %v2790 = vunpack.c.h.b16 %v2133
    %v2791 = vunpack.c.l.b16 %v2134
    %v2792 = vunpack.c.h.b16 %v2134
    %v2793 = vunpack.c.l.b16 %v2135
    %v2794 = vunpack.c.h.b16 %v2135
    %v2795 = vunpack.c.l.b16 %v2136
    %v2796 = vunpack.c.h.b16 %v2136
    %v2797 = vunpack.c.l.b16 %v2137
    %v2798 = vunpack.c.h.b16 %v2137
    %v2799 = vunpack.c.l.b16 %v2138
    %v2800 = vunpack.c.h.b16 %v2138
    %v2801 = vunpack.c.l.b16 %v2139
    %v2802 = vunpack.c.h.b16 %v2139
    %v2803 = vunpack.c.l.b16 %v2140
    %v2804 = vunpack.c.h.b16 %v2140
    %v2805 = vunpack.c.l.b16 %v2141
    %v2806 = vunpack.c.h.b16 %v2141
    %v2807 = vunpack.c.l.b16 %v2142
    %v2808 = vunpack.c.h.b16 %v2142
    %v2809 = vunpack.c.l.b16 %v2143
    %v2810 = vunpack.c.h.b16 %v2143
    %v2811 = vunpack.c.l.b16 %v2144
    %v2812 = vunpack.c.h.b16 %v2144
    %v2813 = vunpack.c.l.b16 %v2145
    %v2814 = vunpack.c.h.b16 %v2145
    %v2815 = vunpack.c.l.b16 %v2146
    %v2816 = vunpack.c.h.b16 %v2146
    %v2817 = vunpack.c.l.b16 %v2147
    %v2818 = vunpack.c.h.b16 %v2147
    %v2819 = vunpack.c.l.b16 %v2148
    %v2820 = vunpack.c.h.b16 %v2148
    %v2821 = vunpack.c.l.b16 %v2149
    %v2822 = vunpack.c.h.b16 %v2149
    %v2823 = vunpack.c.l.b16 %v2150
    %v2824 = vunpack.c.h.b16 %v2150
    %v2825 = vunpack.c.l.b16 %v2151
    %v2826 = vunpack.c.h.b16 %v2151
    %v2827 = vunpack.c.l.b16 %v2152
    %v2828 = vunpack.c.h.b16 %v2152
    %v2829 = vunpack.c.l.b16 %v2153
    %v2830 = vunpack.c.h.b16 %v2153
    %v2831 = vunpack.c.l.b16 %v2154
    %v2832 = vunpack.c.h.b16 %v2154
    %v2833 = vunpack.c.l.b16 %v2155
    %v2834 = vunpack.c.h.b16 %v2155
    %v2835 = vunpack.c.l.b16 %v2156
    %v2836 = vunpack.c.h.b16 %v2156
    %v2837 = vunpack.c.l.b16 %v2157
    %v2838 = vunpack.c.h.b16 %v2157
    %v2839 = vunpack.c.l.b16 %v2158
    %v2840 = vunpack.c.h.b16 %v2158
    %v2841 = vunpack.c.l.b16 %v2159
    %v2842 = vunpack.c.h.b16 %v2159
    %v2843 = vunpack.c.l.b16 %v2160
    %v2844 = vunpack.c.h.b16 %v2160
    %v2845 = vunpack.c.l.b16 %v2161
    %v2846 = vunpack.c.h.b16 %v2161
    %v2847 = vunpack.c.l.b16 %v2162
    %v2848 = vunpack.c.h.b16 %v2162
    %v2849 = vunpack.c.l.b16 %v2163
    %v2850 = vunpack.c.h.b16 %v2163
    %v2851 = vunpack.c.l.b16 %v2164
    %v2852 = vunpack.c.h.b16 %v2164
    %v2853 = vunpack.c.l.b16 %v2165
    %v2854 = vunpack.c.h.b16 %v2165
    %v2855 = vunpack.c.l.b16 %v2166
    %v2856 = vunpack.c.h.b16 %v2166
    %v2857 = vunpack.c.l.b16 %v2167
    %v2858 = vunpack.c.h.b16 %v2167
    %v2859 = vunpack.c.l.b16 %v2168
    %v2860 = vunpack.c.h.b16 %v2168
    %v2861 = vunpack.c.l.b16 %v2169
    %v2862 = vunpack.c.h.b16 %v2169
    %v2863 = vunpack.c.l.b16 %v2170
    %v2864 = vunpack.c.h.b16 %v2170
    %v2865 = vunpack.c.l.b16 %v2171
    %v2866 = vunpack.c.h.b16 %v2171
    %v2867 = vunpack.c.l.b16 %v2172
    %v2868 = vunpack.c.h.b16 %v2172
    %v2869 = vunpack.c.l.b16 %v2173
    %v2870 = vunpack.c.h.b16 %v2173
    %v2871 = vunpack.c.l.b16 %v2174
    %v2872 = vunpack.c.h.b16 %v2174
    %v2873 = vunpack.c.l.b16 %v2175
    %v2874 = vunpack.c.h.b16 %v2175
    %v2875 = vunpack.c.l.b16 %v2176
    %v2876 = vunpack.c.h.b16 %v2176
    %v2877 = vunpack.c.l.b16 %v2177
    %v2878 = vunpack.c.h.b16 %v2177
    %v2879 = vunpack.c.l.b16 %v2178
    %v2880 = vunpack.c.h.b16 %v2178
    %v2881 = vunpack.c.l.b16 %v2179
    %v2882 = vunpack.c.h.b16 %v2179
    %v2883 = vunpack.c.l.b16 %v2180
    %v2884 = vunpack.c.h.b16 %v2180
    %v2885 = vunpack.c.l.b16 %v2181
    %v2886 = vunpack.c.h.b16 %v2181
    %v2887 = vunpack.c.l.b16 %v2182
    %v2888 = vunpack.c.h.b16 %v2182
    %v2889 = vunpack.c.l.b16 %v2183
    %v2890 = vunpack.c.h.b16 %v2183
    %v2891 = vunpack.c.l.b16 %v2184
    %v2892 = vunpack.c.h.b16 %v2184
    %v2893 = vunpack.c.l.b16 %v2185
    %v2894 = vunpack.c.h.b16 %v2185
    %v2895 = vunpack.c.l.b16 %v2186
    %v2896 = vunpack.c.h.b16 %v2186
    %v2897 = vunpack.c.l.b16 %v2187
    %v2898 = vunpack.c.h.b16 %v2187
    %v2899 = vunpack.c.l.b16 %v2188
    %v2900 = vunpack.c.h.b16 %v2188
    %v2901 = vunpack.c.l.b16 %v2189
    %v2902 = vunpack.c.h.b16 %v2189
    %v2903 = vunpack.c.l.b16 %v2190
    %v2904 = vunpack.c.h.b16 %v2190
    %v2905 = vunpack.c.l.b16 %v2191
    %v2906 = vunpack.c.h.b16 %v2191
    %v2907 = vunpack.c.l.b16 %v2192
    %v2908 = vunpack.c.h.b16 %v2192
    %v2909 = vunpack.c.l.b16 %v2193
    %v2910 = vunpack.c.h.b16 %v2193
    %v2911 = vunpack.c.l.b16 %v2194
    %v2912 = vunpack.c.h.b16 %v2194
    %v2913 = vunpack.c.l.b16 %v2195
    %v2914 = vunpack.c.h.b16 %v2195
    %v2915 = vunpack.c.l.b16 %v2196
    %v2916 = vunpack.c.h.b16 %v2196
    %v2917 = vunpack.c.l.b16 %v2197
    %v2918 = vunpack.c.h.b16 %v2197
    %v2919 = vunpack.c.l.b16 %v2198
    %v2920 = vunpack.c.h.b16 %v2198
    %v2921 = vunpack.c.l.b16 %v2199
    %v2922 = vunpack.c.h.b16 %v2199
    %v2923 = vunpack.c.l.b16 %v2200
    %v2924 = vunpack.c.h.b16 %v2200
    %v2925 = vunpack.c.l.b16 %v2201
    %v2926 = vunpack.c.h.b16 %v2201
    %v2927 = vunpack.c.l.b16 %v2202
    %v2928 = vunpack.c.h.b16 %v2202
    %v2929 = vunpack.c.l.b16 %v2203
    %v2930 = vunpack.c.h.b16 %v2203
    %v2931 = vunpack.c.l.b16 %v2204
    %v2932 = vunpack.c.h.b16 %v2204
    %v2933 = vunpack.c.l.b16 %v2205
    %v2934 = vunpack.c.h.b16 %v2205
    %v2935 = vunpack.c.l.b16 %v2206
    %v2936 = vunpack.c.h.b16 %v2206
    %v2937 = vunpack.c.l.b16 %v2207
    %v2938 = vunpack.c.h.b16 %v2207
    %v2939 = vunpack.c.l.b16 %v2208
    %v2940 = vunpack.c.h.b16 %v2208
    %v2941 = vunpack.c.l.b16 %v2209
    %v2942 = vunpack.c.h.b16 %v2209
    %v2943 = vunpack.c.l.b16 %v2210
    %v2944 = vunpack.c.h.b16 %v2210
    %v2945 = vunpack.c.l.b16 %v2211
    %v2946 = vunpack.c.h.b16 %v2211
    %v2947 = vunpack.c.l.b16 %v2212
    %v2948 = vunpack.c.h.b16 %v2212
    %v2949 = vunpack.c.l.b16 %v2213
    %v2950 = vunpack.c.h.b16 %v2213
    %v2951 = vunpack.c.l.b16 %v2214
    %v2952 = vunpack.c.h.b16 %v2214
    %v2953 = vunpack.c.l.b16 %v2215
    %v2954 = vunpack.c.h.b16 %v2215
    %v2955 = vunpack.c.l.b16 %v2216
    %v2956 = vunpack.c.h.b16 %v2216
    %v2957 = vunpack.c.l.b16 %v2217
    %v2958 = vunpack.c.h.b16 %v2217
    %v2959 = vunpack.c.l.b16 %v2218
    %v2960 = vunpack.c.h.b16 %v2218
    %v2961 = vunpack.c.l.b16 %v2219
    %v2962 = vunpack.c.h.b16 %v2219
    %v2963 = vunpack.c.l.b16 %v2220
    %v2964 = vunpack.c.h.b16 %v2220
    %v2965 = vunpack.c.l.b16 %v2221
    %v2966 = vunpack.c.h.b16 %v2221
    %v2967 = vunpack.c.l.b16 %v2222
    %v2968 = vunpack.c.h.b16 %v2222
    %v2969 = vunpack.c.l.b16 %v2223
    %v2970 = vunpack.c.h.b16 %v2223
    %v2971 = vunpack.c.l.b16 %v2224
    %v2972 = vunpack.c.h.b16 %v2224
    %v2973 = vunpack.c.l.b16 %v2225
    %v2974 = vunpack.c.h.b16 %v2225
    %v2975 = vunpack.c.l.b16 %v2226
    %v2976 = vunpack.c.h.b16 %v2226
    %v2977 = vunpack.c.l.b16 %v2227
    %v2978 = vunpack.c.h.b16 %v2227
    %v2979 = vunpack.c.l.b16 %v2228
    %v2980 = vunpack.c.h.b16 %v2228
    %v2981 = vunpack.c.l.b16 %v2229
    %v2982 = vunpack.c.h.b16 %v2229
    %v2983 = vunpack.c.l.b16 %v2230
    %v2984 = vunpack.c.h.b16 %v2230
    %v2985 = vunpack.c.l.b16 %v2231
    %v2986 = vunpack.c.h.b16 %v2231
    %v2987 = vunpack.c.l.b16 %v2232
    %v2988 = vunpack.c.h.b16 %v2232
    %v2989 = vunpack.c.l.b16 %v2233
    %v2990 = vunpack.c.h.b16 %v2233
    %v2991 = vunpack.c.l.b16 %v2234
    %v2992 = vunpack.c.h.b16 %v2234
    %v2993 = vunpack.c.l.b16 %v2235
    %v2994 = vunpack.c.h.b16 %v2235
    %v2995 = vunpack.c.l.b16 %v2236
    %v2996 = vunpack.c.h.b16 %v2236
    %v2997 = vunpack.c.l.b16 %v2237
    %v2998 = vunpack.c.h.b16 %v2237
    %v2999 = vunpack.c.l.b16 %v2238
    %v3000 = vunpack.c.h.b16 %v2238
    %v3001 = vunpack.c.l.b16 %v2239
    %v3002 = vunpack.c.h.b16 %v2239
    %v3003 = vunpack.c.l.b16 %v2240
    %v3004 = vunpack.c.h.b16 %v2240
    %v3005 = vunpack.c.l.b16 %v2241
    %v3006 = vunpack.c.h.b16 %v2241
    %v3007 = vunpack.c.l.b16 %v2242
    %v3008 = vunpack.c.h.b16 %v2242
    %v3009 = vunpack.c.l.b16 %v2243
    %v3010 = vunpack.c.h.b16 %v2243
    %v3011 = vunpack.c.l.b16 %v2244
    %v3012 = vunpack.c.h.b16 %v2244
    %v3013 = vunpack.c.l.b16 %v2245
    %v3014 = vunpack.c.h.b16 %v2245
    %v3015 = vunpack.c.l.b16 %v2246
    %v3016 = vunpack.c.h.b16 %v2246
    %v3017 = vunpack.c.l.b16 %v2247
    %v3018 = vunpack.c.h.b16 %v2247
    %v3019 = vunpack.c.l.b16 %v2248
    %v3020 = vunpack.c.h.b16 %v2248
    %v3021 = vunpack.c.l.b16 %v2249
    %v3022 = vunpack.c.h.b16 %v2249
    %v3023 = vunpack.c.l.b16 %v2250
    %v3024 = vunpack.c.h.b16 %v2250
    %v3025 = vunpack.c.l.b16 %v2251
    %v3026 = vunpack.c.h.b16 %v2251
    %v3027 = vunpack.c.l.b16 %v2252
    %v3028 = vunpack.c.h.b16 %v2252
    %v3029 = vunpack.c.l.b16 %v2253
    %v3030 = vunpack.c.h.b16 %v2253
    %v3031 = vunpack.c.l.b16 %v2254
    %v3032 = vunpack.c.h.b16 %v2254
    %v3033 = vunpack.c.l.b16 %v2255
    %v3034 = vunpack.c.h.b16 %v2255
    %v3035 = vunpack.c.l.b16 %v2256
    %v3036 = vunpack.c.h.b16 %v2256
    %v3037 = vunpack.c.l.b16 %v2257
    %v3038 = vunpack.c.h.b16 %v2257
    %v3039 = vunpack.c.l.b16 %v2258
    %v3040 = vunpack.c.h.b16 %v2258
    %v3041 = vunpack.c.l.b16 %v2259
    %v3042 = vunpack.c.h.b16 %v2259
    %v3043 = vunpack.c.l.b16 %v2260
    %v3044 = vunpack.c.h.b16 %v2260
    %v3045 = vunpack.c.l.b16 %v2261
    %v3046 = vunpack.c.h.b16 %v2261
    %v3047 = vunpack.c.l.b16 %v2262
    %v3048 = vunpack.c.h.b16 %v2262
    %v3049 = vunpack.c.l.b16 %v2263
    %v3050 = vunpack.c.h.b16 %v2263
    %v3051 = vunpack.c.l.b16 %v2264
    %v3052 = vunpack.c.h.b16 %v2264
    %v3053 = vunpack.c.l.b16 %v2265
    %v3054 = vunpack.c.h.b16 %v2265
    %v3055 = vunpack.c.l.b16 %v2266
    %v3056 = vunpack.c.h.b16 %v2266
    %v3057 = vpack.c.b16 %v2549, %v2545
    %v3058 = vpack.c.b16 %v2550, %v2546
    %v3059 = vpack.c.b16 %v2551, %v2547
    %v3060 = vpack.c.b16 %v2552, %v2548
    %v3061 = vpack.c.b16 %v2557, %v2553
    %v3062 = vpack.c.b16 %v2558, %v2554
    %v3063 = vpack.c.b16 %v2559, %v2555
    %v3064 = vpack.c.b16 %v2560, %v2556
    %v3065 = vpack.c.b16 %v2565, %v2561
    %v3066 = vpack.c.b16 %v2566, %v2562
    %v3067 = vpack.c.b16 %v2567, %v2563
    %v3068 = vpack.c.b16 %v2568, %v2564
    %v3069 = vpack.c.b16 %v2573, %v2569
    %v3070 = vpack.c.b16 %v2574, %v2570
    %v3071 = vpack.c.b16 %v2575, %v2571
    %v3072 = vpack.c.b16 %v2576, %v2572
    %v3073 = vpack.c.b16 %v2581, %v2577
    %v3074 = vpack.c.b16 %v2582, %v2578
    %v3075 = vpack.c.b16 %v2583, %v2579
    %v3076 = vpack.c.b16 %v2584, %v2580
    %v3077 = vpack.c.b16 %v2589, %v2585
    %v3078 = vpack.c.b16 %v2590, %v2586
    %v3079 = vpack.c.b16 %v2591, %v2587
    %v3080 = vpack.c.b16 %v2592, %v2588
    %v3081 = vpack.c.b16 %v2597, %v2593
    %v3082 = vpack.c.b16 %v2598, %v2594
    %v3083 = vpack.c.b16 %v2599, %v2595
    %v3084 = vpack.c.b16 %v2600, %v2596
    %v3085 = vpack.c.b16 %v2605, %v2601
    %v3086 = vpack.c.b16 %v2606, %v2602
    %v3087 = vpack.c.b16 %v2607, %v2603
    %v3088 = vpack.c.b16 %v2608, %v2604
    %v3089 = vpack.c.b16 %v2613, %v2609
    %v3090 = vpack.c.b16 %v2614, %v2610
    %v3091 = vpack.c.b16 %v2615, %v2611
    %v3092 = vpack.c.b16 %v2616, %v2612
    %v3093 = vpack.c.b16 %v2621, %v2617
    %v3094 = vpack.c.b16 %v2622, %v2618
    %v3095 = vpack.c.b16 %v2623, %v2619
    %v3096 = vpack.c.b16 %v2624, %v2620
    %v3097 = vpack.c.b16 %v2629, %v2625
    %v3098 = vpack.c.b16 %v2630, %v2626
    %v3099 = vpack.c.b16 %v2631, %v2627
    %v3100 = vpack.c.b16 %v2632, %v2628
    %v3101 = vpack.c.b16 %v2637, %v2633
    %v3102 = vpack.c.b16 %v2638, %v2634
    %v3103 = vpack.c.b16 %v2639, %v2635
    %v3104 = vpack.c.b16 %v2640, %v2636
    %v3105 = vpack.c.b16 %v2645, %v2641
    %v3106 = vpack.c.b16 %v2646, %v2642
    %v3107 = vpack.c.b16 %v2647, %v2643
    %v3108 = vpack.c.b16 %v2648, %v2644
    %v3109 = vpack.c.b16 %v2653, %v2649
    %v3110 = vpack.c.b16 %v2654, %v2650
    %v3111 = vpack.c.b16 %v2655, %v2651
    %v3112 = vpack.c.b16 %v2656, %v2652
    %v3113 = vpack.c.b16 %v2661, %v2657
    %v3114 = vpack.c.b16 %v2662, %v2658
    %v3115 = vpack.c.b16 %v2663, %v2659
    %v3116 = vpack.c.b16 %v2664, %v2660
    %v3117 = vpack.c.b16 %v2669, %v2665
    %v3118 = vpack.c.b16 %v2670, %v2666
    %v3119 = vpack.c.b16 %v2671, %v2667
    %v3120 = vpack.c.b16 %v2672, %v2668
    %v3121 = vpack.c.b16 %v2677, %v2673
    %v3122 = vpack.c.b16 %v2678, %v2674
    %v3123 = vpack.c.b16 %v2679, %v2675
    %v3124 = vpack.c.b16 %v2680, %v2676
    %v3125 = vpack.c.b16 %v2685, %v2681
    %v3126 = vpack.c.b16 %v2686, %v2682
    %v3127 = vpack.c.b16 %v2687, %v2683
    %v3128 = vpack.c.b16 %v2688, %v2684
    %v3129 = vpack.c.b16 %v2693, %v2689
    %v3130 = vpack.c.b16 %v2694, %v2690
    %v3131 = vpack.c.b16 %v2695, %v2691
    %v3132 = vpack.c.b16 %v2696, %v2692
    %v3133 = vpack.c.b16 %v2701, %v2697
    %v3134 = vpack.c.b16 %v2702, %v2698
    %v3135 = vpack.c.b16 %v2703, %v2699
    %v3136 = vpack.c.b16 %v2704, %v2700
    %v3137 = vpack.c.b16 %v2709, %v2705
    %v3138 = vpack.c.b16 %v2710, %v2706
    %v3139 = vpack.c.b16 %v2711, %v2707
    %v3140 = vpack.c.b16 %v2712, %v2708
    %v3141 = vpack.c.b16 %v2717, %v2713
    %v3142 = vpack.c.b16 %v2718, %v2714
    %v3143 = vpack.c.b16 %v2719, %v2715
    %v3144 = vpack.c.b16 %v2720, %v2716
    %v3145 = vpack.c.b16 %v2725, %v2721
    %v3146 = vpack.c.b16 %v2726, %v2722
    %v3147 = vpack.c.b16 %v2727, %v2723
    %v3148 = vpack.c.b16 %v2728, %v2724
    %v3149 = vpack.c.b16 %v2733, %v2729
    %v3150 = vpack.c.b16 %v2734, %v2730
    %v3151 = vpack.c.b16 %v2735, %v2731
    %v3152 = vpack.c.b16 %v2736, %v2732
    %v3153 = vpack.c.b16 %v2741, %v2737
    %v3154 = vpack.c.b16 %v2742, %v2738
    %v3155 = vpack.c.b16 %v2743, %v2739
    %v3156 = vpack.c.b16 %v2744, %v2740
    %v3157 = vpack.c.b16 %v2749, %v2745
    %v3158 = vpack.c.b16 %v2750, %v2746
    %v3159 = vpack.c.b16 %v2751, %v2747
    %v3160 = vpack.c.b16 %v2752, %v2748
    %v3161 = vpack.c.b16 %v2757, %v2753
    %v3162 = vpack.c.b16 %v2758, %v2754
    %v3163 = vpack.c.b16 %v2759, %v2755
    %v3164 = vpack.c.b16 %v2760, %v2756
    %v3165 = vpack.c.b16 %v2765, %v2761
    %v3166 = vpack.c.b16 %v2766, %v2762
    %v3167 = vpack.c.b16 %v2767, %v2763
    %v3168 = vpack.c.b16 %v2768, %v2764
    %v3169 = vpack.c.b16 %v2773, %v2769
    %v3170 = vpack.c.b16 %v2774, %v2770
    %v3171 = vpack.c.b16 %v2775, %v2771
    %v3172 = vpack.c.b16 %v2776, %v2772
    %v3173 = vpack.c.b16 %v2781, %v2777
    %v3174 = vpack.c.b16 %v2782, %v2778
    %v3175 = vpack.c.b16 %v2783, %v2779
    %v3176 = vpack.c.b16 %v2784, %v2780
    %v3177 = vpack.c.b16 %v2789, %v2785
    %v3178 = vpack.c.b16 %v2790, %v2786
    %v3179 = vpack.c.b16 %v2791, %v2787
    %v3180 = vpack.c.b16 %v2792, %v2788
    %v3181 = vpack.c.b16 %v2797, %v2793
    %v3182 = vpack.c.b16 %v2798, %v2794
    %v3183 = vpack.c.b16 %v2799, %v2795
    %v3184 = vpack.c.b16 %v2800, %v2796
    %v3185 = vpack.c.b16 %v2805, %v2801
    %v3186 = vpack.c.b16 %v2806, %v2802
    %v3187 = vpack.c.b16 %v2807, %v2803
    %v3188 = vpack.c.b16 %v2808, %v2804
    %v3189 = vpack.c.b16 %v2813, %v2809
    %v3190 = vpack.c.b16 %v2814, %v2810
    %v3191 = vpack.c.b16 %v2815, %v2811
    %v3192 = vpack.c.b16 %v2816, %v2812
    %v3193 = vpack.c.b16 %v2821, %v2817
    %v3194 = vpack.c.b16 %v2822, %v2818
    %v3195 = vpack.c.b16 %v2823, %v2819
    %v3196 = vpack.c.b16 %v2824, %v2820
    %v3197 = vpack.c.b16 %v2829, %v2825
    %v3198 = vpack.c.b16 %v2830, %v2826
    %v3199 = vpack.c.b16 %v2831, %v2827
    %v3200 = vpack.c.b16 %v2832, %v2828
    %v3201 = vpack.c.b16 %v2837, %v2833
    %v3202 = vpack.c.b16 %v2838, %v2834
    %v3203 = vpack.c.b16 %v2839, %v2835
    %v3204 = vpack.c.b16 %v2840, %v2836
    %v3205 = vpack.c.b16 %v2845, %v2841
    %v3206 = vpack.c.b16 %v2846, %v2842
    %v3207 = vpack.c.b16 %v2847, %v2843
    %v3208 = vpack.c.b16 %v2848, %v2844
    %v3209 = vpack.c.b16 %v2853, %v2849
    %v3210 = vpack.c.b16 %v2854, %v2850
    %v3211 = vpack.c.b16 %v2855, %v2851
    %v3212 = vpack.c.b16 %v2856, %v2852
    %v3213 = vpack.c.b16 %v2861, %v2857
    %v3214 = vpack.c.b16 %v2862, %v2858
    %v3215 = vpack.c.b16 %v2863, %v2859
    %v3216 = vpack.c.b16 %v2864, %v2860
    %v3217 = vpack.c.b16 %v2869, %v2865
    %v3218 = vpack.c.b16 %v2870, %v2866
    %v3219 = vpack.c.b16 %v2871, %v2867
    %v3220 = vpack.c.b16 %v2872, %v2868
    %v3221 = vpack.c.b16 %v2877, %v2873
    %v3222 = vpack.c.b16 %v2878, %v2874
    %v3223 = vpack.c.b16 %v2879, %v2875
    %v3224 = vpack.c.b16 %v2880, %v2876
    %v3225 = vpack.c.b16 %v2885, %v2881
    %v3226 = vpack.c.b16 %v2886, %v2882
    %v3227 = vpack.c.b16 %v2887, %v2883
    %v3228 = vpack.c.b16 %v2888, %v2884
    %v3229 = vpack.c.b16 %v2893, %v2889
    %v3230 = vpack.c.b16 %v2894, %v2890
    %v3231 = vpack.c.b16 %v2895, %v2891
    %v3232 = vpack.c.b16 %v2896, %v2892
    %v3233 = vpack.c.b16 %v2901, %v2897
    %v3234 = vpack.c.b16 %v2902, %v2898
    %v3235 = vpack.c.b16 %v2903, %v2899
    %v3236 = vpack.c.b16 %v2904, %v2900
    %v3237 = vpack.c.b16 %v2909, %v2905
    %v3238 = vpack.c.b16 %v2910, %v2906
    %v3239 = vpack.c.b16 %v2911, %v2907
    %v3240 = vpack.c.b16 %v2912, %v2908
    %v3241 = vpack.c.b16 %v2917, %v2913
    %v3242 = vpack.c.b16 %v2918, %v2914
    %v3243 = vpack.c.b16 %v2919, %v2915
    %v3244 = vpack.c.b16 %v2920, %v2916
    %v3245 = vpack.c.b16 %v2925, %v2921
    %v3246 = vpack.c.b16 %v2926, %v2922
    %v3247 = vpack.c.b16 %v2927, %v2923
    %v3248 = vpack.c.b16 %v2928, %v2924
    %v3249 = vpack.c.b16 %v2933, %v2929
    %v3250 = vpack.c.b16 %v2934, %v2930
    %v3251 = vpack.c.b16 %v2935, %v2931
    %v3252 = vpack.c.b16 %v2936, %v2932
    %v3253 = vpack.c.b16 %v2941, %v2937
    %v3254 = vpack.c.b16 %v2942, %v2938
    %v3255 = vpack.c.b16 %v2943, %v2939
    %v3256 = vpack.c.b16 %v2944, %v2940
    %v3257 = vpack.c.b16 %v2949, %v2945
    %v3258 = vpack.c.b16 %v2950, %v2946
    %v3259 = vpack.c.b16 %v2951, %v2947
    %v3260 = vpack.c.b16 %v2952, %v2948
    %v3261 = vpack.c.b16 %v2957, %v2953
    %v3262 = vpack.c.b16 %v2958, %v2954
    %v3263 = vpack.c.b16 %v2959, %v2955
    %v3264 = vpack.c.b16 %v2960, %v2956
    %v3265 = vpack.c.b16 %v2965, %v2961
    %v3266 = vpack.c.b16 %v2966, %v2962
    %v3267 = vpack.c.b16 %v2967, %v2963
    %v3268 = vpack.c.b16 %v2968, %v2964
    %v3269 = vpack.c.b16 %v2973, %v2969
    %v3270 = vpack.c.b16 %v2974, %v2970
    %v3271 = vpack.c.b16 %v2975, %v2971
    %v3272 = vpack.c.b16 %v2976, %v2972
    %v3273 = vpack.c.b16 %v2981, %v2977
    %v3274 = vpack.c.b16 %v2982, %v2978
    %v3275 = vpack.c.b16 %v2983, %v2979
    %v3276 = vpack.c.b16 %v2984, %v2980
    %v3277 = vpack.c.b16 %v2989, %v2985
    %v3278 = vpack.c.b16 %v2990, %v2986
    %v3279 = vpack.c.b16 %v2991, %v2987
    %v3280 = vpack.c.b16 %v2992, %v2988
    %v3281 = vpack.c.b16 %v2997, %v2993
    %v3282 = vpack.c.b16 %v2998, %v2994
    %v3283 = vpack.c.b16 %v2999, %v2995
    %v3284 = vpack.c.b16 %v3000, %v2996
    %v3285 = vpack.c.b16 %v3005, %v3001
    %v3286 = vpack.c.b16 %v3006, %v3002
    %v3287 = vpack.c.b16 %v3007, %v3003
    %v3288 = vpack.c.b16 %v3008, %v3004
    %v3289 = vpack.c.b16 %v3013, %v3009
    %v3290 = vpack.c.b16 %v3014, %v3010
    %v3291 = vpack.c.b16 %v3015, %v3011
    %v3292 = vpack.c.b16 %v3016, %v3012
    %v3293 = vpack.c.b16 %v3021, %v3017
    %v3294 = vpack.c.b16 %v3022, %v3018
    %v3295 = vpack.c.b16 %v3023, %v3019
    %v3296 = vpack.c.b16 %v3024, %v3020
    %v3297 = vpack.c.b16 %v3029, %v3025
    %v3298 = vpack.c.b16 %v3030, %v3026
    %v3299 = vpack.c.b16 %v3031, %v3027
    %v3300 = vpack.c.b16 %v3032, %v3028
    %v3301 = vpack.c.b16 %v3037, %v3033
    %v3302 = vpack.c.b16 %v3038, %v3034
    %v3303 = vpack.c.b16 %v3039, %v3035
    %v3304 = vpack.c.b16 %v3040, %v3036
    %v3305 = vpack.c.b16 %v3045, %v3041
    %v3306 = vpack.c.b16 %v3046, %v3042
    %v3307 = vpack.c.b16 %v3047, %v3043
    %v3308 = vpack.c.b16 %v3048, %v3044
    %v3309 = vpack.c.b16 %v3053, %v3049
    %v3310 = vpack.c.b16 %v3054, %v3050
    %v3311 = vpack.c.b16 %v3055, %v3051
    %v3312 = vpack.c.b16 %v3056, %v3052
    %3569 = vmatprep.subr.bf16.mxu0 %v3086
    %3570 = vmatpush1.bf16.msra.mxu0 %v3085
    %3571 = vmatprep.subr.bf16.mxu0 %v3082
    %3572 = vmatpush1.bf16.msra.mxu0 %v3081
    %3573 = vmatprep.subr.bf16.mxu0 %v3078
    %3574 = vmatpush1.bf16.msra.mxu0 %v3077
    %3575 = vmatprep.subr.bf16.mxu0 %v3074
    %3576 = vmatpush1.bf16.msra.mxu0 %v3073
    %3577 = vmatprep.subr.bf16.mxu0 %v3070
    %3578 = vmatpush1.bf16.msra.mxu0 %v3069
    %3579 = vmatprep.subr.bf16.mxu0 %v3066
    %3580 = vmatpush1.bf16.msra.mxu0 %v3065
    %3581 = vmatprep.subr.bf16.mxu0 %v3062
    %3582 = vmatpush1.bf16.msra.mxu0 %v3061
    %3583 = vmatprep.subr.bf16.mxu0 %v3058
    %3584 = vmatpush1.bf16.msra.mxu0 %v3057
    %3585 = vmatprep.subr.bf16.mxu0 %v3118
    %3586 = vmatpush2.bf16.msra.mxu0 %v3117
    %3587 = vmatprep.subr.bf16.mxu0 %v3114
    %3588 = vmatpush2.bf16.msra.mxu0 %v3113
    %3589 = vmatprep.subr.bf16.mxu0 %v3110
    %3590 = vmatpush2.bf16.msra.mxu0 %v3109
    %3591 = vmatprep.subr.bf16.mxu0 %v3106
    %3592 = vmatpush2.bf16.msra.mxu0 %v3105
    %3593 = vmatprep.subr.bf16.mxu0 %v3102
    %3594 = vmatpush2.bf16.msra.mxu0 %v3101
    %3595 = vmatprep.subr.bf16.mxu0 %v3098
    %3596 = vmatpush2.bf16.msra.mxu0 %v3097
    %3597 = vmatprep.subr.bf16.mxu0 %v3094
    %3598 = vmatpush2.bf16.msra.mxu0 %v3093
    %3599 = vmatprep.subr.bf16.mxu0 %v3090
    %3600 = vmatpush2.bf16.msra.mxu0 %v3089
    %3601 = vmatprep.mubr.bf16.mxu0 %v2004
    %3602 = vmatmul.mubr.bf16.gmra.mxu0 %v2003
    %v3603 = vpop.f32.mrf.mxu0
    %v3604 = vadd.f32 %v2272, %v3603
    %v3605 = vpop.f32.mrf.mxu0
    %v3606 = vadd.f32 %v2276, %v3605
    %v3607 = vpop.f32.mrf.mxu0
    %v3608 = vadd.f32 %v2272, %v3607
    %v3609 = vpop.f32.mrf.mxu0
    %v3610 = vadd.f32 %v2276, %v3609
    %3611 = vdwg.mxu0
    %3612 = vmatprep.subr.bf16.mxu0 %v3150
    %3613 = vmatpush1.bf16.msra.mxu0 %v3149
    %3614 = vmatprep.subr.bf16.mxu0 %v3146
    %3615 = vmatpush1.bf16.msra.mxu0 %v3145
    %3616 = vmatprep.subr.bf16.mxu0 %v3142
    %3617 = vmatpush1.bf16.msra.mxu0 %v3141
    %3618 = vmatprep.subr.bf16.mxu0 %v3138
    %3619 = vmatpush1.bf16.msra.mxu0 %v3137
    %3620 = vmatprep.subr.bf16.mxu0 %v3134
    %3621 = vmatpush1.bf16.msra.mxu0 %v3133
    %3622 = vmatprep.subr.bf16.mxu0 %v3130
    %3623 = vmatpush1.bf16.msra.mxu0 %v3129
    %3624 = vmatprep.subr.bf16.mxu0 %v3126
    %3625 = vmatpush1.bf16.msra.mxu0 %v3125
    %3626 = vmatprep.subr.bf16.mxu0 %v3122
    %3627 = vmatpush1.bf16.msra.mxu0 %v3121
    %3628 = vmatprep.subr.bf16.mxu0 %v3182
    %3629 = vmatpush2.bf16.msra.mxu0 %v3181
    %3630 = vmatprep.subr.bf16.mxu0 %v3178
    %3631 = vmatpush2.bf16.msra.mxu0 %v3177
    %3632 = vmatprep.subr.bf16.mxu0 %v3174
    %3633 = vmatpush2.bf16.msra.mxu0 %v3173
    %3634 = vmatprep.subr.bf16.mxu0 %v3170
    %3635 = vmatpush2.bf16.msra.mxu0 %v3169
    %3636 = vmatprep.subr.bf16.mxu0 %v3166
    %3637 = vmatpush2.bf16.msra.mxu0 %v3165
    %3638 = vmatprep.subr.bf16.mxu0 %v3162
    %3639 = vmatpush2.bf16.msra.mxu0 %v3161
    %3640 = vmatprep.subr.bf16.mxu0 %v3158
    %3641 = vmatpush2.bf16.msra.mxu0 %v3157
    %3642 = vmatprep.subr.bf16.mxu0 %v3154
    %3643 = vmatpush2.bf16.msra.mxu0 %v3153
    %3644 = vmatprep.mubr.bf16.mxu0 %v2006
    %3645 = vmatmul.mubr.bf16.gmra.mxu0 %v2005
    %v3646 = vpop.f32.mrf.mxu0
    %v3647 = vadd.f32 %v3604, %v3646
    %v3648 = vpop.f32.mrf.mxu0
    %v3649 = vadd.f32 %v3606, %v3648
    %v3650 = vpop.f32.mrf.mxu0
    %v3651 = vadd.f32 %v3608, %v3650
    %v3652 = vpop.f32.mrf.mxu0
    %v3653 = vadd.f32 %v3610, %v3652
    %3654 = vdwg.mxu0
    %3655 = vmatprep.subr.bf16.mxu0 %v3214
    %3656 = vmatpush1.bf16.msra.mxu0 %v3213
    %3657 = vmatprep.subr.bf16.mxu0 %v3210
    %3658 = vmatpush1.bf16.msra.mxu0 %v3209
    %3659 = vmatprep.subr.bf16.mxu0 %v3206
    %3660 = vmatpush1.bf16.msra.mxu0 %v3205
    %3661 = vmatprep.subr.bf16.mxu0 %v3202
    %3662 = vmatpush1.bf16.msra.mxu0 %v3201
    %3663 = vmatprep.subr.bf16.mxu0 %v3198
    %3664 = vmatpush1.bf16.msra.mxu0 %v3197
    %3665 = vmatprep.subr.bf16.mxu0 %v3194
    %3666 = vmatpush1.bf16.msra.mxu0 %v3193
    %3667 = vmatprep.subr.bf16.mxu0 %v3190
    %3668 = vmatpush1.bf16.msra.mxu0 %v3189
    %3669 = vmatprep.subr.bf16.mxu0 %v3186
    %3670 = vmatpush1.bf16.msra.mxu0 %v3185
    %3671 = vmatprep.subr.bf16.mxu0 %v3246
    %3672 = vmatpush2.bf16.msra.mxu0 %v3245
    %3673 = vmatprep.subr.bf16.mxu0 %v3242
    %3674 = vmatpush2.bf16.msra.mxu0 %v3241
    %3675 = vmatprep.subr.bf16.mxu0 %v3238
    %3676 = vmatpush2.bf16.msra.mxu0 %v3237
    %3677 = vmatprep.subr.bf16.mxu0 %v3234
    %3678 = vmatpush2.bf16.msra.mxu0 %v3233
    %3679 = vmatprep.subr.bf16.mxu0 %v3230
    %3680 = vmatpush2.bf16.msra.mxu0 %v3229
    %3681 = vmatprep.subr.bf16.mxu0 %v3226
    %3682 = vmatpush2.bf16.msra.mxu0 %v3225
    %3683 = vmatprep.subr.bf16.mxu0 %v3222
    %3684 = vmatpush2.bf16.msra.mxu0 %v3221
    %3685 = vmatprep.subr.bf16.mxu0 %v3218
    %3686 = vmatpush2.bf16.msra.mxu0 %v3217
    %3687 = vmatprep.mubr.bf16.mxu0 %v2008
    %3688 = vmatmul.mubr.bf16.gmra.mxu0 %v2007
    %v3689 = vpop.f32.mrf.mxu0
    %v3690 = vadd.f32 %v3647, %v3689
    %v3691 = vpop.f32.mrf.mxu0
    %v3692 = vadd.f32 %v3649, %v3691
    %v3693 = vpop.f32.mrf.mxu0
    %v3694 = vadd.f32 %v3651, %v3693
    %v3695 = vpop.f32.mrf.mxu0
    %v3696 = vadd.f32 %v3653, %v3695
    %3697 = vdwg.mxu0
    %3698 = vmatprep.subr.bf16.mxu0 %v3278
    %3699 = vmatpush1.bf16.msra.mxu0 %v3277
    %3700 = vmatprep.subr.bf16.mxu0 %v3274
    %3701 = vmatpush1.bf16.msra.mxu0 %v3273
    %3702 = vmatprep.subr.bf16.mxu0 %v3270
    %3703 = vmatpush1.bf16.msra.mxu0 %v3269
    %3704 = vmatprep.subr.bf16.mxu0 %v3266
    %3705 = vmatpush1.bf16.msra.mxu0 %v3265
    %3706 = vmatprep.subr.bf16.mxu0 %v3262
    %3707 = vmatpush1.bf16.msra.mxu0 %v3261
    %3708 = vmatprep.subr.bf16.mxu0 %v3258
    %3709 = vmatpush1.bf16.msra.mxu0 %v3257
    %3710 = vmatprep.subr.bf16.mxu0 %v3254
    %3711 = vmatpush1.bf16.msra.mxu0 %v3253
    %3712 = vmatprep.subr.bf16.mxu0 %v3250
    %3713 = vmatpush1.bf16.msra.mxu0 %v3249
    %3714 = vmatprep.subr.bf16.mxu0 %v3310
    %3715 = vmatpush2.bf16.msra.mxu0 %v3309
    %3716 = vmatprep.subr.bf16.mxu0 %v3306
    %3717 = vmatpush2.bf16.msra.mxu0 %v3305
    %3718 = vmatprep.subr.bf16.mxu0 %v3302
    %3719 = vmatpush2.bf16.msra.mxu0 %v3301
    %3720 = vmatprep.subr.bf16.mxu0 %v3298
    %3721 = vmatpush2.bf16.msra.mxu0 %v3297
    %3722 = vmatprep.subr.bf16.mxu0 %v3294
    %3723 = vmatpush2.bf16.msra.mxu0 %v3293
    %3724 = vmatprep.subr.bf16.mxu0 %v3290
    %3725 = vmatpush2.bf16.msra.mxu0 %v3289
    %3726 = vmatprep.subr.bf16.mxu0 %v3286
    %3727 = vmatpush2.bf16.msra.mxu0 %v3285
    %3728 = vmatprep.subr.bf16.mxu0 %v3282
    %3729 = vmatpush2.bf16.msra.mxu0 %v3281
    %3730 = vmatprep.mubr.bf16.mxu0 %v2010
    %3731 = vmatmul.mubr.bf16.gmra.mxu0 %v2009
    %v3732 = vpop.f32.mrf.mxu0
    %v3733 = vadd.f32 %v3690, %v3732
    %v3734 = vpop.f32.mrf.mxu0
    %v3735 = vadd.f32 %v3692, %v3734
    %v3736 = vpop.f32.mrf.mxu0
    %v3737 = vadd.f32 %v3694, %v3736
    %v3738 = vpop.f32.mrf.mxu0
    %v3739 = vadd.f32 %v3696, %v3738
    %3740 = vdwg.mxu0
    %3741 = vmatprep.subr.bf16.mxu0 %v3088
    %3742 = vmatpush1.bf16.msra.mxu0 %v3087
    %3743 = vmatprep.subr.bf16.mxu0 %v3084
    %3744 = vmatpush1.bf16.msra.mxu0 %v3083
    %3745 = vmatprep.subr.bf16.mxu0 %v3080
    %3746 = vmatpush1.bf16.msra.mxu0 %v3079
    %3747 = vmatprep.subr.bf16.mxu0 %v3076
    %3748 = vmatpush1.bf16.msra.mxu0 %v3075
    %3749 = vmatprep.subr.bf16.mxu0 %v3072
    %3750 = vmatpush1.bf16.msra.mxu0 %v3071
    %3751 = vmatprep.subr.bf16.mxu0 %v3068
    %3752 = vmatpush1.bf16.msra.mxu0 %v3067
    %3753 = vmatprep.subr.bf16.mxu0 %v3064
    %3754 = vmatpush1.bf16.msra.mxu0 %v3063
    %3755 = vmatprep.subr.bf16.mxu0 %v3060
    %3756 = vmatpush1.bf16.msra.mxu0 %v3059
    %3757 = vmatprep.subr.bf16.mxu0 %v3120
    %3758 = vmatpush2.bf16.msra.mxu0 %v3119
    %3759 = vmatprep.subr.bf16.mxu0 %v3116
    %3760 = vmatpush2.bf16.msra.mxu0 %v3115
    %3761 = vmatprep.subr.bf16.mxu0 %v3112
    %3762 = vmatpush2.bf16.msra.mxu0 %v3111
    %3763 = vmatprep.subr.bf16.mxu0 %v3108
    %3764 = vmatpush2.bf16.msra.mxu0 %v3107
    %3765 = vmatprep.subr.bf16.mxu0 %v3104
    %3766 = vmatpush2.bf16.msra.mxu0 %v3103
    %3767 = vmatprep.subr.bf16.mxu0 %v3100
    %3768 = vmatpush2.bf16.msra.mxu0 %v3099
    %3769 = vmatprep.subr.bf16.mxu0 %v3096
    %3770 = vmatpush2.bf16.msra.mxu0 %v3095
    %3771 = vmatprep.subr.bf16.mxu0 %v3092
    %3772 = vmatpush2.bf16.msra.mxu0 %v3091
    %3773 = vmatprep.mubr.bf16.mxu0 %v2004
    %3774 = vmatmul.mubr.bf16.gmra.mxu0 %v2003
    %v3775 = vpop.f32.mrf.mxu0
    %v3776 = vadd.f32 %v2280, %v3775
    %v3777 = vpop.f32.mrf.mxu0
    %v3778 = vadd.f32 %v2284, %v3777
    %v3779 = vpop.f32.mrf.mxu0
    %v3780 = vadd.f32 %v2280, %v3779
    %v3781 = vpop.f32.mrf.mxu0
    %v3782 = vadd.f32 %v2284, %v3781
    %3783 = vdwg.mxu0
    %3784 = vmatprep.subr.bf16.mxu0 %v3152
    %3785 = vmatpush1.bf16.msra.mxu0 %v3151
    %3786 = vmatprep.subr.bf16.mxu0 %v3148
    %3787 = vmatpush1.bf16.msra.mxu0 %v3147
    %3788 = vmatprep.subr.bf16.mxu0 %v3144
    %3789 = vmatpush1.bf16.msra.mxu0 %v3143
    %3790 = vmatprep.subr.bf16.mxu0 %v3140
    %3791 = vmatpush1.bf16.msra.mxu0 %v3139
    %3792 = vmatprep.subr.bf16.mxu0 %v3136
    %3793 = vmatpush1.bf16.msra.mxu0 %v3135
    %3794 = vmatprep.subr.bf16.mxu0 %v3132
    %3795 = vmatpush1.bf16.msra.mxu0 %v3131
    %3796 = vmatprep.subr.bf16.mxu0 %v3128
    %3797 = vmatpush1.bf16.msra.mxu0 %v3127
    %3798 = vmatprep.subr.bf16.mxu0 %v3124
    %3799 = vmatpush1.bf16.msra.mxu0 %v3123
    %3800 = vmatprep.subr.bf16.mxu0 %v3184
    %3801 = vmatpush2.bf16.msra.mxu0 %v3183
    %3802 = vmatprep.subr.bf16.mxu0 %v3180
    %3803 = vmatpush2.bf16.msra.mxu0 %v3179
    %3804 = vmatprep.subr.bf16.mxu0 %v3176
    %3805 = vmatpush2.bf16.msra.mxu0 %v3175
    %3806 = vmatprep.subr.bf16.mxu0 %v3172
    %3807 = vmatpush2.bf16.msra.mxu0 %v3171
    %3808 = vmatprep.subr.bf16.mxu0 %v3168
    %3809 = vmatpush2.bf16.msra.mxu0 %v3167
    %3810 = vmatprep.subr.bf16.mxu0 %v3164
    %3811 = vmatpush2.bf16.msra.mxu0 %v3163
    %3812 = vmatprep.subr.bf16.mxu0 %v3160
    %3813 = vmatpush2.bf16.msra.mxu0 %v3159
    %3814 = vmatprep.subr.bf16.mxu0 %v3156
    %3815 = vmatpush2.bf16.msra.mxu0 %v3155
    %3816 = vmatprep.mubr.bf16.mxu0 %v2006
    %3817 = vmatmul.mubr.bf16.gmra.mxu0 %v2005
    %v3818 = vpop.f32.mrf.mxu0
    %v3819 = vadd.f32 %v3776, %v3818
    %v3820 = vpop.f32.mrf.mxu0
    %v3821 = vadd.f32 %v3778, %v3820
    %v3822 = vpop.f32.mrf.mxu0
    %v3823 = vadd.f32 %v3780, %v3822
    %v3824 = vpop.f32.mrf.mxu0
    %v3825 = vadd.f32 %v3782, %v3824
    %3826 = vdwg.mxu0
    %3827 = vmatprep.subr.bf16.mxu0 %v3216
    %3828 = vmatpush1.bf16.msra.mxu0 %v3215
    %3829 = vmatprep.subr.bf16.mxu0 %v3212
    %3830 = vmatpush1.bf16.msra.mxu0 %v3211
    %3831 = vmatprep.subr.bf16.mxu0 %v3208
    %3832 = vmatpush1.bf16.msra.mxu0 %v3207
    %3833 = vmatprep.subr.bf16.mxu0 %v3204
    %3834 = vmatpush1.bf16.msra.mxu0 %v3203
    %3835 = vmatprep.subr.bf16.mxu0 %v3200
    %3836 = vmatpush1.bf16.msra.mxu0 %v3199
    %3837 = vmatprep.subr.bf16.mxu0 %v3196
    %3838 = vmatpush1.bf16.msra.mxu0 %v3195
    %3839 = vmatprep.subr.bf16.mxu0 %v3192
    %3840 = vmatpush1.bf16.msra.mxu0 %v3191
    %3841 = vmatprep.subr.bf16.mxu0 %v3188
    %3842 = vmatpush1.bf16.msra.mxu0 %v3187
    %3843 = vmatprep.subr.bf16.mxu0 %v3248
    %3844 = vmatpush2.bf16.msra.mxu0 %v3247
    %3845 = vmatprep.subr.bf16.mxu0 %v3244
    %3846 = vmatpush2.bf16.msra.mxu0 %v3243
    %3847 = vmatprep.subr.bf16.mxu0 %v3240
    %3848 = vmatpush2.bf16.msra.mxu0 %v3239
    %3849 = vmatprep.subr.bf16.mxu0 %v3236
    %3850 = vmatpush2.bf16.msra.mxu0 %v3235
    %3851 = vmatprep.subr.bf16.mxu0 %v3232
    %3852 = vmatpush2.bf16.msra.mxu0 %v3231
    %3853 = vmatprep.subr.bf16.mxu0 %v3228
    %3854 = vmatpush2.bf16.msra.mxu0 %v3227
    %3855 = vmatprep.subr.bf16.mxu0 %v3224
    %3856 = vmatpush2.bf16.msra.mxu0 %v3223
    %3857 = vmatprep.subr.bf16.mxu0 %v3220
    %3858 = vmatpush2.bf16.msra.mxu0 %v3219
    %3859 = vmatprep.mubr.bf16.mxu0 %v2008
    %3860 = vmatmul.mubr.bf16.gmra.mxu0 %v2007
    %v3861 = vpop.f32.mrf.mxu0
    %v3862 = vadd.f32 %v3819, %v3861
    %v3863 = vpop.f32.mrf.mxu0
    %v3864 = vadd.f32 %v3821, %v3863
    %v3865 = vpop.f32.mrf.mxu0
    %v3866 = vadd.f32 %v3823, %v3865
    %v3867 = vpop.f32.mrf.mxu0
    %v3868 = vadd.f32 %v3825, %v3867
    %3869 = vdwg.mxu0
    %3870 = vmatprep.subr.bf16.mxu0 %v3280
    %3871 = vmatpush1.bf16.msra.mxu0 %v3279
    %3872 = vmatprep.subr.bf16.mxu0 %v3276
    %3873 = vmatpush1.bf16.msra.mxu0 %v3275
    %3874 = vmatprep.subr.bf16.mxu0 %v3272
    %3875 = vmatpush1.bf16.msra.mxu0 %v3271
    %3876 = vmatprep.subr.bf16.mxu0 %v3268
    %3877 = vmatpush1.bf16.msra.mxu0 %v3267
    %3878 = vmatprep.subr.bf16.mxu0 %v3264
    %3879 = vmatpush1.bf16.msra.mxu0 %v3263
    %3880 = vmatprep.subr.bf16.mxu0 %v3260
    %3881 = vmatpush1.bf16.msra.mxu0 %v3259
    %3882 = vmatprep.subr.bf16.mxu0 %v3256
    %3883 = vmatpush1.bf16.msra.mxu0 %v3255
    %3884 = vmatprep.subr.bf16.mxu0 %v3252
    %3885 = vmatpush1.bf16.msra.mxu0 %v3251
    %3886 = vmatprep.subr.bf16.mxu0 %v3312
    %3887 = vmatpush2.bf16.msra.mxu0 %v3311
    %3888 = vmatprep.subr.bf16.mxu0 %v3308
    %3889 = vmatpush2.bf16.msra.mxu0 %v3307
    %3890 = vmatprep.subr.bf16.mxu0 %v3304
    %3891 = vmatpush2.bf16.msra.mxu0 %v3303
    %3892 = vmatprep.subr.bf16.mxu0 %v3300
    %3893 = vmatpush2.bf16.msra.mxu0 %v3299
    %3894 = vmatprep.subr.bf16.mxu0 %v3296
    %3895 = vmatpush2.bf16.msra.mxu0 %v3295
    %3896 = vmatprep.subr.bf16.mxu0 %v3292
    %3897 = vmatpush2.bf16.msra.mxu0 %v3291
    %3898 = vmatprep.subr.bf16.mxu0 %v3288
    %3899 = vmatpush2.bf16.msra.mxu0 %v3287
    %3900 = vmatprep.subr.bf16.mxu0 %v3284
    %3901 = vmatpush2.bf16.msra.mxu0 %v3283
    %3902 = vmatprep.mubr.bf16.mxu0 %v2010
    %3903 = vmatmul.mubr.bf16.gmra.mxu0 %v2009
    %v3904 = vpop.f32.mrf.mxu0
    %v3905 = vadd.f32 %v3862, %v3904
    %v3906 = vpop.f32.mrf.mxu0
    %v3907 = vadd.f32 %v3864, %v3906
    %v3908 = vpop.f32.mrf.mxu0
    %v3909 = vadd.f32 %v3866, %v3908
    %v3910 = vpop.f32.mrf.mxu0
    %v3911 = vadd.f32 %v3868, %v3910
    %3912 = vdwg.mxu0
    %v3913 = vmax.f32 %v3733, 0.0
    %v3914 = vmax.f32 %v3735, 0.0
    %v3915 = vmax.f32 %v3905, 0.0
    %v3916 = vmax.f32 %v3907, 0.0
    %v3917 = vmax.f32 %v3737, 0.0
    %v3918 = vmax.f32 %v3739, 0.0
    %v3919 = vmax.f32 %v3909, 0.0
    %v3920 = vmax.f32 %v3911, 0.0
    %v3921 = vpack.c.bf16 %v3917, %v3913
    %v3922 = vpack.c.bf16 %v3918, %v3914
    %v3923 = vpack.c.bf16 %v3919, %v3915
    %v3924 = vpack.c.bf16 %v3920, %v3916
    %v3925 = vld [vmem:[#allocation8] sm:$0xff]
    %v3926 = vld [vmem:[#allocation8 + $0x8] sm:$0xff]
    %v3927 = vld [vmem:[#allocation8 + $0x10] sm:$0xff]
    %v3928 = vld [vmem:[#allocation8 + $0x18] sm:$0xff]
    %v3929 = vld [vmem:[#allocation8 + $0x20] sm:$0xff]
    %v3930 = vld [vmem:[#allocation8 + $0x28] sm:$0xff]
    %v3931 = vld [vmem:[#allocation8 + $0x30] sm:$0xff]
    %v3932 = vld [vmem:[#allocation8 + $0x38] sm:$0xff]
    %v3933 = vld [vmem:[#allocation8 + $0x40] sm:$0xff]
    %v3934 = vld [vmem:[#allocation8 + $0x48] sm:$0xff]
    %v3935 = vld [vmem:[#allocation8 + $0x50] sm:$0xff]
    %v3936 = vld [vmem:[#allocation8 + $0x58] sm:$0xff]
    %v3937 = vld [vmem:[#allocation8 + $0x60] sm:$0xff]
    %v3938 = vld [vmem:[#allocation8 + $0x68] sm:$0xff]
    %v3939 = vld [vmem:[#allocation8 + $0x70] sm:$0xff]
    %v3940 = vld [vmem:[#allocation8 + $0x78] sm:$0xff]
    %v3941 = vld [vmem:[#allocation8 + $0x80] sm:$0xff]
    %v3942 = vld [vmem:[#allocation8 + $0x88] sm:$0xff]
    %v3943 = vld [vmem:[#allocation8 + $0x90] sm:$0xff]
    %v3944 = vld [vmem:[#allocation8 + $0x98] sm:$0xff]
    %v3945 = vld [vmem:[#allocation8 + $0xa0] sm:$0xff]
    %v3946 = vld [vmem:[#allocation8 + $0xa8] sm:$0xff]
    %v3947 = vld [vmem:[#allocation8 + $0xb0] sm:$0xff]
    %v3948 = vld [vmem:[#allocation8 + $0xb8] sm:$0xff]
    %v3949 = vld [vmem:[#allocation8 + $0xc0] sm:$0xff]
    %v3950 = vld [vmem:[#allocation8 + $0xc8] sm:$0xff]
    %v3951 = vld [vmem:[#allocation8 + $0xd0] sm:$0xff]
    %v3952 = vld [vmem:[#allocation8 + $0xd8] sm:$0xff]
    %v3953 = vld [vmem:[#allocation8 + $0xe0] sm:$0xff]
    %v3954 = vld [vmem:[#allocation8 + $0xe8] sm:$0xff]
    %v3955 = vld [vmem:[#allocation8 + $0xf0] sm:$0xff]
    %v3956 = vld [vmem:[#allocation8 + $0xf8] sm:$0xff]
    %v3957 = vld [vmem:[#allocation8 + $0x100] sm:$0xff]
    %v3958 = vld [vmem:[#allocation8 + $0x108] sm:$0xff]
    %v3959 = vld [vmem:[#allocation8 + $0x110] sm:$0xff]
    %v3960 = vld [vmem:[#allocation8 + $0x118] sm:$0xff]
    %v3961 = vld [vmem:[#allocation8 + $0x120] sm:$0xff]
    %v3962 = vld [vmem:[#allocation8 + $0x128] sm:$0xff]
    %v3963 = vld [vmem:[#allocation8 + $0x130] sm:$0xff]
    %v3964 = vld [vmem:[#allocation8 + $0x138] sm:$0xff]
    %v3965 = vld [vmem:[#allocation8 + $0x140] sm:$0xff]
    %v3966 = vld [vmem:[#allocation8 + $0x148] sm:$0xff]
    %v3967 = vld [vmem:[#allocation8 + $0x150] sm:$0xff]
    %v3968 = vld [vmem:[#allocation8 + $0x158] sm:$0xff]
    %v3969 = vld [vmem:[#allocation8 + $0x160] sm:$0xff]
    %v3970 = vld [vmem:[#allocation8 + $0x168] sm:$0xff]
    %v3971 = vld [vmem:[#allocation8 + $0x170] sm:$0xff]
    %v3972 = vld [vmem:[#allocation8 + $0x178] sm:$0xff]
    %v3973 = vld [vmem:[#allocation8 + $0x180] sm:$0xff]
    %v3974 = vld [vmem:[#allocation8 + $0x188] sm:$0xff]
    %v3975 = vld [vmem:[#allocation8 + $0x190] sm:$0xff]
    %v3976 = vld [vmem:[#allocation8 + $0x198] sm:$0xff]
    %v3977 = vld [vmem:[#allocation8 + $0x1a0] sm:$0xff]
    %v3978 = vld [vmem:[#allocation8 + $0x1a8] sm:$0xff]
    %v3979 = vld [vmem:[#allocation8 + $0x1b0] sm:$0xff]
    %v3980 = vld [vmem:[#allocation8 + $0x1b8] sm:$0xff]
    %v3981 = vld [vmem:[#allocation8 + $0x1c0] sm:$0xff]
    %v3982 = vld [vmem:[#allocation8 + $0x1c8] sm:$0xff]
    %v3983 = vld [vmem:[#allocation8 + $0x1d0] sm:$0xff]
    %v3984 = vld [vmem:[#allocation8 + $0x1d8] sm:$0xff]
    %v3985 = vld [vmem:[#allocation8 + $0x1e0] sm:$0xff]
    %v3986 = vld [vmem:[#allocation8 + $0x1e8] sm:$0xff]
    %v3987 = vld [vmem:[#allocation8 + $0x1f0] sm:$0xff]
    %v3988 = vld [vmem:[#allocation8 + $0x1f8] sm:$0xff]
    %v3989 = vld [vmem:[%s7] sm:$0x3]
    %v3991 = vlaneseq
    %v3992 = vshrl.u32 %v3991, 7
    %v3993 = vsub.s32 0, %v3992
    %v3994 = vrot.slane %v3989, %v3993
    %v3995 = vlaneseq
    %v3996 = vshrl.u32 %v3995, 7
    %v3997 = vsub.s32 1, %v3996
    %v3998 = vrot.slane %v3989, %v3997
    %v4065 = vunpack.c.l.b16 %v3925
    %v4066 = vunpack.c.h.b16 %v3925
    %v4067 = vunpack.c.l.b16 %v3926
    %v4068 = vunpack.c.h.b16 %v3926
    %v4069 = vunpack.c.l.b16 %v3927
    %v4070 = vunpack.c.h.b16 %v3927
    %v4071 = vunpack.c.l.b16 %v3928
    %v4072 = vunpack.c.h.b16 %v3928
    %v4073 = vunpack.c.l.b16 %v3929
    %v4074 = vunpack.c.h.b16 %v3929
    %v4075 = vunpack.c.l.b16 %v3930
    %v4076 = vunpack.c.h.b16 %v3930
    %v4077 = vunpack.c.l.b16 %v3931
    %v4078 = vunpack.c.h.b16 %v3931
    %v4079 = vunpack.c.l.b16 %v3932
    %v4080 = vunpack.c.h.b16 %v3932
    %v4081 = vunpack.c.l.b16 %v3933
    %v4082 = vunpack.c.h.b16 %v3933
    %v4083 = vunpack.c.l.b16 %v3934
    %v4084 = vunpack.c.h.b16 %v3934
    %v4085 = vunpack.c.l.b16 %v3935
    %v4086 = vunpack.c.h.b16 %v3935
    %v4087 = vunpack.c.l.b16 %v3936
    %v4088 = vunpack.c.h.b16 %v3936
    %v4089 = vunpack.c.l.b16 %v3937
    %v4090 = vunpack.c.h.b16 %v3937
    %v4091 = vunpack.c.l.b16 %v3938
    %v4092 = vunpack.c.h.b16 %v3938
    %v4093 = vunpack.c.l.b16 %v3939
    %v4094 = vunpack.c.h.b16 %v3939
    %v4095 = vunpack.c.l.b16 %v3940
    %v4096 = vunpack.c.h.b16 %v3940
    %v4097 = vunpack.c.l.b16 %v3941
    %v4098 = vunpack.c.h.b16 %v3941
    %v4099 = vunpack.c.l.b16 %v3942
    %v4100 = vunpack.c.h.b16 %v3942
    %v4101 = vunpack.c.l.b16 %v3943
    %v4102 = vunpack.c.h.b16 %v3943
    %v4103 = vunpack.c.l.b16 %v3944
    %v4104 = vunpack.c.h.b16 %v3944
    %v4105 = vunpack.c.l.b16 %v3945
    %v4106 = vunpack.c.h.b16 %v3945
    %v4107 = vunpack.c.l.b16 %v3946
    %v4108 = vunpack.c.h.b16 %v3946
    %v4109 = vunpack.c.l.b16 %v3947
    %v4110 = vunpack.c.h.b16 %v3947
    %v4111 = vunpack.c.l.b16 %v3948
    %v4112 = vunpack.c.h.b16 %v3948
    %v4113 = vunpack.c.l.b16 %v3949
    %v4114 = vunpack.c.h.b16 %v3949
    %v4115 = vunpack.c.l.b16 %v3950
    %v4116 = vunpack.c.h.b16 %v3950
    %v4117 = vunpack.c.l.b16 %v3951
    %v4118 = vunpack.c.h.b16 %v3951
    %v4119 = vunpack.c.l.b16 %v3952
    %v4120 = vunpack.c.h.b16 %v3952
    %v4121 = vunpack.c.l.b16 %v3953
    %v4122 = vunpack.c.h.b16 %v3953
    %v4123 = vunpack.c.l.b16 %v3954
    %v4124 = vunpack.c.h.b16 %v3954
    %v4125 = vunpack.c.l.b16 %v3955
    %v4126 = vunpack.c.h.b16 %v3955
    %v4127 = vunpack.c.l.b16 %v3956
    %v4128 = vunpack.c.h.b16 %v3956
    %v4129 = vunpack.c.l.b16 %v3957
    %v4130 = vunpack.c.h.b16 %v3957
    %v4131 = vunpack.c.l.b16 %v3958
    %v4132 = vunpack.c.h.b16 %v3958
    %v4133 = vunpack.c.l.b16 %v3959
    %v4134 = vunpack.c.h.b16 %v3959
    %v4135 = vunpack.c.l.b16 %v3960
    %v4136 = vunpack.c.h.b16 %v3960
    %v4137 = vunpack.c.l.b16 %v3961
    %v4138 = vunpack.c.h.b16 %v3961
    %v4139 = vunpack.c.l.b16 %v3962
    %v4140 = vunpack.c.h.b16 %v3962
    %v4141 = vunpack.c.l.b16 %v3963
    %v4142 = vunpack.c.h.b16 %v3963
    %v4143 = vunpack.c.l.b16 %v3964
    %v4144 = vunpack.c.h.b16 %v3964
    %v4145 = vunpack.c.l.b16 %v3965
    %v4146 = vunpack.c.h.b16 %v3965
    %v4147 = vunpack.c.l.b16 %v3966
    %v4148 = vunpack.c.h.b16 %v3966
    %v4149 = vunpack.c.l.b16 %v3967
    %v4150 = vunpack.c.h.b16 %v3967
    %v4151 = vunpack.c.l.b16 %v3968
    %v4152 = vunpack.c.h.b16 %v3968
    %v4153 = vunpack.c.l.b16 %v3969
    %v4154 = vunpack.c.h.b16 %v3969
    %v4155 = vunpack.c.l.b16 %v3970
    %v4156 = vunpack.c.h.b16 %v3970
    %v4157 = vunpack.c.l.b16 %v3971
    %v4158 = vunpack.c.h.b16 %v3971
    %v4159 = vunpack.c.l.b16 %v3972
    %v4160 = vunpack.c.h.b16 %v3972
    %v4161 = vunpack.c.l.b16 %v3973
    %v4162 = vunpack.c.h.b16 %v3973
    %v4163 = vunpack.c.l.b16 %v3974
    %v4164 = vunpack.c.h.b16 %v3974
    %v4165 = vunpack.c.l.b16 %v3975
    %v4166 = vunpack.c.h.b16 %v3975
    %v4167 = vunpack.c.l.b16 %v3976
    %v4168 = vunpack.c.h.b16 %v3976
    %v4169 = vunpack.c.l.b16 %v3977
    %v4170 = vunpack.c.h.b16 %v3977
    %v4171 = vunpack.c.l.b16 %v3978
    %v4172 = vunpack.c.h.b16 %v3978
    %v4173 = vunpack.c.l.b16 %v3979
    %v4174 = vunpack.c.h.b16 %v3979
    %v4175 = vunpack.c.l.b16 %v3980
    %v4176 = vunpack.c.h.b16 %v3980
    %v4177 = vunpack.c.l.b16 %v3981
    %v4178 = vunpack.c.h.b16 %v3981
    %v4179 = vunpack.c.l.b16 %v3982
    %v4180 = vunpack.c.h.b16 %v3982
    %v4181 = vunpack.c.l.b16 %v3983
    %v4182 = vunpack.c.h.b16 %v3983
    %v4183 = vunpack.c.l.b16 %v3984
    %v4184 = vunpack.c.h.b16 %v3984
    %v4185 = vunpack.c.l.b16 %v3985
    %v4186 = vunpack.c.h.b16 %v3985
    %v4187 = vunpack.c.l.b16 %v3986
    %v4188 = vunpack.c.h.b16 %v3986
    %v4189 = vunpack.c.l.b16 %v3987
    %v4190 = vunpack.c.h.b16 %v3987
    %v4191 = vunpack.c.l.b16 %v3988
    %v4192 = vunpack.c.h.b16 %v3988
    %v4193 = vpack.c.b16 %v4067, %v4065
    %v4194 = vpack.c.b16 %v4068, %v4066
    %v4195 = vpack.c.b16 %v4071, %v4069
    %v4196 = vpack.c.b16 %v4072, %v4070
    %v4197 = vpack.c.b16 %v4075, %v4073
    %v4198 = vpack.c.b16 %v4076, %v4074
    %v4199 = vpack.c.b16 %v4079, %v4077
    %v4200 = vpack.c.b16 %v4080, %v4078
    %v4201 = vpack.c.b16 %v4083, %v4081
    %v4202 = vpack.c.b16 %v4084, %v4082
    %v4203 = vpack.c.b16 %v4087, %v4085
    %v4204 = vpack.c.b16 %v4088, %v4086
    %v4205 = vpack.c.b16 %v4091, %v4089
    %v4206 = vpack.c.b16 %v4092, %v4090
    %v4207 = vpack.c.b16 %v4095, %v4093
    %v4208 = vpack.c.b16 %v4096, %v4094
    %v4209 = vpack.c.b16 %v4099, %v4097
    %v4210 = vpack.c.b16 %v4100, %v4098
    %v4211 = vpack.c.b16 %v4103, %v4101
    %v4212 = vpack.c.b16 %v4104, %v4102
    %v4213 = vpack.c.b16 %v4107, %v4105
    %v4214 = vpack.c.b16 %v4108, %v4106
    %v4215 = vpack.c.b16 %v4111, %v4109
    %v4216 = vpack.c.b16 %v4112, %v4110
    %v4217 = vpack.c.b16 %v4115, %v4113
    %v4218 = vpack.c.b16 %v4116, %v4114
    %v4219 = vpack.c.b16 %v4119, %v4117
    %v4220 = vpack.c.b16 %v4120, %v4118
    %v4221 = vpack.c.b16 %v4123, %v4121
    %v4222 = vpack.c.b16 %v4124, %v4122
    %v4223 = vpack.c.b16 %v4127, %v4125
    %v4224 = vpack.c.b16 %v4128, %v4126
    %v4225 = vpack.c.b16 %v4131, %v4129
    %v4226 = vpack.c.b16 %v4132, %v4130
    %v4227 = vpack.c.b16 %v4135, %v4133
    %v4228 = vpack.c.b16 %v4136, %v4134
    %v4229 = vpack.c.b16 %v4139, %v4137
    %v4230 = vpack.c.b16 %v4140, %v4138
    %v4231 = vpack.c.b16 %v4143, %v4141
    %v4232 = vpack.c.b16 %v4144, %v4142
    %v4233 = vpack.c.b16 %v4147, %v4145
    %v4234 = vpack.c.b16 %v4148, %v4146
    %v4235 = vpack.c.b16 %v4151, %v4149
    %v4236 = vpack.c.b16 %v4152, %v4150
    %v4237 = vpack.c.b16 %v4155, %v4153
    %v4238 = vpack.c.b16 %v4156, %v4154
    %v4239 = vpack.c.b16 %v4159, %v4157
    %v4240 = vpack.c.b16 %v4160, %v4158
    %v4241 = vpack.c.b16 %v4163, %v4161
    %v4242 = vpack.c.b16 %v4164, %v4162
    %v4243 = vpack.c.b16 %v4167, %v4165
    %v4244 = vpack.c.b16 %v4168, %v4166
    %v4245 = vpack.c.b16 %v4171, %v4169
    %v4246 = vpack.c.b16 %v4172, %v4170
    %v4247 = vpack.c.b16 %v4175, %v4173
    %v4248 = vpack.c.b16 %v4176, %v4174
    %v4249 = vpack.c.b16 %v4179, %v4177
    %v4250 = vpack.c.b16 %v4180, %v4178
    %v4251 = vpack.c.b16 %v4183, %v4181
    %v4252 = vpack.c.b16 %v4184, %v4182
    %v4253 = vpack.c.b16 %v4187, %v4185
    %v4254 = vpack.c.b16 %v4188, %v4186
    %v4255 = vpack.c.b16 %v4191, %v4189
    %v4256 = vpack.c.b16 %v4192, %v4190
    %4321 = vmatprep.subr.bf16.mxu0 %v4208
    %4322 = vmatpush1.bf16.msra.mxu0 %v4207
    %4323 = vmatprep.subr.bf16.mxu0 %v4206
    %4324 = vmatpush1.bf16.msra.mxu0 %v4205
    %4325 = vmatprep.subr.bf16.mxu0 %v4204
    %4326 = vmatpush1.bf16.msra.mxu0 %v4203
    %4327 = vmatprep.subr.bf16.mxu0 %v4202
    %4328 = vmatpush1.bf16.msra.mxu0 %v4201
    %4329 = vmatprep.subr.bf16.mxu0 %v4200
    %4330 = vmatpush1.bf16.msra.mxu0 %v4199
    %4331 = vmatprep.subr.bf16.mxu0 %v4198
    %4332 = vmatpush1.bf16.msra.mxu0 %v4197
    %4333 = vmatprep.subr.bf16.mxu0 %v4196
    %4334 = vmatpush1.bf16.msra.mxu0 %v4195
    %4335 = vmatprep.subr.bf16.mxu0 %v4194
    %4336 = vmatpush1.bf16.msra.mxu0 %v4193
    %4337 = vmatprep.subr.bf16.mxu0 %v4224
    %4338 = vmatpush2.bf16.msra.mxu0 %v4223
    %4339 = vmatprep.subr.bf16.mxu0 %v4222
    %4340 = vmatpush2.bf16.msra.mxu0 %v4221
    %4341 = vmatprep.subr.bf16.mxu0 %v4220
    %4342 = vmatpush2.bf16.msra.mxu0 %v4219
    %4343 = vmatprep.subr.bf16.mxu0 %v4218
    %4344 = vmatpush2.bf16.msra.mxu0 %v4217
    %4345 = vmatprep.subr.bf16.mxu0 %v4216
    %4346 = vmatpush2.bf16.msra.mxu0 %v4215
    %4347 = vmatprep.subr.bf16.mxu0 %v4214
    %4348 = vmatpush2.bf16.msra.mxu0 %v4213
    %4349 = vmatprep.subr.bf16.mxu0 %v4212
    %4350 = vmatpush2.bf16.msra.mxu0 %v4211
    %4351 = vmatprep.subr.bf16.mxu0 %v4210
    %4352 = vmatpush2.bf16.msra.mxu0 %v4209
    %4353 = vmatprep.mubr.bf16.mxu0 %v3922
    %4354 = vmatmul.mubr.bf16.gmra.mxu0 %v3921
    %v4355 = vpop.f32.mrf.mxu0
    %v4356 = vadd.f32 %v3994, %v4355
    %v4357 = vpop.f32.mrf.mxu0
    %v4358 = vadd.f32 %v3998, %v4357
    %v4359 = vpop.f32.mrf.mxu0
    %v4360 = vadd.f32 %v3994, %v4359
    %v4361 = vpop.f32.mrf.mxu0
    %v4362 = vadd.f32 %v3998, %v4361
    %4363 = vdwg.mxu0
    %4364 = vmatprep.subr.bf16.mxu0 %v4240
    %4365 = vmatpush1.bf16.msra.mxu0 %v4239
    %4366 = vmatprep.subr.bf16.mxu0 %v4238
    %4367 = vmatpush1.bf16.msra.mxu0 %v4237
    %4368 = vmatprep.subr.bf16.mxu0 %v4236
    %4369 = vmatpush1.bf16.msra.mxu0 %v4235
    %4370 = vmatprep.subr.bf16.mxu0 %v4234
    %4371 = vmatpush1.bf16.msra.mxu0 %v4233
    %4372 = vmatprep.subr.bf16.mxu0 %v4232
    %4373 = vmatpush1.bf16.msra.mxu0 %v4231
    %4374 = vmatprep.subr.bf16.mxu0 %v4230
    %4375 = vmatpush1.bf16.msra.mxu0 %v4229
    %4376 = vmatprep.subr.bf16.mxu0 %v4228
    %4377 = vmatpush1.bf16.msra.mxu0 %v4227
    %4378 = vmatprep.subr.bf16.mxu0 %v4226
    %4379 = vmatpush1.bf16.msra.mxu0 %v4225
    %4380 = vmatprep.subr.bf16.mxu0 %v4256
    %4381 = vmatpush2.bf16.msra.mxu0 %v4255
    %4382 = vmatprep.subr.bf16.mxu0 %v4254
    %4383 = vmatpush2.bf16.msra.mxu0 %v4253
    %4384 = vmatprep.subr.bf16.mxu0 %v4252
    %4385 = vmatpush2.bf16.msra.mxu0 %v4251
    %4386 = vmatprep.subr.bf16.mxu0 %v4250
    %4387 = vmatpush2.bf16.msra.mxu0 %v4249
    %4388 = vmatprep.subr.bf16.mxu0 %v4248
    %4389 = vmatpush2.bf16.msra.mxu0 %v4247
    %4390 = vmatprep.subr.bf16.mxu0 %v4246
    %4391 = vmatpush2.bf16.msra.mxu0 %v4245
    %4392 = vmatprep.subr.bf16.mxu0 %v4244
    %4393 = vmatpush2.bf16.msra.mxu0 %v4243
    %4394 = vmatprep.subr.bf16.mxu0 %v4242
    %4395 = vmatpush2.bf16.msra.mxu0 %v4241
    %4396 = vmatprep.mubr.bf16.mxu0 %v3924
    %4397 = vmatmul.mubr.bf16.gmra.mxu0 %v3923
    %v4398 = vpop.f32.mrf.mxu0
    %v4399 = vadd.f32 %v4356, %v4398
    %v4400 = vpop.f32.mrf.mxu0
    %v4401 = vadd.f32 %v4358, %v4400
    %v4402 = vpop.f32.mrf.mxu0
    %v4403 = vadd.f32 %v4360, %v4402
    %v4404 = vpop.f32.mrf.mxu0
    %v4405 = vadd.f32 %v4362, %v4404
    %4406 = vdwg.mxu0
    %v4407 = vtanh.pop %v4399
    %v4408 = vtanh.pop %v4401
    %v4409 = vtanh.pop %v4403
    %v4410 = vtanh.pop %v4405
    %4411 = vst [vmem:[#allocation10] sm:$0xff] %v4407
    %4412 = vst [vmem:[#allocation10 + $0x8] sm:$0xff] %v4408
    %4413 = vst [vmem:[#allocation10 + $0x10] sm:$0xff] %v4409
    %4414 = vst [vmem:[#allocation10 + $0x18] sm:$0xff] %v4410
    // Predicated region
    $region50: #{tpu_custom_call.1} parent=1 // pred_check
      _
    $region51: #{tpu_custom_call.1} parent=1 // pred_check_branch
      %4416 = sbr.rel (0) target = $region53
    $region52: #{tpu_custom_call.1} parent=1 // pred_region
      %s4418 = ssub.s32 512, 512
      %4419 = vsyncadd [#allocation4], %s4418
      %s4420 = sshll.u32 [#allocation10], 4
      %s4421 = int_to_ptr.vmem [resolvable:$true] %s4420
      %4426 = dma.vmem_to_hbm [thread:$0]  %s4421, 512, %s8, [#allocation4], 256, 256, 16
    $region53: #{tpu_custom_call.1} parent=1 // pred_fallthru
      _
    // Predicated region
    $region54: #{tpu_custom_call.1} parent=1 // pred_check
      _
    $region55: #{tpu_custom_call.1} parent=1 // pred_check_branch
      %4428 = sbr.rel (0) target = $region57
    $region56: #{tpu_custom_call.1} parent=1 // pred_region
      %4429 = dma.done [#allocation4], 512
    $region57: #{tpu_custom_call.1} parent=1 // pred_fallthru
      _
    %4430 = vsyncpa [#allocation3], 1
    %4431 = vsyncpa [#allocation6], 1
    %4432 = vsyncpa [#allocation9], 1
    %4433 = vsyncpa [#allocation4], 1

// kernel: tpu_custom_call.1
$region0: #{tpu_custom_call.1}
  #allocation0 [shape = 'u32[]', space=smem, size = 0x4, offset = 0x4, fixed_abs, tag = 'smem constant byte address 0x4 - core index']
  #allocation1 [shape = 'u32[144,128]{1,0:T(1,128)}', space=vmem, size = 0x12000, scoped, tag = 'internal scratch']
  %s0 = inlined_call_operand.vmem [shape: s32[16,8], index: 0, kind: input, shape index: {}]
  %s1 = inlined_call_operand.hbm [shape: bf16[128,384], index: 1, kind: input, shape index: {}]
  %s2 = inlined_call_operand.hbm [shape: bf16[384,1024], index: 2, kind: input, shape index: {}]
  %s3 = inlined_call_operand.vmem [shape: f32[1,1024], index: 3, kind: input, shape index: {}]
  %s4 = inlined_call_operand.hbm [shape: bf16[1024,512], index: 4, kind: input, shape index: {}]
  %s5 = inlined_call_operand.vmem [shape: f32[1,512], index: 5, kind: input, shape index: {}]
  %s6 = inlined_call_operand.hbm [shape: bf16[512,256], index: 6, kind: input, shape index: {}]
  %s7 = inlined_call_operand.vmem [shape: f32[1,256], index: 7, kind: input, shape index: {}]
  %s8 = inlined_call_operand.hbm [shape: f32[16,256], index: 8, kind: output, shape index: {}]
  %s9 = sld [smem:[#allocation0]]
  $region58: #{tpu_custom_call.1} parent=0
    _
  %s11 = ssub.s32 1, %s9
  %s12 = scalar_select 0, %s11, %s9
  $region1: #{tpu_custom_call.1} parent=0
    #allocation2 [shape = 'u8[98304]{0}', space=vmem, size = 0x18000, scoped, tag = 'input window, operand 1, single buffered']
    #allocation3 [shape = 's32[1]{0}', space=sflag, size = 0x4, scoped, tag = 'scoped memory for tpu_custom_call.1']
    #allocation4 [shape = 's32[1]{0}', space=sflag, size = 0x4, scoped, tag = 'scoped memory for tpu_custom_call.1']
    #allocation5 [shape = 'u8[786432]{0}', space=vmem, size = 0xc0000, scoped, tag = 'input window, operand 2, single buffered']
    #allocation6 [shape = 's32[1]{0}', space=sflag, size = 0x4, scoped, tag = 'scoped memory for tpu_custom_call.1']
    #allocation7 [shape = 'u8[1048576]{0}', space=vmem, size = 0x100000, scoped, tag = 'input window, operand 4, single buffered']
    #allocation8 [shape = 'u8[262144]{0}', space=vmem, size = 0x40000, scoped, tag = 'input window, operand 6, single buffered']
    #allocation9 [shape = 's32[1]{0}', space=sflag, size = 0x4, scoped, tag = 'scoped memory for tpu_custom_call.1']
    #allocation10 [shape = 'u8[16384]{0}', space=vmem, size = 0x4000, scoped, tag = 'output window, operand 0, single buffered']
    %13 = vsyncpa [#allocation3], 0
    %14 = vsyncpa [#allocation6], 0
    %15 = vsyncpa [#allocation9], 0
    %16 = vsyncpa [#allocation4], 0
    // Predicated region
    $region2: #{tpu_custom_call.1} parent=1 // pred_check
      _
    $region3: #{tpu_custom_call.1} parent=1 // pred_check_branch
      %18 = sbr.rel (0) target = $region5
    $region4: #{tpu_custom_call.1} parent=1 // pred_region
      _
    $region5: #{tpu_custom_call.1} parent=1 // pred_fallthru
      _
    // Predicated region
    $region6: #{tpu_custom_call.1} parent=1 // pred_check
      _
    $region7: #{tpu_custom_call.1} parent=1 // pred_check_branch
      %20 = sbr.rel (0) target = $region9
    $region8: #{tpu_custom_call.1} parent=1 // pred_region
      %s22 = ssub.s32 3072, 3072
      %23 = vsyncadd [#allocation3], %s22
      %s24 = sshll.u32 [#allocation2], 4
      %s25 = int_to_ptr.vmem [resolvable:$true] %s24
      %30 = dma.hbm_to_vmem [thread:$0]  %s1, 3072, %s25, [#allocation3], 192, 192, 12
    $region9: #{tpu_custom_call.1} parent=1 // pred_fallthru
      _
    // Predicated region
    $region10: #{tpu_custom_call.1} parent=1 // pred_check
      _
    $region11: #{tpu_custom_call.1} parent=1 // pred_check_branch
      %32 = sbr.rel (0) target = $region13
    $region12: #{tpu_custom_call.1} parent=1 // pred_region
      %s34 = ssub.s32 24576, 24576
      %35 = vsyncadd [#allocation6], %s34
      %s36 = sshll.u32 [#allocation5], 4
      %s37 = int_to_ptr.vmem [resolvable:$true] %s36
      %42 = dma.hbm_to_vmem [thread:$0]  %s2, 24576, %s37, [#allocation6], 512, 512, 32
    $region13: #{tpu_custom_call.1} parent=1 // pred_fallthru
      _
    // Predicated region
    $region14: #{tpu_custom_call.1} parent=1 // pred_check
      _
    $region15: #{tpu_custom_call.1} parent=1 // pred_check_branch
      %44 = sbr.rel (0) target = $region17
    $region16: #{tpu_custom_call.1} parent=1 // pred_region
      _
    $region17: #{tpu_custom_call.1} parent=1 // pred_fallthru
      _
    // Predicated region
    $region18: #{tpu_custom_call.1} parent=1 // pred_check
      _
    $region19: #{tpu_custom_call.1} parent=1 // pred_check_branch
      %46 = sbr.rel (0) target = $region21
    $region20: #{tpu_custom_call.1} parent=1 // pred_region
      %s48 = ssub.s32 32768, 32768
      %49 = vsyncadd [#allocation6], %s48
      %s50 = sshll.u32 [#allocation7], 4
      %s51 = int_to_ptr.vmem [resolvable:$true] %s50
      %56 = dma.hbm_to_vmem [thread:$0]  %s4, 32768, %s51, [#allocation6], 256, 256, 16
    $region21: #{tpu_custom_call.1} parent=1 // pred_fallthru
      _
    // Predicated region
    $region22: #{tpu_custom_call.1} parent=1 // pred_check
      _
    $region23: #{tpu_custom_call.1} parent=1 // pred_check_branch
      %58 = sbr.rel (0) target = $region25
    $region24: #{tpu_custom_call.1} parent=1 // pred_region
      _
    $region25: #{tpu_custom_call.1} parent=1 // pred_fallthru
      _
    // Predicated region
    $region26: #{tpu_custom_call.1} parent=1 // pred_check
      _
    $region27: #{tpu_custom_call.1} parent=1 // pred_check_branch
      %60 = sbr.rel (0) target = $region29
    $region28: #{tpu_custom_call.1} parent=1 // pred_region
      %s62 = ssub.s32 8192, 8192
      %63 = vsyncadd [#allocation9], %s62
      %s64 = sshll.u32 [#allocation8], 4
      %s65 = int_to_ptr.vmem [resolvable:$true] %s64
      %70 = dma.hbm_to_vmem [thread:$0]  %s6, 8192, %s65, [#allocation9], 128, 128, 8
    $region29: #{tpu_custom_call.1} parent=1 // pred_fallthru
      _
    // Predicated region
    $region30: #{tpu_custom_call.1} parent=1 // pred_check
      _
    $region31: #{tpu_custom_call.1} parent=1 // pred_check_branch
      %72 = sbr.rel (0) target = $region33
    $region32: #{tpu_custom_call.1} parent=1 // pred_region
      _
    $region33: #{tpu_custom_call.1} parent=1 // pred_fallthru
      _
    // Predicated region
    $region34: #{tpu_custom_call.1} parent=1 // pred_check
      _
    $region35: #{tpu_custom_call.1} parent=1 // pred_check_branch
      %74 = sbr.rel (0) target = $region37
    $region36: #{tpu_custom_call.1} parent=1 // pred_region
      %75 = dma.done [#allocation3], 3072
    $region37: #{tpu_custom_call.1} parent=1 // pred_fallthru
      _
    // Predicated region
    $region38: #{tpu_custom_call.1} parent=1 // pred_check
      _
    $region39: #{tpu_custom_call.1} parent=1 // pred_check_branch
      %77 = sbr.rel (0) target = $region41
    $region40: #{tpu_custom_call.1} parent=1 // pred_region
      %78 = dma.done [#allocation6], 24576
    $region41: #{tpu_custom_call.1} parent=1 // pred_fallthru
      _
    // Predicated region
    $region42: #{tpu_custom_call.1} parent=1 // pred_check
      _
    $region43: #{tpu_custom_call.1} parent=1 // pred_check_branch
      %80 = sbr.rel (0) target = $region45
    $region44: #{tpu_custom_call.1} parent=1 // pred_region
      %81 = dma.done [#allocation6], 32768
    $region45: #{tpu_custom_call.1} parent=1 // pred_fallthru
      _
    // Predicated region
    $region46: #{tpu_custom_call.1} parent=1 // pred_check
      _
    $region47: #{tpu_custom_call.1} parent=1 // pred_check_branch
      %83 = sbr.rel (0) target = $region49
    $region48: #{tpu_custom_call.1} parent=1 // pred_region
      %84 = dma.done [#allocation9], 8192
    $region49: #{tpu_custom_call.1} parent=1 // pred_fallthru
      _
    %v86 = vld [vmem:[%s0] sm:$0xff]
    %v87 = vld [vmem:[%s0 + $0x8] sm:$0xff]
    %v88 = vlaneseq
    %v89 = vand.u32 %v88, 127
    %90 = vset.pattern.permute.xlu0 0
    %91 = vperm.xlu0 %90, %v86
    %v92 = vpop.permute.xlu0 %91
    %93 = vset.pattern.permute.xlu0 0
    %94 = vperm.xlu0 %93, %v87
    %v95 = vpop.permute.xlu0 %94
    %vm96 = vcmp.eq.s32.totalorder %v92, %v89
    %vm97 = vcmp.eq.s32.totalorder %v95, %v89
    %v98 = vsel %vm96, 1, 0
    %v99 = vsel %vm97, 1, 0
    %v100 = vcvt.s32.f32 %v98
    %v101 = vcvt.s32.f32 %v99
    %v102 = vpack.c.bf16 %v101, %v100
    %v103 = vadd.bf16 %v102, 0
    %104 = vset.pattern.permute.xlu0 1
    %105 = vperm.xlu0 %104, %v86
    %v106 = vpop.permute.xlu0 %105
    %107 = vset.pattern.permute.xlu0 1
    %108 = vperm.xlu0 %107, %v87
    %v109 = vpop.permute.xlu0 %108
    %vm110 = vcmp.eq.s32.totalorder %v106, %v89
    %vm111 = vcmp.eq.s32.totalorder %v109, %v89
    %v112 = vsel %vm110, 1, 0
    %v113 = vsel %vm111, 1, 0
    %v114 = vcvt.s32.f32 %v112
    %v115 = vcvt.s32.f32 %v113
    %v116 = vpack.c.bf16 %v115, %v114
    %v117 = vadd.bf16 %v103, %v116
    %118 = vset.pattern.permute.xlu0 2
    %119 = vperm.xlu0 %118, %v86
    %v120 = vpop.permute.xlu0 %119
    %121 = vset.pattern.permute.xlu0 2
    %122 = vperm.xlu0 %121, %v87
    %v123 = vpop.permute.xlu0 %122
    %vm124 = vcmp.eq.s32.totalorder %v120, %v89
    %vm125 = vcmp.eq.s32.totalorder %v123, %v89
    %v126 = vsel %vm124, 1, 0
    %v127 = vsel %vm125, 1, 0
    %v128 = vcvt.s32.f32 %v126
    %v129 = vcvt.s32.f32 %v127
    %v130 = vpack.c.bf16 %v129, %v128
    %v131 = vadd.bf16 %v117, %v130
    %132 = vset.pattern.permute.xlu0 3
    %133 = vperm.xlu0 %132, %v86
    %v134 = vpop.permute.xlu0 %133
    %135 = vset.pattern.permute.xlu0 3
    %136 = vperm.xlu0 %135, %v87
    %v137 = vpop.permute.xlu0 %136
    %vm138 = vcmp.eq.s32.totalorder %v134, %v89
    %vm139 = vcmp.eq.s32.totalorder %v137, %v89
    %v140 = vsel %vm138, 1, 0
    %v141 = vsel %vm139, 1, 0
    %v142 = vcvt.s32.f32 %v140
    %v143 = vcvt.s32.f32 %v141
    %v144 = vpack.c.bf16 %v143, %v142
    %v145 = vadd.bf16 %v131, %v144
    %146 = vset.pattern.permute.xlu0 4
    %147 = vperm.xlu0 %146, %v86
    %v148 = vpop.permute.xlu0 %147
    %149 = vset.pattern.permute.xlu0 4
    %150 = vperm.xlu0 %149, %v87
    %v151 = vpop.permute.xlu0 %150
    %vm152 = vcmp.eq.s32.totalorder %v148, %v89
    %vm153 = vcmp.eq.s32.totalorder %v151, %v89
    %v154 = vsel %vm152, 1, 0
    %v155 = vsel %vm153, 1, 0
    %v156 = vcvt.s32.f32 %v154
    %v157 = vcvt.s32.f32 %v155
    %v158 = vpack.c.bf16 %v157, %v156
    %v159 = vadd.bf16 %v145, %v158
    %160 = vset.pattern.permute.xlu0 5
    %161 = vperm.xlu0 %160, %v86
    %v162 = vpop.permute.xlu0 %161
    %163 = vset.pattern.permute.xlu0 5
    %164 = vperm.xlu0 %163, %v87
    %v165 = vpop.permute.xlu0 %164
    %vm166 = vcmp.eq.s32.totalorder %v162, %v89
    %vm167 = vcmp.eq.s32.totalorder %v165, %v89
    %v168 = vsel %vm166, 1, 0
    %v169 = vsel %vm167, 1, 0
    %v170 = vcvt.s32.f32 %v168
    %v171 = vcvt.s32.f32 %v169
    %v172 = vpack.c.bf16 %v171, %v170
    %v173 = vadd.bf16 %v159, %v172
    %174 = vset.pattern.permute.xlu0 6
    %175 = vperm.xlu0 %174, %v86
    %v176 = vpop.permute.xlu0 %175
    %177 = vset.pattern.permute.xlu0 6
    %178 = vperm.xlu0 %177, %v87
    %v179 = vpop.permute.xlu0 %178
    %vm180 = vcmp.eq.s32.totalorder %v176, %v89
    %vm181 = vcmp.eq.s32.totalorder %v179, %v89
    %v182 = vsel %vm180, 1, 0
    %v183 = vsel %vm181, 1, 0
    %v184 = vcvt.s32.f32 %v182
    %v185 = vcvt.s32.f32 %v183
    %v186 = vpack.c.bf16 %v185, %v184
    %v187 = vadd.bf16 %v173, %v186
    %188 = vset.pattern.permute.xlu0 7
    %189 = vperm.xlu0 %188, %v86
    %v190 = vpop.permute.xlu0 %189
    %191 = vset.pattern.permute.xlu0 7
    %192 = vperm.xlu0 %191, %v87
    %v193 = vpop.permute.xlu0 %192
    %vm194 = vcmp.eq.s32.totalorder %v190, %v89
    %vm195 = vcmp.eq.s32.totalorder %v193, %v89
    %v196 = vsel %vm194, 1, 0
    %v197 = vsel %vm195, 1, 0
    %v198 = vcvt.s32.f32 %v196
    %v199 = vcvt.s32.f32 %v197
    %v200 = vpack.c.bf16 %v199, %v198
    %v201 = vadd.bf16 %v187, %v200
    %v202 = vld [vmem:[#allocation2] sm:$0xff]
    %v203 = vld [vmem:[#allocation2 + $0x8] sm:$0xf]
    %v204 = vld [vmem:[#allocation2 + $0xc] sm:$0xff]
    %v205 = vld [vmem:[#allocation2 + $0x14] sm:$0xf]
    %v206 = vld [vmem:[#allocation2 + $0x18] sm:$0xff]
    %v207 = vld [vmem:[#allocation2 + $0x20] sm:$0xf]
    %v208 = vld [vmem:[#allocation2 + $0x24] sm:$0xff]
    %v209 = vld [vmem:[#allocation2 + $0x2c] sm:$0xf]
    %v210 = vld [vmem:[#allocation2 + $0x30] sm:$0xff]
    %v211 = vld [vmem:[#allocation2 + $0x38] sm:$0xf]
    %v212 = vld [vmem:[#allocation2 + $0x3c] sm:$0xff]
    %v213 = vld [vmem:[#allocation2 + $0x44] sm:$0xf]
    %v214 = vld [vmem:[#allocation2 + $0x48] sm:$0xff]
    %v215 = vld [vmem:[#allocation2 + $0x50] sm:$0xf]
    %v216 = vld [vmem:[#allocation2 + $0x54] sm:$0xff]
    %v217 = vld [vmem:[#allocation2 + $0x5c] sm:$0xf]
    %v218 = vld [vmem:[#allocation2 + $0x60] sm:$0xff]
    %v219 = vld [vmem:[#allocation2 + $0x68] sm:$0xf]
    %v220 = vld [vmem:[#allocation2 + $0x6c] sm:$0xff]
    %v221 = vld [vmem:[#allocation2 + $0x74] sm:$0xf]
    %v222 = vld [vmem:[#allocation2 + $0x78] sm:$0xff]
    %v223 = vld [vmem:[#allocation2 + $0x80] sm:$0xf]
    %v224 = vld [vmem:[#allocation2 + $0x84] sm:$0xff]
    %v225 = vld [vmem:[#allocation2 + $0x8c] sm:$0xf]
    %v226 = vld [vmem:[#allocation2 + $0x90] sm:$0xff]
    %v227 = vld [vmem:[#allocation2 + $0x98] sm:$0xf]
    %v228 = vld [vmem:[#allocation2 + $0x9c] sm:$0xff]
    %v229 = vld [vmem:[#allocation2 + $0xa4] sm:$0xf]
    %v230 = vld [vmem:[#allocation2 + $0xa8] sm:$0xff]
    %v231 = vld [vmem:[#allocation2 + $0xb0] sm:$0xf]
    %v232 = vld [vmem:[#allocation2 + $0xb4] sm:$0xff]
    %v233 = vld [vmem:[#allocation2 + $0xbc] sm:$0xf]
    %v266 = vunpack.c.l.b16 %v202
    %v267 = vunpack.c.h.b16 %v202
    %v268 = vunpack.c.l.b16 %v203
    %v269 = vunpack.c.l.b16 %v204
    %v270 = vunpack.c.h.b16 %v204
    %v271 = vunpack.c.l.b16 %v205
    %v272 = vunpack.c.l.b16 %v206
    %v273 = vunpack.c.h.b16 %v206
    %v274 = vunpack.c.l.b16 %v207
    %v275 = vunpack.c.l.b16 %v208
    %v276 = vunpack.c.h.b16 %v208
    %v277 = vunpack.c.l.b16 %v209
    %v278 = vunpack.c.l.b16 %v210
    %v279 = vunpack.c.h.b16 %v210
    %v280 = vunpack.c.l.b16 %v211
    %v281 = vunpack.c.l.b16 %v212
    %v282 = vunpack.c.h.b16 %v212
    %v283 = vunpack.c.l.b16 %v213
    %v284 = vunpack.c.l.b16 %v214
    %v285 = vunpack.c.h.b16 %v214
    %v286 = vunpack.c.l.b16 %v215
    %v287 = vunpack.c.l.b16 %v216
    %v288 = vunpack.c.h.b16 %v216
    %v289 = vunpack.c.l.b16 %v217
    %v290 = vunpack.c.l.b16 %v218
    %v291 = vunpack.c.h.b16 %v218
    %v292 = vunpack.c.l.b16 %v219
    %v293 = vunpack.c.l.b16 %v220
    %v294 = vunpack.c.h.b16 %v220
    %v295 = vunpack.c.l.b16 %v221
    %v296 = vunpack.c.l.b16 %v222
    %v297 = vunpack.c.h.b16 %v222
    %v298 = vunpack.c.l.b16 %v223
    %v299 = vunpack.c.l.b16 %v224
    %v300 = vunpack.c.h.b16 %v224
    %v301 = vunpack.c.l.b16 %v225
    %v302 = vunpack.c.l.b16 %v226
    %v303 = vunpack.c.h.b16 %v226
    %v304 = vunpack.c.l.b16 %v227
    %v305 = vunpack.c.l.b16 %v228
    %v306 = vunpack.c.h.b16 %v228
    %v307 = vunpack.c.l.b16 %v229
    %v308 = vunpack.c.l.b16 %v230
    %v309 = vunpack.c.h.b16 %v230
    %v310 = vunpack.c.l.b16 %v231
    %v311 = vunpack.c.l.b16 %v232
    %v312 = vunpack.c.h.b16 %v232
    %v313 = vunpack.c.l.b16 %v233
    %v314 = vpack.c.b16 %v269, %v266
    %v315 = vpack.c.b16 %v270, %v267
    %v316 = vpack.c.b16 %v271, %v268
    %v317 = vpack.c.b16 %v275, %v272
    %v318 = vpack.c.b16 %v276, %v273
    %v319 = vpack.c.b16 %v277, %v274
    %v320 = vpack.c.b16 %v281, %v278
    %v321 = vpack.c.b16 %v282, %v279
    %v322 = vpack.c.b16 %v283, %v280
    %v323 = vpack.c.b16 %v287, %v284
    %v324 = vpack.c.b16 %v288, %v285
    %v325 = vpack.c.b16 %v289, %v286
    %v326 = vpack.c.b16 %v293, %v290
    %v327 = vpack.c.b16 %v294, %v291
    %v328 = vpack.c.b16 %v295, %v292
    %v329 = vpack.c.b16 %v299, %v296
    %v330 = vpack.c.b16 %v300, %v297
    %v331 = vpack.c.b16 %v301, %v298
    %v332 = vpack.c.b16 %v305, %v302
    %v333 = vpack.c.b16 %v306, %v303
    %v334 = vpack.c.b16 %v307, %v304
    %v335 = vpack.c.b16 %v311, %v308
    %v336 = vpack.c.b16 %v312, %v309
    %v337 = vpack.c.b16 %v313, %v310
    %362 = vmatprep.subr.bf16.mxu0 %v336
    %363 = vmatpush1.bf16.msra.mxu0 %v335
    %364 = vmatprep.subr.bf16.mxu0 %v333
    %365 = vmatpush1.bf16.msra.mxu0 %v332
    %366 = vmatprep.subr.bf16.mxu0 %v330
    %367 = vmatpush1.bf16.msra.mxu0 %v329
    %368 = vmatprep.subr.bf16.mxu0 %v327
    %369 = vmatpush1.bf16.msra.mxu0 %v326
    %370 = vmatprep.subr.bf16.mxu0 %v324
    %371 = vmatpush1.bf16.msra.mxu0 %v323
    %372 = vmatprep.subr.bf16.mxu0 %v321
    %373 = vmatpush1.bf16.msra.mxu0 %v320
    %374 = vmatprep.subr.bf16.mxu0 %v318
    %375 = vmatpush1.bf16.msra.mxu0 %v317
    %376 = vmatprep.subr.bf16.mxu0 %v315
    %377 = vmatpush1.bf16.msra.mxu0 %v314
    %378 = vmatprep.subr.bf16.mxu0 0
    %379 = vmatpush2.bf16.msra.mxu0 0
    %380 = vmatprep.subr.bf16.mxu0 0
    %381 = vmatpush2.bf16.msra.mxu0 0
    %382 = vmatprep.subr.bf16.mxu0 0
    %383 = vmatpush2.bf16.msra.mxu0 0
    %384 = vmatprep.subr.bf16.mxu0 0
    %385 = vmatpush2.bf16.msra.mxu0 0
    %386 = vmatprep.subr.bf16.mxu0 0
    %387 = vmatpush2.bf16.msra.mxu0 0
    %388 = vmatprep.subr.bf16.mxu0 0
    %389 = vmatpush2.bf16.msra.mxu0 0
    %390 = vmatprep.subr.bf16.mxu0 0
    %391 = vmatpush2.bf16.msra.mxu0 0
    %392 = vmatprep.subr.bf16.mxu0 0
    %393 = vmatpush2.bf16.msra.mxu0 0
    %394 = vmatprep.mubr.bf16.mxu0 0
    %395 = vmatmul.mubr.bf16.gmra.mxu0 %v201
    %v396 = vpop.f32.mrf.mxu0
    %v397 = vadd.f32 0.0, %v396
    %v398 = vpop.f32.mrf.mxu0
    %v399 = vadd.f32 0.0, %v398
    %v400 = vpop.f32.mrf.mxu0
    %v401 = vadd.f32 0.0, %v400
    %v402 = vpop.f32.mrf.mxu0
    %v403 = vadd.f32 0.0, %v402
    %404 = vdwg.mxu0
    %405 = vmatprep.subr.bf16.mxu0 0
    %406 = vmatpush1.bf16.msra.mxu0 %v337
    %407 = vmatprep.subr.bf16.mxu0 0
    %408 = vmatpush1.bf16.msra.mxu0 %v334
    %409 = vmatprep.subr.bf16.mxu0 0
    %410 = vmatpush1.bf16.msra.mxu0 %v331
    %411 = vmatprep.subr.bf16.mxu0 0
    %412 = vmatpush1.bf16.msra.mxu0 %v328
    %413 = vmatprep.subr.bf16.mxu0 0
    %414 = vmatpush1.bf16.msra.mxu0 %v325
    %415 = vmatprep.subr.bf16.mxu0 0
    %416 = vmatpush1.bf16.msra.mxu0 %v322
    %417 = vmatprep.subr.bf16.mxu0 0
    %418 = vmatpush1.bf16.msra.mxu0 %v319
    %419 = vmatprep.subr.bf16.mxu0 0
    %420 = vmatpush1.bf16.msra.mxu0 %v316
    %421 = vmatprep.subr.bf16.mxu0 0
    %422 = vmatpush2.bf16.msra.mxu0 0
    %423 = vmatprep.subr.bf16.mxu0 0
    %424 = vmatpush2.bf16.msra.mxu0 0
    %425 = vmatprep.subr.bf16.mxu0 0
    %426 = vmatpush2.bf16.msra.mxu0 0
    %427 = vmatprep.subr.bf16.mxu0 0
    %428 = vmatpush2.bf16.msra.mxu0 0
    %429 = vmatprep.subr.bf16.mxu0 0
    %430 = vmatpush2.bf16.msra.mxu0 0
    %431 = vmatprep.subr.bf16.mxu0 0
    %432 = vmatpush2.bf16.msra.mxu0 0
    %433 = vmatprep.subr.bf16.mxu0 0
    %434 = vmatpush2.bf16.msra.mxu0 0
    %435 = vmatprep.subr.bf16.mxu0 0
    %436 = vmatpush2.bf16.msra.mxu0 0
    %437 = vmatprep.mubr.bf16.mxu0 0
    %438 = vmatmul.mubr.bf16.gmra.mxu0 %v201
    %v439 = vpop.f32.mrf.mxu0
    %v440 = vadd.f32 0.0, %v439
    %v441 = vpop.f32.mrf.mxu0
    %v442 = vpop.f32.mrf.mxu0
    %v443 = vadd.f32 0.0, %v442
    %v444 = vpop.f32.mrf.mxu0
    %445 = vdwg.mxu0
    %v446 = vpack.c.bf16 %v401, %v397
    %v447 = vpack.c.bf16 %v403, %v399
    %v448 = vpack.c.bf16 %v443, %v440
    %v449 = vld [vmem:[#allocation5] sm:$0xff]
    %v450 = vld [vmem:[#allocation5 + $0x8] sm:$0xff]
    %v451 = vld [vmem:[#allocation5 + $0x10] sm:$0xff]
    %v452 = vld [vmem:[#allocation5 + $0x18] sm:$0xff]
    %v453 = vld [vmem:[#allocation5 + $0x20] sm:$0xff]
    %v454 = vld [vmem:[#allocation5 + $0x28] sm:$0xff]
    %v455 = vld [vmem:[#allocation5 + $0x30] sm:$0xff]
    %v456 = vld [vmem:[#allocation5 + $0x38] sm:$0xff]
    %v457 = vld [vmem:[#allocation5 + $0x40] sm:$0xff]
    %v458 = vld [vmem:[#allocation5 + $0x48] sm:$0xff]
    %v459 = vld [vmem:[#allocation5 + $0x50] sm:$0xff]
    %v460 = vld [vmem:[#allocation5 + $0x58] sm:$0xff]
    %v461 = vld [vmem:[#allocation5 + $0x60] sm:$0xff]
    %v462 = vld [vmem:[#allocation5 + $0x68] sm:$0xff]
    %v463 = vld [vmem:[#allocation5 + $0x70] sm:$0xff]
    %v464 = vld [vmem:[#allocation5 + $0x78] sm:$0xff]
    %v465 = vld [vmem:[#allocation5 + $0x80] sm:$0xff]
    %v466 = vld [vmem:[#allocation5 + $0x88] sm:$0xff]
    %v467 = vld [vmem:[#allocation5 + $0x90] sm:$0xff]
    %v468 = vld [vmem:[#allocation5 + $0x98] sm:$0xff]
    %v469 = vld [vmem:[#allocation5 + $0xa0] sm:$0xff]
    %v470 = vld [vmem:[#allocation5 + $0xa8] sm:$0xff]
    %v471 = vld [vmem:[#allocation5 + $0xb0] sm:$0xff]
    %v472 = vld [vmem:[#allocation5 + $0xb8] sm:$0xff]
    %v473 = vld [vmem:[#allocation5 + $0xc0] sm:$0xff]
    %v474 = vld [vmem:[#allocation5 + $0xc8] sm:$0xff]
    %v475 = vld [vmem:[#allocation5 + $0xd0] sm:$0xff]
    %v476 = vld [vmem:[#allocation5 + $0xd8] sm:$0xff]
    %v477 = vld [vmem:[#allocation5 + $0xe0] sm:$0xff]
    %v478 = vld [vmem:[#allocation5 + $0xe8] sm:$0xff]
    %v479 = vld [vmem:[#allocation5 + $0xf0] sm:$0xff]
    %v480 = vld [vmem:[#allocation5 + $0xf8] sm:$0xff]
    %v481 = vld [vmem:[#allocation5 + $0x100] sm:$0xff]
    %v482 = vld [vmem:[#allocation5 + $0x108] sm:$0xff]
    %v483 = vld [vmem:[#allocation5 + $0x110] sm:$0xff]
    %v484 = vld [vmem:[#allocation5 + $0x118] sm:$0xff]
    %v485 = vld [vmem:[#allocation5 + $0x120] sm:$0xff]
    %v486 = vld [vmem:[#allocation5 + $0x128] sm:$0xff]
    %v487 = vld [vmem:[#allocation5 + $0x130] sm:$0xff]
    %v488 = vld [vmem:[#allocation5 + $0x138] sm:$0xff]
    %v489 = vld [vmem:[#allocation5 + $0x140] sm:$0xff]
    %v490 = vld [vmem:[#allocation5 + $0x148] sm:$0xff]
    %v491 = vld [vmem:[#allocation5 + $0x150] sm:$0xff]
    %v492 = vld [vmem:[#allocation5 + $0x158] sm:$0xff]
    %v493 = vld [vmem:[#allocation5 + $0x160] sm:$0xff]
    %v494 = vld [vmem:[#allocation5 + $0x168] sm:$0xff]
    %v495 = vld [vmem:[#allocation5 + $0x170] sm:$0xff]
    %v496 = vld [vmem:[#allocation5 + $0x178] sm:$0xff]
    %v497 = vld [vmem:[#allocation5 + $0x180] sm:$0xff]
    %v498 = vld [vmem:[#allocation5 + $0x188] sm:$0xff]
    %v499 = vld [vmem:[#allocation5 + $0x190] sm:$0xff]
    %v500 = vld [vmem:[#allocation5 + $0x198] sm:$0xff]
    %v501 = vld [vmem:[#allocation5 + $0x1a0] sm:$0xff]
    %v502 = vld [vmem:[#allocation5 + $0x1a8] sm:$0xff]
    %v503 = vld [vmem:[#allocation5 + $0x1b0] sm:$0xff]
    %v504 = vld [vmem:[#allocation5 + $0x1b8] sm:$0xff]
    %v505 = vld [vmem:[#allocation5 + $0x1c0] sm:$0xff]
    %v506 = vld [vmem:[#allocation5 + $0x1c8] sm:$0xff]
    %v507 = vld [vmem:[#allocation5 + $0x1d0] sm:$0xff]
    %v508 = vld [vmem:[#allocation5 + $0x1d8] sm:$0xff]
    %v509 = vld [vmem:[#allocation5 + $0x1e0] sm:$0xff]
    %v510 = vld [vmem:[#allocation5 + $0x1e8] sm:$0xff]
    %v511 = vld [vmem:[#allocation5 + $0x1f0] sm:$0xff]
    %v512 = vld [vmem:[#allocation5 + $0x1f8] sm:$0xff]
    %v513 = vld [vmem:[#allocation5 + $0x200] sm:$0xff]
    %v514 = vld [vmem:[#allocation5 + $0x208] sm:$0xff]
    %v515 = vld [vmem:[#allocation5 + $0x210] sm:$0xff]
    %v516 = vld [vmem:[#allocation5 + $0x218] sm:$0xff]
    %v517 = vld [vmem:[#allocation5 + $0x220] sm:$0xff]
    %v518 = vld [vmem:[#allocation5 + $0x228] sm:$0xff]
    %v519 = vld [vmem:[#allocation5 + $0x230] sm:$0xff]
    %v520 = vld [vmem:[#allocation5 + $0x238] sm:$0xff]
    %v521 = vld [vmem:[#allocation5 + $0x240] sm:$0xff]
    %v522 = vld [vmem:[#allocation5 + $0x248] sm:$0xff]
    %v523 = vld [vmem:[#allocation5 + $0x250] sm:$0xff]
    %v524 = vld [vmem:[#allocation5 + $0x258] sm:$0xff]
    %v525 = vld [vmem:[#allocation5 + $0x260] sm:$0xff]
    %v526 = vld [vmem:[#allocation5 + $0x268] sm:$0xff]
    %v527 = vld [vmem:[#allocation5 + $0x270] sm:$0xff]
    %v528 = vld [vmem:[#allocation5 + $0x278] sm:$0xff]
    %v529 = vld [vmem:[#allocation5 + $0x280] sm:$0xff]
    %v530 = vld [vmem:[#allocation5 + $0x288] sm:$0xff]
    %v531 = vld [vmem:[#allocation5 + $0x290] sm:$0xff]
    %v532 = vld [vmem:[#allocation5 + $0x298] sm:$0xff]
    %v533 = vld [vmem:[#allocation5 + $0x2a0] sm:$0xff]
    %v534 = vld [vmem:[#allocation5 + $0x2a8] sm:$0xff]
    %v535 = vld [vmem:[#allocation5 + $0x2b0] sm:$0xff]
    %v536 = vld [vmem:[#allocation5 + $0x2b8] sm:$0xff]
    %v537 = vld [vmem:[#allocation5 + $0x2c0] sm:$0xff]
    %v538 = vld [vmem:[#allocation5 + $0x2c8] sm:$0xff]
    %v539 = vld [vmem:[#allocation5 + $0x2d0] sm:$0xff]
    %v540 = vld [vmem:[#allocation5 + $0x2d8] sm:$0xff]
    %v541 = vld [vmem:[#allocation5 + $0x2e0] sm:$0xff]
    %v542 = vld [vmem:[#allocation5 + $0x2e8] sm:$0xff]
    %v543 = vld [vmem:[#allocation5 + $0x2f0] sm:$0xff]
    %v544 = vld [vmem:[#allocation5 + $0x2f8] sm:$0xff]
    %v545 = vld [vmem:[#allocation5 + $0x300] sm:$0xff]
    %v546 = vld [vmem:[#allocation5 + $0x308] sm:$0xff]
    %v547 = vld [vmem:[#allocation5 + $0x310] sm:$0xff]
    %v548 = vld [vmem:[#allocation5 + $0x318] sm:$0xff]
    %v549 = vld [vmem:[#allocation5 + $0x320] sm:$0xff]
    %v550 = vld [vmem:[#allocation5 + $0x328] sm:$0xff]
    %v551 = vld [vmem:[#allocation5 + $0x330] sm:$0xff]
    %v552 = vld [vmem:[#allocation5 + $0x338] sm:$0xff]
    %v553 = vld [vmem:[#allocation5 + $0x340] sm:$0xff]
    %v554 = vld [vmem:[#allocation5 + $0x348] sm:$0xff]
    %v555 = vld [vmem:[#allocation5 + $0x350] sm:$0xff]
    %v556 = vld [vmem:[#allocation5 + $0x358] sm:$0xff]
    %v557 = vld [vmem:[#allocation5 + $0x360] sm:$0xff]
    %v558 = vld [vmem:[#allocation5 + $0x368] sm:$0xff]
    %v559 = vld [vmem:[#allocation5 + $0x370] sm:$0xff]
    %v560 = vld [vmem:[#allocation5 + $0x378] sm:$0xff]
    %v561 = vld [vmem:[#allocation5 + $0x380] sm:$0xff]
    %v562 = vld [vmem:[#allocation5 + $0x388] sm:$0xff]
    %v563 = vld [vmem:[#allocation5 + $0x390] sm:$0xff]
    %v564 = vld [vmem:[#allocation5 + $0x398] sm:$0xff]
    %v565 = vld [vmem:[#allocation5 + $0x3a0] sm:$0xff]
    %v566 = vld [vmem:[#allocation5 + $0x3a8] sm:$0xff]
    %v567 = vld [vmem:[#allocation5 + $0x3b0] sm:$0xff]
    %v568 = vld [vmem:[#allocation5 + $0x3b8] sm:$0xff]
    %v569 = vld [vmem:[#allocation5 + $0x3c0] sm:$0xff]
    %v570 = vld [vmem:[#allocation5 + $0x3c8] sm:$0xff]
    %v571 = vld [vmem:[#allocation5 + $0x3d0] sm:$0xff]
    %v572 = vld [vmem:[#allocation5 + $0x3d8] sm:$0xff]
    %v573 = vld [vmem:[#allocation5 + $0x3e0] sm:$0xff]
    %v574 = vld [vmem:[#allocation5 + $0x3e8] sm:$0xff]
    %v575 = vld [vmem:[#allocation5 + $0x3f0] sm:$0xff]
    %v576 = vld [vmem:[#allocation5 + $0x3f8] sm:$0xff]
    %v577 = vld [vmem:[#allocation5 + $0x400] sm:$0xff]
    %v578 = vld [vmem:[#allocation5 + $0x408] sm:$0xff]
    %v579 = vld [vmem:[#allocation5 + $0x410] sm:$0xff]
    %v580 = vld [vmem:[#allocation5 + $0x418] sm:$0xff]
    %v581 = vld [vmem:[#allocation5 + $0x420] sm:$0xff]
    %v582 = vld [vmem:[#allocation5 + $0x428] sm:$0xff]
    %v583 = vld [vmem:[#allocation5 + $0x430] sm:$0xff]
    %v584 = vld [vmem:[#allocation5 + $0x438] sm:$0xff]
    %v585 = vld [vmem:[#allocation5 + $0x440] sm:$0xff]
    %v586 = vld [vmem:[#allocation5 + $0x448] sm:$0xff]
    %v587 = vld [vmem:[#allocation5 + $0x450] sm:$0xff]
    %v588 = vld [vmem:[#allocation5 + $0x458] sm:$0xff]
    %v589 = vld [vmem:[#allocation5 + $0x460] sm:$0xff]
    %v590 = vld [vmem:[#allocation5 + $0x468] sm:$0xff]
    %v591 = vld [vmem:[#allocation5 + $0x470] sm:$0xff]
    %v592 = vld [vmem:[#allocation5 + $0x478] sm:$0xff]
    %v593 = vld [vmem:[#allocation5 + $0x480] sm:$0xff]
    %v594 = vld [vmem:[#allocation5 + $0x488] sm:$0xff]
    %v595 = vld [vmem:[#allocation5 + $0x490] sm:$0xff]
    %v596 = vld [vmem:[#allocation5 + $0x498] sm:$0xff]
    %v597 = vld [vmem:[#allocation5 + $0x4a0] sm:$0xff]
    %v598 = vld [vmem:[#allocation5 + $0x4a8] sm:$0xff]
    %v599 = vld [vmem:[#allocation5 + $0x4b0] sm:$0xff]
    %v600 = vld [vmem:[#allocation5 + $0x4b8] sm:$0xff]
    %v601 = vld [vmem:[#allocation5 + $0x4c0] sm:$0xff]
    %v602 = vld [vmem:[#allocation5 + $0x4c8] sm:$0xff]
    %v603 = vld [vmem:[#allocation5 + $0x4d0] sm:$0xff]
    %v604 = vld [vmem:[#allocation5 + $0x4d8] sm:$0xff]
    %v605 = vld [vmem:[#allocation5 + $0x4e0] sm:$0xff]
    %v606 = vld [vmem:[#allocation5 + $0x4e8] sm:$0xff]
    %v607 = vld [vmem:[#allocation5 + $0x4f0] sm:$0xff]
    %v608 = vld [vmem:[#allocation5 + $0x4f8] sm:$0xff]
    %v609 = vld [vmem:[#allocation5 + $0x500] sm:$0xff]
    %v610 = vld [vmem:[#allocation5 + $0x508] sm:$0xff]
    %v611 = vld [vmem:[#allocation5 + $0x510] sm:$0xff]
    %v612 = vld [vmem:[#allocation5 + $0x518] sm:$0xff]
    %v613 = vld [vmem:[#allocation5 + $0x520] sm:$0xff]
    %v614 = vld [vmem:[#allocation5 + $0x528] sm:$0xff]
    %v615 = vld [vmem:[#allocation5 + $0x530] sm:$0xff]
    %v616 = vld [vmem:[#allocation5 + $0x538] sm:$0xff]
    %v617 = vld [vmem:[#allocation5 + $0x540] sm:$0xff]
    %v618 = vld [vmem:[#allocation5 + $0x548] sm:$0xff]
    %v619 = vld [vmem:[#allocation5 + $0x550] sm:$0xff]
    %v620 = vld [vmem:[#allocation5 + $0x558] sm:$0xff]
    %v621 = vld [vmem:[#allocation5 + $0x560] sm:$0xff]
    %v622 = vld [vmem:[#allocation5 + $0x568] sm:$0xff]
    %v623 = vld [vmem:[#allocation5 + $0x570] sm:$0xff]
    %v624 = vld [vmem:[#allocation5 + $0x578] sm:$0xff]
    %v625 = vld [vmem:[#allocation5 + $0x580] sm:$0xff]
    %v626 = vld [vmem:[#allocation5 + $0x588] sm:$0xff]
    %v627 = vld [vmem:[#allocation5 + $0x590] sm:$0xff]
    %v628 = vld [vmem:[#allocation5 + $0x598] sm:$0xff]
    %v629 = vld [vmem:[#allocation5 + $0x5a0] sm:$0xff]
    %v630 = vld [vmem:[#allocation5 + $0x5a8] sm:$0xff]
    %v631 = vld [vmem:[#allocation5 + $0x5b0] sm:$0xff]
    %v632 = vld [vmem:[#allocation5 + $0x5b8] sm:$0xff]
    %v633 = vld [vmem:[#allocation5 + $0x5c0] sm:$0xff]
    %v634 = vld [vmem:[#allocation5 + $0x5c8] sm:$0xff]
    %v635 = vld [vmem:[#allocation5 + $0x5d0] sm:$0xff]
    %v636 = vld [vmem:[#allocation5 + $0x5d8] sm:$0xff]
    %v637 = vld [vmem:[#allocation5 + $0x5e0] sm:$0xff]
    %v638 = vld [vmem:[#allocation5 + $0x5e8] sm:$0xff]
    %v639 = vld [vmem:[#allocation5 + $0x5f0] sm:$0xff]
    %v640 = vld [vmem:[#allocation5 + $0x5f8] sm:$0xff]
    %v641 = vld [vmem:[%s3] sm:$0xff]
    %v643 = vlaneseq
    %v644 = vshrl.u32 %v643, 7
    %v645 = vsub.s32 0, %v644
    %v646 = vrot.slane %v641, %v645
    %v647 = vlaneseq
    %v648 = vshrl.u32 %v647, 7
    %v649 = vsub.s32 1, %v648
    %v650 = vrot.slane %v641, %v649
    %v651 = vlaneseq
    %v652 = vshrl.u32 %v651, 7
    %v653 = vsub.s32 2, %v652
    %v654 = vrot.slane %v641, %v653
    %v655 = vlaneseq
    %v656 = vshrl.u32 %v655, 7
    %v657 = vsub.s32 3, %v656
    %v658 = vrot.slane %v641, %v657
    %v659 = vlaneseq
    %v660 = vshrl.u32 %v659, 7
    %v661 = vsub.s32 4, %v660
    %v662 = vrot.slane %v641, %v661
    %v663 = vlaneseq
    %v664 = vshrl.u32 %v663, 7
    %v665 = vsub.s32 5, %v664
    %v666 = vrot.slane %v641, %v665
    %v667 = vlaneseq
    %v668 = vshrl.u32 %v667, 7
    %v669 = vsub.s32 6, %v668
    %v670 = vrot.slane %v641, %v669
    %v671 = vlaneseq
    %v672 = vshrl.u32 %v671, 7
    %v673 = vsub.s32 7, %v672
    %v674 = vrot.slane %v641, %v673
    %v875 = vunpack.c.l.b16 %v449
    %v876 = vunpack.c.h.b16 %v449
    %v877 = vunpack.c.l.b16 %v450
    %v878 = vunpack.c.h.b16 %v450
    %v879 = vunpack.c.l.b16 %v451
    %v880 = vunpack.c.h.b16 %v451
    %v881 = vunpack.c.l.b16 %v452
    %v882 = vunpack.c.h.b16 %v452
    %v883 = vunpack.c.l.b16 %v453
    %v884 = vunpack.c.h.b16 %v453
    %v885 = vunpack.c.l.b16 %v454
    %v886 = vunpack.c.h.b16 %v454
    %v887 = vunpack.c.l.b16 %v455
    %v888 = vunpack.c.h.b16 %v455
    %v889 = vunpack.c.l.b16 %v456
    %v890 = vunpack.c.h.b16 %v456
    %v891 = vunpack.c.l.b16 %v457
    %v892 = vunpack.c.h.b16 %v457
    %v893 = vunpack.c.l.b16 %v458
    %v894 = vunpack.c.h.b16 %v458
    %v895 = vunpack.c.l.b16 %v459
    %v896 = vunpack.c.h.b16 %v459
    %v897 = vunpack.c.l.b16 %v460
    %v898 = vunpack.c.h.b16 %v460
    %v899 = vunpack.c.l.b16 %v461
    %v900 = vunpack.c.h.b16 %v461
    %v901 = vunpack.c.l.b16 %v462
    %v902 = vunpack.c.h.b16 %v462
    %v903 = vunpack.c.l.b16 %v463
    %v904 = vunpack.c.h.b16 %v463
    %v905 = vunpack.c.l.b16 %v464
    %v906 = vunpack.c.h.b16 %v464
    %v907 = vunpack.c.l.b16 %v465
    %v908 = vunpack.c.h.b16 %v465
    %v909 = vunpack.c.l.b16 %v466
    %v910 = vunpack.c.h.b16 %v466
    %v911 = vunpack.c.l.b16 %v467
    %v912 = vunpack.c.h.b16 %v467
    %v913 = vunpack.c.l.b16 %v468
    %v914 = vunpack.c.h.b16 %v468
    %v915 = vunpack.c.l.b16 %v469
    %v916 = vunpack.c.h.b16 %v469
    %v917 = vunpack.c.l.b16 %v470
    %v918 = vunpack.c.h.b16 %v470
    %v919 = vunpack.c.l.b16 %v471
    %v920 = vunpack.c.h.b16 %v471
    %v921 = vunpack.c.l.b16 %v472
    %v922 = vunpack.c.h.b16 %v472
    %v923 = vunpack.c.l.b16 %v473
    %v924 = vunpack.c.h.b16 %v473
    %v925 = vunpack.c.l.b16 %v474
    %v926 = vunpack.c.h.b16 %v474
    %v927 = vunpack.c.l.b16 %v475
    %v928 = vunpack.c.h.b16 %v475
    %v929 = vunpack.c.l.b16 %v476
    %v930 = vunpack.c.h.b16 %v476
    %v931 = vunpack.c.l.b16 %v477
    %v932 = vunpack.c.h.b16 %v477
    %v933 = vunpack.c.l.b16 %v478
    %v934 = vunpack.c.h.b16 %v478
    %v935 = vunpack.c.l.b16 %v479
    %v936 = vunpack.c.h.b16 %v479
    %v937 = vunpack.c.l.b16 %v480
    %v938 = vunpack.c.h.b16 %v480
    %v939 = vunpack.c.l.b16 %v481
    %v940 = vunpack.c.h.b16 %v481
    %v941 = vunpack.c.l.b16 %v482
    %v942 = vunpack.c.h.b16 %v482
    %v943 = vunpack.c.l.b16 %v483
    %v944 = vunpack.c.h.b16 %v483
    %v945 = vunpack.c.l.b16 %v484
    %v946 = vunpack.c.h.b16 %v484
    %v947 = vunpack.c.l.b16 %v485
    %v948 = vunpack.c.h.b16 %v485
    %v949 = vunpack.c.l.b16 %v486
    %v950 = vunpack.c.h.b16 %v486
    %v951 = vunpack.c.l.b16 %v487
    %v952 = vunpack.c.h.b16 %v487
    %v953 = vunpack.c.l.b16 %v488
    %v954 = vunpack.c.h.b16 %v488
    %v955 = vunpack.c.l.b16 %v489
    %v956 = vunpack.c.h.b16 %v489
    %v957 = vunpack.c.l.b16 %v490
    %v958 = vunpack.c.h.b16 %v490
    %v959 = vunpack.c.l.b16 %v491
    %v960 = vunpack.c.h.b16 %v491
    %v961 = vunpack.c.l.b16 %v492
    %v962 = vunpack.c.h.b16 %v492
    %v963 = vunpack.c.l.b16 %v493
    %v964 = vunpack.c.h.b16 %v493
    %v965 = vunpack.c.l.b16 %v494
    %v966 = vunpack.c.h.b16 %v494
    %v967 = vunpack.c.l.b16 %v495
    %v968 = vunpack.c.h.b16 %v495
    %v969 = vunpack.c.l.b16 %v496
    %v970 = vunpack.c.h.b16 %v496
    %v971 = vunpack.c.l.b16 %v497
    %v972 = vunpack.c.h.b16 %v497
    %v973 = vunpack.c.l.b16 %v498
    %v974 = vunpack.c.h.b16 %v498
    %v975 = vunpack.c.l.b16 %v499
    %v976 = vunpack.c.h.b16 %v499
    %v977 = vunpack.c.l.b16 %v500
    %v978 = vunpack.c.h.b16 %v500
    %v979 = vunpack.c.l.b16 %v501
    %v980 = vunpack.c.h.b16 %v501
    %v981 = vunpack.c.l.b16 %v502
    %v982 = vunpack.c.h.b16 %v502
    %v983 = vunpack.c.l.b16 %v503
    %v984 = vunpack.c.h.b16 %v503
    %v985 = vunpack.c.l.b16 %v504
    %v986 = vunpack.c.h.b16 %v504
    %v987 = vunpack.c.l.b16 %v505
    %v988 = vunpack.c.h.b16 %v505
    %v989 = vunpack.c.l.b16 %v506
    %v990 = vunpack.c.h.b16 %v506
    %v991 = vunpack.c.l.b16 %v507
    %v992 = vunpack.c.h.b16 %v507
    %v993 = vunpack.c.l.b16 %v508
    %v994 = vunpack.c.h.b16 %v508
    %v995 = vunpack.c.l.b16 %v509
    %v996 = vunpack.c.h.b16 %v509
    %v997 = vunpack.c.l.b16 %v510
    %v998 = vunpack.c.h.b16 %v510
    %v999 = vunpack.c.l.b16 %v511
    %v1000 = vunpack.c.h.b16 %v511
    %v1001 = vunpack.c.l.b16 %v512
    %v1002 = vunpack.c.h.b16 %v512
    %v1003 = vunpack.c.l.b16 %v513
    %v1004 = vunpack.c.h.b16 %v513
    %v1005 = vunpack.c.l.b16 %v514
    %v1006 = vunpack.c.h.b16 %v514
    %v1007 = vunpack.c.l.b16 %v515
    %v1008 = vunpack.c.h.b16 %v515
    %v1009 = vunpack.c.l.b16 %v516
    %v1010 = vunpack.c.h.b16 %v516
    %v1011 = vunpack.c.l.b16 %v517
    %v1012 = vunpack.c.h.b16 %v517
    %v1013 = vunpack.c.l.b16 %v518
    %v1014 = vunpack.c.h.b16 %v518
    %v1015 = vunpack.c.l.b16 %v519
    %v1016 = vunpack.c.h.b16 %v519
    %v1017 = vunpack.c.l.b16 %v520
    %v1018 = vunpack.c.h.b16 %v520
    %v1019 = vunpack.c.l.b16 %v521
    %v1020 = vunpack.c.h.b16 %v521
    %v1021 = vunpack.c.l.b16 %v522
    %v1022 = vunpack.c.h.b16 %v522
    %v1023 = vunpack.c.l.b16 %v523
    %v1024 = vunpack.c.h.b16 %v523
    %v1025 = vunpack.c.l.b16 %v524
    %v1026 = vunpack.c.h.b16 %v524
    %v1027 = vunpack.c.l.b16 %v525
    %v1028 = vunpack.c.h.b16 %v525
    %v1029 = vunpack.c.l.b16 %v526
    %v1030 = vunpack.c.h.b16 %v526
    %v1031 = vunpack.c.l.b16 %v527
    %v1032 = vunpack.c.h.b16 %v527
    %v1033 = vunpack.c.l.b16 %v528
    %v1034 = vunpack.c.h.b16 %v528
    %v1035 = vunpack.c.l.b16 %v529
    %v1036 = vunpack.c.h.b16 %v529
    %v1037 = vunpack.c.l.b16 %v530
    %v1038 = vunpack.c.h.b16 %v530
    %v1039 = vunpack.c.l.b16 %v531
    %v1040 = vunpack.c.h.b16 %v531
    %v1041 = vunpack.c.l.b16 %v532
    %v1042 = vunpack.c.h.b16 %v532
    %v1043 = vunpack.c.l.b16 %v533
    %v1044 = vunpack.c.h.b16 %v533
    %v1045 = vunpack.c.l.b16 %v534
    %v1046 = vunpack.c.h.b16 %v534
    %v1047 = vunpack.c.l.b16 %v535
    %v1048 = vunpack.c.h.b16 %v535
    %v1049 = vunpack.c.l.b16 %v536
    %v1050 = vunpack.c.h.b16 %v536
    %v1051 = vunpack.c.l.b16 %v537
    %v1052 = vunpack.c.h.b16 %v537
    %v1053 = vunpack.c.l.b16 %v538
    %v1054 = vunpack.c.h.b16 %v538
    %v1055 = vunpack.c.l.b16 %v539
    %v1056 = vunpack.c.h.b16 %v539
    %v1057 = vunpack.c.l.b16 %v540
    %v1058 = vunpack.c.h.b16 %v540
    %v1059 = vunpack.c.l.b16 %v541
    %v1060 = vunpack.c.h.b16 %v541
    %v1061 = vunpack.c.l.b16 %v542
    %v1062 = vunpack.c.h.b16 %v542
    %v1063 = vunpack.c.l.b16 %v543
    %v1064 = vunpack.c.h.b16 %v543
    %v1065 = vunpack.c.l.b16 %v544
    %v1066 = vunpack.c.h.b16 %v544
    %v1067 = vunpack.c.l.b16 %v545
    %v1068 = vunpack.c.h.b16 %v545
    %v1069 = vunpack.c.l.b16 %v546
    %v1070 = vunpack.c.h.b16 %v546
    %v1071 = vunpack.c.l.b16 %v547
    %v1072 = vunpack.c.h.b16 %v547
    %v1073 = vunpack.c.l.b16 %v548
    %v1074 = vunpack.c.h.b16 %v548
    %v1075 = vunpack.c.l.b16 %v549
    %v1076 = vunpack.c.h.b16 %v549
    %v1077 = vunpack.c.l.b16 %v550
    %v1078 = vunpack.c.h.b16 %v550
    %v1079 = vunpack.c.l.b16 %v551
    %v1080 = vunpack.c.h.b16 %v551
    %v1081 = vunpack.c.l.b16 %v552
    %v1082 = vunpack.c.h.b16 %v552
    %v1083 = vunpack.c.l.b16 %v553
    %v1084 = vunpack.c.h.b16 %v553
    %v1085 = vunpack.c.l.b16 %v554
    %v1086 = vunpack.c.h.b16 %v554
    %v1087 = vunpack.c.l.b16 %v555
    %v1088 = vunpack.c.h.b16 %v555
    %v1089 = vunpack.c.l.b16 %v556
    %v1090 = vunpack.c.h.b16 %v556
    %v1091 = vunpack.c.l.b16 %v557
    %v1092 = vunpack.c.h.b16 %v557
    %v1093 = vunpack.c.l.b16 %v558
    %v1094 = vunpack.c.h.b16 %v558
    %v1095 = vunpack.c.l.b16 %v559
    %v1096 = vunpack.c.h.b16 %v559
    %v1097 = vunpack.c.l.b16 %v560
    %v1098 = vunpack.c.h.b16 %v560
    %v1099 = vunpack.c.l.b16 %v561
    %v1100 = vunpack.c.h.b16 %v561
    %v1101 = vunpack.c.l.b16 %v562
    %v1102 = vunpack.c.h.b16 %v562
    %v1103 = vunpack.c.l.b16 %v563
    %v1104 = vunpack.c.h.b16 %v563
    %v1105 = vunpack.c.l.b16 %v564
    %v1106 = vunpack.c.h.b16 %v564
    %v1107 = vunpack.c.l.b16 %v565
    %v1108 = vunpack.c.h.b16 %v565
    %v1109 = vunpack.c.l.b16 %v566
    %v1110 = vunpack.c.h.b16 %v566
    %v1111 = vunpack.c.l.b16 %v567
    %v1112 = vunpack.c.h.b16 %v567
    %v1113 = vunpack.c.l.b16 %v568
    %v1114 = vunpack.c.h.b16 %v568
    %v1115 = vunpack.c.l.b16 %v569
    %v1116 = vunpack.c.h.b16 %v569
    %v1117 = vunpack.c.l.b16 %v570
    %v1118 = vunpack.c.h.b16 %v570
    %v1119 = vunpack.c.l.b16 %v571
    %v1120 = vunpack.c.h.b16 %v571
    %v1121 = vunpack.c.l.b16 %v572
    %v1122 = vunpack.c.h.b16 %v572
    %v1123 = vunpack.c.l.b16 %v573
    %v1124 = vunpack.c.h.b16 %v573
    %v1125 = vunpack.c.l.b16 %v574
    %v1126 = vunpack.c.h.b16 %v574
    %v1127 = vunpack.c.l.b16 %v575
    %v1128 = vunpack.c.h.b16 %v575
    %v1129 = vunpack.c.l.b16 %v576
    %v1130 = vunpack.c.h.b16 %v576
    %v1131 = vunpack.c.l.b16 %v577
    %v1132 = vunpack.c.h.b16 %v577
    %v1133 = vunpack.c.l.b16 %v578
    %v1134 = vunpack.c.h.b16 %v578
    %v1135 = vunpack.c.l.b16 %v579
    %v1136 = vunpack.c.h.b16 %v579
    %v1137 = vunpack.c.l.b16 %v580
    %v1138 = vunpack.c.h.b16 %v580
    %v1139 = vunpack.c.l.b16 %v581
    %v1140 = vunpack.c.h.b16 %v581
    %v1141 = vunpack.c.l.b16 %v582
    %v1142 = vunpack.c.h.b16 %v582
    %v1143 = vunpack.c.l.b16 %v583
    %v1144 = vunpack.c.h.b16 %v583
    %v1145 = vunpack.c.l.b16 %v584
    %v1146 = vunpack.c.h.b16 %v584
    %v1147 = vunpack.c.l.b16 %v585
    %v1148 = vunpack.c.h.b16 %v585
    %v1149 = vunpack.c.l.b16 %v586
    %v1150 = vunpack.c.h.b16 %v586
    %v1151 = vunpack.c.l.b16 %v587
    %v1152 = vunpack.c.h.b16 %v587
    %v1153 = vunpack.c.l.b16 %v588
    %v1154 = vunpack.c.h.b16 %v588
    %v1155 = vunpack.c.l.b16 %v589
    %v1156 = vunpack.c.h.b16 %v589
    %v1157 = vunpack.c.l.b16 %v590
    %v1158 = vunpack.c.h.b16 %v590
    %v1159 = vunpack.c.l.b16 %v591
    %v1160 = vunpack.c.h.b16 %v591
    %v1161 = vunpack.c.l.b16 %v592
    %v1162 = vunpack.c.h.b16 %v592
    %v1163 = vunpack.c.l.b16 %v593
    %v1164 = vunpack.c.h.b16 %v593
    %v1165 = vunpack.c.l.b16 %v594
    %v1166 = vunpack.c.h.b16 %v594
    %v1167 = vunpack.c.l.b16 %v595
    %v1168 = vunpack.c.h.b16 %v595
    %v1169 = vunpack.c.l.b16 %v596
    %v1170 = vunpack.c.h.b16 %v596
    %v1171 = vunpack.c.l.b16 %v597
    %v1172 = vunpack.c.h.b16 %v597
    %v1173 = vunpack.c.l.b16 %v598
    %v1174 = vunpack.c.h.b16 %v598
    %v1175 = vunpack.c.l.b16 %v599
    %v1176 = vunpack.c.h.b16 %v599
    %v1177 = vunpack.c.l.b16 %v600
    %v1178 = vunpack.c.h.b16 %v600
    %v1179 = vunpack.c.l.b16 %v601
    %v1180 = vunpack.c.h.b16 %v601
    %v1181 = vunpack.c.l.b16 %v602
    %v1182 = vunpack.c.h.b16 %v602
    %v1183 = vunpack.c.l.b16 %v603
    %v1184 = vunpack.c.h.b16 %v603
    %v1185 = vunpack.c.l.b16 %v604
    %v1186 = vunpack.c.h.b16 %v604
    %v1187 = vunpack.c.l.b16 %v605
    %v1188 = vunpack.c.h.b16 %v605
    %v1189 = vunpack.c.l.b16 %v606
    %v1190 = vunpack.c.h.b16 %v606
    %v1191 = vunpack.c.l.b16 %v607
    %v1192 = vunpack.c.h.b16 %v607
    %v1193 = vunpack.c.l.b16 %v608
    %v1194 = vunpack.c.h.b16 %v608
    %v1195 = vunpack.c.l.b16 %v609
    %v1196 = vunpack.c.h.b16 %v609
    %v1197 = vunpack.c.l.b16 %v610
    %v1198 = vunpack.c.h.b16 %v610
    %v1199 = vunpack.c.l.b16 %v611
    %v1200 = vunpack.c.h.b16 %v611
    %v1201 = vunpack.c.l.b16 %v612
    %v1202 = vunpack.c.h.b16 %v612
    %v1203 = vunpack.c.l.b16 %v613
    %v1204 = vunpack.c.h.b16 %v613
    %v1205 = vunpack.c.l.b16 %v614
    %v1206 = vunpack.c.h.b16 %v614
    %v1207 = vunpack.c.l.b16 %v615
    %v1208 = vunpack.c.h.b16 %v615
    %v1209 = vunpack.c.l.b16 %v616
    %v1210 = vunpack.c.h.b16 %v616
    %v1211 = vunpack.c.l.b16 %v617
    %v1212 = vunpack.c.h.b16 %v617
    %v1213 = vunpack.c.l.b16 %v618
    %v1214 = vunpack.c.h.b16 %v618
    %v1215 = vunpack.c.l.b16 %v619
    %v1216 = vunpack.c.h.b16 %v619
    %v1217 = vunpack.c.l.b16 %v620
    %v1218 = vunpack.c.h.b16 %v620
    %v1219 = vunpack.c.l.b16 %v621
    %v1220 = vunpack.c.h.b16 %v621
    %v1221 = vunpack.c.l.b16 %v622
    %v1222 = vunpack.c.h.b16 %v622
    %v1223 = vunpack.c.l.b16 %v623
    %v1224 = vunpack.c.h.b16 %v623
    %v1225 = vunpack.c.l.b16 %v624
    %v1226 = vunpack.c.h.b16 %v624
    %v1227 = vunpack.c.l.b16 %v625
    %v1228 = vunpack.c.h.b16 %v625
    %v1229 = vunpack.c.l.b16 %v626
    %v1230 = vunpack.c.h.b16 %v626
    %v1231 = vunpack.c.l.b16 %v627
    %v1232 = vunpack.c.h.b16 %v627
    %v1233 = vunpack.c.l.b16 %v628
    %v1234 = vunpack.c.h.b16 %v628
    %v1235 = vunpack.c.l.b16 %v629
    %v1236 = vunpack.c.h.b16 %v629
    %v1237 = vunpack.c.l.b16 %v630
    %v1238 = vunpack.c.h.b16 %v630
    %v1239 = vunpack.c.l.b16 %v631
    %v1240 = vunpack.c.h.b16 %v631
    %v1241 = vunpack.c.l.b16 %v632
    %v1242 = vunpack.c.h.b16 %v632
    %v1243 = vunpack.c.l.b16 %v633
    %v1244 = vunpack.c.h.b16 %v633
    %v1245 = vunpack.c.l.b16 %v634
    %v1246 = vunpack.c.h.b16 %v634
    %v1247 = vunpack.c.l.b16 %v635
    %v1248 = vunpack.c.h.b16 %v635
    %v1249 = vunpack.c.l.b16 %v636
    %v1250 = vunpack.c.h.b16 %v636
    %v1251 = vunpack.c.l.b16 %v637
    %v1252 = vunpack.c.h.b16 %v637
    %v1253 = vunpack.c.l.b16 %v638
    %v1254 = vunpack.c.h.b16 %v638
    %v1255 = vunpack.c.l.b16 %v639
    %v1256 = vunpack.c.h.b16 %v639
    %v1257 = vunpack.c.l.b16 %v640
    %v1258 = vunpack.c.h.b16 %v640
    %v1259 = vpack.c.b16 %v883, %v875
    %v1260 = vpack.c.b16 %v884, %v876
    %v1261 = vpack.c.b16 %v885, %v877
    %v1262 = vpack.c.b16 %v886, %v878
    %v1263 = vpack.c.b16 %v887, %v879
    %v1264 = vpack.c.b16 %v888, %v880
    %v1265 = vpack.c.b16 %v889, %v881
    %v1266 = vpack.c.b16 %v890, %v882
    %v1267 = vpack.c.b16 %v899, %v891
    %v1268 = vpack.c.b16 %v900, %v892
    %v1269 = vpack.c.b16 %v901, %v893
    %v1270 = vpack.c.b16 %v902, %v894
    %v1271 = vpack.c.b16 %v903, %v895
    %v1272 = vpack.c.b16 %v904, %v896
    %v1273 = vpack.c.b16 %v905, %v897
    %v1274 = vpack.c.b16 %v906, %v898
    %v1275 = vpack.c.b16 %v915, %v907
    %v1276 = vpack.c.b16 %v916, %v908
    %v1277 = vpack.c.b16 %v917, %v909
    %v1278 = vpack.c.b16 %v918, %v910
    %v1279 = vpack.c.b16 %v919, %v911
    %v1280 = vpack.c.b16 %v920, %v912
    %v1281 = vpack.c.b16 %v921, %v913
    %v1282 = vpack.c.b16 %v922, %v914
    %v1283 = vpack.c.b16 %v931, %v923
    %v1284 = vpack.c.b16 %v932, %v924
    %v1285 = vpack.c.b16 %v933, %v925
    %v1286 = vpack.c.b16 %v934, %v926
    %v1287 = vpack.c.b16 %v935, %v927
    %v1288 = vpack.c.b16 %v936, %v928
    %v1289 = vpack.c.b16 %v937, %v929
    %v1290 = vpack.c.b16 %v938, %v930
    %v1291 = vpack.c.b16 %v947, %v939
    %v1292 = vpack.c.b16 %v948, %v940
    %v1293 = vpack.c.b16 %v949, %v941
    %v1294 = vpack.c.b16 %v950, %v942
    %v1295 = vpack.c.b16 %v951, %v943
    %v1296 = vpack.c.b16 %v952, %v944
    %v1297 = vpack.c.b16 %v953, %v945
    %v1298 = vpack.c.b16 %v954, %v946
    %v1299 = vpack.c.b16 %v963, %v955
    %v1300 = vpack.c.b16 %v964, %v956
    %v1301 = vpack.c.b16 %v965, %v957
    %v1302 = vpack.c.b16 %v966, %v958
    %v1303 = vpack.c.b16 %v967, %v959
    %v1304 = vpack.c.b16 %v968, %v960
    %v1305 = vpack.c.b16 %v969, %v961
    %v1306 = vpack.c.b16 %v970, %v962
    %v1307 = vpack.c.b16 %v979, %v971
    %v1308 = vpack.c.b16 %v980, %v972
    %v1309 = vpack.c.b16 %v981, %v973
    %v1310 = vpack.c.b16 %v982, %v974
    %v1311 = vpack.c.b16 %v983, %v975
    %v1312 = vpack.c.b16 %v984, %v976
    %v1313 = vpack.c.b16 %v985, %v977
    %v1314 = vpack.c.b16 %v986, %v978
    %v1315 = vpack.c.b16 %v995, %v987
    %v1316 = vpack.c.b16 %v996, %v988
    %v1317 = vpack.c.b16 %v997, %v989
    %v1318 = vpack.c.b16 %v998, %v990
    %v1319 = vpack.c.b16 %v999, %v991
    %v1320 = vpack.c.b16 %v1000, %v992
    %v1321 = vpack.c.b16 %v1001, %v993
    %v1322 = vpack.c.b16 %v1002, %v994
    %v1323 = vpack.c.b16 %v1011, %v1003
    %v1324 = vpack.c.b16 %v1012, %v1004
    %v1325 = vpack.c.b16 %v1013, %v1005
    %v1326 = vpack.c.b16 %v1014, %v1006
    %v1327 = vpack.c.b16 %v1015, %v1007
    %v1328 = vpack.c.b16 %v1016, %v1008
    %v1329 = vpack.c.b16 %v1017, %v1009
    %v1330 = vpack.c.b16 %v1018, %v1010
    %v1331 = vpack.c.b16 %v1027, %v1019
    %v1332 = vpack.c.b16 %v1028, %v1020
    %v1333 = vpack.c.b16 %v1029, %v1021
    %v1334 = vpack.c.b16 %v1030, %v1022
    %v1335 = vpack.c.b16 %v1031, %v1023
    %v1336 = vpack.c.b16 %v1032, %v1024
    %v1337 = vpack.c.b16 %v1033, %v1025
    %v1338 = vpack.c.b16 %v1034, %v1026
    %v1339 = vpack.c.b16 %v1043, %v1035
    %v1340 = vpack.c.b16 %v1044, %v1036
    %v1341 = vpack.c.b16 %v1045, %v1037
    %v1342 = vpack.c.b16 %v1046, %v1038
    %v1343 = vpack.c.b16 %v1047, %v1039
    %v1344 = vpack.c.b16 %v1048, %v1040
    %v1345 = vpack.c.b16 %v1049, %v1041
    %v1346 = vpack.c.b16 %v1050, %v1042
    %v1347 = vpack.c.b16 %v1059, %v1051
    %v1348 = vpack.c.b16 %v1060, %v1052
    %v1349 = vpack.c.b16 %v1061, %v1053
    %v1350 = vpack.c.b16 %v1062, %v1054
    %v1351 = vpack.c.b16 %v1063, %v1055
    %v1352 = vpack.c.b16 %v1064, %v1056
    %v1353 = vpack.c.b16 %v1065, %v1057
    %v1354 = vpack.c.b16 %v1066, %v1058
    %v1355 = vpack.c.b16 %v1075, %v1067
    %v1356 = vpack.c.b16 %v1076, %v1068
    %v1357 = vpack.c.b16 %v1077, %v1069
    %v1358 = vpack.c.b16 %v1078, %v1070
    %v1359 = vpack.c.b16 %v1079, %v1071
    %v1360 = vpack.c.b16 %v1080, %v1072
    %v1361 = vpack.c.b16 %v1081, %v1073
    %v1362 = vpack.c.b16 %v1082, %v1074
    %v1363 = vpack.c.b16 %v1091, %v1083
    %v1364 = vpack.c.b16 %v1092, %v1084
    %v1365 = vpack.c.b16 %v1093, %v1085
    %v1366 = vpack.c.b16 %v1094, %v1086
    %v1367 = vpack.c.b16 %v1095, %v1087
    %v1368 = vpack.c.b16 %v1096, %v1088
    %v1369 = vpack.c.b16 %v1097, %v1089
    %v1370 = vpack.c.b16 %v1098, %v1090
    %v1371 = vpack.c.b16 %v1107, %v1099
    %v1372 = vpack.c.b16 %v1108, %v1100
    %v1373 = vpack.c.b16 %v1109, %v1101
    %v1374 = vpack.c.b16 %v1110, %v1102
    %v1375 = vpack.c.b16 %v1111, %v1103
    %v1376 = vpack.c.b16 %v1112, %v1104
    %v1377 = vpack.c.b16 %v1113, %v1105
    %v1378 = vpack.c.b16 %v1114, %v1106
    %v1379 = vpack.c.b16 %v1123, %v1115
    %v1380 = vpack.c.b16 %v1124, %v1116
    %v1381 = vpack.c.b16 %v1125, %v1117
    %v1382 = vpack.c.b16 %v1126, %v1118
    %v1383 = vpack.c.b16 %v1127, %v1119
    %v1384 = vpack.c.b16 %v1128, %v1120
    %v1385 = vpack.c.b16 %v1129, %v1121
    %v1386 = vpack.c.b16 %v1130, %v1122
    %v1387 = vpack.c.b16 %v1139, %v1131
    %v1388 = vpack.c.b16 %v1140, %v1132
    %v1389 = vpack.c.b16 %v1141, %v1133
    %v1390 = vpack.c.b16 %v1142, %v1134
    %v1391 = vpack.c.b16 %v1143, %v1135
    %v1392 = vpack.c.b16 %v1144, %v1136
    %v1393 = vpack.c.b16 %v1145, %v1137
    %v1394 = vpack.c.b16 %v1146, %v1138
    %v1395 = vpack.c.b16 %v1155, %v1147
    %v1396 = vpack.c.b16 %v1156, %v1148
    %v1397 = vpack.c.b16 %v1157, %v1149
    %v1398 = vpack.c.b16 %v1158, %v1150
    %v1399 = vpack.c.b16 %v1159, %v1151
    %v1400 = vpack.c.b16 %v1160, %v1152
    %v1401 = vpack.c.b16 %v1161, %v1153
    %v1402 = vpack.c.b16 %v1162, %v1154
    %v1403 = vpack.c.b16 %v1171, %v1163
    %v1404 = vpack.c.b16 %v1172, %v1164
    %v1405 = vpack.c.b16 %v1173, %v1165
    %v1406 = vpack.c.b16 %v1174, %v1166
    %v1407 = vpack.c.b16 %v1175, %v1167
    %v1408 = vpack.c.b16 %v1176, %v1168
    %v1409 = vpack.c.b16 %v1177, %v1169
    %v1410 = vpack.c.b16 %v1178, %v1170
    %v1411 = vpack.c.b16 %v1187, %v1179
    %v1412 = vpack.c.b16 %v1188, %v1180
    %v1413 = vpack.c.b16 %v1189, %v1181
    %v1414 = vpack.c.b16 %v1190, %v1182
    %v1415 = vpack.c.b16 %v1191, %v1183
    %v1416 = vpack.c.b16 %v1192, %v1184
    %v1417 = vpack.c.b16 %v1193, %v1185
    %v1418 = vpack.c.b16 %v1194, %v1186
    %v1419 = vpack.c.b16 %v1203, %v1195
    %v1420 = vpack.c.b16 %v1204, %v1196
    %v1421 = vpack.c.b16 %v1205, %v1197
    %v1422 = vpack.c.b16 %v1206, %v1198
    %v1423 = vpack.c.b16 %v1207, %v1199
    %v1424 = vpack.c.b16 %v1208, %v1200
    %v1425 = vpack.c.b16 %v1209, %v1201
    %v1426 = vpack.c.b16 %v1210, %v1202
    %v1427 = vpack.c.b16 %v1219, %v1211
    %v1428 = vpack.c.b16 %v1220, %v1212
    %v1429 = vpack.c.b16 %v1221, %v1213
    %v1430 = vpack.c.b16 %v1222, %v1214
    %v1431 = vpack.c.b16 %v1223, %v1215
    %v1432 = vpack.c.b16 %v1224, %v1216
    %v1433 = vpack.c.b16 %v1225, %v1217
    %v1434 = vpack.c.b16 %v1226, %v1218
    %v1435 = vpack.c.b16 %v1235, %v1227
    %v1436 = vpack.c.b16 %v1236, %v1228
    %v1437 = vpack.c.b16 %v1237, %v1229
    %v1438 = vpack.c.b16 %v1238, %v1230
    %v1439 = vpack.c.b16 %v1239, %v1231
    %v1440 = vpack.c.b16 %v1240, %v1232
    %v1441 = vpack.c.b16 %v1241, %v1233
    %v1442 = vpack.c.b16 %v1242, %v1234
    %v1443 = vpack.c.b16 %v1251, %v1243
    %v1444 = vpack.c.b16 %v1252, %v1244
    %v1445 = vpack.c.b16 %v1253, %v1245
    %v1446 = vpack.c.b16 %v1254, %v1246
    %v1447 = vpack.c.b16 %v1255, %v1247
    %v1448 = vpack.c.b16 %v1256, %v1248
    %v1449 = vpack.c.b16 %v1257, %v1249
    %v1450 = vpack.c.b16 %v1258, %v1250
    %1643 = vmatprep.subr.bf16.mxu0 %v1316
    %1644 = vmatpush1.bf16.msra.mxu0 %v1315
    %1645 = vmatprep.subr.bf16.mxu0 %v1308
    %1646 = vmatpush1.bf16.msra.mxu0 %v1307
    %1647 = vmatprep.subr.bf16.mxu0 %v1300
    %1648 = vmatpush1.bf16.msra.mxu0 %v1299
    %1649 = vmatprep.subr.bf16.mxu0 %v1292
    %1650 = vmatpush1.bf16.msra.mxu0 %v1291
    %1651 = vmatprep.subr.bf16.mxu0 %v1284
    %1652 = vmatpush1.bf16.msra.mxu0 %v1283
    %1653 = vmatprep.subr.bf16.mxu0 %v1276
    %1654 = vmatpush1.bf16.msra.mxu0 %v1275
    %1655 = vmatprep.subr.bf16.mxu0 %v1268
    %1656 = vmatpush1.bf16.msra.mxu0 %v1267
    %1657 = vmatprep.subr.bf16.mxu0 %v1260
    %1658 = vmatpush1.bf16.msra.mxu0 %v1259
    %1659 = vmatprep.subr.bf16.mxu0 %v1380
    %1660 = vmatpush2.bf16.msra.mxu0 %v1379
    %1661 = vmatprep.subr.bf16.mxu0 %v1372
    %1662 = vmatpush2.bf16.msra.mxu0 %v1371
    %1663 = vmatprep.subr.bf16.mxu0 %v1364
    %1664 = vmatpush2.bf16.msra.mxu0 %v1363
    %1665 = vmatprep.subr.bf16.mxu0 %v1356
    %1666 = vmatpush2.bf16.msra.mxu0 %v1355
    %1667 = vmatprep.subr.bf16.mxu0 %v1348
    %1668 = vmatpush2.bf16.msra.mxu0 %v1347
    %1669 = vmatprep.subr.bf16.mxu0 %v1340
    %1670 = vmatpush2.bf16.msra.mxu0 %v1339
    %1671 = vmatprep.subr.bf16.mxu0 %v1332
    %1672 = vmatpush2.bf16.msra.mxu0 %v1331
    %1673 = vmatprep.subr.bf16.mxu0 %v1324
    %1674 = vmatpush2.bf16.msra.mxu0 %v1323
    %1675 = vmatprep.mubr.bf16.mxu0 %v447
    %1676 = vmatmul.mubr.bf16.gmra.mxu0 %v446
    %v1677 = vpop.f32.mrf.mxu0
    %v1678 = vadd.f32 %v646, %v1677
    %v1679 = vpop.f32.mrf.mxu0
    %v1680 = vadd.f32 %v650, %v1679
    %v1681 = vpop.f32.mrf.mxu0
    %v1682 = vadd.f32 %v646, %v1681
    %v1683 = vpop.f32.mrf.mxu0
    %v1684 = vadd.f32 %v650, %v1683
    %1685 = vdwg.mxu0
    %1686 = vmatprep.subr.bf16.mxu0 %v1444
    %1687 = vmatpush1.bf16.msra.mxu0 %v1443
    %1688 = vmatprep.subr.bf16.mxu0 %v1436
    %1689 = vmatpush1.bf16.msra.mxu0 %v1435
    %1690 = vmatprep.subr.bf16.mxu0 %v1428
    %1691 = vmatpush1.bf16.msra.mxu0 %v1427
    %1692 = vmatprep.subr.bf16.mxu0 %v1420
    %1693 = vmatpush1.bf16.msra.mxu0 %v1419
    %1694 = vmatprep.subr.bf16.mxu0 %v1412
    %1695 = vmatpush1.bf16.msra.mxu0 %v1411
    %1696 = vmatprep.subr.bf16.mxu0 %v1404
    %1697 = vmatpush1.bf16.msra.mxu0 %v1403
    %1698 = vmatprep.subr.bf16.mxu0 %v1396
    %1699 = vmatpush1.bf16.msra.mxu0 %v1395
    %1700 = vmatprep.subr.bf16.mxu0 %v1388
    %1701 = vmatpush1.bf16.msra.mxu0 %v1387
    %1702 = vmatprep.subr.bf16.mxu0 0
    %1703 = vmatpush2.bf16.msra.mxu0 0
    %1704 = vmatprep.subr.bf16.mxu0 0
    %1705 = vmatpush2.bf16.msra.mxu0 0
    %1706 = vmatprep.subr.bf16.mxu0 0
    %1707 = vmatpush2.bf16.msra.mxu0 0
    %1708 = vmatprep.subr.bf16.mxu0 0
    %1709 = vmatpush2.bf16.msra.mxu0 0
    %1710 = vmatprep.subr.bf16.mxu0 0
    %1711 = vmatpush2.bf16.msra.mxu0 0
    %1712 = vmatprep.subr.bf16.mxu0 0
    %1713 = vmatpush2.bf16.msra.mxu0 0
    %1714 = vmatprep.subr.bf16.mxu0 0
    %1715 = vmatpush2.bf16.msra.mxu0 0
    %1716 = vmatprep.subr.bf16.mxu0 0
    %1717 = vmatpush2.bf16.msra.mxu0 0
    %1718 = vmatprep.mubr.bf16.mxu0 0
    %1719 = vmatmul.mubr.bf16.gmra.mxu0 %v448
    %v1720 = vpop.f32.mrf.mxu0
    %v1721 = vadd.f32 %v1678, %v1720
    %v1722 = vpop.f32.mrf.mxu0
    %v1723 = vadd.f32 %v1680, %v1722
    %v1724 = vpop.f32.mrf.mxu0
    %v1725 = vadd.f32 %v1682, %v1724
    %v1726 = vpop.f32.mrf.mxu0
    %v1727 = vadd.f32 %v1684, %v1726
    %1728 = vdwg.mxu0
    %1729 = vmatprep.subr.bf16.mxu0 %v1318
    %1730 = vmatpush1.bf16.msra.mxu0 %v1317
    %1731 = vmatprep.subr.bf16.mxu0 %v1310
    %1732 = vmatpush1.bf16.msra.mxu0 %v1309
    %1733 = vmatprep.subr.bf16.mxu0 %v1302
    %1734 = vmatpush1.bf16.msra.mxu0 %v1301
    %1735 = vmatprep.subr.bf16.mxu0 %v1294
    %1736 = vmatpush1.bf16.msra.mxu0 %v1293
    %1737 = vmatprep.subr.bf16.mxu0 %v1286
    %1738 = vmatpush1.bf16.msra.mxu0 %v1285
    %1739 = vmatprep.subr.bf16.mxu0 %v1278
    %1740 = vmatpush1.bf16.msra.mxu0 %v1277
    %1741 = vmatprep.subr.bf16.mxu0 %v1270
    %1742 = vmatpush1.bf16.msra.mxu0 %v1269
    %1743 = vmatprep.subr.bf16.mxu0 %v1262
    %1744 = vmatpush1.bf16.msra.mxu0 %v1261
    %1745 = vmatprep.subr.bf16.mxu0 %v1382
    %1746 = vmatpush2.bf16.msra.mxu0 %v1381
    %1747 = vmatprep.subr.bf16.mxu0 %v1374
    %1748 = vmatpush2.bf16.msra.mxu0 %v1373
    %1749 = vmatprep.subr.bf16.mxu0 %v1366
    %1750 = vmatpush2.bf16.msra.mxu0 %v1365
    %1751 = vmatprep.subr.bf16.mxu0 %v1358
    %1752 = vmatpush2.bf16.msra.mxu0 %v1357
    %1753 = vmatprep.subr.bf16.mxu0 %v1350
    %1754 = vmatpush2.bf16.msra.mxu0 %v1349
    %1755 = vmatprep.subr.bf16.mxu0 %v1342
    %1756 = vmatpush2.bf16.msra.mxu0 %v1341
    %1757 = vmatprep.subr.bf16.mxu0 %v1334
    %1758 = vmatpush2.bf16.msra.mxu0 %v1333
    %1759 = vmatprep.subr.bf16.mxu0 %v1326
    %1760 = vmatpush2.bf16.msra.mxu0 %v1325
    %1761 = vmatprep.mubr.bf16.mxu0 %v447
    %1762 = vmatmul.mubr.bf16.gmra.mxu0 %v446
    %v1763 = vpop.f32.mrf.mxu0
    %v1764 = vadd.f32 %v654, %v1763
    %v1765 = vpop.f32.mrf.mxu0
    %v1766 = vadd.f32 %v658, %v1765
    %v1767 = vpop.f32.mrf.mxu0
    %v1768 = vadd.f32 %v654, %v1767
    %v1769 = vpop.f32.mrf.mxu0
    %v1770 = vadd.f32 %v658, %v1769
    %1771 = vdwg.mxu0
    %1772 = vmatprep.subr.bf16.mxu0 %v1446
    %1773 = vmatpush1.bf16.msra.mxu0 %v1445
    %1774 = vmatprep.subr.bf16.mxu0 %v1438
    %1775 = vmatpush1.bf16.msra.mxu0 %v1437
    %1776 = vmatprep.subr.bf16.mxu0 %v1430
    %1777 = vmatpush1.bf16.msra.mxu0 %v1429
    %1778 = vmatprep.subr.bf16.mxu0 %v1422
    %1779 = vmatpush1.bf16.msra.mxu0 %v1421
    %1780 = vmatprep.subr.bf16.mxu0 %v1414
    %1781 = vmatpush1.bf16.msra.mxu0 %v1413
    %1782 = vmatprep.subr.bf16.mxu0 %v1406
    %1783 = vmatpush1.bf16.msra.mxu0 %v1405
    %1784 = vmatprep.subr.bf16.mxu0 %v1398
    %1785 = vmatpush1.bf16.msra.mxu0 %v1397
    %1786 = vmatprep.subr.bf16.mxu0 %v1390
    %1787 = vmatpush1.bf16.msra.mxu0 %v1389
    %1788 = vmatprep.subr.bf16.mxu0 0
    %1789 = vmatpush2.bf16.msra.mxu0 0
    %1790 = vmatprep.subr.bf16.mxu0 0
    %1791 = vmatpush2.bf16.msra.mxu0 0
    %1792 = vmatprep.subr.bf16.mxu0 0
    %1793 = vmatpush2.bf16.msra.mxu0 0
    %1794 = vmatprep.subr.bf16.mxu0 0
    %1795 = vmatpush2.bf16.msra.mxu0 0
    %1796 = vmatprep.subr.bf16.mxu0 0
    %1797 = vmatpush2.bf16.msra.mxu0 0
    %1798 = vmatprep.subr.bf16.mxu0 0
    %1799 = vmatpush2.bf16.msra.mxu0 0
    %1800 = vmatprep.subr.bf16.mxu0 0
    %1801 = vmatpush2.bf16.msra.mxu0 0
    %1802 = vmatprep.subr.bf16.mxu0 0
    %1803 = vmatpush2.bf16.msra.mxu0 0
    %1804 = vmatprep.mubr.bf16.mxu0 0
    %1805 = vmatmul.mubr.bf16.gmra.mxu0 %v448
    %v1806 = vpop.f32.mrf.mxu0
    %v1807 = vadd.f32 %v1764, %v1806
    %v1808 = vpop.f32.mrf.mxu0
    %v1809 = vadd.f32 %v1766, %v1808
    %v1810 = vpop.f32.mrf.mxu0
    %v1811 = vadd.f32 %v1768, %v1810
    %v1812 = vpop.f32.mrf.mxu0
    %v1813 = vadd.f32 %v1770, %v1812
    %1814 = vdwg.mxu0
    %1815 = vmatprep.subr.bf16.mxu0 %v1320
    %1816 = vmatpush1.bf16.msra.mxu0 %v1319
    %1817 = vmatprep.subr.bf16.mxu0 %v1312
    %1818 = vmatpush1.bf16.msra.mxu0 %v1311
    %1819 = vmatprep.subr.bf16.mxu0 %v1304
    %1820 = vmatpush1.bf16.msra.mxu0 %v1303
    %1821 = vmatprep.subr.bf16.mxu0 %v1296
    %1822 = vmatpush1.bf16.msra.mxu0 %v1295
    %1823 = vmatprep.subr.bf16.mxu0 %v1288
    %1824 = vmatpush1.bf16.msra.mxu0 %v1287
    %1825 = vmatprep.subr.bf16.mxu0 %v1280
    %1826 = vmatpush1.bf16.msra.mxu0 %v1279
    %1827 = vmatprep.subr.bf16.mxu0 %v1272
    %1828 = vmatpush1.bf16.msra.mxu0 %v1271
    %1829 = vmatprep.subr.bf16.mxu0 %v1264
    %1830 = vmatpush1.bf16.msra.mxu0 %v1263
    %1831 = vmatprep.subr.bf16.mxu0 %v1384
    %1832 = vmatpush2.bf16.msra.mxu0 %v1383
    %1833 = vmatprep.subr.bf16.mxu0 %v1376
    %1834 = vmatpush2.bf16.msra.mxu0 %v1375
    %1835 = vmatprep.subr.bf16.mxu0 %v1368
    %1836 = vmatpush2.bf16.msra.mxu0 %v1367
    %1837 = vmatprep.subr.bf16.mxu0 %v1360
    %1838 = vmatpush2.bf16.msra.mxu0 %v1359
    %1839 = vmatprep.subr.bf16.mxu0 %v1352
    %1840 = vmatpush2.bf16.msra.mxu0 %v1351
    %1841 = vmatprep.subr.bf16.mxu0 %v1344
    %1842 = vmatpush2.bf16.msra.mxu0 %v1343
    %1843 = vmatprep.subr.bf16.mxu0 %v1336
    %1844 = vmatpush2.bf16.msra.mxu0 %v1335
    %1845 = vmatprep.subr.bf16.mxu0 %v1328
    %1846 = vmatpush2.bf16.msra.mxu0 %v1327
    %1847 = vmatprep.mubr.bf16.mxu0 %v447
    %1848 = vmatmul.mubr.bf16.gmra.mxu0 %v446
    %v1849 = vpop.f32.mrf.mxu0
    %v1850 = vadd.f32 %v662, %v1849
    %v1851 = vpop.f32.mrf.mxu0
    %v1852 = vadd.f32 %v666, %v1851
    %v1853 = vpop.f32.mrf.mxu0
    %v1854 = vadd.f32 %v662, %v1853
    %v1855 = vpop.f32.mrf.mxu0
    %v1856 = vadd.f32 %v666, %v1855
    %1857 = vdwg.mxu0
    %1858 = vmatprep.subr.bf16.mxu0 %v1448
    %1859 = vmatpush1.bf16.msra.mxu0 %v1447
    %1860 = vmatprep.subr.bf16.mxu0 %v1440
    %1861 = vmatpush1.bf16.msra.mxu0 %v1439
    %1862 = vmatprep.subr.bf16.mxu0 %v1432
    %1863 = vmatpush1.bf16.msra.mxu0 %v1431
    %1864 = vmatprep.subr.bf16.mxu0 %v1424
    %1865 = vmatpush1.bf16.msra.mxu0 %v1423
    %1866 = vmatprep.subr.bf16.mxu0 %v1416
    %1867 = vmatpush1.bf16.msra.mxu0 %v1415
    %1868 = vmatprep.subr.bf16.mxu0 %v1408
    %1869 = vmatpush1.bf16.msra.mxu0 %v1407
    %1870 = vmatprep.subr.bf16.mxu0 %v1400
    %1871 = vmatpush1.bf16.msra.mxu0 %v1399
    %1872 = vmatprep.subr.bf16.mxu0 %v1392
    %1873 = vmatpush1.bf16.msra.mxu0 %v1391
    %1874 = vmatprep.subr.bf16.mxu0 0
    %1875 = vmatpush2.bf16.msra.mxu0 0
    %1876 = vmatprep.subr.bf16.mxu0 0
    %1877 = vmatpush2.bf16.msra.mxu0 0
    %1878 = vmatprep.subr.bf16.mxu0 0
    %1879 = vmatpush2.bf16.msra.mxu0 0
    %1880 = vmatprep.subr.bf16.mxu0 0
    %1881 = vmatpush2.bf16.msra.mxu0 0
    %1882 = vmatprep.subr.bf16.mxu0 0
    %1883 = vmatpush2.bf16.msra.mxu0 0
    %1884 = vmatprep.subr.bf16.mxu0 0
    %1885 = vmatpush2.bf16.msra.mxu0 0
    %1886 = vmatprep.subr.bf16.mxu0 0
    %1887 = vmatpush2.bf16.msra.mxu0 0
    %1888 = vmatprep.subr.bf16.mxu0 0
    %1889 = vmatpush2.bf16.msra.mxu0 0
    %1890 = vmatprep.mubr.bf16.mxu0 0
    %1891 = vmatmul.mubr.bf16.gmra.mxu0 %v448
    %v1892 = vpop.f32.mrf.mxu0
    %v1893 = vadd.f32 %v1850, %v1892
    %v1894 = vpop.f32.mrf.mxu0
    %v1895 = vadd.f32 %v1852, %v1894
    %v1896 = vpop.f32.mrf.mxu0
    %v1897 = vadd.f32 %v1854, %v1896
    %v1898 = vpop.f32.mrf.mxu0
    %v1899 = vadd.f32 %v1856, %v1898
    %1900 = vdwg.mxu0
    %1901 = vmatprep.subr.bf16.mxu0 %v1322
    %1902 = vmatpush1.bf16.msra.mxu0 %v1321
    %1903 = vmatprep.subr.bf16.mxu0 %v1314
    %1904 = vmatpush1.bf16.msra.mxu0 %v1313
    %1905 = vmatprep.subr.bf16.mxu0 %v1306
    %1906 = vmatpush1.bf16.msra.mxu0 %v1305
    %1907 = vmatprep.subr.bf16.mxu0 %v1298
    %1908 = vmatpush1.bf16.msra.mxu0 %v1297
    %1909 = vmatprep.subr.bf16.mxu0 %v1290
    %1910 = vmatpush1.bf16.msra.mxu0 %v1289
    %1911 = vmatprep.subr.bf16.mxu0 %v1282
    %1912 = vmatpush1.bf16.msra.mxu0 %v1281
    %1913 = vmatprep.subr.bf16.mxu0 %v1274
    %1914 = vmatpush1.bf16.msra.mxu0 %v1273
    %1915 = vmatprep.subr.bf16.mxu0 %v1266
    %1916 = vmatpush1.bf16.msra.mxu0 %v1265
    %1917 = vmatprep.subr.bf16.mxu0 %v1386
    %1918 = vmatpush2.bf16.msra.mxu0 %v1385
    %1919 = vmatprep.subr.bf16.mxu0 %v1378
    %1920 = vmatpush2.bf16.msra.mxu0 %v1377
    %1921 = vmatprep.subr.bf16.mxu0 %v1370
    %1922 = vmatpush2.bf16.msra.mxu0 %v1369
    %1923 = vmatprep.subr.bf16.mxu0 %v1362
    %1924 = vmatpush2.bf16.msra.mxu0 %v1361
    %1925 = vmatprep.subr.bf16.mxu0 %v1354
    %1926 = vmatpush2.bf16.msra.mxu0 %v1353
    %1927 = vmatprep.subr.bf16.mxu0 %v1346
    %1928 = vmatpush2.bf16.msra.mxu0 %v1345
    %1929 = vmatprep.subr.bf16.mxu0 %v1338
    %1930 = vmatpush2.bf16.msra.mxu0 %v1337
    %1931 = vmatprep.subr.bf16.mxu0 %v1330
    %1932 = vmatpush2.bf16.msra.mxu0 %v1329
    %1933 = vmatprep.mubr.bf16.mxu0 %v447
    %1934 = vmatmul.mubr.bf16.gmra.mxu0 %v446
    %v1935 = vpop.f32.mrf.mxu0
    %v1936 = vadd.f32 %v670, %v1935
    %v1937 = vpop.f32.mrf.mxu0
    %v1938 = vadd.f32 %v674, %v1937
    %v1939 = vpop.f32.mrf.mxu0
    %v1940 = vadd.f32 %v670, %v1939
    %v1941 = vpop.f32.mrf.mxu0
    %v1942 = vadd.f32 %v674, %v1941
    %1943 = vdwg.mxu0
    %1944 = vmatprep.subr.bf16.mxu0 %v1450
    %1945 = vmatpush1.bf16.msra.mxu0 %v1449
    %1946 = vmatprep.subr.bf16.mxu0 %v1442
    %1947 = vmatpush1.bf16.msra.mxu0 %v1441
    %1948 = vmatprep.subr.bf16.mxu0 %v1434
    %1949 = vmatpush1.bf16.msra.mxu0 %v1433
    %1950 = vmatprep.subr.bf16.mxu0 %v1426
    %1951 = vmatpush1.bf16.msra.mxu0 %v1425
    %1952 = vmatprep.subr.bf16.mxu0 %v1418
    %1953 = vmatpush1.bf16.msra.mxu0 %v1417
    %1954 = vmatprep.subr.bf16.mxu0 %v1410
    %1955 = vmatpush1.bf16.msra.mxu0 %v1409
    %1956 = vmatprep.subr.bf16.mxu0 %v1402
    %1957 = vmatpush1.bf16.msra.mxu0 %v1401
    %1958 = vmatprep.subr.bf16.mxu0 %v1394
    %1959 = vmatpush1.bf16.msra.mxu0 %v1393
    %1960 = vmatprep.subr.bf16.mxu0 0
    %1961 = vmatpush2.bf16.msra.mxu0 0
    %1962 = vmatprep.subr.bf16.mxu0 0
    %1963 = vmatpush2.bf16.msra.mxu0 0
    %1964 = vmatprep.subr.bf16.mxu0 0
    %1965 = vmatpush2.bf16.msra.mxu0 0
    %1966 = vmatprep.subr.bf16.mxu0 0
    %1967 = vmatpush2.bf16.msra.mxu0 0
    %1968 = vmatprep.subr.bf16.mxu0 0
    %1969 = vmatpush2.bf16.msra.mxu0 0
    %1970 = vmatprep.subr.bf16.mxu0 0
    %1971 = vmatpush2.bf16.msra.mxu0 0
    %1972 = vmatprep.subr.bf16.mxu0 0
    %1973 = vmatpush2.bf16.msra.mxu0 0
    %1974 = vmatprep.subr.bf16.mxu0 0
    %1975 = vmatpush2.bf16.msra.mxu0 0
    %1976 = vmatprep.mubr.bf16.mxu0 0
    %1977 = vmatmul.mubr.bf16.gmra.mxu0 %v448
    %v1978 = vpop.f32.mrf.mxu0
    %v1979 = vadd.f32 %v1936, %v1978
    %v1980 = vpop.f32.mrf.mxu0
    %v1981 = vadd.f32 %v1938, %v1980
    %v1982 = vpop.f32.mrf.mxu0
    %v1983 = vadd.f32 %v1940, %v1982
    %v1984 = vpop.f32.mrf.mxu0
    %v1985 = vadd.f32 %v1942, %v1984
    %1986 = vdwg.mxu0
    %v1987 = vmax.f32 %v1721, 0.0
    %v1988 = vmax.f32 %v1723, 0.0
    %v1989 = vmax.f32 %v1807, 0.0
    %v1990 = vmax.f32 %v1809, 0.0
    %v1991 = vmax.f32 %v1893, 0.0
    %v1992 = vmax.f32 %v1895, 0.0
    %v1993 = vmax.f32 %v1979, 0.0
    %v1994 = vmax.f32 %v1981, 0.0
    %v1995 = vmax.f32 %v1725, 0.0
    %v1996 = vmax.f32 %v1727, 0.0
    %v1997 = vmax.f32 %v1811, 0.0
    %v1998 = vmax.f32 %v1813, 0.0
    %v1999 = vmax.f32 %v1897, 0.0
    %v2000 = vmax.f32 %v1899, 0.0
    %v2001 = vmax.f32 %v1983, 0.0
    %v2002 = vmax.f32 %v1985, 0.0
    %v2003 = vpack.c.bf16 %v1995, %v1987
    %v2004 = vpack.c.bf16 %v1996, %v1988
    %v2005 = vpack.c.bf16 %v1997, %v1989
    %v2006 = vpack.c.bf16 %v1998, %v1990
    %v2007 = vpack.c.bf16 %v1999, %v1991
    %v2008 = vpack.c.bf16 %v2000, %v1992
    %v2009 = vpack.c.bf16 %v2001, %v1993
    %v2010 = vpack.c.bf16 %v2002, %v1994
    %v2011 = vld [vmem:[#allocation7] sm:$0xff]
    %v2012 = vld [vmem:[#allocation7 + $0x8] sm:$0xff]
    %v2013 = vld [vmem:[#allocation7 + $0x10] sm:$0xff]
    %v2014 = vld [vmem:[#allocation7 + $0x18] sm:$0xff]
    %v2015 = vld [vmem:[#allocation7 + $0x20] sm:$0xff]
    %v2016 = vld [vmem:[#allocation7 + $0x28] sm:$0xff]
    %v2017 = vld [vmem:[#allocation7 + $0x30] sm:$0xff]
    %v2018 = vld [vmem:[#allocation7 + $0x38] sm:$0xff]
    %v2019 = vld [vmem:[#allocation7 + $0x40] sm:$0xff]
    %v2020 = vld [vmem:[#allocation7 + $0x48] sm:$0xff]
    %v2021 = vld [vmem:[#allocation7 + $0x50] sm:$0xff]
    %v2022 = vld [vmem:[#allocation7 + $0x58] sm:$0xff]
    %v2023 = vld [vmem:[#allocation7 + $0x60] sm:$0xff]
    %v2024 = vld [vmem:[#allocation7 + $0x68] sm:$0xff]
    %v2025 = vld [vmem:[#allocation7 + $0x70] sm:$0xff]
    %v2026 = vld [vmem:[#allocation7 + $0x78] sm:$0xff]
    %v2027 = vld [vmem:[#allocation7 + $0x80] sm:$0xff]
    %v2028 = vld [vmem:[#allocation7 + $0x88] sm:$0xff]
    %v2029 = vld [vmem:[#allocation7 + $0x90] sm:$0xff]
    %v2030 = vld [vmem:[#allocation7 + $0x98] sm:$0xff]
    %v2031 = vld [vmem:[#allocation7 + $0xa0] sm:$0xff]
    %v2032 = vld [vmem:[#allocation7 + $0xa8] sm:$0xff]
    %v2033 = vld [vmem:[#allocation7 + $0xb0] sm:$0xff]
    %v2034 = vld [vmem:[#allocation7 + $0xb8] sm:$0xff]
    %v2035 = vld [vmem:[#allocation7 + $0xc0] sm:$0xff]
    %v2036 = vld [vmem:[#allocation7 + $0xc8] sm:$0xff]
    %v2037 = vld [vmem:[#allocation7 + $0xd0] sm:$0xff]
    %v2038 = vld [vmem:[#allocation7 + $0xd8] sm:$0xff]
    %v2039 = vld [vmem:[#allocation7 + $0xe0] sm:$0xff]
    %v2040 = vld [vmem:[#allocation7 + $0xe8] sm:$0xff]
    %v2041 = vld [vmem:[#allocation7 + $0xf0] sm:$0xff]
    %v2042 = vld [vmem:[#allocation7 + $0xf8] sm:$0xff]
    %v2043 = vld [vmem:[#allocation7 + $0x100] sm:$0xff]
    %v2044 = vld [vmem:[#allocation7 + $0x108] sm:$0xff]
    %v2045 = vld [vmem:[#allocation7 + $0x110] sm:$0xff]
    %v2046 = vld [vmem:[#allocation7 + $0x118] sm:$0xff]
    %v2047 = vld [vmem:[#allocation7 + $0x120] sm:$0xff]
    %v2048 = vld [vmem:[#allocation7 + $0x128] sm:$0xff]
    %v2049 = vld [vmem:[#allocation7 + $0x130] sm:$0xff]
    %v2050 = vld [vmem:[#allocation7 + $0x138] sm:$0xff]
    %v2051 = vld [vmem:[#allocation7 + $0x140] sm:$0xff]
    %v2052 = vld [vmem:[#allocation7 + $0x148] sm:$0xff]
    %v2053 = vld [vmem:[#allocation7 + $0x150] sm:$0xff]
    %v2054 = vld [vmem:[#allocation7 + $0x158] sm:$0xff]
    %v2055 = vld [vmem:[#allocation7 + $0x160] sm:$0xff]
    %v2056 = vld [vmem:[#allocation7 + $0x168] sm:$0xff]
    %v2057 = vld [vmem:[#allocation7 + $0x170] sm:$0xff]
    %v2058 = vld [vmem:[#allocation7 + $0x178] sm:$0xff]
    %v2059 = vld [vmem:[#allocation7 + $0x180] sm:$0xff]
    %v2060 = vld [vmem:[#allocation7 + $0x188] sm:$0xff]
    %v2061 = vld [vmem:[#allocation7 + $0x190] sm:$0xff]
    %v2062 = vld [vmem:[#allocation7 + $0x198] sm:$0xff]
    %v2063 = vld [vmem:[#allocation7 + $0x1a0] sm:$0xff]
    %v2064 = vld [vmem:[#allocation7 + $0x1a8] sm:$0xff]
    %v2065 = vld [vmem:[#allocation7 + $0x1b0] sm:$0xff]
    %v2066 = vld [vmem:[#allocation7 + $0x1b8] sm:$0xff]
    %v2067 = vld [vmem:[#allocation7 + $0x1c0] sm:$0xff]
    %v2068 = vld [vmem:[#allocation7 + $0x1c8] sm:$0xff]
    %v2069 = vld [vmem:[#allocation7 + $0x1d0] sm:$0xff]
    %v2070 = vld [vmem:[#allocation7 + $0x1d8] sm:$0xff]
    %v2071 = vld [vmem:[#allocation7 + $0x1e0] sm:$0xff]
    %v2072 = vld [vmem:[#allocation7 + $0x1e8] sm:$0xff]
    %v2073 = vld [vmem:[#allocation7 + $0x1f0] sm:$0xff]
    %v2074 = vld [vmem:[#allocation7 + $0x1f8] sm:$0xff]
    %v2075 = vld [vmem:[#allocation7 + $0x200] sm:$0xff]
    %v2076 = vld [vmem:[#allocation7 + $0x208] sm:$0xff]
    %v2077 = vld [vmem:[#allocation7 + $0x210] sm:$0xff]
    %v2078 = vld [vmem:[#allocation7 + $0x218] sm:$0xff]
    %v2079 = vld [vmem:[#allocation7 + $0x220] sm:$0xff]
    %v2080 = vld [vmem:[#allocation7 + $0x228] sm:$0xff]
    %v2081 = vld [vmem:[#allocation7 + $0x230] sm:$0xff]
    %v2082 = vld [vmem:[#allocation7 + $0x238] sm:$0xff]
    %v2083 = vld [vmem:[#allocation7 + $0x240] sm:$0xff]
    %v2084 = vld [vmem:[#allocation7 + $0x248] sm:$0xff]
    %v2085 = vld [vmem:[#allocation7 + $0x250] sm:$0xff]
    %v2086 = vld [vmem:[#allocation7 + $0x258] sm:$0xff]
    %v2087 = vld [vmem:[#allocation7 + $0x260] sm:$0xff]
    %v2088 = vld [vmem:[#allocation7 + $0x268] sm:$0xff]
    %v2089 = vld [vmem:[#allocation7 + $0x270] sm:$0xff]
    %v2090 = vld [vmem:[#allocation7 + $0x278] sm:$0xff]
    %v2091 = vld [vmem:[#allocation7 + $0x280] sm:$0xff]
    %v2092 = vld [vmem:[#allocation7 + $0x288] sm:$0xff]
    %v2093 = vld [vmem:[#allocation7 + $0x290] sm:$0xff]
    %v2094 = vld [vmem:[#allocation7 + $0x298] sm:$0xff]
    %v2095 = vld [vmem:[#allocation7 + $0x2a0] sm:$0xff]
    %v2096 = vld [vmem:[#allocation7 + $0x2a8] sm:$0xff]
    %v2097 = vld [vmem:[#allocation7 + $0x2b0] sm:$0xff]
    %v2098 = vld [vmem:[#allocation7 + $0x2b8] sm:$0xff]
    %v2099 = vld [vmem:[#allocation7 + $0x2c0] sm:$0xff]
    %v2100 = vld [vmem:[#allocation7 + $0x2c8] sm:$0xff]
    %v2101 = vld [vmem:[#allocation7 + $0x2d0] sm:$0xff]
    %v2102 = vld [vmem:[#allocation7 + $0x2d8] sm:$0xff]
    %v2103 = vld [vmem:[#allocation7 + $0x2e0] sm:$0xff]
    %v2104 = vld [vmem:[#allocation7 + $0x2e8] sm:$0xff]
    %v2105 = vld [vmem:[#allocation7 + $0x2f0] sm:$0xff]
    %v2106 = vld [vmem:[#allocation7 + $0x2f8] sm:$0xff]
    %v2107 = vld [vmem:[#allocation7 + $0x300] sm:$0xff]
    %v2108 = vld [vmem:[#allocation7 + $0x308] sm:$0xff]
    %v2109 = vld [vmem:[#allocation7 + $0x310] sm:$0xff]
    %v2110 = vld [vmem:[#allocation7 + $0x318] sm:$0xff]
    %v2111 = vld [vmem:[#allocation7 + $0x320] sm:$0xff]
    %v2112 = vld [vmem:[#allocation7 + $0x328] sm:$0xff]
    %v2113 = vld [vmem:[#allocation7 + $0x330] sm:$0xff]
    %v2114 = vld [vmem:[#allocation7 + $0x338] sm:$0xff]
    %v2115 = vld [vmem:[#allocation7 + $0x340] sm:$0xff]
    %v2116 = vld [vmem:[#allocation7 + $0x348] sm:$0xff]
    %v2117 = vld [vmem:[#allocation7 + $0x350] sm:$0xff]
    %v2118 = vld [vmem:[#allocation7 + $0x358] sm:$0xff]
    %v2119 = vld [vmem:[#allocation7 + $0x360] sm:$0xff]
    %v2120 = vld [vmem:[#allocation7 + $0x368] sm:$0xff]
    %v2121 = vld [vmem:[#allocation7 + $0x370] sm:$0xff]
    %v2122 = vld [vmem:[#allocation7 + $0x378] sm:$0xff]
    %v2123 = vld [vmem:[#allocation7 + $0x380] sm:$0xff]
    %v2124 = vld [vmem:[#allocation7 + $0x388] sm:$0xff]
    %v2125 = vld [vmem:[#allocation7 + $0x390] sm:$0xff]
    %v2126 = vld [vmem:[#allocation7 + $0x398] sm:$0xff]
    %v2127 = vld [vmem:[#allocation7 + $0x3a0] sm:$0xff]
    %v2128 = vld [vmem:[#allocation7 + $0x3a8] sm:$0xff]
    %v2129 = vld [vmem:[#allocation7 + $0x3b0] sm:$0xff]
    %v2130 = vld [vmem:[#allocation7 + $0x3b8] sm:$0xff]
    %v2131 = vld [vmem:[#allocation7 + $0x3c0] sm:$0xff]
    %v2132 = vld [vmem:[#allocation7 + $0x3c8] sm:$0xff]
    %v2133 = vld [vmem:[#allocation7 + $0x3d0] sm:$0xff]
    %v2134 = vld [vmem:[#allocation7 + $0x3d8] sm:$0xff]
    %v2135 = vld [vmem:[#allocation7 + $0x3e0] sm:$0xff]
    %v2136 = vld [vmem:[#allocation7 + $0x3e8] sm:$0xff]
    %v2137 = vld [vmem:[#allocation7 + $0x3f0] sm:$0xff]
    %v2138 = vld [vmem:[#allocation7 + $0x3f8] sm:$0xff]
    %v2139 = vld [vmem:[#allocation7 + $0x400] sm:$0xff]
    %v2140 = vld [vmem:[#allocation7 + $0x408] sm:$0xff]
    %v2141 = vld [vmem:[#allocation7 + $0x410] sm:$0xff]
    %v2142 = vld [vmem:[#allocation7 + $0x418] sm:$0xff]
    %v2143 = vld [vmem:[#allocation7 + $0x420] sm:$0xff]
    %v2144 = vld [vmem:[#allocation7 + $0x428] sm:$0xff]
    %v2145 = vld [vmem:[#allocation7 + $0x430] sm:$0xff]
    %v2146 = vld [vmem:[#allocation7 + $0x438] sm:$0xff]
    %v2147 = vld [vmem:[#allocation7 + $0x440] sm:$0xff]
    %v2148 = vld [vmem:[#allocation7 + $0x448] sm:$0xff]
    %v2149 = vld [vmem:[#allocation7 + $0x450] sm:$0xff]
    %v2150 = vld [vmem:[#allocation7 + $0x458] sm:$0xff]
    %v2151 = vld [vmem:[#allocation7 + $0x460] sm:$0xff]
    %v2152 = vld [vmem:[#allocation7 + $0x468] sm:$0xff]
    %v2153 = vld [vmem:[#allocation7 + $0x470] sm:$0xff]
    %v2154 = vld [vmem:[#allocation7 + $0x478] sm:$0xff]
    %v2155 = vld [vmem:[#allocation7 + $0x480] sm:$0xff]
    %v2156 = vld [vmem:[#allocation7 + $0x488] sm:$0xff]
    %v2157 = vld [vmem:[#allocation7 + $0x490] sm:$0xff]
    %v2158 = vld [vmem:[#allocation7 + $0x498] sm:$0xff]
    %v2159 = vld [vmem:[#allocation7 + $0x4a0] sm:$0xff]
    %v2160 = vld [vmem:[#allocation7 + $0x4a8] sm:$0xff]
    %v2161 = vld [vmem:[#allocation7 + $0x4b0] sm:$0xff]
    %v2162 = vld [vmem:[#allocation7 + $0x4b8] sm:$0xff]
    %v2163 = vld [vmem:[#allocation7 + $0x4c0] sm:$0xff]
    %v2164 = vld [vmem:[#allocation7 + $0x4c8] sm:$0xff]
    %v2165 = vld [vmem:[#allocation7 + $0x4d0] sm:$0xff]
    %v2166 = vld [vmem:[#allocation7 + $0x4d8] sm:$0xff]
    %v2167 = vld [vmem:[#allocation7 + $0x4e0] sm:$0xff]
    %v2168 = vld [vmem:[#allocation7 + $0x4e8] sm:$0xff]
    %v2169 = vld [vmem:[#allocation7 + $0x4f0] sm:$0xff]
    %v2170 = vld [vmem:[#allocation7 + $0x4f8] sm:$0xff]
    %v2171 = vld [vmem:[#allocation7 + $0x500] sm:$0xff]
    %v2172 = vld [vmem:[#allocation7 + $0x508] sm:$0xff]
    %v2173 = vld [vmem:[#allocation7 + $0x510] sm:$0xff]
    %v2174 = vld [vmem:[#allocation7 + $0x518] sm:$0xff]
    %v2175 = vld [vmem:[#allocation7 + $0x520] sm:$0xff]
    %v2176 = vld [vmem:[#allocation7 + $0x528] sm:$0xff]
    %v2177 = vld [vmem:[#allocation7 + $0x530] sm:$0xff]
    %v2178 = vld [vmem:[#allocation7 + $0x538] sm:$0xff]
    %v2179 = vld [vmem:[#allocation7 + $0x540] sm:$0xff]
    %v2180 = vld [vmem:[#allocation7 + $0x548] sm:$0xff]
    %v2181 = vld [vmem:[#allocation7 + $0x550] sm:$0xff]
    %v2182 = vld [vmem:[#allocation7 + $0x558] sm:$0xff]
    %v2183 = vld [vmem:[#allocation7 + $0x560] sm:$0xff]
    %v2184 = vld [vmem:[#allocation7 + $0x568] sm:$0xff]
    %v2185 = vld [vmem:[#allocation7 + $0x570] sm:$0xff]
    %v2186 = vld [vmem:[#allocation7 + $0x578] sm:$0xff]
    %v2187 = vld [vmem:[#allocation7 + $0x580] sm:$0xff]
    %v2188 = vld [vmem:[#allocation7 + $0x588] sm:$0xff]
    %v2189 = vld [vmem:[#allocation7 + $0x590] sm:$0xff]
    %v2190 = vld [vmem:[#allocation7 + $0x598] sm:$0xff]
    %v2191 = vld [vmem:[#allocation7 + $0x5a0] sm:$0xff]
    %v2192 = vld [vmem:[#allocation7 + $0x5a8] sm:$0xff]
    %v2193 = vld [vmem:[#allocation7 + $0x5b0] sm:$0xff]
    %v2194 = vld [vmem:[#allocation7 + $0x5b8] sm:$0xff]
    %v2195 = vld [vmem:[#allocation7 + $0x5c0] sm:$0xff]
    %v2196 = vld [vmem:[#allocation7 + $0x5c8] sm:$0xff]
    %v2197 = vld [vmem:[#allocation7 + $0x5d0] sm:$0xff]
    %v2198 = vld [vmem:[#allocation7 + $0x5d8] sm:$0xff]
    %v2199 = vld [vmem:[#allocation7 + $0x5e0] sm:$0xff]
    %v2200 = vld [vmem:[#allocation7 + $0x5e8] sm:$0xff]
    %v2201 = vld [vmem:[#allocation7 + $0x5f0] sm:$0xff]
    %v2202 = vld [vmem:[#allocation7 + $0x5f8] sm:$0xff]
    %v2203 = vld [vmem:[#allocation7 + $0x600] sm:$0xff]
    %v2204 = vld [vmem:[#allocation7 + $0x608] sm:$0xff]
    %v2205 = vld [vmem:[#allocation7 + $0x610] sm:$0xff]
    %v2206 = vld [vmem:[#allocation7 + $0x618] sm:$0xff]
    %v2207 = vld [vmem:[#allocation7 + $0x620] sm:$0xff]
    %v2208 = vld [vmem:[#allocation7 + $0x628] sm:$0xff]
    %v2209 = vld [vmem:[#allocation7 + $0x630] sm:$0xff]
    %v2210 = vld [vmem:[#allocation7 + $0x638] sm:$0xff]
    %v2211 = vld [vmem:[#allocation7 + $0x640] sm:$0xff]
    %v2212 = vld [vmem:[#allocation7 + $0x648] sm:$0xff]
    %v2213 = vld [vmem:[#allocation7 + $0x650] sm:$0xff]
    %v2214 = vld [vmem:[#allocation7 + $0x658] sm:$0xff]
    %v2215 = vld [vmem:[#allocation7 + $0x660] sm:$0xff]
    %v2216 = vld [vmem:[#allocation7 + $0x668] sm:$0xff]
    %v2217 = vld [vmem:[#allocation7 + $0x670] sm:$0xff]
    %v2218 = vld [vmem:[#allocation7 + $0x678] sm:$0xff]
    %v2219 = vld [vmem:[#allocation7 + $0x680] sm:$0xff]
    %v2220 = vld [vmem:[#allocation7 + $0x688] sm:$0xff]
    %v2221 = vld [vmem:[#allocation7 + $0x690] sm:$0xff]
    %v2222 = vld [vmem:[#allocation7 + $0x698] sm:$0xff]
    %v2223 = vld [vmem:[#allocation7 + $0x6a0] sm:$0xff]
    %v2224 = vld [vmem:[#allocation7 + $0x6a8] sm:$0xff]
    %v2225 = vld [vmem:[#allocation7 + $0x6b0] sm:$0xff]
    %v2226 = vld [vmem:[#allocation7 + $0x6b8] sm:$0xff]
    %v2227 = vld [vmem:[#allocation7 + $0x6c0] sm:$0xff]
    %v2228 = vld [vmem:[#allocation7 + $0x6c8] sm:$0xff]
    %v2229 = vld [vmem:[#allocation7 + $0x6d0] sm:$0xff]
    %v2230 = vld [vmem:[#allocation7 + $0x6d8] sm:$0xff]
    %v2231 = vld [vmem:[#allocation7 + $0x6e0] sm:$0xff]
    %v2232 = vld [vmem:[#allocation7 + $0x6e8] sm:$0xff]
    %v2233 = vld [vmem:[#allocation7 + $0x6f0] sm:$0xff]
    %v2234 = vld [vmem:[#allocation7 + $0x6f8] sm:$0xff]
    %v2235 = vld [vmem:[#allocation7 + $0x700] sm:$0xff]
    %v2236 = vld [vmem:[#allocation7 + $0x708] sm:$0xff]
    %v2237 = vld [vmem:[#allocation7 + $0x710] sm:$0xff]
    %v2238 = vld [vmem:[#allocation7 + $0x718] sm:$0xff]
    %v2239 = vld [vmem:[#allocation7 + $0x720] sm:$0xff]
    %v2240 = vld [vmem:[#allocation7 + $0x728] sm:$0xff]
    %v2241 = vld [vmem:[#allocation7 + $0x730] sm:$0xff]
    %v2242 = vld [vmem:[#allocation7 + $0x738] sm:$0xff]
    %v2243 = vld [vmem:[#allocation7 + $0x740] sm:$0xff]
    %v2244 = vld [vmem:[#allocation7 + $0x748] sm:$0xff]
    %v2245 = vld [vmem:[#allocation7 + $0x750] sm:$0xff]
    %v2246 = vld [vmem:[#allocation7 + $0x758] sm:$0xff]
    %v2247 = vld [vmem:[#allocation7 + $0x760] sm:$0xff]
    %v2248 = vld [vmem:[#allocation7 + $0x768] sm:$0xff]
    %v2249 = vld [vmem:[#allocation7 + $0x770] sm:$0xff]
    %v2250 = vld [vmem:[#allocation7 + $0x778] sm:$0xff]
    %v2251 = vld [vmem:[#allocation7 + $0x780] sm:$0xff]
    %v2252 = vld [vmem:[#allocation7 + $0x788] sm:$0xff]
    %v2253 = vld [vmem:[#allocation7 + $0x790] sm:$0xff]
    %v2254 = vld [vmem:[#allocation7 + $0x798] sm:$0xff]
    %v2255 = vld [vmem:[#allocation7 + $0x7a0] sm:$0xff]
    %v2256 = vld [vmem:[#allocation7 + $0x7a8] sm:$0xff]
    %v2257 = vld [vmem:[#allocation7 + $0x7b0] sm:$0xff]
    %v2258 = vld [vmem:[#allocation7 + $0x7b8] sm:$0xff]
    %v2259 = vld [vmem:[#allocation7 + $0x7c0] sm:$0xff]
    %v2260 = vld [vmem:[#allocation7 + $0x7c8] sm:$0xff]
    %v2261 = vld [vmem:[#allocation7 + $0x7d0] sm:$0xff]
    %v2262 = vld [vmem:[#allocation7 + $0x7d8] sm:$0xff]
    %v2263 = vld [vmem:[#allocation7 + $0x7e0] sm:$0xff]
    %v2264 = vld [vmem:[#allocation7 + $0x7e8] sm:$0xff]
    %v2265 = vld [vmem:[#allocation7 + $0x7f0] sm:$0xff]
    %v2266 = vld [vmem:[#allocation7 + $0x7f8] sm:$0xff]
    %v2267 = vld [vmem:[%s5] sm:$0xf]
    %v2269 = vlaneseq
    %v2270 = vshrl.u32 %v2269, 7
    %v2271 = vsub.s32 0, %v2270
    %v2272 = vrot.slane %v2267, %v2271
    %v2273 = vlaneseq
    %v2274 = vshrl.u32 %v2273, 7
    %v2275 = vsub.s32 1, %v2274
    %v2276 = vrot.slane %v2267, %v2275
    %v2277 = vlaneseq
    %v2278 = vshrl.u32 %v2277, 7
    %v2279 = vsub.s32 2, %v2278
    %v2280 = vrot.slane %v2267, %v2279
    %v2281 = vlaneseq
    %v2282 = vshrl.u32 %v2281, 7
    %v2283 = vsub.s32 3, %v2282
    %v2284 = vrot.slane %v2267, %v2283
    %v2545 = vunpack.c.l.b16 %v2011
    %v2546 = vunpack.c.h.b16 %v2011
    %v2547 = vunpack.c.l.b16 %v2012
    %v2548 = vunpack.c.h.b16 %v2012
    %v2549 = vunpack.c.l.b16 %v2013
    %v2550 = vunpack.c.h.b16 %v2013
    %v2551 = vunpack.c.l.b16 %v2014
    %v2552 = vunpack.c.h.b16 %v2014
    %v2553 = vunpack.c.l.b16 %v2015
    %v2554 = vunpack.c.h.b16 %v2015
    %v2555 = vunpack.c.l.b16 %v2016
    %v2556 = vunpack.c.h.b16 %v2016
    %v2557 = vunpack.c.l.b16 %v2017
    %v2558 = vunpack.c.h.b16 %v2017
    %v2559 = vunpack.c.l.b16 %v2018
    %v2560 = vunpack.c.h.b16 %v2018
    %v2561 = vunpack.c.l.b16 %v2019
    %v2562 = vunpack.c.h.b16 %v2019
    %v2563 = vunpack.c.l.b16 %v2020
    %v2564 = vunpack.c.h.b16 %v2020
    %v2565 = vunpack.c.l.b16 %v2021
    %v2566 = vunpack.c.h.b16 %v2021
    %v2567 = vunpack.c.l.b16 %v2022
    %v2568 = vunpack.c.h.b16 %v2022
    %v2569 = vunpack.c.l.b16 %v2023
    %v2570 = vunpack.c.h.b16 %v2023
    %v2571 = vunpack.c.l.b16 %v2024
    %v2572 = vunpack.c.h.b16 %v2024
    %v2573 = vunpack.c.l.b16 %v2025
    %v2574 = vunpack.c.h.b16 %v2025
    %v2575 = vunpack.c.l.b16 %v2026
    %v2576 = vunpack.c.h.b16 %v2026
    %v2577 = vunpack.c.l.b16 %v2027
    %v2578 = vunpack.c.h.b16 %v2027
    %v2579 = vunpack.c.l.b16 %v2028
    %v2580 = vunpack.c.h.b16 %v2028
    %v2581 = vunpack.c.l.b16 %v2029
    %v2582 = vunpack.c.h.b16 %v2029
    %v2583 = vunpack.c.l.b16 %v2030
    %v2584 = vunpack.c.h.b16 %v2030
    %v2585 = vunpack.c.l.b16 %v2031
    %v2586 = vunpack.c.h.b16 %v2031
    %v2587 = vunpack.c.l.b16 %v2032
    %v2588 = vunpack.c.h.b16 %v2032
    %v2589 = vunpack.c.l.b16 %v2033
    %v2590 = vunpack.c.h.b16 %v2033
    %v2591 = vunpack.c.l.b16 %v2034
    %v2592 = vunpack.c.h.b16 %v2034
    %v2593 = vunpack.c.l.b16 %v2035
    %v2594 = vunpack.c.h.b16 %v2035
    %v2595 = vunpack.c.l.b16 %v2036
    %v2596 = vunpack.c.h.b16 %v2036
    %v2597 = vunpack.c.l.b16 %v2037
    %v2598 = vunpack.c.h.b16 %v2037
    %v2599 = vunpack.c.l.b16 %v2038
    %v2600 = vunpack.c.h.b16 %v2038
    %v2601 = vunpack.c.l.b16 %v2039
    %v2602 = vunpack.c.h.b16 %v2039
    %v2603 = vunpack.c.l.b16 %v2040
    %v2604 = vunpack.c.h.b16 %v2040
    %v2605 = vunpack.c.l.b16 %v2041
    %v2606 = vunpack.c.h.b16 %v2041
    %v2607 = vunpack.c.l.b16 %v2042
    %v2608 = vunpack.c.h.b16 %v2042
    %v2609 = vunpack.c.l.b16 %v2043
    %v2610 = vunpack.c.h.b16 %v2043
    %v2611 = vunpack.c.l.b16 %v2044
    %v2612 = vunpack.c.h.b16 %v2044
    %v2613 = vunpack.c.l.b16 %v2045
    %v2614 = vunpack.c.h.b16 %v2045
    %v2615 = vunpack.c.l.b16 %v2046
    %v2616 = vunpack.c.h.b16 %v2046
    %v2617 = vunpack.c.l.b16 %v2047
    %v2618 = vunpack.c.h.b16 %v2047
    %v2619 = vunpack.c.l.b16 %v2048
    %v2620 = vunpack.c.h.b16 %v2048
    %v2621 = vunpack.c.l.b16 %v2049
    %v2622 = vunpack.c.h.b16 %v2049
    %v2623 = vunpack.c.l.b16 %v2050
    %v2624 = vunpack.c.h.b16 %v2050
    %v2625 = vunpack.c.l.b16 %v2051
    %v2626 = vunpack.c.h.b16 %v2051
    %v2627 = vunpack.c.l.b16 %v2052
    %v2628 = vunpack.c.h.b16 %v2052
    %v2629 = vunpack.c.l.b16 %v2053
    %v2630 = vunpack.c.h.b16 %v2053
    %v2631 = vunpack.c.l.b16 %v2054
    %v2632 = vunpack.c.h.b16 %v2054
    %v2633 = vunpack.c.l.b16 %v2055
    %v2634 = vunpack.c.h.b16 %v2055
    %v2635 = vunpack.c.l.b16 %v2056
    %v2636 = vunpack.c.h.b16 %v2056
    %v2637 = vunpack.c.l.b16 %v2057
    %v2638 = vunpack.c.h.b16 %v2057
    %v2639 = vunpack.c.l.b16 %v2058
    %v2640 = vunpack.c.h.b16 %v2058
    %v2641 = vunpack.c.l.b16 %v2059
    %v2642 = vunpack.c.h.b16 %v2059
    %v2643 = vunpack.c.l.b16 %v2060
    %v2644 = vunpack.c.h.b16 %v2060
    %v2645 = vunpack.c.l.b16 %v2061
    %v2646 = vunpack.c.h.b16 %v2061
    %v2647 = vunpack.c.l.b16 %v2062
    %v2648 = vunpack.c.h.b16 %v2062
    %v2649 = vunpack.c.l.b16 %v2063
    %v2650 = vunpack.c.h.b16 %v2063
    %v2651 = vunpack.c.l.b16 %v2064
    %v2652 = vunpack.c.h.b16 %v2064
    %v2653 = vunpack.c.l.b16 %v2065
    %v2654 = vunpack.c.h.b16 %v2065
    %v2655 = vunpack.c.l.b16 %v2066
    %v2656 = vunpack.c.h.b16 %v2066
    %v2657 = vunpack.c.l.b16 %v2067
    %v2658 = vunpack.c.h.b16 %v2067
    %v2659 = vunpack.c.l.b16 %v2068
    %v2660 = vunpack.c.h.b16 %v2068
    %v2661 = vunpack.c.l.b16 %v2069
    %v2662 = vunpack.c.h.b16 %v2069
    %v2663 = vunpack.c.l.b16 %v2070
    %v2664 = vunpack.c.h.b16 %v2070
    %v2665 = vunpack.c.l.b16 %v2071
    %v2666 = vunpack.c.h.b16 %v2071
    %v2667 = vunpack.c.l.b16 %v2072
    %v2668 = vunpack.c.h.b16 %v2072
    %v2669 = vunpack.c.l.b16 %v2073
    %v2670 = vunpack.c.h.b16 %v2073
    %v2671 = vunpack.c.l.b16 %v2074
    %v2672 = vunpack.c.h.b16 %v2074
    %v2673 = vunpack.c.l.b16 %v2075
    %v2674 = vunpack.c.h.b16 %v2075
    %v2675 = vunpack.c.l.b16 %v2076
    %v2676 = vunpack.c.h.b16 %v2076
    %v2677 = vunpack.c.l.b16 %v2077
    %v2678 = vunpack.c.h.b16 %v2077
    %v2679 = vunpack.c.l.b16 %v2078
    %v2680 = vunpack.c.h.b16 %v2078
    %v2681 = vunpack.c.l.b16 %v2079
    %v2682 = vunpack.c.h.b16 %v2079
    %v2683 = vunpack.c.l.b16 %v2080
    %v2684 = vunpack.c.h.b16 %v2080
    %v2685 = vunpack.c.l.b16 %v2081
    %v2686 = vunpack.c.h.b16 %v2081
    %v2687 = vunpack.c.l.b16 %v2082
    %v2688 = vunpack.c.h.b16 %v2082
    %v2689 = vunpack.c.l.b16 %v2083
    %v2690 = vunpack.c.h.b16 %v2083
    %v2691 = vunpack.c.l.b16 %v2084
    %v2692 = vunpack.c.h.b16 %v2084
    %v2693 = vunpack.c.l.b16 %v2085
    %v2694 = vunpack.c.h.b16 %v2085
    %v2695 = vunpack.c.l.b16 %v2086
    %v2696 = vunpack.c.h.b16 %v2086
    %v2697 = vunpack.c.l.b16 %v2087
    %v2698 = vunpack.c.h.b16 %v2087
    %v2699 = vunpack.c.l.b16 %v2088
    %v2700 = vunpack.c.h.b16 %v2088
    %v2701 = vunpack.c.l.b16 %v2089
    %v2702 = vunpack.c.h.b16 %v2089
    %v2703 = vunpack.c.l.b16 %v2090
    %v2704 = vunpack.c.h.b16 %v2090
    %v2705 = vunpack.c.l.b16 %v2091
    %v2706 = vunpack.c.h.b16 %v2091
    %v2707 = vunpack.c.l.b16 %v2092
    %v2708 = vunpack.c.h.b16 %v2092
    %v2709 = vunpack.c.l.b16 %v2093
    %v2710 = vunpack.c.h.b16 %v2093
    %v2711 = vunpack.c.l.b16 %v2094
    %v2712 = vunpack.c.h.b16 %v2094
    %v2713 = vunpack.c.l.b16 %v2095
    %v2714 = vunpack.c.h.b16 %v2095
    %v2715 = vunpack.c.l.b16 %v2096
    %v2716 = vunpack.c.h.b16 %v2096
    %v2717 = vunpack.c.l.b16 %v2097
    %v2718 = vunpack.c.h.b16 %v2097
    %v2719 = vunpack.c.l.b16 %v2098
    %v2720 = vunpack.c.h.b16 %v2098
    %v2721 = vunpack.c.l.b16 %v2099
    %v2722 = vunpack.c.h.b16 %v2099
    %v2723 = vunpack.c.l.b16 %v2100
    %v2724 = vunpack.c.h.b16 %v2100
    %v2725 = vunpack.c.l.b16 %v2101
    %v2726 = vunpack.c.h.b16 %v2101
    %v2727 = vunpack.c.l.b16 %v2102
    %v2728 = vunpack.c.h.b16 %v2102
    %v2729 = vunpack.c.l.b16 %v2103
    %v2730 = vunpack.c.h.b16 %v2103
    %v2731 = vunpack.c.l.b16 %v2104
    %v2732 = vunpack.c.h.b16 %v2104
    %v2733 = vunpack.c.l.b16 %v2105
    %v2734 = vunpack.c.h.b16 %v2105
    %v2735 = vunpack.c.l.b16 %v2106
    %v2736 = vunpack.c.h.b16 %v2106
    %v2737 = vunpack.c.l.b16 %v2107
    %v2738 = vunpack.c.h.b16 %v2107
    %v2739 = vunpack.c.l.b16 %v2108
    %v2740 = vunpack.c.h.b16 %v2108
    %v2741 = vunpack.c.l.b16 %v2109
    %v2742 = vunpack.c.h.b16 %v2109
    %v2743 = vunpack.c.l.b16 %v2110
    %v2744 = vunpack.c.h.b16 %v2110
    %v2745 = vunpack.c.l.b16 %v2111
    %v2746 = vunpack.c.h.b16 %v2111
    %v2747 = vunpack.c.l.b16 %v2112
    %v2748 = vunpack.c.h.b16 %v2112
    %v2749 = vunpack.c.l.b16 %v2113
    %v2750 = vunpack.c.h.b16 %v2113
    %v2751 = vunpack.c.l.b16 %v2114
    %v2752 = vunpack.c.h.b16 %v2114
    %v2753 = vunpack.c.l.b16 %v2115
    %v2754 = vunpack.c.h.b16 %v2115
    %v2755 = vunpack.c.l.b16 %v2116
    %v2756 = vunpack.c.h.b16 %v2116
    %v2757 = vunpack.c.l.b16 %v2117
    %v2758 = vunpack.c.h.b16 %v2117
    %v2759 = vunpack.c.l.b16 %v2118
    %v2760 = vunpack.c.h.b16 %v2118
    %v2761 = vunpack.c.l.b16 %v2119
    %v2762 = vunpack.c.h.b16 %v2119
    %v2763 = vunpack.c.l.b16 %v2120
    %v2764 = vunpack.c.h.b16 %v2120
    %v2765 = vunpack.c.l.b16 %v2121
    %v2766 = vunpack.c.h.b16 %v2121
    %v2767 = vunpack.c.l.b16 %v2122
    %v2768 = vunpack.c.h.b16 %v2122
    %v2769 = vunpack.c.l.b16 %v2123
    %v2770 = vunpack.c.h.b16 %v2123
    %v2771 = vunpack.c.l.b16 %v2124
    %v2772 = vunpack.c.h.b16 %v2124
    %v2773 = vunpack.c.l.b16 %v2125
    %v2774 = vunpack.c.h.b16 %v2125
    %v2775 = vunpack.c.l.b16 %v2126
    %v2776 = vunpack.c.h.b16 %v2126
    %v2777 = vunpack.c.l.b16 %v2127
    %v2778 = vunpack.c.h.b16 %v2127
    %v2779 = vunpack.c.l.b16 %v2128
    %v2780 = vunpack.c.h.b16 %v2128
    %v2781 = vunpack.c.l.b16 %v2129
    %v2782 = vunpack.c.h.b16 %v2129
    %v2783 = vunpack.c.l.b16 %v2130
    %v2784 = vunpack.c.h.b16 %v2130
    %v2785 = vunpack.c.l.b16 %v2131
    %v2786 = vunpack.c.h.b16 %v2131
    %v2787 = vunpack.c.l.b16 %v2132
    %v2788 = vunpack.c.h.b16 %v2132
    %v2789 = vunpack.c.l.b16 %v2133
    %v2790 = vunpack.c.h.b16 %v2133
    %v2791 = vunpack.c.l.b16 %v2134
    %v2792 = vunpack.c.h.b16 %v2134
    %v2793 = vunpack.c.l.b16 %v2135
    %v2794 = vunpack.c.h.b16 %v2135
    %v2795 = vunpack.c.l.b16 %v2136
    %v2796 = vunpack.c.h.b16 %v2136
    %v2797 = vunpack.c.l.b16 %v2137
    %v2798 = vunpack.c.h.b16 %v2137
    %v2799 = vunpack.c.l.b16 %v2138
    %v2800 = vunpack.c.h.b16 %v2138
    %v2801 = vunpack.c.l.b16 %v2139
    %v2802 = vunpack.c.h.b16 %v2139
    %v2803 = vunpack.c.l.b16 %v2140
    %v2804 = vunpack.c.h.b16 %v2140
    %v2805 = vunpack.c.l.b16 %v2141
    %v2806 = vunpack.c.h.b16 %v2141
    %v2807 = vunpack.c.l.b16 %v2142
    %v2808 = vunpack.c.h.b16 %v2142
    %v2809 = vunpack.c.l.b16 %v2143
    %v2810 = vunpack.c.h.b16 %v2143
    %v2811 = vunpack.c.l.b16 %v2144
    %v2812 = vunpack.c.h.b16 %v2144
    %v2813 = vunpack.c.l.b16 %v2145
    %v2814 = vunpack.c.h.b16 %v2145
    %v2815 = vunpack.c.l.b16 %v2146
    %v2816 = vunpack.c.h.b16 %v2146
    %v2817 = vunpack.c.l.b16 %v2147
    %v2818 = vunpack.c.h.b16 %v2147
    %v2819 = vunpack.c.l.b16 %v2148
    %v2820 = vunpack.c.h.b16 %v2148
    %v2821 = vunpack.c.l.b16 %v2149
    %v2822 = vunpack.c.h.b16 %v2149
    %v2823 = vunpack.c.l.b16 %v2150
    %v2824 = vunpack.c.h.b16 %v2150
    %v2825 = vunpack.c.l.b16 %v2151
    %v2826 = vunpack.c.h.b16 %v2151
    %v2827 = vunpack.c.l.b16 %v2152
    %v2828 = vunpack.c.h.b16 %v2152
    %v2829 = vunpack.c.l.b16 %v2153
    %v2830 = vunpack.c.h.b16 %v2153
    %v2831 = vunpack.c.l.b16 %v2154
    %v2832 = vunpack.c.h.b16 %v2154
    %v2833 = vunpack.c.l.b16 %v2155
    %v2834 = vunpack.c.h.b16 %v2155
    %v2835 = vunpack.c.l.b16 %v2156
    %v2836 = vunpack.c.h.b16 %v2156
    %v2837 = vunpack.c.l.b16 %v2157
    %v2838 = vunpack.c.h.b16 %v2157
    %v2839 = vunpack.c.l.b16 %v2158
    %v2840 = vunpack.c.h.b16 %v2158
    %v2841 = vunpack.c.l.b16 %v2159
    %v2842 = vunpack.c.h.b16 %v2159
    %v2843 = vunpack.c.l.b16 %v2160
    %v2844 = vunpack.c.h.b16 %v2160
    %v2845 = vunpack.c.l.b16 %v2161
    %v2846 = vunpack.c.h.b16 %v2161
    %v2847 = vunpack.c.l.b16 %v2162
    %v2848 = vunpack.c.h.b16 %v2162
    %v2849 = vunpack.c.l.b16 %v2163
    %v2850 = vunpack.c.h.b16 %v2163
    %v2851 = vunpack.c.l.b16 %v2164
    %v2852 = vunpack.c.h.b16 %v2164
    %v2853 = vunpack.c.l.b16 %v2165
    %v2854 = vunpack.c.h.b16 %v2165
    %v2855 = vunpack.c.l.b16 %v2166
    %v2856 = vunpack.c.h.b16 %v2166
    %v2857 = vunpack.c.l.b16 %v2167
    %v2858 = vunpack.c.h.b16 %v2167
    %v2859 = vunpack.c.l.b16 %v2168
    %v2860 = vunpack.c.h.b16 %v2168
    %v2861 = vunpack.c.l.b16 %v2169
    %v2862 = vunpack.c.h.b16 %v2169
    %v2863 = vunpack.c.l.b16 %v2170
    %v2864 = vunpack.c.h.b16 %v2170
    %v2865 = vunpack.c.l.b16 %v2171
    %v2866 = vunpack.c.h.b16 %v2171
    %v2867 = vunpack.c.l.b16 %v2172
    %v2868 = vunpack.c.h.b16 %v2172
    %v2869 = vunpack.c.l.b16 %v2173
    %v2870 = vunpack.c.h.b16 %v2173
    %v2871 = vunpack.c.l.b16 %v2174
    %v2872 = vunpack.c.h.b16 %v2174
    %v2873 = vunpack.c.l.b16 %v2175
    %v2874 = vunpack.c.h.b16 %v2175
    %v2875 = vunpack.c.l.b16 %v2176
    %v2876 = vunpack.c.h.b16 %v2176
    %v2877 = vunpack.c.l.b16 %v2177
    %v2878 = vunpack.c.h.b16 %v2177
    %v2879 = vunpack.c.l.b16 %v2178
    %v2880 = vunpack.c.h.b16 %v2178
    %v2881 = vunpack.c.l.b16 %v2179
    %v2882 = vunpack.c.h.b16 %v2179
    %v2883 = vunpack.c.l.b16 %v2180
    %v2884 = vunpack.c.h.b16 %v2180
    %v2885 = vunpack.c.l.b16 %v2181
    %v2886 = vunpack.c.h.b16 %v2181
    %v2887 = vunpack.c.l.b16 %v2182
    %v2888 = vunpack.c.h.b16 %v2182
    %v2889 = vunpack.c.l.b16 %v2183
    %v2890 = vunpack.c.h.b16 %v2183
    %v2891 = vunpack.c.l.b16 %v2184
    %v2892 = vunpack.c.h.b16 %v2184
    %v2893 = vunpack.c.l.b16 %v2185
    %v2894 = vunpack.c.h.b16 %v2185
    %v2895 = vunpack.c.l.b16 %v2186
    %v2896 = vunpack.c.h.b16 %v2186
    %v2897 = vunpack.c.l.b16 %v2187
    %v2898 = vunpack.c.h.b16 %v2187
    %v2899 = vunpack.c.l.b16 %v2188
    %v2900 = vunpack.c.h.b16 %v2188
    %v2901 = vunpack.c.l.b16 %v2189
    %v2902 = vunpack.c.h.b16 %v2189
    %v2903 = vunpack.c.l.b16 %v2190
    %v2904 = vunpack.c.h.b16 %v2190
    %v2905 = vunpack.c.l.b16 %v2191
    %v2906 = vunpack.c.h.b16 %v2191
    %v2907 = vunpack.c.l.b16 %v2192
    %v2908 = vunpack.c.h.b16 %v2192
    %v2909 = vunpack.c.l.b16 %v2193
    %v2910 = vunpack.c.h.b16 %v2193
    %v2911 = vunpack.c.l.b16 %v2194
    %v2912 = vunpack.c.h.b16 %v2194
    %v2913 = vunpack.c.l.b16 %v2195
    %v2914 = vunpack.c.h.b16 %v2195
    %v2915 = vunpack.c.l.b16 %v2196
    %v2916 = vunpack.c.h.b16 %v2196
    %v2917 = vunpack.c.l.b16 %v2197
    %v2918 = vunpack.c.h.b16 %v2197
    %v2919 = vunpack.c.l.b16 %v2198
    %v2920 = vunpack.c.h.b16 %v2198
    %v2921 = vunpack.c.l.b16 %v2199
    %v2922 = vunpack.c.h.b16 %v2199
    %v2923 = vunpack.c.l.b16 %v2200
    %v2924 = vunpack.c.h.b16 %v2200
    %v2925 = vunpack.c.l.b16 %v2201
    %v2926 = vunpack.c.h.b16 %v2201
    %v2927 = vunpack.c.l.b16 %v2202
    %v2928 = vunpack.c.h.b16 %v2202
    %v2929 = vunpack.c.l.b16 %v2203
    %v2930 = vunpack.c.h.b16 %v2203
    %v2931 = vunpack.c.l.b16 %v2204
    %v2932 = vunpack.c.h.b16 %v2204
    %v2933 = vunpack.c.l.b16 %v2205
    %v2934 = vunpack.c.h.b16 %v2205
    %v2935 = vunpack.c.l.b16 %v2206
    %v2936 = vunpack.c.h.b16 %v2206
    %v2937 = vunpack.c.l.b16 %v2207
    %v2938 = vunpack.c.h.b16 %v2207
    %v2939 = vunpack.c.l.b16 %v2208
    %v2940 = vunpack.c.h.b16 %v2208
    %v2941 = vunpack.c.l.b16 %v2209
    %v2942 = vunpack.c.h.b16 %v2209
    %v2943 = vunpack.c.l.b16 %v2210
    %v2944 = vunpack.c.h.b16 %v2210
    %v2945 = vunpack.c.l.b16 %v2211
    %v2946 = vunpack.c.h.b16 %v2211
    %v2947 = vunpack.c.l.b16 %v2212
    %v2948 = vunpack.c.h.b16 %v2212
    %v2949 = vunpack.c.l.b16 %v2213
    %v2950 = vunpack.c.h.b16 %v2213
    %v2951 = vunpack.c.l.b16 %v2214
    %v2952 = vunpack.c.h.b16 %v2214
    %v2953 = vunpack.c.l.b16 %v2215
    %v2954 = vunpack.c.h.b16 %v2215
    %v2955 = vunpack.c.l.b16 %v2216
    %v2956 = vunpack.c.h.b16 %v2216
    %v2957 = vunpack.c.l.b16 %v2217
    %v2958 = vunpack.c.h.b16 %v2217
    %v2959 = vunpack.c.l.b16 %v2218
    %v2960 = vunpack.c.h.b16 %v2218
    %v2961 = vunpack.c.l.b16 %v2219
    %v2962 = vunpack.c.h.b16 %v2219
    %v2963 = vunpack.c.l.b16 %v2220
    %v2964 = vunpack.c.h.b16 %v2220
    %v2965 = vunpack.c.l.b16 %v2221
    %v2966 = vunpack.c.h.b16 %v2221
    %v2967 = vunpack.c.l.b16 %v2222
    %v2968 = vunpack.c.h.b16 %v2222
    %v2969 = vunpack.c.l.b16 %v2223
    %v2970 = vunpack.c.h.b16 %v2223
    %v2971 = vunpack.c.l.b16 %v2224
    %v2972 = vunpack.c.h.b16 %v2224
    %v2973 = vunpack.c.l.b16 %v2225
    %v2974 = vunpack.c.h.b16 %v2225
    %v2975 = vunpack.c.l.b16 %v2226
    %v2976 = vunpack.c.h.b16 %v2226
    %v2977 = vunpack.c.l.b16 %v2227
    %v2978 = vunpack.c.h.b16 %v2227
    %v2979 = vunpack.c.l.b16 %v2228
    %v2980 = vunpack.c.h.b16 %v2228
    %v2981 = vunpack.c.l.b16 %v2229
    %v2982 = vunpack.c.h.b16 %v2229
    %v2983 = vunpack.c.l.b16 %v2230
    %v2984 = vunpack.c.h.b16 %v2230
    %v2985 = vunpack.c.l.b16 %v2231
    %v2986 = vunpack.c.h.b16 %v2231
    %v2987 = vunpack.c.l.b16 %v2232
    %v2988 = vunpack.c.h.b16 %v2232
    %v2989 = vunpack.c.l.b16 %v2233
    %v2990 = vunpack.c.h.b16 %v2233
    %v2991 = vunpack.c.l.b16 %v2234
    %v2992 = vunpack.c.h.b16 %v2234
    %v2993 = vunpack.c.l.b16 %v2235
    %v2994 = vunpack.c.h.b16 %v2235
    %v2995 = vunpack.c.l.b16 %v2236
    %v2996 = vunpack.c.h.b16 %v2236
    %v2997 = vunpack.c.l.b16 %v2237
    %v2998 = vunpack.c.h.b16 %v2237
    %v2999 = vunpack.c.l.b16 %v2238
    %v3000 = vunpack.c.h.b16 %v2238
    %v3001 = vunpack.c.l.b16 %v2239
    %v3002 = vunpack.c.h.b16 %v2239
    %v3003 = vunpack.c.l.b16 %v2240
    %v3004 = vunpack.c.h.b16 %v2240
    %v3005 = vunpack.c.l.b16 %v2241
    %v3006 = vunpack.c.h.b16 %v2241
    %v3007 = vunpack.c.l.b16 %v2242
    %v3008 = vunpack.c.h.b16 %v2242
    %v3009 = vunpack.c.l.b16 %v2243
    %v3010 = vunpack.c.h.b16 %v2243
    %v3011 = vunpack.c.l.b16 %v2244
    %v3012 = vunpack.c.h.b16 %v2244
    %v3013 = vunpack.c.l.b16 %v2245
    %v3014 = vunpack.c.h.b16 %v2245
    %v3015 = vunpack.c.l.b16 %v2246
    %v3016 = vunpack.c.h.b16 %v2246
    %v3017 = vunpack.c.l.b16 %v2247
    %v3018 = vunpack.c.h.b16 %v2247
    %v3019 = vunpack.c.l.b16 %v2248
    %v3020 = vunpack.c.h.b16 %v2248
    %v3021 = vunpack.c.l.b16 %v2249
    %v3022 = vunpack.c.h.b16 %v2249
    %v3023 = vunpack.c.l.b16 %v2250
    %v3024 = vunpack.c.h.b16 %v2250
    %v3025 = vunpack.c.l.b16 %v2251
    %v3026 = vunpack.c.h.b16 %v2251
    %v3027 = vunpack.c.l.b16 %v2252
    %v3028 = vunpack.c.h.b16 %v2252
    %v3029 = vunpack.c.l.b16 %v2253
    %v3030 = vunpack.c.h.b16 %v2253
    %v3031 = vunpack.c.l.b16 %v2254
    %v3032 = vunpack.c.h.b16 %v2254
    %v3033 = vunpack.c.l.b16 %v2255
    %v3034 = vunpack.c.h.b16 %v2255
    %v3035 = vunpack.c.l.b16 %v2256
    %v3036 = vunpack.c.h.b16 %v2256
    %v3037 = vunpack.c.l.b16 %v2257
    %v3038 = vunpack.c.h.b16 %v2257
    %v3039 = vunpack.c.l.b16 %v2258
    %v3040 = vunpack.c.h.b16 %v2258
    %v3041 = vunpack.c.l.b16 %v2259
    %v3042 = vunpack.c.h.b16 %v2259
    %v3043 = vunpack.c.l.b16 %v2260
    %v3044 = vunpack.c.h.b16 %v2260
    %v3045 = vunpack.c.l.b16 %v2261
    %v3046 = vunpack.c.h.b16 %v2261
    %v3047 = vunpack.c.l.b16 %v2262
    %v3048 = vunpack.c.h.b16 %v2262
    %v3049 = vunpack.c.l.b16 %v2263
    %v3050 = vunpack.c.h.b16 %v2263
    %v3051 = vunpack.c.l.b16 %v2264
    %v3052 = vunpack.c.h.b16 %v2264
    %v3053 = vunpack.c.l.b16 %v2265
    %v3054 = vunpack.c.h.b16 %v2265
    %v3055 = vunpack.c.l.b16 %v2266
    %v3056 = vunpack.c.h.b16 %v2266
    %v3057 = vpack.c.b16 %v2549, %v2545
    %v3058 = vpack.c.b16 %v2550, %v2546
    %v3059 = vpack.c.b16 %v2551, %v2547
    %v3060 = vpack.c.b16 %v2552, %v2548
    %v3061 = vpack.c.b16 %v2557, %v2553
    %v3062 = vpack.c.b16 %v2558, %v2554
    %v3063 = vpack.c.b16 %v2559, %v2555
    %v3064 = vpack.c.b16 %v2560, %v2556
    %v3065 = vpack.c.b16 %v2565, %v2561
    %v3066 = vpack.c.b16 %v2566, %v2562
    %v3067 = vpack.c.b16 %v2567, %v2563
    %v3068 = vpack.c.b16 %v2568, %v2564
    %v3069 = vpack.c.b16 %v2573, %v2569
    %v3070 = vpack.c.b16 %v2574, %v2570
    %v3071 = vpack.c.b16 %v2575, %v2571
    %v3072 = vpack.c.b16 %v2576, %v2572
    %v3073 = vpack.c.b16 %v2581, %v2577
    %v3074 = vpack.c.b16 %v2582, %v2578
    %v3075 = vpack.c.b16 %v2583, %v2579
    %v3076 = vpack.c.b16 %v2584, %v2580
    %v3077 = vpack.c.b16 %v2589, %v2585
    %v3078 = vpack.c.b16 %v2590, %v2586
    %v3079 = vpack.c.b16 %v2591, %v2587
    %v3080 = vpack.c.b16 %v2592, %v2588
    %v3081 = vpack.c.b16 %v2597, %v2593
    %v3082 = vpack.c.b16 %v2598, %v2594
    %v3083 = vpack.c.b16 %v2599, %v2595
    %v3084 = vpack.c.b16 %v2600, %v2596
    %v3085 = vpack.c.b16 %v2605, %v2601
    %v3086 = vpack.c.b16 %v2606, %v2602
    %v3087 = vpack.c.b16 %v2607, %v2603
    %v3088 = vpack.c.b16 %v2608, %v2604
    %v3089 = vpack.c.b16 %v2613, %v2609
    %v3090 = vpack.c.b16 %v2614, %v2610
    %v3091 = vpack.c.b16 %v2615, %v2611
    %v3092 = vpack.c.b16 %v2616, %v2612
    %v3093 = vpack.c.b16 %v2621, %v2617
    %v3094 = vpack.c.b16 %v2622, %v2618
    %v3095 = vpack.c.b16 %v2623, %v2619
    %v3096 = vpack.c.b16 %v2624, %v2620
    %v3097 = vpack.c.b16 %v2629, %v2625
    %v3098 = vpack.c.b16 %v2630, %v2626
    %v3099 = vpack.c.b16 %v2631, %v2627
    %v3100 = vpack.c.b16 %v2632, %v2628
    %v3101 = vpack.c.b16 %v2637, %v2633
    %v3102 = vpack.c.b16 %v2638, %v2634
    %v3103 = vpack.c.b16 %v2639, %v2635
    %v3104 = vpack.c.b16 %v2640, %v2636
    %v3105 = vpack.c.b16 %v2645, %v2641
    %v3106 = vpack.c.b16 %v2646, %v2642
    %v3107 = vpack.c.b16 %v2647, %v2643
    %v3108 = vpack.c.b16 %v2648, %v2644
    %v3109 = vpack.c.b16 %v2653, %v2649
    %v3110 = vpack.c.b16 %v2654, %v2650
    %v3111 = vpack.c.b16 %v2655, %v2651
    %v3112 = vpack.c.b16 %v2656, %v2652
    %v3113 = vpack.c.b16 %v2661, %v2657
    %v3114 = vpack.c.b16 %v2662, %v2658
    %v3115 = vpack.c.b16 %v2663, %v2659
    %v3116 = vpack.c.b16 %v2664, %v2660
    %v3117 = vpack.c.b16 %v2669, %v2665
    %v3118 = vpack.c.b16 %v2670, %v2666
    %v3119 = vpack.c.b16 %v2671, %v2667
    %v3120 = vpack.c.b16 %v2672, %v2668
    %v3121 = vpack.c.b16 %v2677, %v2673
    %v3122 = vpack.c.b16 %v2678, %v2674
    %v3123 = vpack.c.b16 %v2679, %v2675
    %v3124 = vpack.c.b16 %v2680, %v2676
    %v3125 = vpack.c.b16 %v2685, %v2681
    %v3126 = vpack.c.b16 %v2686, %v2682
    %v3127 = vpack.c.b16 %v2687, %v2683
    %v3128 = vpack.c.b16 %v2688, %v2684
    %v3129 = vpack.c.b16 %v2693, %v2689
    %v3130 = vpack.c.b16 %v2694, %v2690
    %v3131 = vpack.c.b16 %v2695, %v2691
    %v3132 = vpack.c.b16 %v2696, %v2692
    %v3133 = vpack.c.b16 %v2701, %v2697
    %v3134 = vpack.c.b16 %v2702, %v2698
    %v3135 = vpack.c.b16 %v2703, %v2699
    %v3136 = vpack.c.b16 %v2704, %v2700
    %v3137 = vpack.c.b16 %v2709, %v2705
    %v3138 = vpack.c.b16 %v2710, %v2706
    %v3139 = vpack.c.b16 %v2711, %v2707
    %v3140 = vpack.c.b16 %v2712, %v2708
    %v3141 = vpack.c.b16 %v2717, %v2713
    %v3142 = vpack.c.b16 %v2718, %v2714
    %v3143 = vpack.c.b16 %v2719, %v2715
    %v3144 = vpack.c.b16 %v2720, %v2716
    %v3145 = vpack.c.b16 %v2725, %v2721
    %v3146 = vpack.c.b16 %v2726, %v2722
    %v3147 = vpack.c.b16 %v2727, %v2723
    %v3148 = vpack.c.b16 %v2728, %v2724
    %v3149 = vpack.c.b16 %v2733, %v2729
    %v3150 = vpack.c.b16 %v2734, %v2730
    %v3151 = vpack.c.b16 %v2735, %v2731
    %v3152 = vpack.c.b16 %v2736, %v2732
    %v3153 = vpack.c.b16 %v2741, %v2737
    %v3154 = vpack.c.b16 %v2742, %v2738
    %v3155 = vpack.c.b16 %v2743, %v2739
    %v3156 = vpack.c.b16 %v2744, %v2740
    %v3157 = vpack.c.b16 %v2749, %v2745
    %v3158 = vpack.c.b16 %v2750, %v2746
    %v3159 = vpack.c.b16 %v2751, %v2747
    %v3160 = vpack.c.b16 %v2752, %v2748
    %v3161 = vpack.c.b16 %v2757, %v2753
    %v3162 = vpack.c.b16 %v2758, %v2754
    %v3163 = vpack.c.b16 %v2759, %v2755
    %v3164 = vpack.c.b16 %v2760, %v2756
    %v3165 = vpack.c.b16 %v2765, %v2761
    %v3166 = vpack.c.b16 %v2766, %v2762
    %v3167 = vpack.c.b16 %v2767, %v2763
    %v3168 = vpack.c.b16 %v2768, %v2764
    %v3169 = vpack.c.b16 %v2773, %v2769
    %v3170 = vpack.c.b16 %v2774, %v2770
    %v3171 = vpack.c.b16 %v2775, %v2771
    %v3172 = vpack.c.b16 %v2776, %v2772
    %v3173 = vpack.c.b16 %v2781, %v2777
    %v3174 = vpack.c.b16 %v2782, %v2778
    %v3175 = vpack.c.b16 %v2783, %v2779
    %v3176 = vpack.c.b16 %v2784, %v2780
    %v3177 = vpack.c.b16 %v2789, %v2785
    %v3178 = vpack.c.b16 %v2790, %v2786
    %v3179 = vpack.c.b16 %v2791, %v2787
    %v3180 = vpack.c.b16 %v2792, %v2788
    %v3181 = vpack.c.b16 %v2797, %v2793
    %v3182 = vpack.c.b16 %v2798, %v2794
    %v3183 = vpack.c.b16 %v2799, %v2795
    %v3184 = vpack.c.b16 %v2800, %v2796
    %v3185 = vpack.c.b16 %v2805, %v2801
    %v3186 = vpack.c.b16 %v2806, %v2802
    %v3187 = vpack.c.b16 %v2807, %v2803
    %v3188 = vpack.c.b16 %v2808, %v2804
    %v3189 = vpack.c.b16 %v2813, %v2809
    %v3190 = vpack.c.b16 %v2814, %v2810
    %v3191 = vpack.c.b16 %v2815, %v2811
    %v3192 = vpack.c.b16 %v2816, %v2812
    %v3193 = vpack.c.b16 %v2821, %v2817
    %v3194 = vpack.c.b16 %v2822, %v2818
    %v3195 = vpack.c.b16 %v2823, %v2819
    %v3196 = vpack.c.b16 %v2824, %v2820
    %v3197 = vpack.c.b16 %v2829, %v2825
    %v3198 = vpack.c.b16 %v2830, %v2826
    %v3199 = vpack.c.b16 %v2831, %v2827
    %v3200 = vpack.c.b16 %v2832, %v2828
    %v3201 = vpack.c.b16 %v2837, %v2833
    %v3202 = vpack.c.b16 %v2838, %v2834
    %v3203 = vpack.c.b16 %v2839, %v2835
    %v3204 = vpack.c.b16 %v2840, %v2836
    %v3205 = vpack.c.b16 %v2845, %v2841
    %v3206 = vpack.c.b16 %v2846, %v2842
    %v3207 = vpack.c.b16 %v2847, %v2843
    %v3208 = vpack.c.b16 %v2848, %v2844
    %v3209 = vpack.c.b16 %v2853, %v2849
    %v3210 = vpack.c.b16 %v2854, %v2850
    %v3211 = vpack.c.b16 %v2855, %v2851
    %v3212 = vpack.c.b16 %v2856, %v2852
    %v3213 = vpack.c.b16 %v2861, %v2857
    %v3214 = vpack.c.b16 %v2862, %v2858
    %v3215 = vpack.c.b16 %v2863, %v2859
    %v3216 = vpack.c.b16 %v2864, %v2860
    %v3217 = vpack.c.b16 %v2869, %v2865
    %v3218 = vpack.c.b16 %v2870, %v2866
    %v3219 = vpack.c.b16 %v2871, %v2867
    %v3220 = vpack.c.b16 %v2872, %v2868
    %v3221 = vpack.c.b16 %v2877, %v2873
    %v3222 = vpack.c.b16 %v2878, %v2874
    %v3223 = vpack.c.b16 %v2879, %v2875
    %v3224 = vpack.c.b16 %v2880, %v2876
    %v3225 = vpack.c.b16 %v2885, %v2881
    %v3226 = vpack.c.b16 %v2886, %v2882
    %v3227 = vpack.c.b16 %v2887, %v2883
    %v3228 = vpack.c.b16 %v2888, %v2884
    %v3229 = vpack.c.b16 %v2893, %v2889
    %v3230 = vpack.c.b16 %v2894, %v2890
    %v3231 = vpack.c.b16 %v2895, %v2891
    %v3232 = vpack.c.b16 %v2896, %v2892
    %v3233 = vpack.c.b16 %v2901, %v2897
    %v3234 = vpack.c.b16 %v2902, %v2898
    %v3235 = vpack.c.b16 %v2903, %v2899
    %v3236 = vpack.c.b16 %v2904, %v2900
    %v3237 = vpack.c.b16 %v2909, %v2905
    %v3238 = vpack.c.b16 %v2910, %v2906
    %v3239 = vpack.c.b16 %v2911, %v2907
    %v3240 = vpack.c.b16 %v2912, %v2908
    %v3241 = vpack.c.b16 %v2917, %v2913
    %v3242 = vpack.c.b16 %v2918, %v2914
    %v3243 = vpack.c.b16 %v2919, %v2915
    %v3244 = vpack.c.b16 %v2920, %v2916
    %v3245 = vpack.c.b16 %v2925, %v2921
    %v3246 = vpack.c.b16 %v2926, %v2922
    %v3247 = vpack.c.b16 %v2927, %v2923
    %v3248 = vpack.c.b16 %v2928, %v2924
    %v3249 = vpack.c.b16 %v2933, %v2929
    %v3250 = vpack.c.b16 %v2934, %v2930
    %v3251 = vpack.c.b16 %v2935, %v2931
    %v3252 = vpack.c.b16 %v2936, %v2932
    %v3253 = vpack.c.b16 %v2941, %v2937
    %v3254 = vpack.c.b16 %v2942, %v2938
    %v3255 = vpack.c.b16 %v2943, %v2939
    %v3256 = vpack.c.b16 %v2944, %v2940
    %v3257 = vpack.c.b16 %v2949, %v2945
    %v3258 = vpack.c.b16 %v2950, %v2946
    %v3259 = vpack.c.b16 %v2951, %v2947
    %v3260 = vpack.c.b16 %v2952, %v2948
    %v3261 = vpack.c.b16 %v2957, %v2953
    %v3262 = vpack.c.b16 %v2958, %v2954
    %v3263 = vpack.c.b16 %v2959, %v2955
    %v3264 = vpack.c.b16 %v2960, %v2956
    %v3265 = vpack.c.b16 %v2965, %v2961
    %v3266 = vpack.c.b16 %v2966, %v2962
    %v3267 = vpack.c.b16 %v2967, %v2963
    %v3268 = vpack.c.b16 %v2968, %v2964
    %v3269 = vpack.c.b16 %v2973, %v2969
    %v3270 = vpack.c.b16 %v2974, %v2970
    %v3271 = vpack.c.b16 %v2975, %v2971
    %v3272 = vpack.c.b16 %v2976, %v2972
    %v3273 = vpack.c.b16 %v2981, %v2977
    %v3274 = vpack.c.b16 %v2982, %v2978
    %v3275 = vpack.c.b16 %v2983, %v2979
    %v3276 = vpack.c.b16 %v2984, %v2980
    %v3277 = vpack.c.b16 %v2989, %v2985
    %v3278 = vpack.c.b16 %v2990, %v2986
    %v3279 = vpack.c.b16 %v2991, %v2987
    %v3280 = vpack.c.b16 %v2992, %v2988
    %v3281 = vpack.c.b16 %v2997, %v2993
    %v3282 = vpack.c.b16 %v2998, %v2994
    %v3283 = vpack.c.b16 %v2999, %v2995
    %v3284 = vpack.c.b16 %v3000, %v2996
    %v3285 = vpack.c.b16 %v3005, %v3001
    %v3286 = vpack.c.b16 %v3006, %v3002
    %v3287 = vpack.c.b16 %v3007, %v3003
    %v3288 = vpack.c.b16 %v3008, %v3004
    %v3289 = vpack.c.b16 %v3013, %v3009
    %v3290 = vpack.c.b16 %v3014, %v3010
    %v3291 = vpack.c.b16 %v3015, %v3011
    %v3292 = vpack.c.b16 %v3016, %v3012
    %v3293 = vpack.c.b16 %v3021, %v3017
    %v3294 = vpack.c.b16 %v3022, %v3018
    %v3295 = vpack.c.b16 %v3023, %v3019
    %v3296 = vpack.c.b16 %v3024, %v3020
    %v3297 = vpack.c.b16 %v3029, %v3025
    %v3298 = vpack.c.b16 %v3030, %v3026
    %v3299 = vpack.c.b16 %v3031, %v3027
    %v3300 = vpack.c.b16 %v3032, %v3028
    %v3301 = vpack.c.b16 %v3037, %v3033
    %v3302 = vpack.c.b16 %v3038, %v3034
    %v3303 = vpack.c.b16 %v3039, %v3035
    %v3304 = vpack.c.b16 %v3040, %v3036
    %v3305 = vpack.c.b16 %v3045, %v3041
    %v3306 = vpack.c.b16 %v3046, %v3042
    %v3307 = vpack.c.b16 %v3047, %v3043
    %v3308 = vpack.c.b16 %v3048, %v3044
    %v3309 = vpack.c.b16 %v3053, %v3049
    %v3310 = vpack.c.b16 %v3054, %v3050
    %v3311 = vpack.c.b16 %v3055, %v3051
    %v3312 = vpack.c.b16 %v3056, %v3052
    %3569 = vmatprep.subr.bf16.mxu0 %v3086
    %3570 = vmatpush1.bf16.msra.mxu0 %v3085
    %3571 = vmatprep.subr.bf16.mxu0 %v3082
    %3572 = vmatpush1.bf16.msra.mxu0 %v3081
    %3573 = vmatprep.subr.bf16.mxu0 %v3078
    %3574 = vmatpush1.bf16.msra.mxu0 %v3077
    %3575 = vmatprep.subr.bf16.mxu0 %v3074
    %3576 = vmatpush1.bf16.msra.mxu0 %v3073
    %3577 = vmatprep.subr.bf16.mxu0 %v3070
    %3578 = vmatpush1.bf16.msra.mxu0 %v3069
    %3579 = vmatprep.subr.bf16.mxu0 %v3066
    %3580 = vmatpush1.bf16.msra.mxu0 %v3065
    %3581 = vmatprep.subr.bf16.mxu0 %v3062
    %3582 = vmatpush1.bf16.msra.mxu0 %v3061
    %3583 = vmatprep.subr.bf16.mxu0 %v3058
    %3584 = vmatpush1.bf16.msra.mxu0 %v3057
    %3585 = vmatprep.subr.bf16.mxu0 %v3118
    %3586 = vmatpush2.bf16.msra.mxu0 %v3117
    %3587 = vmatprep.subr.bf16.mxu0 %v3114
    %3588 = vmatpush2.bf16.msra.mxu0 %v3113
    %3589 = vmatprep.subr.bf16.mxu0 %v3110
    %3590 = vmatpush2.bf16.msra.mxu0 %v3109
    %3591 = vmatprep.subr.bf16.mxu0 %v3106
    %3592 = vmatpush2.bf16.msra.mxu0 %v3105
    %3593 = vmatprep.subr.bf16.mxu0 %v3102
    %3594 = vmatpush2.bf16.msra.mxu0 %v3101
    %3595 = vmatprep.subr.bf16.mxu0 %v3098
    %3596 = vmatpush2.bf16.msra.mxu0 %v3097
    %3597 = vmatprep.subr.bf16.mxu0 %v3094
    %3598 = vmatpush2.bf16.msra.mxu0 %v3093
    %3599 = vmatprep.subr.bf16.mxu0 %v3090
    %3600 = vmatpush2.bf16.msra.mxu0 %v3089
    %3601 = vmatprep.mubr.bf16.mxu0 %v2004
    %3602 = vmatmul.mubr.bf16.gmra.mxu0 %v2003
    %v3603 = vpop.f32.mrf.mxu0
    %v3604 = vadd.f32 %v2272, %v3603
    %v3605 = vpop.f32.mrf.mxu0
    %v3606 = vadd.f32 %v2276, %v3605
    %v3607 = vpop.f32.mrf.mxu0
    %v3608 = vadd.f32 %v2272, %v3607
    %v3609 = vpop.f32.mrf.mxu0
    %v3610 = vadd.f32 %v2276, %v3609
    %3611 = vdwg.mxu0
    %3612 = vmatprep.subr.bf16.mxu0 %v3150
    %3613 = vmatpush1.bf16.msra.mxu0 %v3149
    %3614 = vmatprep.subr.bf16.mxu0 %v3146
    %3615 = vmatpush1.bf16.msra.mxu0 %v3145
    %3616 = vmatprep.subr.bf16.mxu0 %v3142
    %3617 = vmatpush1.bf16.msra.mxu0 %v3141
    %3618 = vmatprep.subr.bf16.mxu0 %v3138
    %3619 = vmatpush1.bf16.msra.mxu0 %v3137
    %3620 = vmatprep.subr.bf16.mxu0 %v3134
    %3621 = vmatpush1.bf16.msra.mxu0 %v3133
    %3622 = vmatprep.subr.bf16.mxu0 %v3130
    %3623 = vmatpush1.bf16.msra.mxu0 %v3129
    %3624 = vmatprep.subr.bf16.mxu0 %v3126
    %3625 = vmatpush1.bf16.msra.mxu0 %v3125
    %3626 = vmatprep.subr.bf16.mxu0 %v3122
    %3627 = vmatpush1.bf16.msra.mxu0 %v3121
    %3628 = vmatprep.subr.bf16.mxu0 %v3182
    %3629 = vmatpush2.bf16.msra.mxu0 %v3181
    %3630 = vmatprep.subr.bf16.mxu0 %v3178
    %3631 = vmatpush2.bf16.msra.mxu0 %v3177
    %3632 = vmatprep.subr.bf16.mxu0 %v3174
    %3633 = vmatpush2.bf16.msra.mxu0 %v3173
    %3634 = vmatprep.subr.bf16.mxu0 %v3170
    %3635 = vmatpush2.bf16.msra.mxu0 %v3169
    %3636 = vmatprep.subr.bf16.mxu0 %v3166
    %3637 = vmatpush2.bf16.msra.mxu0 %v3165
    %3638 = vmatprep.subr.bf16.mxu0 %v3162
    %3639 = vmatpush2.bf16.msra.mxu0 %v3161
    %3640 = vmatprep.subr.bf16.mxu0 %v3158
    %3641 = vmatpush2.bf16.msra.mxu0 %v3157
    %3642 = vmatprep.subr.bf16.mxu0 %v3154
    %3643 = vmatpush2.bf16.msra.mxu0 %v3153
    %3644 = vmatprep.mubr.bf16.mxu0 %v2006
    %3645 = vmatmul.mubr.bf16.gmra.mxu0 %v2005
    %v3646 = vpop.f32.mrf.mxu0
    %v3647 = vadd.f32 %v3604, %v3646
    %v3648 = vpop.f32.mrf.mxu0
    %v3649 = vadd.f32 %v3606, %v3648
    %v3650 = vpop.f32.mrf.mxu0
    %v3651 = vadd.f32 %v3608, %v3650
    %v3652 = vpop.f32.mrf.mxu0
    %v3653 = vadd.f32 %v3610, %v3652
    %3654 = vdwg.mxu0
    %3655 = vmatprep.subr.bf16.mxu0 %v3214
    %3656 = vmatpush1.bf16.msra.mxu0 %v3213
    %3657 = vmatprep.subr.bf16.mxu0 %v3210
    %3658 = vmatpush1.bf16.msra.mxu0 %v3209
    %3659 = vmatprep.subr.bf16.mxu0 %v3206
    %3660 = vmatpush1.bf16.msra.mxu0 %v3205
    %3661 = vmatprep.subr.bf16.mxu0 %v3202
    %3662 = vmatpush1.bf16.msra.mxu0 %v3201
    %3663 = vmatprep.subr.bf16.mxu0 %v3198
    %3664 = vmatpush1.bf16.msra.mxu0 %v3197
    %3665 = vmatprep.subr.bf16.mxu0 %v3194
    %3666 = vmatpush1.bf16.msra.mxu0 %v3193
    %3667 = vmatprep.subr.bf16.mxu0 %v3190
    %3668 = vmatpush1.bf16.msra.mxu0 %v3189
    %3669 = vmatprep.subr.bf16.mxu0 %v3186
    %3670 = vmatpush1.bf16.msra.mxu0 %v3185
    %3671 = vmatprep.subr.bf16.mxu0 %v3246
    %3672 = vmatpush2.bf16.msra.mxu0 %v3245
    %3673 = vmatprep.subr.bf16.mxu0 %v3242
    %3674 = vmatpush2.bf16.msra.mxu0 %v3241
    %3675 = vmatprep.subr.bf16.mxu0 %v3238
    %3676 = vmatpush2.bf16.msra.mxu0 %v3237
    %3677 = vmatprep.subr.bf16.mxu0 %v3234
    %3678 = vmatpush2.bf16.msra.mxu0 %v3233
    %3679 = vmatprep.subr.bf16.mxu0 %v3230
    %3680 = vmatpush2.bf16.msra.mxu0 %v3229
    %3681 = vmatprep.subr.bf16.mxu0 %v3226
    %3682 = vmatpush2.bf16.msra.mxu0 %v3225
    %3683 = vmatprep.subr.bf16.mxu0 %v3222
    %3684 = vmatpush2.bf16.msra.mxu0 %v3221
    %3685 = vmatprep.subr.bf16.mxu0 %v3218
    %3686 = vmatpush2.bf16.msra.mxu0 %v3217
    %3687 = vmatprep.mubr.bf16.mxu0 %v2008
    %3688 = vmatmul.mubr.bf16.gmra.mxu0 %v2007
    %v3689 = vpop.f32.mrf.mxu0
    %v3690 = vadd.f32 %v3647, %v3689
    %v3691 = vpop.f32.mrf.mxu0
    %v3692 = vadd.f32 %v3649, %v3691
    %v3693 = vpop.f32.mrf.mxu0
    %v3694 = vadd.f32 %v3651, %v3693
    %v3695 = vpop.f32.mrf.mxu0
    %v3696 = vadd.f32 %v3653, %v3695
    %3697 = vdwg.mxu0
    %3698 = vmatprep.subr.bf16.mxu0 %v3278
    %3699 = vmatpush1.bf16.msra.mxu0 %v3277
    %3700 = vmatprep.subr.bf16.mxu0 %v3274
    %3701 = vmatpush1.bf16.msra.mxu0 %v3273
    %3702 = vmatprep.subr.bf16.mxu0 %v3270
    %3703 = vmatpush1.bf16.msra.mxu0 %v3269
    %3704 = vmatprep.subr.bf16.mxu0 %v3266
    %3705 = vmatpush1.bf16.msra.mxu0 %v3265
    %3706 = vmatprep.subr.bf16.mxu0 %v3262
    %3707 = vmatpush1.bf16.msra.mxu0 %v3261
    %3708 = vmatprep.subr.bf16.mxu0 %v3258
    %3709 = vmatpush1.bf16.msra.mxu0 %v3257
    %3710 = vmatprep.subr.bf16.mxu0 %v3254
    %3711 = vmatpush1.bf16.msra.mxu0 %v3253
    %3712 = vmatprep.subr.bf16.mxu0 %v3250
    %3713 = vmatpush1.bf16.msra.mxu0 %v3249
    %3714 = vmatprep.subr.bf16.mxu0 %v3310
    %3715 = vmatpush2.bf16.msra.mxu0 %v3309
    %3716 = vmatprep.subr.bf16.mxu0 %v3306
    %3717 = vmatpush2.bf16.msra.mxu0 %v3305
    %3718 = vmatprep.subr.bf16.mxu0 %v3302
    %3719 = vmatpush2.bf16.msra.mxu0 %v3301
    %3720 = vmatprep.subr.bf16.mxu0 %v3298
    %3721 = vmatpush2.bf16.msra.mxu0 %v3297
    %3722 = vmatprep.subr.bf16.mxu0 %v3294
    %3723 = vmatpush2.bf16.msra.mxu0 %v3293
    %3724 = vmatprep.subr.bf16.mxu0 %v3290
    %3725 = vmatpush2.bf16.msra.mxu0 %v3289
    %3726 = vmatprep.subr.bf16.mxu0 %v3286
    %3727 = vmatpush2.bf16.msra.mxu0 %v3285
    %3728 = vmatprep.subr.bf16.mxu0 %v3282
    %3729 = vmatpush2.bf16.msra.mxu0 %v3281
    %3730 = vmatprep.mubr.bf16.mxu0 %v2010
    %3731 = vmatmul.mubr.bf16.gmra.mxu0 %v2009
    %v3732 = vpop.f32.mrf.mxu0
    %v3733 = vadd.f32 %v3690, %v3732
    %v3734 = vpop.f32.mrf.mxu0
    %v3735 = vadd.f32 %v3692, %v3734
    %v3736 = vpop.f32.mrf.mxu0
    %v3737 = vadd.f32 %v3694, %v3736
    %v3738 = vpop.f32.mrf.mxu0
    %v3739 = vadd.f32 %v3696, %v3738
    %3740 = vdwg.mxu0
    %3741 = vmatprep.subr.bf16.mxu0 %v3088
    %3742 = vmatpush1.bf16.msra.mxu0 %v3087
    %3743 = vmatprep.subr.bf16.mxu0 %v3084
    %3744 = vmatpush1.bf16.msra.mxu0 %v3083
    %3745 = vmatprep.subr.bf16.mxu0 %v3080
    %3746 = vmatpush1.bf16.msra.mxu0 %v3079
    %3747 = vmatprep.subr.bf16.mxu0 %v3076
    %3748 = vmatpush1.bf16.msra.mxu0 %v3075
    %3749 = vmatprep.subr.bf16.mxu0 %v3072
    %3750 = vmatpush1.bf16.msra.mxu0 %v3071
    %3751 = vmatprep.subr.bf16.mxu0 %v3068
    %3752 = vmatpush1.bf16.msra.mxu0 %v3067
    %3753 = vmatprep.subr.bf16.mxu0 %v3064
    %3754 = vmatpush1.bf16.msra.mxu0 %v3063
    %3755 = vmatprep.subr.bf16.mxu0 %v3060
    %3756 = vmatpush1.bf16.msra.mxu0 %v3059
    %3757 = vmatprep.subr.bf16.mxu0 %v3120
    %3758 = vmatpush2.bf16.msra.mxu0 %v3119
    %3759 = vmatprep.subr.bf16.mxu0 %v3116
    %3760 = vmatpush2.bf16.msra.mxu0 %v3115
    %3761 = vmatprep.subr.bf16.mxu0 %v3112
    %3762 = vmatpush2.bf16.msra.mxu0 %v3111
    %3763 = vmatprep.subr.bf16.mxu0 %v3108
    %3764 = vmatpush2.bf16.msra.mxu0 %v3107
    %3765 = vmatprep.subr.bf16.mxu0 %v3104
    %3766 = vmatpush2.bf16.msra.mxu0 %v3103
    %3767 = vmatprep.subr.bf16.mxu0 %v3100
    %3768 = vmatpush2.bf16.msra.mxu0 %v3099
    %3769 = vmatprep.subr.bf16.mxu0 %v3096
    %3770 = vmatpush2.bf16.msra.mxu0 %v3095
    %3771 = vmatprep.subr.bf16.mxu0 %v3092
    %3772 = vmatpush2.bf16.msra.mxu0 %v3091
    %3773 = vmatprep.mubr.bf16.mxu0 %v2004
    %3774 = vmatmul.mubr.bf16.gmra.mxu0 %v2003
    %v3775 = vpop.f32.mrf.mxu0
    %v3776 = vadd.f32 %v2280, %v3775
    %v3777 = vpop.f32.mrf.mxu0
    %v3778 = vadd.f32 %v2284, %v3777
    %v3779 = vpop.f32.mrf.mxu0
    %v3780 = vadd.f32 %v2280, %v3779
    %v3781 = vpop.f32.mrf.mxu0
    %v3782 = vadd.f32 %v2284, %v3781
    %3783 = vdwg.mxu0
    %3784 = vmatprep.subr.bf16.mxu0 %v3152
    %3785 = vmatpush1.bf16.msra.mxu0 %v3151
    %3786 = vmatprep.subr.bf16.mxu0 %v3148
    %3787 = vmatpush1.bf16.msra.mxu0 %v3147
    %3788 = vmatprep.subr.bf16.mxu0 %v3144
    %3789 = vmatpush1.bf16.msra.mxu0 %v3143
    %3790 = vmatprep.subr.bf16.mxu0 %v3140
    %3791 = vmatpush1.bf16.msra.mxu0 %v3139
    %3792 = vmatprep.subr.bf16.mxu0 %v3136
    %3793 = vmatpush1.bf16.msra.mxu0 %v3135
    %3794 = vmatprep.subr.bf16.mxu0 %v3132
    %3795 = vmatpush1.bf16.msra.mxu0 %v3131
    %3796 = vmatprep.subr.bf16.mxu0 %v3128
    %3797 = vmatpush1.bf16.msra.mxu0 %v3127
    %3798 = vmatprep.subr.bf16.mxu0 %v3124
    %3799 = vmatpush1.bf16.msra.mxu0 %v3123
    %3800 = vmatprep.subr.bf16.mxu0 %v3184
    %3801 = vmatpush2.bf16.msra.mxu0 %v3183
    %3802 = vmatprep.subr.bf16.mxu0 %v3180
    %3803 = vmatpush2.bf16.msra.mxu0 %v3179
    %3804 = vmatprep.subr.bf16.mxu0 %v3176
    %3805 = vmatpush2.bf16.msra.mxu0 %v3175
    %3806 = vmatprep.subr.bf16.mxu0 %v3172
    %3807 = vmatpush2.bf16.msra.mxu0 %v3171
    %3808 = vmatprep.subr.bf16.mxu0 %v3168
    %3809 = vmatpush2.bf16.msra.mxu0 %v3167
    %3810 = vmatprep.subr.bf16.mxu0 %v3164
    %3811 = vmatpush2.bf16.msra.mxu0 %v3163
    %3812 = vmatprep.subr.bf16.mxu0 %v3160
    %3813 = vmatpush2.bf16.msra.mxu0 %v3159
    %3814 = vmatprep.subr.bf16.mxu0 %v3156
    %3815 = vmatpush2.bf16.msra.mxu0 %v3155
    %3816 = vmatprep.mubr.bf16.mxu0 %v2006
    %3817 = vmatmul.mubr.bf16.gmra.mxu0 %v2005
    %v3818 = vpop.f32.mrf.mxu0
    %v3819 = vadd.f32 %v3776, %v3818
    %v3820 = vpop.f32.mrf.mxu0
    %v3821 = vadd.f32 %v3778, %v3820
    %v3822 = vpop.f32.mrf.mxu0
    %v3823 = vadd.f32 %v3780, %v3822
    %v3824 = vpop.f32.mrf.mxu0
    %v3825 = vadd.f32 %v3782, %v3824
    %3826 = vdwg.mxu0
    %3827 = vmatprep.subr.bf16.mxu0 %v3216
    %3828 = vmatpush1.bf16.msra.mxu0 %v3215
    %3829 = vmatprep.subr.bf16.mxu0 %v3212
    %3830 = vmatpush1.bf16.msra.mxu0 %v3211
    %3831 = vmatprep.subr.bf16.mxu0 %v3208
    %3832 = vmatpush1.bf16.msra.mxu0 %v3207
    %3833 = vmatprep.subr.bf16.mxu0 %v3204
    %3834 = vmatpush1.bf16.msra.mxu0 %v3203
    %3835 = vmatprep.subr.bf16.mxu0 %v3200
    %3836 = vmatpush1.bf16.msra.mxu0 %v3199
    %3837 = vmatprep.subr.bf16.mxu0 %v3196
    %3838 = vmatpush1.bf16.msra.mxu0 %v3195
    %3839 = vmatprep.subr.bf16.mxu0 %v3192
    %3840 = vmatpush1.bf16.msra.mxu0 %v3191
    %3841 = vmatprep.subr.bf16.mxu0 %v3188
    %3842 = vmatpush1.bf16.msra.mxu0 %v3187
    %3843 = vmatprep.subr.bf16.mxu0 %v3248
    %3844 = vmatpush2.bf16.msra.mxu0 %v3247
    %3845 = vmatprep.subr.bf16.mxu0 %v3244
    %3846 = vmatpush2.bf16.msra.mxu0 %v3243
    %3847 = vmatprep.subr.bf16.mxu0 %v3240
    %3848 = vmatpush2.bf16.msra.mxu0 %v3239
    %3849 = vmatprep.subr.bf16.mxu0 %v3236
    %3850 = vmatpush2.bf16.msra.mxu0 %v3235
    %3851 = vmatprep.subr.bf16.mxu0 %v3232
    %3852 = vmatpush2.bf16.msra.mxu0 %v3231
    %3853 = vmatprep.subr.bf16.mxu0 %v3228
    %3854 = vmatpush2.bf16.msra.mxu0 %v3227
    %3855 = vmatprep.subr.bf16.mxu0 %v3224
    %3856 = vmatpush2.bf16.msra.mxu0 %v3223
    %3857 = vmatprep.subr.bf16.mxu0 %v3220
    %3858 = vmatpush2.bf16.msra.mxu0 %v3219
    %3859 = vmatprep.mubr.bf16.mxu0 %v2008
    %3860 = vmatmul.mubr.bf16.gmra.mxu0 %v2007
    %v3861 = vpop.f32.mrf.mxu0
    %v3862 = vadd.f32 %v3819, %v3861
    %v3863 = vpop.f32.mrf.mxu0
    %v3864 = vadd.f32 %v3821, %v3863
    %v3865 = vpop.f32.mrf.mxu0
    %v3866 = vadd.f32 %v3823, %v3865
    %v3867 = vpop.f32.mrf.mxu0
    %v3868 = vadd.f32 %v3825, %v3867
    %3869 = vdwg.mxu0
    %3870 = vmatprep.subr.bf16.mxu0 %v3280
    %3871 = vmatpush1.bf16.msra.mxu0 %v3279
    %3872 = vmatprep.subr.bf16.mxu0 %v3276
    %3873 = vmatpush1.bf16.msra.mxu0 %v3275
    %3874 = vmatprep.subr.bf16.mxu0 %v3272
    %3875 = vmatpush1.bf16.msra.mxu0 %v3271
    %3876 = vmatprep.subr.bf16.mxu0 %v3268
    %3877 = vmatpush1.bf16.msra.mxu0 %v3267
    %3878 = vmatprep.subr.bf16.mxu0 %v3264
    %3879 = vmatpush1.bf16.msra.mxu0 %v3263
    %3880 = vmatprep.subr.bf16.mxu0 %v3260
    %3881 = vmatpush1.bf16.msra.mxu0 %v3259
    %3882 = vmatprep.subr.bf16.mxu0 %v3256
    %3883 = vmatpush1.bf16.msra.mxu0 %v3255
    %3884 = vmatprep.subr.bf16.mxu0 %v3252
    %3885 = vmatpush1.bf16.msra.mxu0 %v3251
    %3886 = vmatprep.subr.bf16.mxu0 %v3312
    %3887 = vmatpush2.bf16.msra.mxu0 %v3311
    %3888 = vmatprep.subr.bf16.mxu0 %v3308
    %3889 = vmatpush2.bf16.msra.mxu0 %v3307
    %3890 = vmatprep.subr.bf16.mxu0 %v3304
    %3891 = vmatpush2.bf16.msra.mxu0 %v3303
    %3892 = vmatprep.subr.bf16.mxu0 %v3300
    %3893 = vmatpush2.bf16.msra.mxu0 %v3299
    %3894 = vmatprep.subr.bf16.mxu0 %v3296
    %3895 = vmatpush2.bf16.msra.mxu0 %v3295
    %3896 = vmatprep.subr.bf16.mxu0 %v3292
    %3897 = vmatpush2.bf16.msra.mxu0 %v3291
    %3898 = vmatprep.subr.bf16.mxu0 %v3288
    %3899 = vmatpush2.bf16.msra.mxu0 %v3287
    %3900 = vmatprep.subr.bf16.mxu0 %v3284
    %3901 = vmatpush2.bf16.msra.mxu0 %v3283
    %3902 = vmatprep.mubr.bf16.mxu0 %v2010
    %3903 = vmatmul.mubr.bf16.gmra.mxu0 %v2009
    %v3904 = vpop.f32.mrf.mxu0
    %v3905 = vadd.f32 %v3862, %v3904
    %v3906 = vpop.f32.mrf.mxu0
    %v3907 = vadd.f32 %v3864, %v3906
    %v3908 = vpop.f32.mrf.mxu0
    %v3909 = vadd.f32 %v3866, %v3908
    %v3910 = vpop.f32.mrf.mxu0
    %v3911 = vadd.f32 %v3868, %v3910
    %3912 = vdwg.mxu0
    %v3913 = vmax.f32 %v3733, 0.0
    %v3914 = vmax.f32 %v3735, 0.0
    %v3915 = vmax.f32 %v3905, 0.0
    %v3916 = vmax.f32 %v3907, 0.0
    %v3917 = vmax.f32 %v3737, 0.0
    %v3918 = vmax.f32 %v3739, 0.0
    %v3919 = vmax.f32 %v3909, 0.0
    %v3920 = vmax.f32 %v3911, 0.0
    %v3921 = vpack.c.bf16 %v3917, %v3913
    %v3922 = vpack.c.bf16 %v3918, %v3914
    %v3923 = vpack.c.bf16 %v3919, %v3915
    %v3924 = vpack.c.bf16 %v3920, %v3916
    %v3925 = vld [vmem:[#allocation8] sm:$0xff]
    %v3926 = vld [vmem:[#allocation8 + $0x8] sm:$0xff]
    %v3927 = vld [vmem:[#allocation8 + $0x10] sm:$0xff]
    %v3928 = vld [vmem:[#allocation8 + $0x18] sm:$0xff]
    %v3929 = vld [vmem:[#allocation8 + $0x20] sm:$0xff]
    %v3930 = vld [vmem:[#allocation8 + $0x28] sm:$0xff]
    %v3931 = vld [vmem:[#allocation8 + $0x30] sm:$0xff]
    %v3932 = vld [vmem:[#allocation8 + $0x38] sm:$0xff]
    %v3933 = vld [vmem:[#allocation8 + $0x40] sm:$0xff]
    %v3934 = vld [vmem:[#allocation8 + $0x48] sm:$0xff]
    %v3935 = vld [vmem:[#allocation8 + $0x50] sm:$0xff]
    %v3936 = vld [vmem:[#allocation8 + $0x58] sm:$0xff]
    %v3937 = vld [vmem:[#allocation8 + $0x60] sm:$0xff]
    %v3938 = vld [vmem:[#allocation8 + $0x68] sm:$0xff]
    %v3939 = vld [vmem:[#allocation8 + $0x70] sm:$0xff]
    %v3940 = vld [vmem:[#allocation8 + $0x78] sm:$0xff]
    %v3941 = vld [vmem:[#allocation8 + $0x80] sm:$0xff]
    %v3942 = vld [vmem:[#allocation8 + $0x88] sm:$0xff]
    %v3943 = vld [vmem:[#allocation8 + $0x90] sm:$0xff]
    %v3944 = vld [vmem:[#allocation8 + $0x98] sm:$0xff]
    %v3945 = vld [vmem:[#allocation8 + $0xa0] sm:$0xff]
    %v3946 = vld [vmem:[#allocation8 + $0xa8] sm:$0xff]
    %v3947 = vld [vmem:[#allocation8 + $0xb0] sm:$0xff]
    %v3948 = vld [vmem:[#allocation8 + $0xb8] sm:$0xff]
    %v3949 = vld [vmem:[#allocation8 + $0xc0] sm:$0xff]
    %v3950 = vld [vmem:[#allocation8 + $0xc8] sm:$0xff]
    %v3951 = vld [vmem:[#allocation8 + $0xd0] sm:$0xff]
    %v3952 = vld [vmem:[#allocation8 + $0xd8] sm:$0xff]
    %v3953 = vld [vmem:[#allocation8 + $0xe0] sm:$0xff]
    %v3954 = vld [vmem:[#allocation8 + $0xe8] sm:$0xff]
    %v3955 = vld [vmem:[#allocation8 + $0xf0] sm:$0xff]
    %v3956 = vld [vmem:[#allocation8 + $0xf8] sm:$0xff]
    %v3957 = vld [vmem:[#allocation8 + $0x100] sm:$0xff]
    %v3958 = vld [vmem:[#allocation8 + $0x108] sm:$0xff]
    %v3959 = vld [vmem:[#allocation8 + $0x110] sm:$0xff]
    %v3960 = vld [vmem:[#allocation8 + $0x118] sm:$0xff]
    %v3961 = vld [vmem:[#allocation8 + $0x120] sm:$0xff]
    %v3962 = vld [vmem:[#allocation8 + $0x128] sm:$0xff]
    %v3963 = vld [vmem:[#allocation8 + $0x130] sm:$0xff]
    %v3964 = vld [vmem:[#allocation8 + $0x138] sm:$0xff]
    %v3965 = vld [vmem:[#allocation8 + $0x140] sm:$0xff]
    %v3966 = vld [vmem:[#allocation8 + $0x148] sm:$0xff]
    %v3967 = vld [vmem:[#allocation8 + $0x150] sm:$0xff]
    %v3968 = vld [vmem:[#allocation8 + $0x158] sm:$0xff]
    %v3969 = vld [vmem:[#allocation8 + $0x160] sm:$0xff]
    %v3970 = vld [vmem:[#allocation8 + $0x168] sm:$0xff]
    %v3971 = vld [vmem:[#allocation8 + $0x170] sm:$0xff]
    %v3972 = vld [vmem:[#allocation8 + $0x178] sm:$0xff]
    %v3973 = vld [vmem:[#allocation8 + $0x180] sm:$0xff]
    %v3974 = vld [vmem:[#allocation8 + $0x188] sm:$0xff]
    %v3975 = vld [vmem:[#allocation8 + $0x190] sm:$0xff]
    %v3976 = vld [vmem:[#allocation8 + $0x198] sm:$0xff]
    %v3977 = vld [vmem:[#allocation8 + $0x1a0] sm:$0xff]
    %v3978 = vld [vmem:[#allocation8 + $0x1a8] sm:$0xff]
    %v3979 = vld [vmem:[#allocation8 + $0x1b0] sm:$0xff]
    %v3980 = vld [vmem:[#allocation8 + $0x1b8] sm:$0xff]
    %v3981 = vld [vmem:[#allocation8 + $0x1c0] sm:$0xff]
    %v3982 = vld [vmem:[#allocation8 + $0x1c8] sm:$0xff]
    %v3983 = vld [vmem:[#allocation8 + $0x1d0] sm:$0xff]
    %v3984 = vld [vmem:[#allocation8 + $0x1d8] sm:$0xff]
    %v3985 = vld [vmem:[#allocation8 + $0x1e0] sm:$0xff]
    %v3986 = vld [vmem:[#allocation8 + $0x1e8] sm:$0xff]
    %v3987 = vld [vmem:[#allocation8 + $0x1f0] sm:$0xff]
    %v3988 = vld [vmem:[#allocation8 + $0x1f8] sm:$0xff]
    %v3989 = vld [vmem:[%s7] sm:$0x3]
    %v3991 = vlaneseq
    %v3992 = vshrl.u32 %v3991, 7
    %v3993 = vsub.s32 0, %v3992
    %v3994 = vrot.slane %v3989, %v3993
    %v3995 = vlaneseq
    %v3996 = vshrl.u32 %v3995, 7
    %v3997 = vsub.s32 1, %v3996
    %v3998 = vrot.slane %v3989, %v3997
    %v4065 = vunpack.c.l.b16 %v3925
    %v4066 = vunpack.c.h.b16 %v3925
    %v4067 = vunpack.c.l.b16 %v3926
    %v4068 = vunpack.c.h.b16 %v3926
    %v4069 = vunpack.c.l.b16 %v3927
    %v4070 = vunpack.c.h.b16 %v3927
    %v4071 = vunpack.c.l.b16 %v3928
    %v4072 = vunpack.c.h.b16 %v3928
    %v4073 = vunpack.c.l.b16 %v3929
    %v4074 = vunpack.c.h.b16 %v3929
    %v4075 = vunpack.c.l.b16 %v3930
    %v4076 = vunpack.c.h.b16 %v3930
    %v4077 = vunpack.c.l.b16 %v3931
    %v4078 = vunpack.c.h.b16 %v3931
    %v4079 = vunpack.c.l.b16 %v3932
    %v4080 = vunpack.c.h.b16 %v3932
    %v4081 = vunpack.c.l.b16 %v3933
    %v4082 = vunpack.c.h.b16 %v3933
    %v4083 = vunpack.c.l.b16 %v3934
    %v4084 = vunpack.c.h.b16 %v3934
    %v4085 = vunpack.c.l.b16 %v3935
    %v4086 = vunpack.c.h.b16 %v3935
    %v4087 = vunpack.c.l.b16 %v3936
    %v4088 = vunpack.c.h.b16 %v3936
    %v4089 = vunpack.c.l.b16 %v3937
    %v4090 = vunpack.c.h.b16 %v3937
    %v4091 = vunpack.c.l.b16 %v3938
    %v4092 = vunpack.c.h.b16 %v3938
    %v4093 = vunpack.c.l.b16 %v3939
    %v4094 = vunpack.c.h.b16 %v3939
    %v4095 = vunpack.c.l.b16 %v3940
    %v4096 = vunpack.c.h.b16 %v3940
    %v4097 = vunpack.c.l.b16 %v3941
    %v4098 = vunpack.c.h.b16 %v3941
    %v4099 = vunpack.c.l.b16 %v3942
    %v4100 = vunpack.c.h.b16 %v3942
    %v4101 = vunpack.c.l.b16 %v3943
    %v4102 = vunpack.c.h.b16 %v3943
    %v4103 = vunpack.c.l.b16 %v3944
    %v4104 = vunpack.c.h.b16 %v3944
    %v4105 = vunpack.c.l.b16 %v3945
    %v4106 = vunpack.c.h.b16 %v3945
    %v4107 = vunpack.c.l.b16 %v3946
    %v4108 = vunpack.c.h.b16 %v3946
    %v4109 = vunpack.c.l.b16 %v3947
    %v4110 = vunpack.c.h.b16 %v3947
    %v4111 = vunpack.c.l.b16 %v3948
    %v4112 = vunpack.c.h.b16 %v3948
    %v4113 = vunpack.c.l.b16 %v3949
    %v4114 = vunpack.c.h.b16 %v3949
    %v4115 = vunpack.c.l.b16 %v3950
    %v4116 = vunpack.c.h.b16 %v3950
    %v4117 = vunpack.c.l.b16 %v3951
    %v4118 = vunpack.c.h.b16 %v3951
    %v4119 = vunpack.c.l.b16 %v3952
    %v4120 = vunpack.c.h.b16 %v3952
    %v4121 = vunpack.c.l.b16 %v3953
    %v4122 = vunpack.c.h.b16 %v3953
    %v4123 = vunpack.c.l.b16 %v3954
    %v4124 = vunpack.c.h.b16 %v3954
    %v4125 = vunpack.c.l.b16 %v3955
    %v4126 = vunpack.c.h.b16 %v3955
    %v4127 = vunpack.c.l.b16 %v3956
    %v4128 = vunpack.c.h.b16 %v3956
    %v4129 = vunpack.c.l.b16 %v3957
    %v4130 = vunpack.c.h.b16 %v3957
    %v4131 = vunpack.c.l.b16 %v3958
    %v4132 = vunpack.c.h.b16 %v3958
    %v4133 = vunpack.c.l.b16 %v3959
    %v4134 = vunpack.c.h.b16 %v3959
    %v4135 = vunpack.c.l.b16 %v3960
    %v4136 = vunpack.c.h.b16 %v3960
    %v4137 = vunpack.c.l.b16 %v3961
    %v4138 = vunpack.c.h.b16 %v3961
    %v4139 = vunpack.c.l.b16 %v3962
    %v4140 = vunpack.c.h.b16 %v3962
    %v4141 = vunpack.c.l.b16 %v3963
    %v4142 = vunpack.c.h.b16 %v3963
    %v4143 = vunpack.c.l.b16 %v3964
    %v4144 = vunpack.c.h.b16 %v3964
    %v4145 = vunpack.c.l.b16 %v3965
    %v4146 = vunpack.c.h.b16 %v3965
    %v4147 = vunpack.c.l.b16 %v3966
    %v4148 = vunpack.c.h.b16 %v3966
    %v4149 = vunpack.c.l.b16 %v3967
    %v4150 = vunpack.c.h.b16 %v3967
    %v4151 = vunpack.c.l.b16 %v3968
    %v4152 = vunpack.c.h.b16 %v3968
    %v4153 = vunpack.c.l.b16 %v3969
    %v4154 = vunpack.c.h.b16 %v3969
    %v4155 = vunpack.c.l.b16 %v3970
    %v4156 = vunpack.c.h.b16 %v3970
    %v4157 = vunpack.c.l.b16 %v3971
    %v4158 = vunpack.c.h.b16 %v3971
    %v4159 = vunpack.c.l.b16 %v3972
    %v4160 = vunpack.c.h.b16 %v3972
    %v4161 = vunpack.c.l.b16 %v3973
    %v4162 = vunpack.c.h.b16 %v3973
    %v4163 = vunpack.c.l.b16 %v3974
    %v4164 = vunpack.c.h.b16 %v3974
    %v4165 = vunpack.c.l.b16 %v3975
    %v4166 = vunpack.c.h.b16 %v3975
    %v4167 = vunpack.c.l.b16 %v3976
    %v4168 = vunpack.c.h.b16 %v3976
    %v4169 = vunpack.c.l.b16 %v3977
    %v4170 = vunpack.c.h.b16 %v3977
    %v4171 = vunpack.c.l.b16 %v3978
    %v4172 = vunpack.c.h.b16 %v3978
    %v4173 = vunpack.c.l.b16 %v3979
    %v4174 = vunpack.c.h.b16 %v3979
    %v4175 = vunpack.c.l.b16 %v3980
    %v4176 = vunpack.c.h.b16 %v3980
    %v4177 = vunpack.c.l.b16 %v3981
    %v4178 = vunpack.c.h.b16 %v3981
    %v4179 = vunpack.c.l.b16 %v3982
    %v4180 = vunpack.c.h.b16 %v3982
    %v4181 = vunpack.c.l.b16 %v3983
    %v4182 = vunpack.c.h.b16 %v3983
    %v4183 = vunpack.c.l.b16 %v3984
    %v4184 = vunpack.c.h.b16 %v3984
    %v4185 = vunpack.c.l.b16 %v3985
    %v4186 = vunpack.c.h.b16 %v3985
    %v4187 = vunpack.c.l.b16 %v3986
    %v4188 = vunpack.c.h.b16 %v3986
    %v4189 = vunpack.c.l.b16 %v3987
    %v4190 = vunpack.c.h.b16 %v3987
    %v4191 = vunpack.c.l.b16 %v3988
    %v4192 = vunpack.c.h.b16 %v3988
    %v4193 = vpack.c.b16 %v4067, %v4065
    %v4194 = vpack.c.b16 %v4068, %v4066
    %v4195 = vpack.c.b16 %v4071, %v4069
    %v4196 = vpack.c.b16 %v4072, %v4070
    %v4197 = vpack.c.b16 %v4075, %v4073
    %v4198 = vpack.c.b16 %v4076, %v4074
    %v4199 = vpack.c.b16 %v4079, %v4077
    %v4200 = vpack.c.b16 %v4080, %v4078
    %v4201 = vpack.c.b16 %v4083, %v4081
    %v4202 = vpack.c.b16 %v4084, %v4082
    %v4203 = vpack.c.b16 %v4087, %v4085
    %v4204 = vpack.c.b16 %v4088, %v4086
    %v4205 = vpack.c.b16 %v4091, %v4089
    %v4206 = vpack.c.b16 %v4092, %v4090
    %v4207 = vpack.c.b16 %v4095, %v4093
    %v4208 = vpack.c.b16 %v4096, %v4094
    %v4209 = vpack.c.b16 %v4099, %v4097
    %v4210 = vpack.c.b16 %v4100, %v4098
    %v4211 = vpack.c.b16 %v4103, %v4101
    %v4212 = vpack.c.b16 %v4104, %v4102
    %v4213 = vpack.c.b16 %v4107, %v4105
    %v4214 = vpack.c.b16 %v4108, %v4106
    %v4215 = vpack.c.b16 %v4111, %v4109
    %v4216 = vpack.c.b16 %v4112, %v4110
    %v4217 = vpack.c.b16 %v4115, %v4113
    %v4218 = vpack.c.b16 %v4116, %v4114
    %v4219 = vpack.c.b16 %v4119, %v4117
    %v4220 = vpack.c.b16 %v4120, %v4118
    %v4221 = vpack.c.b16 %v4123, %v4121
    %v4222 = vpack.c.b16 %v4124, %v4122
    %v4223 = vpack.c.b16 %v4127, %v4125
    %v4224 = vpack.c.b16 %v4128, %v4126
    %v4225 = vpack.c.b16 %v4131, %v4129
    %v4226 = vpack.c.b16 %v4132, %v4130
    %v4227 = vpack.c.b16 %v4135, %v4133
    %v4228 = vpack.c.b16 %v4136, %v4134
    %v4229 = vpack.c.b16 %v4139, %v4137
    %v4230 = vpack.c.b16 %v4140, %v4138
    %v4231 = vpack.c.b16 %v4143, %v4141
    %v4232 = vpack.c.b16 %v4144, %v4142
    %v4233 = vpack.c.b16 %v4147, %v4145
    %v4234 = vpack.c.b16 %v4148, %v4146
    %v4235 = vpack.c.b16 %v4151, %v4149
    %v4236 = vpack.c.b16 %v4152, %v4150
    %v4237 = vpack.c.b16 %v4155, %v4153
    %v4238 = vpack.c.b16 %v4156, %v4154
    %v4239 = vpack.c.b16 %v4159, %v4157
    %v4240 = vpack.c.b16 %v4160, %v4158
    %v4241 = vpack.c.b16 %v4163, %v4161
    %v4242 = vpack.c.b16 %v4164, %v4162
    %v4243 = vpack.c.b16 %v4167, %v4165
    %v4244 = vpack.c.b16 %v4168, %v4166
    %v4245 = vpack.c.b16 %v4171, %v4169
    %v4246 = vpack.c.b16 %v4172, %v4170
    %v4247 = vpack.c.b16 %v4175, %v4173
    %v4248 = vpack.c.b16 %v4176, %v4174
    %v4249 = vpack.c.b16 %v4179, %v4177
    %v4250 = vpack.c.b16 %v4180, %v4178
    %v4251 = vpack.c.b16 %v4183, %v4181
    %v4252 = vpack.c.b16 %v4184, %v4182
    %v4253 = vpack.c.b16 %v4187, %v4185
    %v4254 = vpack.c.b16 %v4188, %v4186
    %v4255 = vpack.c.b16 %v4191, %v4189
    %v4256 = vpack.c.b16 %v4192, %v4190
    %4321 = vmatprep.subr.bf16.mxu0 %v4208
    %4322 = vmatpush1.bf16.msra.mxu0 %v4207
    %4323 = vmatprep.subr.bf16.mxu0 %v4206
    %4324 = vmatpush1.bf16.msra.mxu0 %v4205
    %4325 = vmatprep.subr.bf16.mxu0 %v4204
    %4326 = vmatpush1.bf16.msra.mxu0 %v4203
    %4327 = vmatprep.subr.bf16.mxu0 %v4202
    %4328 = vmatpush1.bf16.msra.mxu0 %v4201
    %4329 = vmatprep.subr.bf16.mxu0 %v4200
    %4330 = vmatpush1.bf16.msra.mxu0 %v4199
    %4331 = vmatprep.subr.bf16.mxu0 %v4198
    %4332 = vmatpush1.bf16.msra.mxu0 %v4197
    %4333 = vmatprep.subr.bf16.mxu0 %v4196
    %4334 = vmatpush1.bf16.msra.mxu0 %v4195
    %4335 = vmatprep.subr.bf16.mxu0 %v4194
    %4336 = vmatpush1.bf16.msra.mxu0 %v4193
    %4337 = vmatprep.subr.bf16.mxu0 %v4224
    %4338 = vmatpush2.bf16.msra.mxu0 %v4223
    %4339 = vmatprep.subr.bf16.mxu0 %v4222
    %4340 = vmatpush2.bf16.msra.mxu0 %v4221
    %4341 = vmatprep.subr.bf16.mxu0 %v4220
    %4342 = vmatpush2.bf16.msra.mxu0 %v4219
    %4343 = vmatprep.subr.bf16.mxu0 %v4218
    %4344 = vmatpush2.bf16.msra.mxu0 %v4217
    %4345 = vmatprep.subr.bf16.mxu0 %v4216
    %4346 = vmatpush2.bf16.msra.mxu0 %v4215
    %4347 = vmatprep.subr.bf16.mxu0 %v4214
    %4348 = vmatpush2.bf16.msra.mxu0 %v4213
    %4349 = vmatprep.subr.bf16.mxu0 %v4212
    %4350 = vmatpush2.bf16.msra.mxu0 %v4211
    %4351 = vmatprep.subr.bf16.mxu0 %v4210
    %4352 = vmatpush2.bf16.msra.mxu0 %v4209
    %4353 = vmatprep.mubr.bf16.mxu0 %v3922
    %4354 = vmatmul.mubr.bf16.gmra.mxu0 %v3921
    %v4355 = vpop.f32.mrf.mxu0
    %v4356 = vadd.f32 %v3994, %v4355
    %v4357 = vpop.f32.mrf.mxu0
    %v4358 = vadd.f32 %v3998, %v4357
    %v4359 = vpop.f32.mrf.mxu0
    %v4360 = vadd.f32 %v3994, %v4359
    %v4361 = vpop.f32.mrf.mxu0
    %v4362 = vadd.f32 %v3998, %v4361
    %4363 = vdwg.mxu0
    %4364 = vmatprep.subr.bf16.mxu0 %v4240
    %4365 = vmatpush1.bf16.msra.mxu0 %v4239
    %4366 = vmatprep.subr.bf16.mxu0 %v4238
    %4367 = vmatpush1.bf16.msra.mxu0 %v4237
    %4368 = vmatprep.subr.bf16.mxu0 %v4236
    %4369 = vmatpush1.bf16.msra.mxu0 %v4235
    %4370 = vmatprep.subr.bf16.mxu0 %v4234
    %4371 = vmatpush1.bf16.msra.mxu0 %v4233
    %4372 = vmatprep.subr.bf16.mxu0 %v4232
    %4373 = vmatpush1.bf16.msra.mxu0 %v4231
    %4374 = vmatprep.subr.bf16.mxu0 %v4230
    %4375 = vmatpush1.bf16.msra.mxu0 %v4229
    %4376 = vmatprep.subr.bf16.mxu0 %v4228
    %4377 = vmatpush1.bf16.msra.mxu0 %v4227
    %4378 = vmatprep.subr.bf16.mxu0 %v4226
    %4379 = vmatpush1.bf16.msra.mxu0 %v4225
    %4380 = vmatprep.subr.bf16.mxu0 %v4256
    %4381 = vmatpush2.bf16.msra.mxu0 %v4255
    %4382 = vmatprep.subr.bf16.mxu0 %v4254
    %4383 = vmatpush2.bf16.msra.mxu0 %v4253
    %4384 = vmatprep.subr.bf16.mxu0 %v4252
    %4385 = vmatpush2.bf16.msra.mxu0 %v4251
    %4386 = vmatprep.subr.bf16.mxu0 %v4250
    %4387 = vmatpush2.bf16.msra.mxu0 %v4249
    %4388 = vmatprep.subr.bf16.mxu0 %v4248
    %4389 = vmatpush2.bf16.msra.mxu0 %v4247
    %4390 = vmatprep.subr.bf16.mxu0 %v4246
    %4391 = vmatpush2.bf16.msra.mxu0 %v4245
    %4392 = vmatprep.subr.bf16.mxu0 %v4244
    %4393 = vmatpush2.bf16.msra.mxu0 %v4243
    %4394 = vmatprep.subr.bf16.mxu0 %v4242
    %4395 = vmatpush2.bf16.msra.mxu0 %v4241
    %4396 = vmatprep.mubr.bf16.mxu0 %v3924
    %4397 = vmatmul.mubr.bf16.gmra.mxu0 %v3923
    %v4398 = vpop.f32.mrf.mxu0
    %v4399 = vadd.f32 %v4356, %v4398
    %v4400 = vpop.f32.mrf.mxu0
    %v4401 = vadd.f32 %v4358, %v4400
    %v4402 = vpop.f32.mrf.mxu0
    %v4403 = vadd.f32 %v4360, %v4402
    %v4404 = vpop.f32.mrf.mxu0
    %v4405 = vadd.f32 %v4362, %v4404
    %4406 = vdwg.mxu0
    %v4407 = vtanh.pop %v4399
    %v4408 = vtanh.pop %v4401
    %v4409 = vtanh.pop %v4403
    %v4410 = vtanh.pop %v4405
    %4411 = vst [vmem:[#allocation10] sm:$0xff] %v4407
    %4412 = vst [vmem:[#allocation10 + $0x8] sm:$0xff] %v4408
    %4413 = vst [vmem:[#allocation10 + $0x10] sm:$0xff] %v4409
    %4414 = vst [vmem:[#allocation10 + $0x18] sm:$0xff] %v4410
    // Predicated region
    $region50: #{tpu_custom_call.1} parent=1 // pred_check
      _
    $region51: #{tpu_custom_call.1} parent=1 // pred_check_branch
      %4416 = sbr.rel (0) target = $region53
    $region52: #{tpu_custom_call.1} parent=1 // pred_region
      %s4418 = ssub.s32 512, 512
      %4419 = vsyncadd [#allocation4], %s4418
      %s4420 = sshll.u32 [#allocation10], 4
      %s4421 = int_to_ptr.vmem [resolvable:$true] %s4420
      %4426 = dma.vmem_to_hbm [thread:$0]  %s4421, 512, %s8, [#allocation4], 256, 256, 16
    $region53: #{tpu_custom_call.1} parent=1 // pred_fallthru
      _
    // Predicated region
    $region54: #{tpu_custom_call.1} parent=1 // pred_check
      _
    $region55: #{tpu_custom_call.1} parent=1 // pred_check_branch
      %4428 = sbr.rel (0) target = $region57
    $region56: #{tpu_custom_call.1} parent=1 // pred_region
      %4429 = dma.done [#allocation4], 512
    $region57: #{tpu_custom_call.1} parent=1 // pred_fallthru
      _
    %4430 = vsyncpa [#allocation3], 1
    %4431 = vsyncpa [#allocation6], 1
    %4432 = vsyncpa [#allocation9], 1
    %4433 = vsyncpa [#allocation4], 1

</llo_original>
